<compile_context>
chip_gen: v7x
topology: tpu7x:2x2x1
jax: 0.10.0
libtpu: 0.0.40
codegen_flags: <defaults>
</compile_context>

<pallas_src>
import functools

import jax
import jax.numpy as jnp
import numpy as np
from jax.experimental import pallas as pl
from jax.experimental.pallas import tpu as pltpu

NUM_FRAMES = 4
BN_EPS = 1e-5


# ----------------------------------------------------------------------------
# Kernel: fused 3x3 conv (pad=1) + folded BN + ReLU (+ optional global pool).
# ----------------------------------------------------------------------------
def conv3x3_bn_relu_kernel(x_ref, w_ref, scale_ref, bias_ref, o_ref,
                           *, H, W, Cin, Cout, stride, pool):
    """One grid step processes IB images.

    x_ref:     (IB, H+2, W+2, Cin)  zero-padded, channels-last
    w_ref:     (9, Cin, Cout)       tap-major weights, tap k = 3*dy + dx
    scale_ref: (1, Cout)            BN scale  gamma / sqrt(var + eps)
    bias_ref:  (1, Cout)            BN bias   beta + (conv_b - mean) * scale
    o_ref:     (IB, H/stride, W/stride, Cout)   or (IB, 1, Cout) if pool
    """
    IB = x_ref.shape[0]
    HW = H * W

    # 3x3 conv as 9 shifted-window matmuls accumulated in f32 on the MXU.
    acc = jnp.zeros((IB * HW, Cout), jnp.float32)
    for dy in range(3):
        for dx in range(3):
            win = x_ref[:, dy:dy + H, dx:dx + W, :]          # (IB, H, W, Cin)
            win = win.reshape(IB * HW, Cin)
            acc = acc + jnp.dot(win, w_ref[3 * dy + dx],
                                preferred_element_type=jnp.float32)

    if stride == 2:
        # out[i, j] = stride1_out[2i, 2j]; done with a constant 0/1 selection
        # matmul so everything stays on the MXU (no strided relayouts).
        Ho, Wo = H // 2, W // 2
        HWo = Ho * Wo
        k = jax.lax.broadcasted_iota(jnp.int32, (HWo, HW), 0)
        r = jax.lax.broadcasted_iota(jnp.int32, (HWo, HW), 1)
        src = (k // Wo) * (2 * W) + (k % Wo) * 2
        sel = jnp.where(r == src, 1.0, 0.0).astype(jnp.float32)
        acc = jnp.concatenate(
            [jnp.dot(sel, acc[i * HW:(i + 1) * HW],
                     preferred_element_type=jnp.float32)
             for i in range(IB)], axis=0)                    # (IB*HWo, Cout)
    else:
        Ho, Wo = H, W
        HWo = HW

    # Folded BatchNorm (inference mode) + ReLU.
    y = jnp.maximum(acc * scale_ref[...] + bias_ref[...], 0.0)

    if pool:
        # AdaptiveAvgPool2d((1,1)): mean over the spatial axis, lane-dense out.
        o_ref[...] = jnp.mean(y.reshape(IB, HWo, Cout), axis=1, keepdims=True)
    else:
        o_ref[...] = y.reshape(IB, Ho, Wo, Cout)


# ----------------------------------------------------------------------------
# Per-layer wrapper.
# ----------------------------------------------------------------------------
def _images_per_block(n):
    # biggest image block that still leaves a grid of >= 2 steps (megacore).
    for ib in (8, 4, 2):
        if n % ib == 0 and n // ib >= 2:
            return ib
    return 1


def conv_bn_relu_pallas(x_nhwc, w9, scale, bias, *, stride=1, pool=False):
    N, H, W, Cin = x_nhwc.shape
    Cout = w9.shape[-1]

    # Pad tiny channel counts (RGB input) to 8 so the MXU contraction dim has
    # a friendlier shape; padded channels are zero on both sides -> no change.
    if Cin < 8:
        pad = 8 - Cin
        x_nhwc = jnp.pad(x_nhwc, ((0, 0), (0, 0), (0, 0), (0, pad)))
        w9 = jnp.pad(w9, ((0, 0), (0, pad), (0, 0)))
        Cin = 8

    xp = jnp.pad(x_nhwc, ((0, 0), (1, 1), (1, 1), (0, 0)))   # conv padding=1
    Hp, Wp = H + 2, W + 2
    Ho, Wo = H // stride, W // stride

    ib = _images_per_block(N)
    grid = (N // ib,)

    kernel = functools.partial(conv3x3_bn_relu_kernel, H=H, W=W, Cin=Cin,
                               Cout=Cout, stride=stride, pool=pool)

    if pool:
        out_shape = jax.ShapeDtypeStruct((N, 1, Cout), jnp.float32)
        out_spec = pl.BlockSpec((ib, 1, Cout), lambda g: (g, 0, 0))
    else:
        out_shape = jax.ShapeDtypeStruct((N, Ho, Wo, Cout), jnp.float32)
        out_spec = pl.BlockSpec((ib, Ho, Wo, Cout), lambda g: (g, 0, 0, 0))

    return pl.pallas_call(
        kernel,
        out_shape=out_shape,
        grid=grid,
        in_specs=[
            pl.BlockSpec((ib, Hp, Wp, Cin), lambda g: (g, 0, 0, 0)),
            pl.BlockSpec((9, Cin, Cout), lambda g: (0, 0, 0)),
            pl.BlockSpec((1, Cout), lambda g: (0, 0)),
            pl.BlockSpec((1, Cout), lambda g: (0, 0)),
        ],
        out_specs=out_spec,
        compiler_params=pltpu.CompilerParams(
            dimension_semantics=("parallel",)),
    )(xp, w9, scale, bias)


# ----------------------------------------------------------------------------
# Full forward pass (matches video_model.forward).
# ----------------------------------------------------------------------------
LAYER_STRIDES = (1, 2, 1, 1, 1)
LAYER_POOL = (False, False, False, False, True)

_LAYER_DEFS = (
    # (cin, cout, conv_has_bias)
    (3, 32, False),
    (32, 64, False),
    (64, 128, True),
    (128, 128, True),
    (128, 128, True),
)


def video_model_forward(x, params, num_frames=NUM_FRAMES):
    """x: (batch, num_frames, C, H, W) or (batch*num_frames, C, H, W)."""
    if x.ndim == 4:
        n, c, h, w = x.shape
        x = x.reshape(n // num_frames, num_frames, c, h, w)
    B, T, C, H, W = x.shape
    if C != 3:
        x = x[:, :, :3]
    N = B * T

    # NCHW -> channels-last working layout (cheap: only 3 channels).
    a = x.reshape(N, 3, H, W).transpose(0, 2, 3, 1).astype(jnp.float32)

    for i, (s, p) in enumerate(zip(LAYER_STRIDES, LAYER_POOL), start=1):
        a = conv_bn_relu_pallas(a, params[f"w{i}"], params[f"s{i}"],
                                params[f"b{i}"], stride=s, pool=p)

    # (N, 1, 128) -> (batch, num_frames * 128)  (== x.view(x.size(0), -1))
    return a.reshape(B, -1)


# ----------------------------------------------------------------------------
# Parameter construction (PyTorch layouts, folded for the kernels).
# ----------------------------------------------------------------------------
def make_params(key):
    """BatchNorm (inference) + conv bias fold:
         y = (conv(x) + conv_b - mean) * gamma/sqrt(var+eps) + beta
           = conv(x) * scale + bias
    NOTE: a freshly-initialised PyTorch module has gamma=1, beta=0, mean=0,
    var=1 (BN ~= identity); random BN statistics are used here so the folded
    path is actually exercised by the numerical check.
    """
    params = {}
    for i, (cin, cout, has_bias) in enumerate(_LAYER_DEFS, start=1):
        key, kw, kb, k1, k2, k3, k4 = jax.random.split(key, 7)
        std = float(np.sqrt(2.0 / (9 * cout)))              # kaiming, fan_out
        w = std * jax.random.normal(kw, (cout, cin, 3, 3), jnp.float32)
        conv_b = (0.1 * jax.random.normal(kb, (cout,), jnp.float32)
                  if has_bias else jnp.zeros((cout,), jnp.float32))
        bn_w = 1.0 + 0.2 * jax.random.normal(k1, (cout,), jnp.float32)
        bn_b = 0.1 * jax.random.normal(k2, (cout,), jnp.float32)
        bn_mean = 0.1 * jax.random.normal(k3, (cout,), jnp.float32)
        bn_var = 0.5 + jax.random.uniform(k4, (cout,), jnp.float32)

        scale = bn_w / jnp.sqrt(bn_var + BN_EPS)
        bias = bn_b + (conv_b - bn_mean) * scale

        # (Cout, Cin, 3, 3) -> tap-major (9, Cin, Cout), tap k = 3*dy + dx
        w9 = jnp.transpose(w, (2, 3, 1, 0)).reshape(9, cin, cout)

        params[f"w{i}"] = w9
        params[f"s{i}"] = scale.reshape(1, cout)
        params[f"b{i}"] = bias.reshape(1, cout)
    return params


# ----------------------------------------------------------------------------
# Pure-JAX reference (mirrors the PyTorch forward), for verification.
# ----------------------------------------------------------------------------
def reference_forward(x, params, num_frames=NUM_FRAMES):
    if x.ndim == 4:
        n, c, h, w = x.shape
        x = x.reshape(n // num_frames, num_frames, c, h, w)
    B, T, C, H, W = x.shape
    if C != 3:
        x = x[:, :, :3]
    a = x.reshape(B * T, 3, H, W).transpose(0, 2, 3, 1).astype(jnp.float32)
    for i, s in enumerate(LAYER_STRIDES, start=1):
        w9 = params[f"w{i}"]
        cin, cout = w9.shape[1], w9.shape[2]
        w_hwio = w9.reshape(3, 3, cin, cout)
        a = jax.lax.conv_general_dilated(
            a, w_hwio, window_strides=(s, s), padding=((1, 1), (1, 1)),
            dimension_numbers=("NHWC", "HWIO", "NHWC"),
            precision=jax.lax.Precision.HIGHEST)
        a = jnp.maximum(a * params[f"s{i}"] + params[f"b{i}"], 0.0)
    pooled = a.mean(axis=(1, 2))            # AdaptiveAvgPool2d((1,1))
    return pooled.reshape(B, -1)


if __name__ == "__main__":
    # Small shapes consistent with the module: 2 clips x 4 frames, 3x16x16.
    B, T, C, H, W = 2, NUM_FRAMES, 3, 16, 16
    key = jax.random.PRNGKey(0)
    kx, kp = jax.random.split(key)
    x = jax.random.normal(kx, (B, T, C, H, W), jnp.float32)
    params = make_params(kp)

    out = video_model_forward(x, params, num_frames=T)
    out = jax.block_until_ready(out)

    ref = reference_forward(x, params, num_frames=T)
    assert out.shape == (B, T * 128), out.shape
    # Kernel matmuls use the f32 MXU path (expected diff ~1e-5); tolerance is
    # kept generous so the smoke test is robust across TPU generations.
    np.testing.assert_allclose(np.asarray(out), np.asarray(ref),
                               rtol=1e-2, atol=1e-2)
    print("KERNEL_OK")
</pallas_src>

<mosaic_0001>
module attributes {stable_mosaic.version = 11 : i64} {
  func.func @conv3x3_bn_relu_kernel(%arg0: i32, %arg1: memref<4x18x18x8xf32, #tpu.memory_space<vmem>>, %arg2: memref<9x8x32xf32, #tpu.memory_space<vmem>>, %arg3: memref<1x32xf32, #tpu.memory_space<vmem>>, %arg4: memref<1x32xf32, #tpu.memory_space<vmem>>, %arg5: memref<4x16x16x32xf32, #tpu.memory_space<vmem>>) attributes {dimension_semantics = [#tpu.dimension_semantics<parallel>], iteration_bounds = array<i64: 2>, scalar_prefetch = 0 : i64, scratch_operands = 0 : i64, tpu.core_type = #tpu.core_type<tc>, window_params = [{transform_indices = @transform_0, window_bounds = array<i64: 4, 18, 18, 8>}, {pipeline_mode = #tpu.pipeline_mode<synchronous>, transform_indices = @transform_1, window_bounds = array<i64: 9, 8, 32>}, {pipeline_mode = #tpu.pipeline_mode<synchronous>, transform_indices = @transform_2, window_bounds = array<i64: 1, 32>}, {pipeline_mode = #tpu.pipeline_mode<synchronous>, transform_indices = @transform_3, window_bounds = array<i64: 1, 32>}, {transform_indices = @transform_4, window_bounds = array<i64: 4, 16, 16, 32>}]} {
    %cst = arith.constant 0.000000e+00 : f32
    %0 = vector.broadcast %cst : f32 to vector<1024x32xf32>
    %c0 = arith.constant 0 : index
    %c0_0 = arith.constant 0 : index
    %c0_1 = arith.constant 0 : index
    %c0_2 = arith.constant 0 : index
    %1 = vector.load %arg1[%c0, %c0_0, %c0_1, %c0_2] : memref<4x18x18x8xf32, #tpu.memory_space<vmem>>, vector<4x16x16x8xf32>
    %2 = vector.shape_cast %1 : vector<4x16x16x8xf32> to vector<1024x8xf32>
    %c0_3 = arith.constant 0 : index
    %c0_4 = arith.constant 0 : index
    %c0_5 = arith.constant 0 : index
    %3 = vector.load %arg2[%c0_3, %c0_4, %c0_5] : memref<9x8x32xf32, #tpu.memory_space<vmem>>, vector<1x8x32xf32>
    %4 = vector.shape_cast %3 : vector<1x8x32xf32> to vector<8x32xf32>
    %cst_6 = arith.constant dense<0.000000e+00> : vector<1024x32xf32>
    %5 = tpu.matmul %2, %4, %cst_6 {dimension_numbers = #tpu.dot_dimension_numbers<[1], [0], [0], [1], [0, 0, 1, 1], [], []>} : vector<1024x8xf32>, vector<8x32xf32>, vector<1024x32xf32> -> vector<1024x32xf32>
    %6 = arith.addf %0, %5 : vector<1024x32xf32>
    %c0_7 = arith.constant 0 : index
    %c0_8 = arith.constant 0 : index
    %c1 = arith.constant 1 : index
    %c0_9 = arith.constant 0 : index
    %7 = vector.load %arg1[%c0_7, %c0_8, %c1, %c0_9] : memref<4x18x18x8xf32, #tpu.memory_space<vmem>>, vector<4x16x16x8xf32>
    %8 = vector.shape_cast %7 : vector<4x16x16x8xf32> to vector<1024x8xf32>
    %c1_10 = arith.constant 1 : index
    %c0_11 = arith.constant 0 : index
    %c0_12 = arith.constant 0 : index
    %9 = vector.load %arg2[%c1_10, %c0_11, %c0_12] : memref<9x8x32xf32, #tpu.memory_space<vmem>>, vector<1x8x32xf32>
    %10 = vector.shape_cast %9 : vector<1x8x32xf32> to vector<8x32xf32>
    %cst_13 = arith.constant dense<0.000000e+00> : vector<1024x32xf32>
    %11 = tpu.matmul %8, %10, %cst_13 {dimension_numbers = #tpu.dot_dimension_numbers<[1], [0], [0], [1], [0, 0, 1, 1], [], []>} : vector<1024x8xf32>, vector<8x32xf32>, vector<1024x32xf32> -> vector<1024x32xf32>
    %12 = arith.addf %6, %11 : vector<1024x32xf32>
    %c0_14 = arith.constant 0 : index
    %c0_15 = arith.constant 0 : index
    %c2 = arith.constant 2 : index
    %c0_16 = arith.constant 0 : index
    %13 = vector.load %arg1[%c0_14, %c0_15, %c2, %c0_16] : memref<4x18x18x8xf32, #tpu.memory_space<vmem>>, vector<4x16x16x8xf32>
    %14 = vector.shape_cast %13 : vector<4x16x16x8xf32> to vector<1024x8xf32>
    %c2_17 = arith.constant 2 : index
    %c0_18 = arith.constant 0 : index
    %c0_19 = arith.constant 0 : index
    %15 = vector.load %arg2[%c2_17, %c0_18, %c0_19] : memref<9x8x32xf32, #tpu.memory_space<vmem>>, vector<1x8x32xf32>
    %16 = vector.shape_cast %15 : vector<1x8x32xf32> to vector<8x32xf32>
    %cst_20 = arith.constant dense<0.000000e+00> : vector<1024x32xf32>
    %17 = tpu.matmul %14, %16, %cst_20 {dimension_numbers = #tpu.dot_dimension_numbers<[1], [0], [0], [1], [0, 0, 1, 1], [], []>} : vector<1024x8xf32>, vector<8x32xf32>, vector<1024x32xf32> -> vector<1024x32xf32>
    %18 = arith.addf %12, %17 : vector<1024x32xf32>
    %c0_21 = arith.constant 0 : index
    %c1_22 = arith.constant 1 : index
    %c0_23 = arith.constant 0 : index
    %c0_24 = arith.constant 0 : index
    %19 = vector.load %arg1[%c0_21, %c1_22, %c0_23, %c0_24] : memref<4x18x18x8xf32, #tpu.memory_space<vmem>>, vector<4x16x16x8xf32>
    %20 = vector.shape_cast %19 : vector<4x16x16x8xf32> to vector<1024x8xf32>
    %c3 = arith.constant 3 : index
    %c0_25 = arith.constant 0 : index
    %c0_26 = arith.constant 0 : index
    %21 = vector.load %arg2[%c3, %c0_25, %c0_26] : memref<9x8x32xf32, #tpu.memory_space<vmem>>, vector<1x8x32xf32>
    %22 = vector.shape_cast %21 : vector<1x8x32xf32> to vector<8x32xf32>
    %cst_27 = arith.constant dense<0.000000e+00> : vector<1024x32xf32>
    %23 = tpu.matmul %20, %22, %cst_27 {dimension_numbers = #tpu.dot_dimension_numbers<[1], [0], [0], [1], [0, 0, 1, 1], [], []>} : vector<1024x8xf32>, vector<8x32xf32>, vector<1024x32xf32> -> vector<1024x32xf32>
    %24 = arith.addf %18, %23 : vector<1024x32xf32>
    %c0_28 = arith.constant 0 : index
    %c1_29 = arith.constant 1 : index
    %c1_30 = arith.constant 1 : index
    %c0_31 = arith.constant 0 : index
    %25 = vector.load %arg1[%c0_28, %c1_29, %c1_30, %c0_31] : memref<4x18x18x8xf32, #tpu.memory_space<vmem>>, vector<4x16x16x8xf32>
    %26 = vector.shape_cast %25 : vector<4x16x16x8xf32> to vector<1024x8xf32>
    %c4 = arith.constant 4 : index
    %c0_32 = arith.constant 0 : index
    %c0_33 = arith.constant 0 : index
    %27 = vector.load %arg2[%c4, %c0_32, %c0_33] : memref<9x8x32xf32, #tpu.memory_space<vmem>>, vector<1x8x32xf32>
    %28 = vector.shape_cast %27 : vector<1x8x32xf32> to vector<8x32xf32>
    %cst_34 = arith.constant dense<0.000000e+00> : vector<1024x32xf32>
    %29 = tpu.matmul %26, %28, %cst_34 {dimension_numbers = #tpu.dot_dimension_numbers<[1], [0], [0], [1], [0, 0, 1, 1], [], []>} : vector<1024x8xf32>, vector<8x32xf32>, vector<1024x32xf32> -> vector<1024x32xf32>
    %30 = arith.addf %24, %29 : vector<1024x32xf32>
    %c0_35 = arith.constant 0 : index
    %c1_36 = arith.constant 1 : index
    %c2_37 = arith.constant 2 : index
    %c0_38 = arith.constant 0 : index
    %31 = vector.load %arg1[%c0_35, %c1_36, %c2_37, %c0_38] : memref<4x18x18x8xf32, #tpu.memory_space<vmem>>, vector<4x16x16x8xf32>
    %32 = vector.shape_cast %31 : vector<4x16x16x8xf32> to vector<1024x8xf32>
    %c5 = arith.constant 5 : index
    %c0_39 = arith.constant 0 : index
    %c0_40 = arith.constant 0 : index
    %33 = vector.load %arg2[%c5, %c0_39, %c0_40] : memref<9x8x32xf32, #tpu.memory_space<vmem>>, vector<1x8x32xf32>
    %34 = vector.shape_cast %33 : vector<1x8x32xf32> to vector<8x32xf32>
    %cst_41 = arith.constant dense<0.000000e+00> : vector<1024x32xf32>
    %35 = tpu.matmul %32, %34, %cst_41 {dimension_numbers = #tpu.dot_dimension_numbers<[1], [0], [0], [1], [0, 0, 1, 1], [], []>} : vector<1024x8xf32>, vector<8x32xf32>, vector<1024x32xf32> -> vector<1024x32xf32>
    %36 = arith.addf %30, %35 : vector<1024x32xf32>
    %c0_42 = arith.constant 0 : index
    %c2_43 = arith.constant 2 : index
    %c0_44 = arith.constant 0 : index
    %c0_45 = arith.constant 0 : index
    %37 = vector.load %arg1[%c0_42, %c2_43, %c0_44, %c0_45] : memref<4x18x18x8xf32, #tpu.memory_space<vmem>>, vector<4x16x16x8xf32>
    %38 = vector.shape_cast %37 : vector<4x16x16x8xf32> to vector<1024x8xf32>
    %c6 = arith.constant 6 : index
    %c0_46 = arith.constant 0 : index
    %c0_47 = arith.constant 0 : index
    %39 = vector.load %arg2[%c6, %c0_46, %c0_47] : memref<9x8x32xf32, #tpu.memory_space<vmem>>, vector<1x8x32xf32>
    %40 = vector.shape_cast %39 : vector<1x8x32xf32> to vector<8x32xf32>
    %cst_48 = arith.constant dense<0.000000e+00> : vector<1024x32xf32>
    %41 = tpu.matmul %38, %40, %cst_48 {dimension_numbers = #tpu.dot_dimension_numbers<[1], [0], [0], [1], [0, 0, 1, 1], [], []>} : vector<1024x8xf32>, vector<8x32xf32>, vector<1024x32xf32> -> vector<1024x32xf32>
    %42 = arith.addf %36, %41 : vector<1024x32xf32>
    %c0_49 = arith.constant 0 : index
    %c2_50 = arith.constant 2 : index
    %c1_51 = arith.constant 1 : index
    %c0_52 = arith.constant 0 : index
    %43 = vector.load %arg1[%c0_49, %c2_50, %c1_51, %c0_52] : memref<4x18x18x8xf32, #tpu.memory_space<vmem>>, vector<4x16x16x8xf32>
    %44 = vector.shape_cast %43 : vector<4x16x16x8xf32> to vector<1024x8xf32>
    %c7 = arith.constant 7 : index
    %c0_53 = arith.constant 0 : index
    %c0_54 = arith.constant 0 : index
    %45 = vector.load %arg2[%c7, %c0_53, %c0_54] : memref<9x8x32xf32, #tpu.memory_space<vmem>>, vector<1x8x32xf32>
    %46 = vector.shape_cast %45 : vector<1x8x32xf32> to vector<8x32xf32>
    %cst_55 = arith.constant dense<0.000000e+00> : vector<1024x32xf32>
    %47 = tpu.matmul %44, %46, %cst_55 {dimension_numbers = #tpu.dot_dimension_numbers<[1], [0], [0], [1], [0, 0, 1, 1], [], []>} : vector<1024x8xf32>, vector<8x32xf32>, vector<1024x32xf32> -> vector<1024x32xf32>
    %48 = arith.addf %42, %47 : vector<1024x32xf32>
    %c0_56 = arith.constant 0 : index
    %c2_57 = arith.constant 2 : index
    %c2_58 = arith.constant 2 : index
    %c0_59 = arith.constant 0 : index
    %49 = vector.load %arg1[%c0_56, %c2_57, %c2_58, %c0_59] : memref<4x18x18x8xf32, #tpu.memory_space<vmem>>, vector<4x16x16x8xf32>
    %50 = vector.shape_cast %49 : vector<4x16x16x8xf32> to vector<1024x8xf32>
    %c8 = arith.constant 8 : index
    %c0_60 = arith.constant 0 : index
    %c0_61 = arith.constant 0 : index
    %51 = vector.load %arg2[%c8, %c0_60, %c0_61] : memref<9x8x32xf32, #tpu.memory_space<vmem>>, vector<1x8x32xf32>
    %52 = vector.shape_cast %51 : vector<1x8x32xf32> to vector<8x32xf32>
    %cst_62 = arith.constant dense<0.000000e+00> : vector<1024x32xf32>
    %53 = tpu.matmul %50, %52, %cst_62 {dimension_numbers = #tpu.dot_dimension_numbers<[1], [0], [0], [1], [0, 0, 1, 1], [], []>} : vector<1024x8xf32>, vector<8x32xf32>, vector<1024x32xf32> -> vector<1024x32xf32>
    %54 = arith.addf %48, %53 : vector<1024x32xf32>
    %c0_63 = arith.constant 0 : index
    %c0_64 = arith.constant 0 : index
    %55 = vector.load %arg3[%c0_63, %c0_64] : memref<1x32xf32, #tpu.memory_space<vmem>>, vector<1x32xf32>
    %56 = vector.broadcast %55 : vector<1x32xf32> to vector<1024x32xf32>
    %57 = arith.mulf %54, %56 : vector<1024x32xf32>
    %c0_65 = arith.constant 0 : index
    %c0_66 = arith.constant 0 : index
    %58 = vector.load %arg4[%c0_65, %c0_66] : memref<1x32xf32, #tpu.memory_space<vmem>>, vector<1x32xf32>
    %59 = vector.broadcast %58 : vector<1x32xf32> to vector<1024x32xf32>
    %60 = arith.addf %57, %59 : vector<1024x32xf32>
    %cst_67 = arith.constant 0.000000e+00 : f32
    %61 = vector.broadcast %cst_67 : f32 to vector<1024x32xf32>
    %62 = arith.maximumf %60, %61 : vector<1024x32xf32>
    %63 = vector.shape_cast %62 : vector<1024x32xf32> to vector<4x16x16x32xf32>
    %c0_68 = arith.constant 0 : index
    %c0_69 = arith.constant 0 : index
    %c0_70 = arith.constant 0 : index
    %c0_71 = arith.constant 0 : index
    %64 = vector.load %arg5[%c0_68, %c0_69, %c0_70, %c0_71] : memref<4x16x16x32xf32, #tpu.memory_space<vmem>>, vector<4x16x16x32xf32>
    tpu.vector_store %arg5[%c0_68, %c0_69, %c0_70, %c0_71], %63 {strides = array<i32>} : memref<4x16x16x32xf32, #tpu.memory_space<vmem>>, vector<4x16x16x32xf32>,
    return
  }
  func.func @transform_0(%arg0: i32) -> (i32, i32, i32, i32) {
    %c0_i32 = arith.constant 0 : i32
    %c0_i32_0 = arith.constant 0 : i32
    %c0_i32_1 = arith.constant 0 : i32
    %c0_i32_2 = arith.constant 0 : i32
    return %arg0, %c0_i32, %c0_i32_0, %c0_i32_1 : i32, i32, i32, i32
  }
  func.func @transform_1(%arg0: i32) -> (i32, i32, i32) {
    %c0_i32 = arith.constant 0 : i32
    %c0_i32_0 = arith.constant 0 : i32
    %c0_i32_1 = arith.constant 0 : i32
    %c0_i32_2 = arith.constant 0 : i32
    return %c0_i32, %c0_i32_0, %c0_i32_1 : i32, i32, i32
  }
  func.func @transform_2(%arg0: i32) -> (i32, i32) {
    %c0_i32 = arith.constant 0 : i32
    %c0_i32_0 = arith.constant 0 : i32
    %c0_i32_1 = arith.constant 0 : i32
    return %c0_i32, %c0_i32_0 : i32, i32
  }
  func.func @transform_3(%arg0: i32) -> (i32, i32) {
    %c0_i32 = arith.constant 0 : i32
    %c0_i32_0 = arith.constant 0 : i32
    %c0_i32_1 = arith.constant 0 : i32
    return %c0_i32, %c0_i32_0 : i32, i32
  }
  func.func @transform_4(%arg0: i32) -> (i32, i32, i32, i32) {
    %c0_i32 = arith.constant 0 : i32
    %c0_i32_0 = arith.constant 0 : i32
    %c0_i32_1 = arith.constant 0 : i32
    %c0_i32_2 = arith.constant 0 : i32
    return %arg0, %c0_i32, %c0_i32_0, %c0_i32_1 : i32, i32, i32, i32
  }
}

</mosaic_0001>

<llo_original>
// kernel: tpu_custom_call.1
$region0: #{tpu_custom_call.1}
  #allocation0 [shape = 'u32[]', space=smem, size = 0x4, offset = 0x4, fixed_abs, tag = 'smem constant byte address 0x4 - core index']
  #allocation1 [shape = 'u32[144,128]{1,0:T(1,128)}', space=vmem, size = 0x12000, scoped, tag = 'internal scratch']
  %s0 = inlined_call_operand.vmem [shape: f32[8,18,18,8], index: 0, kind: input, shape index: {}]
  %s1 = inlined_call_operand.vmem [shape: f32[9,8,32], index: 1, kind: input, shape index: {}]
  %s2 = inlined_call_operand.vmem [shape: f32[1,32], index: 2, kind: input, shape index: {}]
  %s3 = inlined_call_operand.vmem [shape: f32[1,32], index: 3, kind: input, shape index: {}]
  %s4 = inlined_call_operand.hbm [shape: f32[8,16,16,32], index: 4, kind: output, shape index: {}]
  %s5 = sld [smem:[#allocation0]]
  $region49: #{tpu_custom_call.1} parent=0
    _
  %s7 = ssub.s32 1, %s5
  %s8 = scalar_select 0, %s7, %s5
  $region1: #{tpu_custom_call.1} parent=0
    #allocation2 [shape = 'u8[1048576]{0}', space=vmem, size = 0x100000, scoped, tag = 'output window, operand 0']
    #allocation3 [shape = 's32[2]{0}', space=sflag, size = 0x8, scoped, tag = 'scoped memory for tpu_custom_call.1']
    %9 = vsyncpa [#allocation3], 0
    %s10 = scalar_lea.sflag [#allocation3], 1
    %11 = vsyncpa %s10, 0
    loop: start=0, step=1, limit=4
    $region2: #{tpu_custom_call.1} parent=1 // loop_pre_header
      _
    $region3: #{tpu_custom_call.1} parent=1 // loop_header
      %s13 = sphi 0, %s17
      %p14 = scmp.ge.s32.totalorder %s13, 4
      %s23 = sphi 0, %s25
      %s26 = sphi 0, %s23
      %s27 = sphi 0, %s26
      %s43 = sphi 0, %s27
      %s47 = sphi 0, %s47
      %s49 = sphi 0, %s47
      %s50 = sphi 0, %s49
      %s64 = sphi 0, %s50
      %s68 = sphi 0, %s68
      %s70 = sphi 0, %s68
      %s71 = sphi 0, %s70
      %s85 = sphi 0, %s71
      %s89 = sphi 0, %s89
      %s91 = sphi 0, %s89
      %s92 = sphi 0, %s91
      %s106 = sphi 0, %s92
      %s112 = sphi 0, %s114
      %s115 = sphi 0, %s112
      %s116 = sphi 0, %s115
      %s132 = sphi 0, %s116
    $region4: #{tpu_custom_call.1} parent=1 // loop_header_branch
      %16 = sbr.rel (%p14) target = $region8
    $region5: #{tpu_custom_call.1} parent=1 // loop_body
      %s18 = ssub.s32 %s13, 1
      %s19 = ssub.s32 %s13, 2
      %s20 = sadd.s32 %s13, 1
      %s21 = ssub.s32 %s13, %s20
      %p22 = scmp.eq.s32.totalorder %s21, 0
      %s24 = sadd.s32 %s23, 1
      %s25 = scalar_select %p22, %s23, %s24
      %p28 = pneg %p22
      %p29 = scmp.eq.s32.totalorder %s13, 1
      %p30 = por %p28, %p29
      %p31 = scmp.ne.s32.totalorder %s23, %s26
      %p32 = scmp.eq.s32.totalorder %s13, 0
      %p33 = por %p31, %p32
      %p34 = scmp.ne.s32.totalorder %s23, %s26
      %p35 = scmp.eq.s32.totalorder %s18, 1
      %p36 = por %p34, %p35
      %p37 = scmp.ne.s32.totalorder %s26, %s27
      %p38 = scmp.eq.s32.totalorder %s18, 0
      %p39 = por %p37, %p38
      %p40 = scmp.ne.s32.totalorder %s26, %s27
      %p41 = scmp.eq.s32.totalorder %s19, 1
      %p42 = por %p40, %p41
      %p44 = scmp.ne.s32.totalorder %s27, %s43
      %p45 = scmp.eq.s32.totalorder %s19, 0
      %p46 = por %p44, %p45
      %s48 = sadd.s32 %s47, 1
      %p51 = scmp.eq.s32.totalorder %s13, 1
      %p52 = scmp.ne.s32.totalorder %s47, %s49
      %p53 = scmp.eq.s32.totalorder %s13, 0
      %p54 = por %p52, %p53
      %p55 = scmp.ne.s32.totalorder %s47, %s49
      %p56 = scmp.eq.s32.totalorder %s18, 1
      %p57 = por %p55, %p56
      %p58 = scmp.ne.s32.totalorder %s49, %s50
      %p59 = scmp.eq.s32.totalorder %s18, 0
      %p60 = por %p58, %p59
      %p61 = scmp.ne.s32.totalorder %s49, %s50
      %p62 = scmp.eq.s32.totalorder %s19, 1
      %p63 = por %p61, %p62
      %p65 = scmp.ne.s32.totalorder %s50, %s64
      %p66 = scmp.eq.s32.totalorder %s19, 0
      %p67 = por %p65, %p66
      %s69 = sadd.s32 %s68, 1
      %p72 = scmp.eq.s32.totalorder %s13, 1
      %p73 = scmp.ne.s32.totalorder %s68, %s70
      %p74 = scmp.eq.s32.totalorder %s13, 0
      %p75 = por %p73, %p74
      %p76 = scmp.ne.s32.totalorder %s68, %s70
      %p77 = scmp.eq.s32.totalorder %s18, 1
      %p78 = por %p76, %p77
      %p79 = scmp.ne.s32.totalorder %s70, %s71
      %p80 = scmp.eq.s32.totalorder %s18, 0
      %p81 = por %p79, %p80
      %p82 = scmp.ne.s32.totalorder %s70, %s71
      %p83 = scmp.eq.s32.totalorder %s19, 1
      %p84 = por %p82, %p83
      %p86 = scmp.ne.s32.totalorder %s71, %s85
      %p87 = scmp.eq.s32.totalorder %s19, 0
      %p88 = por %p86, %p87
      %s90 = sadd.s32 %s89, 1
      %p93 = scmp.eq.s32.totalorder %s13, 1
      %p94 = scmp.ne.s32.totalorder %s89, %s91
      %p95 = scmp.eq.s32.totalorder %s13, 0
      %p96 = por %p94, %p95
      %p97 = scmp.ne.s32.totalorder %s89, %s91
      %p98 = scmp.eq.s32.totalorder %s18, 1
      %p99 = por %p97, %p98
      %p100 = scmp.ne.s32.totalorder %s91, %s92
      %p101 = scmp.eq.s32.totalorder %s18, 0
      %p102 = por %p100, %p101
      %p103 = scmp.ne.s32.totalorder %s91, %s92
      %p104 = scmp.eq.s32.totalorder %s19, 1
      %p105 = por %p103, %p104
      %p107 = scmp.ne.s32.totalorder %s92, %s106
      %p108 = scmp.eq.s32.totalorder %s19, 0
      %p109 = por %p107, %p108
      %s110 = ssub.s32 %s13, %s20
      %p111 = scmp.eq.s32.totalorder %s110, 0
      %s113 = sadd.s32 %s112, 1
      %s114 = scalar_select %p111, %s112, %s113
      %p117 = pneg %p111
      %p118 = scmp.eq.s32.totalorder %s13, 1
      %p119 = por %p117, %p118
      %p120 = scmp.ne.s32.totalorder %s112, %s115
      %p121 = scmp.eq.s32.totalorder %s13, 0
      %p122 = por %p120, %p121
      %p123 = scmp.ne.s32.totalorder %s112, %s115
      %p124 = scmp.eq.s32.totalorder %s18, 1
      %p125 = por %p123, %p124
      %p126 = scmp.ne.s32.totalorder %s115, %s116
      %p127 = scmp.eq.s32.totalorder %s18, 0
      %p128 = por %p126, %p127
      %p129 = scmp.ne.s32.totalorder %s115, %s116
      %p130 = scmp.eq.s32.totalorder %s19, 1
      %p131 = por %p129, %p130
      %p133 = scmp.ne.s32.totalorder %s116, %s132
      %p134 = scmp.eq.s32.totalorder %s19, 0
      %p135 = por %p133, %p134
      %p136 = scmp.le.s32.totalorder 1, %s13
      %p137 = scmp.lt.s32.totalorder %s13, 3
      %p138 = pnand %p136, %p137
      %p139 = pneg %p138
      // Predicated region
      $region9: #{tpu_custom_call.1} parent=5 // pred_check
        _
      $region10: #{tpu_custom_call.1} parent=5 // pred_check_branch
        %141 = sbr.rel (%p138) target = $region12
      $region11: #{tpu_custom_call.1} parent=5 // pred_region
        %s142 = ssub.s32 %s13, 1
        // Predicated region
        $region13: #{tpu_custom_call.1} parent=11 // pred_check
          %p143 = pneg %p60
        $region14: #{tpu_custom_call.1} parent=11 // pred_check_branch
          %145 = sbr.rel (%p143) target = $region16
        $region15: #{tpu_custom_call.1} parent=11 // pred_region
          _
        $region16: #{tpu_custom_call.1} parent=11 // pred_fallthru
          _
        // Predicated region
        $region17: #{tpu_custom_call.1} parent=11 // pred_check
          %p146 = pneg %p81
        $region18: #{tpu_custom_call.1} parent=11 // pred_check_branch
          %148 = sbr.rel (%p146) target = $region20
        $region19: #{tpu_custom_call.1} parent=11 // pred_region
          _
        $region20: #{tpu_custom_call.1} parent=11 // pred_fallthru
          _
        // Predicated region
        $region21: #{tpu_custom_call.1} parent=11 // pred_check
          %p149 = pneg %p102
        $region22: #{tpu_custom_call.1} parent=11 // pred_check_branch
          %151 = sbr.rel (%p149) target = $region24
        $region23: #{tpu_custom_call.1} parent=11 // pred_region
          _
        $region24: #{tpu_custom_call.1} parent=11 // pred_fallthru
          _
      $region12: #{tpu_custom_call.1} parent=5 // pred_fallthru
        _
      %p152 = scmp.lt.s32.totalorder %s13, 2
      // Predicated region
      $region25: #{tpu_custom_call.1} parent=5 // pred_check
        %p153 = pneg %p152
      $region26: #{tpu_custom_call.1} parent=5 // pred_check_branch
        %155 = sbr.rel (%p153) target = $region28
      $region27: #{tpu_custom_call.1} parent=5 // pred_region
        // Predicated region
        $region29: #{tpu_custom_call.1} parent=27 // pred_check
          %p156 = pneg %p33
        $region30: #{tpu_custom_call.1} parent=27 // pred_check_branch
          %158 = sbr.rel (%p156) target = $region32
        $region31: #{tpu_custom_call.1} parent=27 // pred_region
          %s159 = smul.u32 4, %s13
          %p160 = scmp.lt.s32.totalorder %s159, 7
          %s161 = scalar_select %p160, %s159, 7
          %s162 = smul.addr %s161, 54
          %s163 = smul.addr %s162, 8
          %s164 = scalar_lea.vmem %s0, %s163
          %s165 = smul.u32 4, %s13
        $region32: #{tpu_custom_call.1} parent=27 // pred_fallthru
          _
      $region28: #{tpu_custom_call.1} parent=5 // pred_fallthru
        _
      %p166 = scmp.le.s32.totalorder 1, %s13
      %p167 = scmp.lt.s32.totalorder %s13, 3
      %p168 = pnand %p166, %p167
      %p169 = pneg %p168
      // Predicated region
      $region33: #{tpu_custom_call.1} parent=5 // pred_check
        _
      $region34: #{tpu_custom_call.1} parent=5 // pred_check_branch
        %171 = sbr.rel (%p168) target = $region36
      $region35: #{tpu_custom_call.1} parent=5 // pred_region
        %s172 = ssub.s32 %s13, 1
        %s173 = smul.u32 4, %s18
        %p174 = scmp.lt.s32.totalorder %s173, 7
        %s175 = scalar_select %p174, %s173, 7
        %s176 = smul.addr %s175, 54
        %s177 = smul.addr %s176, 8
        %s178 = scalar_lea.vmem %s0, %s177
        %p179 = pneg %p39
        %p180 = pneg %p36
        %p181 = pneg %p60
        %p182 = pneg %p57
        %p183 = pneg %p81
        %p184 = pneg %p78
        %p185 = pneg %p102
        %p186 = pneg %p99
        %p187 = pneg %p128
        %p188 = pneg %p125
        %s189 = sand.u32 %s115, 1
        %s190 = scalar_lea.sflag [#allocation3], %s189
        %s191 = sand.u32 %s115, 1
        %s192 = smul.addr %s191, 1024
        %s193 = scalar_lea.vmem [#allocation2], %s192
        %s194 = smul.u32 4, %s18
        %p195 = scmp.lt.s32.totalorder %s194, 7
        %s196 = scalar_select %p195, %s194, 7
        %s197 = smul.addr %s196, 54
        %s198 = smul.addr %s197, 8
        %s199 = scalar_lea.vmem %s0, %s198
        %s200 = smul.u32 4, %s18
        %s201 = smul.u32 4, %s18
        %v202 = vld [vmem:[%s199] sm:$0xff]
        %v203 = vld [vmem:[%s199 + $0x8] sm:$0xff]
        %v204 = vld [vmem:[%s199 + $0x18] sm:$0xff]
        %v205 = vld [vmem:[%s199 + $0x20] sm:$0xff]
        %v206 = vld [vmem:[%s199 + $0x30] sm:$0xff]
        %v207 = vld [vmem:[%s199 + $0x38] sm:$0xff]
        %v208 = vld [vmem:[%s199 + $0x48] sm:$0xff]
        %v209 = vld [vmem:[%s199 + $0x50] sm:$0xff]
        %v210 = vld [vmem:[%s199 + $0x60] sm:$0xff]
        %v211 = vld [vmem:[%s199 + $0x68] sm:$0xff]
        %v212 = vld [vmem:[%s199 + $0x78] sm:$0xff]
        %v213 = vld [vmem:[%s199 + $0x80] sm:$0xff]
        %v214 = vld [vmem:[%s199 + $0x90] sm:$0xff]
        %v215 = vld [vmem:[%s199 + $0x98] sm:$0xff]
        %v216 = vld [vmem:[%s199 + $0xa8] sm:$0xff]
        %v217 = vld [vmem:[%s199 + $0xb0] sm:$0xff]
        %v218 = vld [vmem:[%s199 + $0xc0] sm:$0xff]
        %v219 = vld [vmem:[%s199 + $0xc8] sm:$0xff]
        %v220 = vld [vmem:[%s199 + $0xd8] sm:$0xff]
        %v221 = vld [vmem:[%s199 + $0xe0] sm:$0xff]
        %v222 = vld [vmem:[%s199 + $0xf0] sm:$0xff]
        %v223 = vld [vmem:[%s199 + $0xf8] sm:$0xff]
        %v224 = vld [vmem:[%s199 + $0x108] sm:$0xff]
        %v225 = vld [vmem:[%s199 + $0x110] sm:$0xff]
        %v226 = vld [vmem:[%s199 + $0x120] sm:$0xff]
        %v227 = vld [vmem:[%s199 + $0x128] sm:$0xff]
        %v228 = vld [vmem:[%s199 + $0x138] sm:$0xff]
        %v229 = vld [vmem:[%s199 + $0x140] sm:$0xff]
        %v230 = vld [vmem:[%s199 + $0x150] sm:$0xff]
        %v231 = vld [vmem:[%s199 + $0x158] sm:$0xff]
        %v232 = vld [vmem:[%s199 + $0x168] sm:$0xff]
        %v233 = vld [vmem:[%s199 + $0x170] sm:$0xff]
        %v234 = vld [vmem:[%s199 + $0x1b0] sm:$0xff]
        %v235 = vld [vmem:[%s199 + $0x1b8] sm:$0xff]
        %v236 = vld [vmem:[%s199 + $0x1c8] sm:$0xff]
        %v237 = vld [vmem:[%s199 + $0x1d0] sm:$0xff]
        %v238 = vld [vmem:[%s199 + $0x1e0] sm:$0xff]
        %v239 = vld [vmem:[%s199 + $0x1e8] sm:$0xff]
        %v240 = vld [vmem:[%s199 + $0x1f8] sm:$0xff]
        %v241 = vld [vmem:[%s199 + $0x200] sm:$0xff]
        %v242 = vld [vmem:[%s199 + $0x210] sm:$0xff]
        %v243 = vld [vmem:[%s199 + $0x218] sm:$0xff]
        %v244 = vld [vmem:[%s199 + $0x228] sm:$0xff]
        %v245 = vld [vmem:[%s199 + $0x230] sm:$0xff]
        %v246 = vld [vmem:[%s199 + $0x240] sm:$0xff]
        %v247 = vld [vmem:[%s199 + $0x248] sm:$0xff]
        %v248 = vld [vmem:[%s199 + $0x258] sm:$0xff]
        %v249 = vld [vmem:[%s199 + $0x260] sm:$0xff]
        %v250 = vld [vmem:[%s199 + $0x270] sm:$0xff]
        %v251 = vld [vmem:[%s199 + $0x278] sm:$0xff]
        %v252 = vld [vmem:[%s199 + $0x288] sm:$0xff]
        %v253 = vld [vmem:[%s199 + $0x290] sm:$0xff]
        %v254 = vld [vmem:[%s199 + $0x2a0] sm:$0xff]
        %v255 = vld [vmem:[%s199 + $0x2a8] sm:$0xff]
        %v256 = vld [vmem:[%s199 + $0x2b8] sm:$0xff]
        %v257 = vld [vmem:[%s199 + $0x2c0] sm:$0xff]
        %v258 = vld [vmem:[%s199 + $0x2d0] sm:$0xff]
        %v259 = vld [vmem:[%s199 + $0x2d8] sm:$0xff]
        %v260 = vld [vmem:[%s199 + $0x2e8] sm:$0xff]
        %v261 = vld [vmem:[%s199 + $0x2f0] sm:$0xff]
        %v262 = vld [vmem:[%s199 + $0x300] sm:$0xff]
        %v263 = vld [vmem:[%s199 + $0x308] sm:$0xff]
        %v264 = vld [vmem:[%s199 + $0x318] sm:$0xff]
        %v265 = vld [vmem:[%s199 + $0x320] sm:$0xff]
        %v266 = vld [vmem:[%s199 + $0x360] sm:$0xff]
        %v267 = vld [vmem:[%s199 + $0x368] sm:$0xff]
        %v268 = vld [vmem:[%s199 + $0x378] sm:$0xff]
        %v269 = vld [vmem:[%s199 + $0x380] sm:$0xff]
        %v270 = vld [vmem:[%s199 + $0x390] sm:$0xff]
        %v271 = vld [vmem:[%s199 + $0x398] sm:$0xff]
        %v272 = vld [vmem:[%s199 + $0x3a8] sm:$0xff]
        %v273 = vld [vmem:[%s199 + $0x3b0] sm:$0xff]
        %v274 = vld [vmem:[%s199 + $0x3c0] sm:$0xff]
        %v275 = vld [vmem:[%s199 + $0x3c8] sm:$0xff]
        %v276 = vld [vmem:[%s199 + $0x3d8] sm:$0xff]
        %v277 = vld [vmem:[%s199 + $0x3e0] sm:$0xff]
        %v278 = vld [vmem:[%s199 + $0x3f0] sm:$0xff]
        %v279 = vld [vmem:[%s199 + $0x3f8] sm:$0xff]
        %v280 = vld [vmem:[%s199 + $0x408] sm:$0xff]
        %v281 = vld [vmem:[%s199 + $0x410] sm:$0xff]
        %v282 = vld [vmem:[%s199 + $0x420] sm:$0xff]
        %v283 = vld [vmem:[%s199 + $0x428] sm:$0xff]
        %v284 = vld [vmem:[%s199 + $0x438] sm:$0xff]
        %v285 = vld [vmem:[%s199 + $0x440] sm:$0xff]
        %v286 = vld [vmem:[%s199 + $0x450] sm:$0xff]
        %v287 = vld [vmem:[%s199 + $0x458] sm:$0xff]
        %v288 = vld [vmem:[%s199 + $0x468] sm:$0xff]
        %v289 = vld [vmem:[%s199 + $0x470] sm:$0xff]
        %v290 = vld [vmem:[%s199 + $0x480] sm:$0xff]
        %v291 = vld [vmem:[%s199 + $0x488] sm:$0xff]
        %v292 = vld [vmem:[%s199 + $0x498] sm:$0xff]
        %v293 = vld [vmem:[%s199 + $0x4a0] sm:$0xff]
        %v294 = vld [vmem:[%s199 + $0x4b0] sm:$0xff]
        %v295 = vld [vmem:[%s199 + $0x4b8] sm:$0xff]
        %v296 = vld [vmem:[%s199 + $0x4c8] sm:$0xff]
        %v297 = vld [vmem:[%s199 + $0x4d0] sm:$0xff]
        %v298 = vld [vmem:[%s199 + $0x510] sm:$0xff]
        %v299 = vld [vmem:[%s199 + $0x518] sm:$0xff]
        %v300 = vld [vmem:[%s199 + $0x528] sm:$0xff]
        %v301 = vld [vmem:[%s199 + $0x530] sm:$0xff]
        %v302 = vld [vmem:[%s199 + $0x540] sm:$0xff]
        %v303 = vld [vmem:[%s199 + $0x548] sm:$0xff]
        %v304 = vld [vmem:[%s199 + $0x558] sm:$0xff]
        %v305 = vld [vmem:[%s199 + $0x560] sm:$0xff]
        %v306 = vld [vmem:[%s199 + $0x570] sm:$0xff]
        %v307 = vld [vmem:[%s199 + $0x578] sm:$0xff]
        %v308 = vld [vmem:[%s199 + $0x588] sm:$0xff]
        %v309 = vld [vmem:[%s199 + $0x590] sm:$0xff]
        %v310 = vld [vmem:[%s199 + $0x5a0] sm:$0xff]
        %v311 = vld [vmem:[%s199 + $0x5a8] sm:$0xff]
        %v312 = vld [vmem:[%s199 + $0x5b8] sm:$0xff]
        %v313 = vld [vmem:[%s199 + $0x5c0] sm:$0xff]
        %v314 = vld [vmem:[%s199 + $0x5d0] sm:$0xff]
        %v315 = vld [vmem:[%s199 + $0x5d8] sm:$0xff]
        %v316 = vld [vmem:[%s199 + $0x5e8] sm:$0xff]
        %v317 = vld [vmem:[%s199 + $0x5f0] sm:$0xff]
        %v318 = vld [vmem:[%s199 + $0x600] sm:$0xff]
        %v319 = vld [vmem:[%s199 + $0x608] sm:$0xff]
        %v320 = vld [vmem:[%s199 + $0x618] sm:$0xff]
        %v321 = vld [vmem:[%s199 + $0x620] sm:$0xff]
        %v322 = vld [vmem:[%s199 + $0x630] sm:$0xff]
        %v323 = vld [vmem:[%s199 + $0x638] sm:$0xff]
        %v324 = vld [vmem:[%s199 + $0x648] sm:$0xff]
        %v325 = vld [vmem:[%s199 + $0x650] sm:$0xff]
        %v326 = vld [vmem:[%s199 + $0x660] sm:$0xff]
        %v327 = vld [vmem:[%s199 + $0x668] sm:$0xff]
        %v328 = vld [vmem:[%s199 + $0x678] sm:$0xff]
        %v329 = vld [vmem:[%s199 + $0x680] sm:$0xff]
        %v330 = vld [vmem:[%s1] sm:$0xff]
        %v331 = vld [vmem:[%s199 + $0x1] sm:$0xff]
        %v332 = vld [vmem:[%s199 + $0x9] sm:$0xff]
        %v333 = vld [vmem:[%s199 + $0x19] sm:$0xff]
        %v334 = vld [vmem:[%s199 + $0x21] sm:$0xff]
        %v335 = vld [vmem:[%s199 + $0x31] sm:$0xff]
        %v336 = vld [vmem:[%s199 + $0x39] sm:$0xff]
        %v337 = vld [vmem:[%s199 + $0x49] sm:$0xff]
        %v338 = vld [vmem:[%s199 + $0x51] sm:$0xff]
        %v339 = vld [vmem:[%s199 + $0x61] sm:$0xff]
        %v340 = vld [vmem:[%s199 + $0x69] sm:$0xff]
        %v341 = vld [vmem:[%s199 + $0x79] sm:$0xff]
        %v342 = vld [vmem:[%s199 + $0x81] sm:$0xff]
        %v343 = vld [vmem:[%s199 + $0x91] sm:$0xff]
        %v344 = vld [vmem:[%s199 + $0x99] sm:$0xff]
        %v345 = vld [vmem:[%s199 + $0xa9] sm:$0xff]
        %v346 = vld [vmem:[%s199 + $0xb1] sm:$0xff]
        %v347 = vld [vmem:[%s199 + $0xc1] sm:$0xff]
        %v348 = vld [vmem:[%s199 + $0xc9] sm:$0xff]
        %v349 = vld [vmem:[%s199 + $0xd9] sm:$0xff]
        %v350 = vld [vmem:[%s199 + $0xe1] sm:$0xff]
        %v351 = vld [vmem:[%s199 + $0xf1] sm:$0xff]
        %v352 = vld [vmem:[%s199 + $0xf9] sm:$0xff]
        %v353 = vld [vmem:[%s199 + $0x109] sm:$0xff]
        %v354 = vld [vmem:[%s199 + $0x111] sm:$0xff]
        %v355 = vld [vmem:[%s199 + $0x121] sm:$0xff]
        %v356 = vld [vmem:[%s199 + $0x129] sm:$0xff]
        %v357 = vld [vmem:[%s199 + $0x139] sm:$0xff]
        %v358 = vld [vmem:[%s199 + $0x141] sm:$0xff]
        %v359 = vld [vmem:[%s199 + $0x151] sm:$0xff]
        %v360 = vld [vmem:[%s199 + $0x159] sm:$0xff]
        %v361 = vld [vmem:[%s199 + $0x169] sm:$0xff]
        %v362 = vld [vmem:[%s199 + $0x171] sm:$0xff]
        %v363 = vld [vmem:[%s199 + $0x1b1] sm:$0xff]
        %v364 = vld [vmem:[%s199 + $0x1b9] sm:$0xff]
        %v365 = vld [vmem:[%s199 + $0x1c9] sm:$0xff]
        %v366 = vld [vmem:[%s199 + $0x1d1] sm:$0xff]
        %v367 = vld [vmem:[%s199 + $0x1e1] sm:$0xff]
        %v368 = vld [vmem:[%s199 + $0x1e9] sm:$0xff]
        %v369 = vld [vmem:[%s199 + $0x1f9] sm:$0xff]
        %v370 = vld [vmem:[%s199 + $0x201] sm:$0xff]
        %v371 = vld [vmem:[%s199 + $0x211] sm:$0xff]
        %v372 = vld [vmem:[%s199 + $0x219] sm:$0xff]
        %v373 = vld [vmem:[%s199 + $0x229] sm:$0xff]
        %v374 = vld [vmem:[%s199 + $0x231] sm:$0xff]
        %v375 = vld [vmem:[%s199 + $0x241] sm:$0xff]
        %v376 = vld [vmem:[%s199 + $0x249] sm:$0xff]
        %v377 = vld [vmem:[%s199 + $0x259] sm:$0xff]
        %v378 = vld [vmem:[%s199 + $0x261] sm:$0xff]
        %v379 = vld [vmem:[%s199 + $0x271] sm:$0xff]
        %v380 = vld [vmem:[%s199 + $0x279] sm:$0xff]
        %v381 = vld [vmem:[%s199 + $0x289] sm:$0xff]
        %v382 = vld [vmem:[%s199 + $0x291] sm:$0xff]
        %v383 = vld [vmem:[%s199 + $0x2a1] sm:$0xff]
        %v384 = vld [vmem:[%s199 + $0x2a9] sm:$0xff]
        %v385 = vld [vmem:[%s199 + $0x2b9] sm:$0xff]
        %v386 = vld [vmem:[%s199 + $0x2c1] sm:$0xff]
        %v387 = vld [vmem:[%s199 + $0x2d1] sm:$0xff]
        %v388 = vld [vmem:[%s199 + $0x2d9] sm:$0xff]
        %v389 = vld [vmem:[%s199 + $0x2e9] sm:$0xff]
        %v390 = vld [vmem:[%s199 + $0x2f1] sm:$0xff]
        %v391 = vld [vmem:[%s199 + $0x301] sm:$0xff]
        %v392 = vld [vmem:[%s199 + $0x309] sm:$0xff]
        %v393 = vld [vmem:[%s199 + $0x319] sm:$0xff]
        %v394 = vld [vmem:[%s199 + $0x321] sm:$0xff]
        %v395 = vld [vmem:[%s199 + $0x361] sm:$0xff]
        %v396 = vld [vmem:[%s199 + $0x369] sm:$0xff]
        %v397 = vld [vmem:[%s199 + $0x379] sm:$0xff]
        %v398 = vld [vmem:[%s199 + $0x381] sm:$0xff]
        %v399 = vld [vmem:[%s199 + $0x391] sm:$0xff]
        %v400 = vld [vmem:[%s199 + $0x399] sm:$0xff]
        %v401 = vld [vmem:[%s199 + $0x3a9] sm:$0xff]
        %v402 = vld [vmem:[%s199 + $0x3b1] sm:$0xff]
        %v403 = vld [vmem:[%s199 + $0x3c1] sm:$0xff]
        %v404 = vld [vmem:[%s199 + $0x3c9] sm:$0xff]
        %v405 = vld [vmem:[%s199 + $0x3d9] sm:$0xff]
        %v406 = vld [vmem:[%s199 + $0x3e1] sm:$0xff]
        %v407 = vld [vmem:[%s199 + $0x3f1] sm:$0xff]
        %v408 = vld [vmem:[%s199 + $0x3f9] sm:$0xff]
        %v409 = vld [vmem:[%s199 + $0x409] sm:$0xff]
        %v410 = vld [vmem:[%s199 + $0x411] sm:$0xff]
        %v411 = vld [vmem:[%s199 + $0x421] sm:$0xff]
        %v412 = vld [vmem:[%s199 + $0x429] sm:$0xff]
        %v413 = vld [vmem:[%s199 + $0x439] sm:$0xff]
        %v414 = vld [vmem:[%s199 + $0x441] sm:$0xff]
        %v415 = vld [vmem:[%s199 + $0x451] sm:$0xff]
        %v416 = vld [vmem:[%s199 + $0x459] sm:$0xff]
        %v417 = vld [vmem:[%s199 + $0x469] sm:$0xff]
        %v418 = vld [vmem:[%s199 + $0x471] sm:$0xff]
        %v419 = vld [vmem:[%s199 + $0x481] sm:$0xff]
        %v420 = vld [vmem:[%s199 + $0x489] sm:$0xff]
        %v421 = vld [vmem:[%s199 + $0x499] sm:$0xff]
        %v422 = vld [vmem:[%s199 + $0x4a1] sm:$0xff]
        %v423 = vld [vmem:[%s199 + $0x4b1] sm:$0xff]
        %v424 = vld [vmem:[%s199 + $0x4b9] sm:$0xff]
        %v425 = vld [vmem:[%s199 + $0x4c9] sm:$0xff]
        %v426 = vld [vmem:[%s199 + $0x4d1] sm:$0xff]
        %v427 = vld [vmem:[%s199 + $0x511] sm:$0xff]
        %v428 = vld [vmem:[%s199 + $0x519] sm:$0xff]
        %v429 = vld [vmem:[%s199 + $0x529] sm:$0xff]
        %v430 = vld [vmem:[%s199 + $0x531] sm:$0xff]
        %v431 = vld [vmem:[%s199 + $0x541] sm:$0xff]
        %v432 = vld [vmem:[%s199 + $0x549] sm:$0xff]
        %v433 = vld [vmem:[%s199 + $0x559] sm:$0xff]
        %v434 = vld [vmem:[%s199 + $0x561] sm:$0xff]
        %v435 = vld [vmem:[%s199 + $0x571] sm:$0xff]
        %v436 = vld [vmem:[%s199 + $0x579] sm:$0xff]
        %v437 = vld [vmem:[%s199 + $0x589] sm:$0xff]
        %v438 = vld [vmem:[%s199 + $0x591] sm:$0xff]
        %v439 = vld [vmem:[%s199 + $0x5a1] sm:$0xff]
        %v440 = vld [vmem:[%s199 + $0x5a9] sm:$0xff]
        %v441 = vld [vmem:[%s199 + $0x5b9] sm:$0xff]
        %v442 = vld [vmem:[%s199 + $0x5c1] sm:$0xff]
        %v443 = vld [vmem:[%s199 + $0x5d1] sm:$0xff]
        %v444 = vld [vmem:[%s199 + $0x5d9] sm:$0xff]
        %v445 = vld [vmem:[%s199 + $0x5e9] sm:$0xff]
        %v446 = vld [vmem:[%s199 + $0x5f1] sm:$0xff]
        %v447 = vld [vmem:[%s199 + $0x601] sm:$0xff]
        %v448 = vld [vmem:[%s199 + $0x609] sm:$0xff]
        %v449 = vld [vmem:[%s199 + $0x619] sm:$0xff]
        %v450 = vld [vmem:[%s199 + $0x621] sm:$0xff]
        %v451 = vld [vmem:[%s199 + $0x631] sm:$0xff]
        %v452 = vld [vmem:[%s199 + $0x639] sm:$0xff]
        %v453 = vld [vmem:[%s199 + $0x649] sm:$0xff]
        %v454 = vld [vmem:[%s199 + $0x651] sm:$0xff]
        %v455 = vld [vmem:[%s199 + $0x661] sm:$0xff]
        %v456 = vld [vmem:[%s199 + $0x669] sm:$0xff]
        %v457 = vld [vmem:[%s199 + $0x679] sm:$0xff]
        %v458 = vld [vmem:[%s199 + $0x681] sm:$0xff]
        %s459 = scalar_lea.vmem %s1, 8
        %v460 = vld [vmem:[%s459] sm:$0xff]
        %vm461 = vcmask 64512
        %v463 = vsel %vm461, %v331, 0
        %v466 = vsel %vm461, %v332, 0
        %v469 = vsel %vm461, %v333, 0
        %v472 = vsel %vm461, %v334, 0
        %v475 = vsel %vm461, %v335, 0
        %v478 = vsel %vm461, %v336, 0
        %v481 = vsel %vm461, %v337, 0
        %v484 = vsel %vm461, %v338, 0
        %v487 = vsel %vm461, %v339, 0
        %v490 = vsel %vm461, %v340, 0
        %v493 = vsel %vm461, %v341, 0
        %v496 = vsel %vm461, %v342, 0
        %v499 = vsel %vm461, %v343, 0
        %v502 = vsel %vm461, %v344, 0
        %v505 = vsel %vm461, %v345, 0
        %v508 = vsel %vm461, %v346, 0
        %v511 = vsel %vm461, %v347, 0
        %v514 = vsel %vm461, %v348, 0
        %v517 = vsel %vm461, %v349, 0
        %v520 = vsel %vm461, %v350, 0
        %v523 = vsel %vm461, %v351, 0
        %v526 = vsel %vm461, %v352, 0
        %v529 = vsel %vm461, %v353, 0
        %v532 = vsel %vm461, %v354, 0
        %v535 = vsel %vm461, %v355, 0
        %v538 = vsel %vm461, %v356, 0
        %v541 = vsel %vm461, %v357, 0
        %v544 = vsel %vm461, %v358, 0
        %v547 = vsel %vm461, %v359, 0
        %v550 = vsel %vm461, %v360, 0
        %v553 = vsel %vm461, %v361, 0
        %v556 = vsel %vm461, %v362, 0
        %v559 = vsel %vm461, %v363, 0
        %v562 = vsel %vm461, %v364, 0
        %v565 = vsel %vm461, %v365, 0
        %v568 = vsel %vm461, %v366, 0
        %v571 = vsel %vm461, %v367, 0
        %v574 = vsel %vm461, %v368, 0
        %v577 = vsel %vm461, %v369, 0
        %v580 = vsel %vm461, %v370, 0
        %v583 = vsel %vm461, %v371, 0
        %v586 = vsel %vm461, %v372, 0
        %v589 = vsel %vm461, %v373, 0
        %v592 = vsel %vm461, %v374, 0
        %v595 = vsel %vm461, %v375, 0
        %v598 = vsel %vm461, %v376, 0
        %v601 = vsel %vm461, %v377, 0
        %v604 = vsel %vm461, %v378, 0
        %v607 = vsel %vm461, %v379, 0
        %v610 = vsel %vm461, %v380, 0
        %v613 = vsel %vm461, %v381, 0
        %v616 = vsel %vm461, %v382, 0
        %v619 = vsel %vm461, %v383, 0
        %v622 = vsel %vm461, %v384, 0
        %v625 = vsel %vm461, %v385, 0
        %v628 = vsel %vm461, %v386, 0
        %v631 = vsel %vm461, %v387, 0
        %v634 = vsel %vm461, %v388, 0
        %v637 = vsel %vm461, %v389, 0
        %v640 = vsel %vm461, %v390, 0
        %v643 = vsel %vm461, %v391, 0
        %v646 = vsel %vm461, %v392, 0
        %v649 = vsel %vm461, %v393, 0
        %v652 = vsel %vm461, %v394, 0
        %v655 = vsel %vm461, %v395, 0
        %v658 = vsel %vm461, %v396, 0
        %v661 = vsel %vm461, %v397, 0
        %v664 = vsel %vm461, %v398, 0
        %v667 = vsel %vm461, %v399, 0
        %v670 = vsel %vm461, %v400, 0
        %v673 = vsel %vm461, %v401, 0
        %v676 = vsel %vm461, %v402, 0
        %v679 = vsel %vm461, %v403, 0
        %v682 = vsel %vm461, %v404, 0
        %v685 = vsel %vm461, %v405, 0
        %v688 = vsel %vm461, %v406, 0
        %v691 = vsel %vm461, %v407, 0
        %v694 = vsel %vm461, %v408, 0
        %v697 = vsel %vm461, %v409, 0
        %v700 = vsel %vm461, %v410, 0
        %v703 = vsel %vm461, %v411, 0
        %v706 = vsel %vm461, %v412, 0
        %v709 = vsel %vm461, %v413, 0
        %v712 = vsel %vm461, %v414, 0
        %v715 = vsel %vm461, %v415, 0
        %v718 = vsel %vm461, %v416, 0
        %v721 = vsel %vm461, %v417, 0
        %v724 = vsel %vm461, %v418, 0
        %v727 = vsel %vm461, %v419, 0
        %v730 = vsel %vm461, %v420, 0
        %v733 = vsel %vm461, %v421, 0
        %v736 = vsel %vm461, %v422, 0
        %v739 = vsel %vm461, %v423, 0
        %v742 = vsel %vm461, %v424, 0
        %v745 = vsel %vm461, %v425, 0
        %v748 = vsel %vm461, %v426, 0
        %v751 = vsel %vm461, %v427, 0
        %v754 = vsel %vm461, %v428, 0
        %v757 = vsel %vm461, %v429, 0
        %v760 = vsel %vm461, %v430, 0
        %v763 = vsel %vm461, %v431, 0
        %v766 = vsel %vm461, %v432, 0
        %v769 = vsel %vm461, %v433, 0
        %v772 = vsel %vm461, %v434, 0
        %v775 = vsel %vm461, %v435, 0
        %v778 = vsel %vm461, %v436, 0
        %v781 = vsel %vm461, %v437, 0
        %v784 = vsel %vm461, %v438, 0
        %v787 = vsel %vm461, %v439, 0
        %v790 = vsel %vm461, %v440, 0
        %v793 = vsel %vm461, %v441, 0
        %v796 = vsel %vm461, %v442, 0
        %v799 = vsel %vm461, %v443, 0
        %v802 = vsel %vm461, %v444, 0
        %v805 = vsel %vm461, %v445, 0
        %v808 = vsel %vm461, %v446, 0
        %v811 = vsel %vm461, %v447, 0
        %v814 = vsel %vm461, %v448, 0
        %v817 = vsel %vm461, %v449, 0
        %v820 = vsel %vm461, %v450, 0
        %v823 = vsel %vm461, %v451, 0
        %v826 = vsel %vm461, %v452, 0
        %v829 = vsel %vm461, %v453, 0
        %v832 = vsel %vm461, %v454, 0
        %v835 = vsel %vm461, %v455, 0
        %v838 = vsel %vm461, %v456, 0
        %v841 = vsel %vm461, %v457, 0
        %v844 = vsel %vm461, %v458, 0
        %846 = vmatprep.subr.mxu0 0.0
        %847 = vmatpush1.msra.mxu0 %v460
        %848 = vmatprep.subr.mxu0 0.0
        %849 = vmatpush1.msra.mxu0 0.0
        %850 = vmatprep.subr.mxu0 0.0
        %851 = vmatpush1.msra.mxu0 0.0
        %852 = vmatprep.subr.mxu0 0.0
        %853 = vmatpush1.msra.mxu0 0.0
        %854 = vmatprep.subr.mxu0 0.0
        %855 = vmatpush1.msra.mxu0 0.0
        %856 = vmatprep.subr.mxu0 0.0
        %857 = vmatpush1.msra.mxu0 0.0
        %858 = vmatprep.subr.mxu0 0.0
        %859 = vmatpush1.msra.mxu0 0.0
        %860 = vmatprep.subr.mxu0 0.0
        %861 = vmatpush1.msra.mxu0 0.0
        %862 = vmatprep.subr.mxu0 0.0
        %863 = vmatpush1.msra.mxu0 0.0
        %864 = vmatprep.subr.mxu0 0.0
        %865 = vmatpush1.msra.mxu0 0.0
        %866 = vmatprep.subr.mxu0 0.0
        %867 = vmatpush1.msra.mxu0 0.0
        %868 = vmatprep.subr.mxu0 0.0
        %869 = vmatpush1.msra.mxu0 0.0
        %870 = vmatprep.subr.mxu0 0.0
        %871 = vmatpush1.msra.mxu0 0.0
        %872 = vmatprep.subr.mxu0 0.0
        %873 = vmatpush1.msra.mxu0 0.0
        %874 = vmatprep.subr.mxu0 0.0
        %875 = vmatpush1.msra.mxu0 0.0
        %876 = vmatprep.subr.mxu0 0.0
        %877 = vmatpush1.msra.mxu0 0.0
        %878 = vmatprep.subr.mxu0 0.0
        %879 = vmatpush1.msra.mxu0 0.0
        %880 = vmatprep.subr.mxu0 0.0
        %881 = vmatpush1.msra.mxu0 0.0
        %882 = vmatprep.subr.mxu0 0.0
        %883 = vmatpush1.msra.mxu0 0.0
        %884 = vmatprep.subr.mxu0 0.0
        %885 = vmatpush1.msra.mxu0 0.0
        %886 = vmatprep.subr.mxu0 0.0
        %887 = vmatpush1.msra.mxu0 0.0
        %888 = vmatprep.subr.mxu0 0.0
        %889 = vmatpush1.msra.mxu0 0.0
        %890 = vmatprep.subr.mxu0 0.0
        %891 = vmatpush1.msra.mxu0 0.0
        %892 = vmatprep.subr.mxu0 0.0
        %893 = vmatpush1.msra.mxu0 0.0
        %894 = vmatprep.subr.mxu0 0.0
        %895 = vmatpush1.msra.mxu0 0.0
        %896 = vmatprep.subr.mxu0 0.0
        %897 = vmatpush1.msra.mxu0 0.0
        %898 = vmatprep.subr.mxu0 0.0
        %899 = vmatpush1.msra.mxu0 0.0
        %900 = vmatprep.subr.mxu0 0.0
        %901 = vmatpush1.msra.mxu0 0.0
        %902 = vmatprep.subr.mxu0 0.0
        %903 = vmatpush1.msra.mxu0 0.0
        %904 = vmatprep.subr.mxu0 0.0
        %905 = vmatpush1.msra.mxu0 0.0
        %906 = vmatprep.subr.mxu0 0.0
        %907 = vmatpush1.msra.mxu0 0.0
        %908 = vmatprep.subr.mxu0 0.0
        %909 = vmatpush1.msra.mxu0 0.0
        %910 = vmatprep.mubr.f32.mxu0 0.0
        %911 = vmatmul.mubr.f32.gmra.mrb[0].mxu0 %v463
        %v912 = vpop.f32.mrb[0].mxu0
        %v913 = vadd.f32 0.0, %v912
        %v914 = vpop.f32.mrb[0].mxu0
        %915 = vmatprep.mubr.f32.mxu0 0.0
        %916 = vmatmul.mubr.f32.gmra.mrb[0].mxu0 %v466
        %v917 = vpop.f32.mrb[0].mxu0
        %v918 = vadd.f32 0.0, %v917
        %v919 = vpop.f32.mrb[0].mxu0
        %920 = vmatprep.mubr.f32.mxu0 0.0
        %921 = vmatmul.mubr.f32.gmra.mrb[0].mxu0 %v469
        %v922 = vpop.f32.mrb[0].mxu0
        %v923 = vadd.f32 0.0, %v922
        %v924 = vpop.f32.mrb[0].mxu0
        %925 = vmatprep.mubr.f32.mxu0 0.0
        %926 = vmatmul.mubr.f32.gmra.mrb[0].mxu0 %v472
        %v927 = vpop.f32.mrb[0].mxu0
        %v928 = vadd.f32 0.0, %v927
        %v929 = vpop.f32.mrb[0].mxu0
        %930 = vmatprep.mubr.f32.mxu0 0.0
        %931 = vmatmul.mubr.f32.gmra.mrb[0].mxu0 %v475
        %v932 = vpop.f32.mrb[0].mxu0
        %v933 = vadd.f32 0.0, %v932
        %v934 = vpop.f32.mrb[0].mxu0
        %935 = vmatprep.mubr.f32.mxu0 0.0
        %936 = vmatmul.mubr.f32.gmra.mrb[0].mxu0 %v478
        %v937 = vpop.f32.mrb[0].mxu0
        %v938 = vadd.f32 0.0, %v937
        %v939 = vpop.f32.mrb[0].mxu0
        %940 = vmatprep.mubr.f32.mxu0 0.0
        %941 = vmatmul.mubr.f32.gmra.mrb[0].mxu0 %v481
        %v942 = vpop.f32.mrb[0].mxu0
        %v943 = vadd.f32 0.0, %v942
        %v944 = vpop.f32.mrb[0].mxu0
        %945 = vmatprep.mubr.f32.mxu0 0.0
        %946 = vmatmul.mubr.f32.gmra.mrb[0].mxu0 %v484
        %v947 = vpop.f32.mrb[0].mxu0
        %v948 = vadd.f32 0.0, %v947
        %v949 = vpop.f32.mrb[0].mxu0
        %950 = vmatprep.mubr.f32.mxu0 0.0
        %951 = vmatmul.mubr.f32.gmra.mrb[0].mxu0 %v487
        %v952 = vpop.f32.mrb[0].mxu0
        %v953 = vadd.f32 0.0, %v952
        %v954 = vpop.f32.mrb[0].mxu0
        %955 = vmatprep.mubr.f32.mxu0 0.0
        %956 = vmatmul.mubr.f32.gmra.mrb[0].mxu0 %v490
        %v957 = vpop.f32.mrb[0].mxu0
        %v958 = vadd.f32 0.0, %v957
        %v959 = vpop.f32.mrb[0].mxu0
        %960 = vmatprep.mubr.f32.mxu0 0.0
        %961 = vmatmul.mubr.f32.gmra.mrb[0].mxu0 %v493
        %v962 = vpop.f32.mrb[0].mxu0
        %v963 = vadd.f32 0.0, %v962
        %v964 = vpop.f32.mrb[0].mxu0
        %965 = vmatprep.mubr.f32.mxu0 0.0
        %966 = vmatmul.mubr.f32.gmra.mrb[0].mxu0 %v496
        %v967 = vpop.f32.mrb[0].mxu0
        %v968 = vadd.f32 0.0, %v967
        %v969 = vpop.f32.mrb[0].mxu0
        %970 = vmatprep.mubr.f32.mxu0 0.0
        %971 = vmatmul.mubr.f32.gmra.mrb[0].mxu0 %v499
        %v972 = vpop.f32.mrb[0].mxu0
        %v973 = vadd.f32 0.0, %v972
        %v974 = vpop.f32.mrb[0].mxu0
        %975 = vmatprep.mubr.f32.mxu0 0.0
        %976 = vmatmul.mubr.f32.gmra.mrb[0].mxu0 %v502
        %v977 = vpop.f32.mrb[0].mxu0
        %v978 = vadd.f32 0.0, %v977
        %v979 = vpop.f32.mrb[0].mxu0
        %980 = vmatprep.mubr.f32.mxu0 0.0
        %981 = vmatmul.mubr.f32.gmra.mrb[0].mxu0 %v505
        %v982 = vpop.f32.mrb[0].mxu0
        %v983 = vadd.f32 0.0, %v982
        %v984 = vpop.f32.mrb[0].mxu0
        %985 = vmatprep.mubr.f32.mxu0 0.0
        %986 = vmatmul.mubr.f32.gmra.mrb[0].mxu0 %v508
        %v987 = vpop.f32.mrb[0].mxu0
        %v988 = vadd.f32 0.0, %v987
        %v989 = vpop.f32.mrb[0].mxu0
        %990 = vmatprep.mubr.f32.mxu0 0.0
        %991 = vmatmul.mubr.f32.gmra.mrb[0].mxu0 %v511
        %v992 = vpop.f32.mrb[0].mxu0
        %v993 = vadd.f32 0.0, %v992
        %v994 = vpop.f32.mrb[0].mxu0
        %995 = vmatprep.mubr.f32.mxu0 0.0
        %996 = vmatmul.mubr.f32.gmra.mrb[0].mxu0 %v514
        %v997 = vpop.f32.mrb[0].mxu0
        %v998 = vadd.f32 0.0, %v997
        %v999 = vpop.f32.mrb[0].mxu0
        %1000 = vmatprep.mubr.f32.mxu0 0.0
        %1001 = vmatmul.mubr.f32.gmra.mrb[0].mxu0 %v517
        %v1002 = vpop.f32.mrb[0].mxu0
        %v1003 = vadd.f32 0.0, %v1002
        %v1004 = vpop.f32.mrb[0].mxu0
        %1005 = vmatprep.mubr.f32.mxu0 0.0
        %1006 = vmatmul.mubr.f32.gmra.mrb[0].mxu0 %v520
        %v1007 = vpop.f32.mrb[0].mxu0
        %v1008 = vadd.f32 0.0, %v1007
        %v1009 = vpop.f32.mrb[0].mxu0
        %1010 = vmatprep.mubr.f32.mxu0 0.0
        %1011 = vmatmul.mubr.f32.gmra.mrb[0].mxu0 %v523
        %v1012 = vpop.f32.mrb[0].mxu0
        %v1013 = vadd.f32 0.0, %v1012
        %v1014 = vpop.f32.mrb[0].mxu0
        %1015 = vmatprep.mubr.f32.mxu0 0.0
        %1016 = vmatmul.mubr.f32.gmra.mrb[0].mxu0 %v526
        %v1017 = vpop.f32.mrb[0].mxu0
        %v1018 = vadd.f32 0.0, %v1017
        %v1019 = vpop.f32.mrb[0].mxu0
        %1020 = vmatprep.mubr.f32.mxu0 0.0
        %1021 = vmatmul.mubr.f32.gmra.mrb[0].mxu0 %v529
        %v1022 = vpop.f32.mrb[0].mxu0
        %v1023 = vadd.f32 0.0, %v1022
        %v1024 = vpop.f32.mrb[0].mxu0
        %1025 = vmatprep.mubr.f32.mxu0 0.0
        %1026 = vmatmul.mubr.f32.gmra.mrb[0].mxu0 %v532
        %v1027 = vpop.f32.mrb[0].mxu0
        %v1028 = vadd.f32 0.0, %v1027
        %v1029 = vpop.f32.mrb[0].mxu0
        %1030 = vmatprep.mubr.f32.mxu0 0.0
        %1031 = vmatmul.mubr.f32.gmra.mrb[0].mxu0 %v535
        %v1032 = vpop.f32.mrb[0].mxu0
        %v1033 = vadd.f32 0.0, %v1032
        %v1034 = vpop.f32.mrb[0].mxu0
        %1035 = vmatprep.mubr.f32.mxu0 0.0
        %1036 = vmatmul.mubr.f32.gmra.mrb[0].mxu0 %v538
        %v1037 = vpop.f32.mrb[0].mxu0
        %v1038 = vadd.f32 0.0, %v1037
        %v1039 = vpop.f32.mrb[0].mxu0
        %1040 = vmatprep.mubr.f32.mxu0 0.0
        %1041 = vmatmul.mubr.f32.gmra.mrb[0].mxu0 %v541
        %v1042 = vpop.f32.mrb[0].mxu0
        %v1043 = vadd.f32 0.0, %v1042
        %v1044 = vpop.f32.mrb[0].mxu0
        %1045 = vmatprep.mubr.f32.mxu0 0.0
        %1046 = vmatmul.mubr.f32.gmra.mrb[0].mxu0 %v544
        %v1047 = vpop.f32.mrb[0].mxu0
        %v1048 = vadd.f32 0.0, %v1047
        %v1049 = vpop.f32.mrb[0].mxu0
        %1050 = vmatprep.mubr.f32.mxu0 0.0
        %1051 = vmatmul.mubr.f32.gmra.mrb[0].mxu0 %v547
        %v1052 = vpop.f32.mrb[0].mxu0
        %v1053 = vadd.f32 0.0, %v1052
        %v1054 = vpop.f32.mrb[0].mxu0
        %1055 = vmatprep.mubr.f32.mxu0 0.0
        %1056 = vmatmul.mubr.f32.gmra.mrb[0].mxu0 %v550
        %v1057 = vpop.f32.mrb[0].mxu0
        %v1058 = vadd.f32 0.0, %v1057
        %v1059 = vpop.f32.mrb[0].mxu0
        %1060 = vmatprep.mubr.f32.mxu0 0.0
        %1061 = vmatmul.mubr.f32.gmra.mrb[0].mxu0 %v553
        %v1062 = vpop.f32.mrb[0].mxu0
        %v1063 = vadd.f32 0.0, %v1062
        %v1064 = vpop.f32.mrb[0].mxu0
        %1065 = vmatprep.mubr.f32.mxu0 0.0
        %1066 = vmatmul.mubr.f32.gmra.mrb[0].mxu0 %v556
        %v1067 = vpop.f32.mrb[0].mxu0
        %v1068 = vadd.f32 0.0, %v1067
        %v1069 = vpop.f32.mrb[0].mxu0
        %1070 = vmatprep.mubr.f32.mxu0 0.0
        %1071 = vmatmul.mubr.f32.gmra.mrb[0].mxu0 %v559
        %v1072 = vpop.f32.mrb[0].mxu0
        %v1073 = vadd.f32 0.0, %v1072
        %v1074 = vpop.f32.mrb[0].mxu0
        %1075 = vmatprep.mubr.f32.mxu0 0.0
        %1076 = vmatmul.mubr.f32.gmra.mrb[0].mxu0 %v562
        %v1077 = vpop.f32.mrb[0].mxu0
        %v1078 = vadd.f32 0.0, %v1077
        %v1079 = vpop.f32.mrb[0].mxu0
        %1080 = vmatprep.mubr.f32.mxu0 0.0
        %1081 = vmatmul.mubr.f32.gmra.mrb[0].mxu0 %v565
        %v1082 = vpop.f32.mrb[0].mxu0
        %v1083 = vadd.f32 0.0, %v1082
        %v1084 = vpop.f32.mrb[0].mxu0
        %1085 = vmatprep.mubr.f32.mxu0 0.0
        %1086 = vmatmul.mubr.f32.gmra.mrb[0].mxu0 %v568
        %v1087 = vpop.f32.mrb[0].mxu0
        %v1088 = vadd.f32 0.0, %v1087
        %v1089 = vpop.f32.mrb[0].mxu0
        %1090 = vmatprep.mubr.f32.mxu0 0.0
        %1091 = vmatmul.mubr.f32.gmra.mrb[0].mxu0 %v571
        %v1092 = vpop.f32.mrb[0].mxu0
        %v1093 = vadd.f32 0.0, %v1092
        %v1094 = vpop.f32.mrb[0].mxu0
        %1095 = vmatprep.mubr.f32.mxu0 0.0
        %1096 = vmatmul.mubr.f32.gmra.mrb[0].mxu0 %v574
        %v1097 = vpop.f32.mrb[0].mxu0
        %v1098 = vadd.f32 0.0, %v1097
        %v1099 = vpop.f32.mrb[0].mxu0
        %1100 = vmatprep.mubr.f32.mxu0 0.0
        %1101 = vmatmul.mubr.f32.gmra.mrb[0].mxu0 %v577
        %v1102 = vpop.f32.mrb[0].mxu0
        %v1103 = vadd.f32 0.0, %v1102
        %v1104 = vpop.f32.mrb[0].mxu0
        %1105 = vmatprep.mubr.f32.mxu0 0.0
        %1106 = vmatmul.mubr.f32.gmra.mrb[0].mxu0 %v580
        %v1107 = vpop.f32.mrb[0].mxu0
        %v1108 = vadd.f32 0.0, %v1107
        %v1109 = vpop.f32.mrb[0].mxu0
        %1110 = vmatprep.mubr.f32.mxu0 0.0
        %1111 = vmatmul.mubr.f32.gmra.mrb[0].mxu0 %v583
        %v1112 = vpop.f32.mrb[0].mxu0
        %v1113 = vadd.f32 0.0, %v1112
        %v1114 = vpop.f32.mrb[0].mxu0
        %1115 = vmatprep.mubr.f32.mxu0 0.0
        %1116 = vmatmul.mubr.f32.gmra.mrb[0].mxu0 %v586
        %v1117 = vpop.f32.mrb[0].mxu0
        %v1118 = vadd.f32 0.0, %v1117
        %v1119 = vpop.f32.mrb[0].mxu0
        %1120 = vmatprep.mubr.f32.mxu0 0.0
        %1121 = vmatmul.mubr.f32.gmra.mrb[0].mxu0 %v589
        %v1122 = vpop.f32.mrb[0].mxu0
        %v1123 = vadd.f32 0.0, %v1122
        %v1124 = vpop.f32.mrb[0].mxu0
        %1125 = vmatprep.mubr.f32.mxu0 0.0
        %1126 = vmatmul.mubr.f32.gmra.mrb[0].mxu0 %v592
        %v1127 = vpop.f32.mrb[0].mxu0
        %v1128 = vadd.f32 0.0, %v1127
        %v1129 = vpop.f32.mrb[0].mxu0
        %1130 = vmatprep.mubr.f32.mxu0 0.0
        %1131 = vmatmul.mubr.f32.gmra.mrb[0].mxu0 %v595
        %v1132 = vpop.f32.mrb[0].mxu0
        %v1133 = vadd.f32 0.0, %v1132
        %v1134 = vpop.f32.mrb[0].mxu0
        %1135 = vmatprep.mubr.f32.mxu0 0.0
        %1136 = vmatmul.mubr.f32.gmra.mrb[0].mxu0 %v598
        %v1137 = vpop.f32.mrb[0].mxu0
        %v1138 = vadd.f32 0.0, %v1137
        %v1139 = vpop.f32.mrb[0].mxu0
        %1140 = vmatprep.mubr.f32.mxu0 0.0
        %1141 = vmatmul.mubr.f32.gmra.mrb[0].mxu0 %v601
        %v1142 = vpop.f32.mrb[0].mxu0
        %v1143 = vadd.f32 0.0, %v1142
        %v1144 = vpop.f32.mrb[0].mxu0
        %1145 = vmatprep.mubr.f32.mxu0 0.0
        %1146 = vmatmul.mubr.f32.gmra.mrb[0].mxu0 %v604
        %v1147 = vpop.f32.mrb[0].mxu0
        %v1148 = vadd.f32 0.0, %v1147
        %v1149 = vpop.f32.mrb[0].mxu0
        %1150 = vmatprep.mubr.f32.mxu0 0.0
        %1151 = vmatmul.mubr.f32.gmra.mrb[0].mxu0 %v607
        %v1152 = vpop.f32.mrb[0].mxu0
        %v1153 = vadd.f32 0.0, %v1152
        %v1154 = vpop.f32.mrb[0].mxu0
        %1155 = vmatprep.mubr.f32.mxu0 0.0
        %1156 = vmatmul.mubr.f32.gmra.mrb[0].mxu0 %v610
        %v1157 = vpop.f32.mrb[0].mxu0
        %v1158 = vadd.f32 0.0, %v1157
        %v1159 = vpop.f32.mrb[0].mxu0
        %1160 = vmatprep.mubr.f32.mxu0 0.0
        %1161 = vmatmul.mubr.f32.gmra.mrb[0].mxu0 %v613
        %v1162 = vpop.f32.mrb[0].mxu0
        %v1163 = vadd.f32 0.0, %v1162
        %v1164 = vpop.f32.mrb[0].mxu0
        %1165 = vmatprep.mubr.f32.mxu0 0.0
        %1166 = vmatmul.mubr.f32.gmra.mrb[0].mxu0 %v616
        %v1167 = vpop.f32.mrb[0].mxu0
        %v1168 = vadd.f32 0.0, %v1167
        %v1169 = vpop.f32.mrb[0].mxu0
        %1170 = vmatprep.mubr.f32.mxu0 0.0
        %1171 = vmatmul.mubr.f32.gmra.mrb[0].mxu0 %v619
        %v1172 = vpop.f32.mrb[0].mxu0
        %v1173 = vadd.f32 0.0, %v1172
        %v1174 = vpop.f32.mrb[0].mxu0
        %1175 = vmatprep.mubr.f32.mxu0 0.0
        %1176 = vmatmul.mubr.f32.gmra.mrb[0].mxu0 %v622
        %v1177 = vpop.f32.mrb[0].mxu0
        %v1178 = vadd.f32 0.0, %v1177
        %v1179 = vpop.f32.mrb[0].mxu0
        %1180 = vmatprep.mubr.f32.mxu0 0.0
        %1181 = vmatmul.mubr.f32.gmra.mrb[0].mxu0 %v625
        %v1182 = vpop.f32.mrb[0].mxu0
        %v1183 = vadd.f32 0.0, %v1182
        %v1184 = vpop.f32.mrb[0].mxu0
        %1185 = vmatprep.mubr.f32.mxu0 0.0
        %1186 = vmatmul.mubr.f32.gmra.mrb[0].mxu0 %v628
        %v1187 = vpop.f32.mrb[0].mxu0
        %v1188 = vadd.f32 0.0, %v1187
        %v1189 = vpop.f32.mrb[0].mxu0
        %1190 = vmatprep.mubr.f32.mxu0 0.0
        %1191 = vmatmul.mubr.f32.gmra.mrb[0].mxu0 %v631
        %v1192 = vpop.f32.mrb[0].mxu0
        %v1193 = vadd.f32 0.0, %v1192
        %v1194 = vpop.f32.mrb[0].mxu0
        %1195 = vmatprep.mubr.f32.mxu0 0.0
        %1196 = vmatmul.mubr.f32.gmra.mrb[0].mxu0 %v634
        %v1197 = vpop.f32.mrb[0].mxu0
        %v1198 = vadd.f32 0.0, %v1197
        %v1199 = vpop.f32.mrb[0].mxu0
        %1200 = vmatprep.mubr.f32.mxu0 0.0
        %1201 = vmatmul.mubr.f32.gmra.mrb[0].mxu0 %v637
        %v1202 = vpop.f32.mrb[0].mxu0
        %v1203 = vadd.f32 0.0, %v1202
        %v1204 = vpop.f32.mrb[0].mxu0
        %1205 = vmatprep.mubr.f32.mxu0 0.0
        %1206 = vmatmul.mubr.f32.gmra.mrb[0].mxu0 %v640
        %v1207 = vpop.f32.mrb[0].mxu0
        %v1208 = vadd.f32 0.0, %v1207
        %v1209 = vpop.f32.mrb[0].mxu0
        %1210 = vmatprep.mubr.f32.mxu0 0.0
        %1211 = vmatmul.mubr.f32.gmra.mrb[0].mxu0 %v643
        %v1212 = vpop.f32.mrb[0].mxu0
        %v1213 = vadd.f32 0.0, %v1212
        %v1214 = vpop.f32.mrb[0].mxu0
        %1215 = vmatprep.mubr.f32.mxu0 0.0
        %1216 = vmatmul.mubr.f32.gmra.mrb[0].mxu0 %v646
        %v1217 = vpop.f32.mrb[0].mxu0
        %v1218 = vadd.f32 0.0, %v1217
        %v1219 = vpop.f32.mrb[0].mxu0
        %1220 = vmatprep.mubr.f32.mxu0 0.0
        %1221 = vmatmul.mubr.f32.gmra.mrb[0].mxu0 %v649
        %v1222 = vpop.f32.mrb[0].mxu0
        %v1223 = vadd.f32 0.0, %v1222
        %v1224 = vpop.f32.mrb[0].mxu0
        %1225 = vmatprep.mubr.f32.mxu0 0.0
        %1226 = vmatmul.mubr.f32.gmra.mrb[0].mxu0 %v652
        %v1227 = vpop.f32.mrb[0].mxu0
        %v1228 = vadd.f32 0.0, %v1227
        %v1229 = vpop.f32.mrb[0].mxu0
        %1230 = vmatprep.mubr.f32.mxu0 0.0
        %1231 = vmatmul.mubr.f32.gmra.mrb[0].mxu0 %v655
        %v1232 = vpop.f32.mrb[0].mxu0
        %v1233 = vadd.f32 0.0, %v1232
        %v1234 = vpop.f32.mrb[0].mxu0
        %1235 = vmatprep.mubr.f32.mxu0 0.0
        %1236 = vmatmul.mubr.f32.gmra.mrb[0].mxu0 %v658
        %v1237 = vpop.f32.mrb[0].mxu0
        %v1238 = vadd.f32 0.0, %v1237
        %v1239 = vpop.f32.mrb[0].mxu0
        %1240 = vmatprep.mubr.f32.mxu0 0.0
        %1241 = vmatmul.mubr.f32.gmra.mrb[0].mxu0 %v661
        %v1242 = vpop.f32.mrb[0].mxu0
        %v1243 = vadd.f32 0.0, %v1242
        %v1244 = vpop.f32.mrb[0].mxu0
        %1245 = vmatprep.mubr.f32.mxu0 0.0
        %1246 = vmatmul.mubr.f32.gmra.mrb[0].mxu0 %v664
        %v1247 = vpop.f32.mrb[0].mxu0
        %v1248 = vadd.f32 0.0, %v1247
        %v1249 = vpop.f32.mrb[0].mxu0
        %1250 = vmatprep.mubr.f32.mxu0 0.0
        %1251 = vmatmul.mubr.f32.gmra.mrb[0].mxu0 %v667
        %v1252 = vpop.f32.mrb[0].mxu0
        %v1253 = vadd.f32 0.0, %v1252
        %v1254 = vpop.f32.mrb[0].mxu0
        %1255 = vmatprep.mubr.f32.mxu0 0.0
        %1256 = vmatmul.mubr.f32.gmra.mrb[0].mxu0 %v670
        %v1257 = vpop.f32.mrb[0].mxu0
        %v1258 = vadd.f32 0.0, %v1257
        %v1259 = vpop.f32.mrb[0].mxu0
        %1260 = vmatprep.mubr.f32.mxu0 0.0
        %1261 = vmatmul.mubr.f32.gmra.mrb[0].mxu0 %v673
        %v1262 = vpop.f32.mrb[0].mxu0
        %v1263 = vadd.f32 0.0, %v1262
        %v1264 = vpop.f32.mrb[0].mxu0
        %1265 = vmatprep.mubr.f32.mxu0 0.0
        %1266 = vmatmul.mubr.f32.gmra.mrb[0].mxu0 %v676
        %v1267 = vpop.f32.mrb[0].mxu0
        %v1268 = vadd.f32 0.0, %v1267
        %v1269 = vpop.f32.mrb[0].mxu0
        %1270 = vmatprep.mubr.f32.mxu0 0.0
        %1271 = vmatmul.mubr.f32.gmra.mrb[0].mxu0 %v679
        %v1272 = vpop.f32.mrb[0].mxu0
        %v1273 = vadd.f32 0.0, %v1272
        %v1274 = vpop.f32.mrb[0].mxu0
        %1275 = vmatprep.mubr.f32.mxu0 0.0
        %1276 = vmatmul.mubr.f32.gmra.mrb[0].mxu0 %v682
        %v1277 = vpop.f32.mrb[0].mxu0
        %v1278 = vadd.f32 0.0, %v1277
        %v1279 = vpop.f32.mrb[0].mxu0
        %1280 = vmatprep.mubr.f32.mxu0 0.0
        %1281 = vmatmul.mubr.f32.gmra.mrb[0].mxu0 %v685
        %v1282 = vpop.f32.mrb[0].mxu0
        %v1283 = vadd.f32 0.0, %v1282
        %v1284 = vpop.f32.mrb[0].mxu0
        %1285 = vmatprep.mubr.f32.mxu0 0.0
        %1286 = vmatmul.mubr.f32.gmra.mrb[0].mxu0 %v688
        %v1287 = vpop.f32.mrb[0].mxu0
        %v1288 = vadd.f32 0.0, %v1287
        %v1289 = vpop.f32.mrb[0].mxu0
        %1290 = vmatprep.mubr.f32.mxu0 0.0
        %1291 = vmatmul.mubr.f32.gmra.mrb[0].mxu0 %v691
        %v1292 = vpop.f32.mrb[0].mxu0
        %v1293 = vadd.f32 0.0, %v1292
        %v1294 = vpop.f32.mrb[0].mxu0
        %1295 = vmatprep.mubr.f32.mxu0 0.0
        %1296 = vmatmul.mubr.f32.gmra.mrb[0].mxu0 %v694
        %v1297 = vpop.f32.mrb[0].mxu0
        %v1298 = vadd.f32 0.0, %v1297
        %v1299 = vpop.f32.mrb[0].mxu0
        %1300 = vmatprep.mubr.f32.mxu0 0.0
        %1301 = vmatmul.mubr.f32.gmra.mrb[0].mxu0 %v697
        %v1302 = vpop.f32.mrb[0].mxu0
        %v1303 = vadd.f32 0.0, %v1302
        %v1304 = vpop.f32.mrb[0].mxu0
        %1305 = vmatprep.mubr.f32.mxu0 0.0
        %1306 = vmatmul.mubr.f32.gmra.mrb[0].mxu0 %v700
        %v1307 = vpop.f32.mrb[0].mxu0
        %v1308 = vadd.f32 0.0, %v1307
        %v1309 = vpop.f32.mrb[0].mxu0
        %1310 = vmatprep.mubr.f32.mxu0 0.0
        %1311 = vmatmul.mubr.f32.gmra.mrb[0].mxu0 %v703
        %v1312 = vpop.f32.mrb[0].mxu0
        %v1313 = vadd.f32 0.0, %v1312
        %v1314 = vpop.f32.mrb[0].mxu0
        %1315 = vmatprep.mubr.f32.mxu0 0.0
        %1316 = vmatmul.mubr.f32.gmra.mrb[0].mxu0 %v706
        %v1317 = vpop.f32.mrb[0].mxu0
        %v1318 = vadd.f32 0.0, %v1317
        %v1319 = vpop.f32.mrb[0].mxu0
        %1320 = vmatprep.mubr.f32.mxu0 0.0
        %1321 = vmatmul.mubr.f32.gmra.mrb[0].mxu0 %v709
        %v1322 = vpop.f32.mrb[0].mxu0
        %v1323 = vadd.f32 0.0, %v1322
        %v1324 = vpop.f32.mrb[0].mxu0
        %1325 = vmatprep.mubr.f32.mxu0 0.0
        %1326 = vmatmul.mubr.f32.gmra.mrb[0].mxu0 %v712
        %v1327 = vpop.f32.mrb[0].mxu0
        %v1328 = vadd.f32 0.0, %v1327
        %v1329 = vpop.f32.mrb[0].mxu0
        %1330 = vmatprep.mubr.f32.mxu0 0.0
        %1331 = vmatmul.mubr.f32.gmra.mrb[0].mxu0 %v715
        %v1332 = vpop.f32.mrb[0].mxu0
        %v1333 = vadd.f32 0.0, %v1332
        %v1334 = vpop.f32.mrb[0].mxu0
        %1335 = vmatprep.mubr.f32.mxu0 0.0
        %1336 = vmatmul.mubr.f32.gmra.mrb[0].mxu0 %v718
        %v1337 = vpop.f32.mrb[0].mxu0
        %v1338 = vadd.f32 0.0, %v1337
        %v1339 = vpop.f32.mrb[0].mxu0
        %1340 = vmatprep.mubr.f32.mxu0 0.0
        %1341 = vmatmul.mubr.f32.gmra.mrb[0].mxu0 %v721
        %v1342 = vpop.f32.mrb[0].mxu0
        %v1343 = vadd.f32 0.0, %v1342
        %v1344 = vpop.f32.mrb[0].mxu0
        %1345 = vmatprep.mubr.f32.mxu0 0.0
        %1346 = vmatmul.mubr.f32.gmra.mrb[0].mxu0 %v724
        %v1347 = vpop.f32.mrb[0].mxu0
        %v1348 = vadd.f32 0.0, %v1347
        %v1349 = vpop.f32.mrb[0].mxu0
        %1350 = vmatprep.mubr.f32.mxu0 0.0
        %1351 = vmatmul.mubr.f32.gmra.mrb[0].mxu0 %v727
        %v1352 = vpop.f32.mrb[0].mxu0
        %v1353 = vadd.f32 0.0, %v1352
        %v1354 = vpop.f32.mrb[0].mxu0
        %1355 = vmatprep.mubr.f32.mxu0 0.0
        %1356 = vmatmul.mubr.f32.gmra.mrb[0].mxu0 %v730
        %v1357 = vpop.f32.mrb[0].mxu0
        %v1358 = vadd.f32 0.0, %v1357
        %v1359 = vpop.f32.mrb[0].mxu0
        %1360 = vmatprep.mubr.f32.mxu0 0.0
        %1361 = vmatmul.mubr.f32.gmra.mrb[0].mxu0 %v733
        %v1362 = vpop.f32.mrb[0].mxu0
        %v1363 = vadd.f32 0.0, %v1362
        %v1364 = vpop.f32.mrb[0].mxu0
        %1365 = vmatprep.mubr.f32.mxu0 0.0
        %1366 = vmatmul.mubr.f32.gmra.mrb[0].mxu0 %v736
        %v1367 = vpop.f32.mrb[0].mxu0
        %v1368 = vadd.f32 0.0, %v1367
        %v1369 = vpop.f32.mrb[0].mxu0
        %1370 = vmatprep.mubr.f32.mxu0 0.0
        %1371 = vmatmul.mubr.f32.gmra.mrb[0].mxu0 %v739
        %v1372 = vpop.f32.mrb[0].mxu0
        %v1373 = vadd.f32 0.0, %v1372
        %v1374 = vpop.f32.mrb[0].mxu0
        %1375 = vmatprep.mubr.f32.mxu0 0.0
        %1376 = vmatmul.mubr.f32.gmra.mrb[0].mxu0 %v742
        %v1377 = vpop.f32.mrb[0].mxu0
        %v1378 = vadd.f32 0.0, %v1377
        %v1379 = vpop.f32.mrb[0].mxu0
        %1380 = vmatprep.mubr.f32.mxu0 0.0
        %1381 = vmatmul.mubr.f32.gmra.mrb[0].mxu0 %v745
        %v1382 = vpop.f32.mrb[0].mxu0
        %v1383 = vadd.f32 0.0, %v1382
        %v1384 = vpop.f32.mrb[0].mxu0
        %1385 = vmatprep.mubr.f32.mxu0 0.0
        %1386 = vmatmul.mubr.f32.gmra.mrb[0].mxu0 %v748
        %v1387 = vpop.f32.mrb[0].mxu0
        %v1388 = vadd.f32 0.0, %v1387
        %v1389 = vpop.f32.mrb[0].mxu0
        %1390 = vmatprep.mubr.f32.mxu0 0.0
        %1391 = vmatmul.mubr.f32.gmra.mrb[0].mxu0 %v751
        %v1392 = vpop.f32.mrb[0].mxu0
        %v1393 = vadd.f32 0.0, %v1392
        %v1394 = vpop.f32.mrb[0].mxu0
        %1395 = vmatprep.mubr.f32.mxu0 0.0
        %1396 = vmatmul.mubr.f32.gmra.mrb[0].mxu0 %v754
        %v1397 = vpop.f32.mrb[0].mxu0
        %v1398 = vadd.f32 0.0, %v1397
        %v1399 = vpop.f32.mrb[0].mxu0
        %1400 = vmatprep.mubr.f32.mxu0 0.0
        %1401 = vmatmul.mubr.f32.gmra.mrb[0].mxu0 %v757
        %v1402 = vpop.f32.mrb[0].mxu0
        %v1403 = vadd.f32 0.0, %v1402
        %v1404 = vpop.f32.mrb[0].mxu0
        %1405 = vmatprep.mubr.f32.mxu0 0.0
        %1406 = vmatmul.mubr.f32.gmra.mrb[0].mxu0 %v760
        %v1407 = vpop.f32.mrb[0].mxu0
        %v1408 = vadd.f32 0.0, %v1407
        %v1409 = vpop.f32.mrb[0].mxu0
        %1410 = vmatprep.mubr.f32.mxu0 0.0
        %1411 = vmatmul.mubr.f32.gmra.mrb[0].mxu0 %v763
        %v1412 = vpop.f32.mrb[0].mxu0
        %v1413 = vadd.f32 0.0, %v1412
        %v1414 = vpop.f32.mrb[0].mxu0
        %1415 = vmatprep.mubr.f32.mxu0 0.0
        %1416 = vmatmul.mubr.f32.gmra.mrb[0].mxu0 %v766
        %v1417 = vpop.f32.mrb[0].mxu0
        %v1418 = vadd.f32 0.0, %v1417
        %v1419 = vpop.f32.mrb[0].mxu0
        %1420 = vmatprep.mubr.f32.mxu0 0.0
        %1421 = vmatmul.mubr.f32.gmra.mrb[0].mxu0 %v769
        %v1422 = vpop.f32.mrb[0].mxu0
        %v1423 = vadd.f32 0.0, %v1422
        %v1424 = vpop.f32.mrb[0].mxu0
        %1425 = vmatprep.mubr.f32.mxu0 0.0
        %1426 = vmatmul.mubr.f32.gmra.mrb[0].mxu0 %v772
        %v1427 = vpop.f32.mrb[0].mxu0
        %v1428 = vadd.f32 0.0, %v1427
        %v1429 = vpop.f32.mrb[0].mxu0
        %1430 = vmatprep.mubr.f32.mxu0 0.0
        %1431 = vmatmul.mubr.f32.gmra.mrb[0].mxu0 %v775
        %v1432 = vpop.f32.mrb[0].mxu0
        %v1433 = vadd.f32 0.0, %v1432
        %v1434 = vpop.f32.mrb[0].mxu0
        %1435 = vmatprep.mubr.f32.mxu0 0.0
        %1436 = vmatmul.mubr.f32.gmra.mrb[0].mxu0 %v778
        %v1437 = vpop.f32.mrb[0].mxu0
        %v1438 = vadd.f32 0.0, %v1437
        %v1439 = vpop.f32.mrb[0].mxu0
        %1440 = vmatprep.mubr.f32.mxu0 0.0
        %1441 = vmatmul.mubr.f32.gmra.mrb[0].mxu0 %v781
        %v1442 = vpop.f32.mrb[0].mxu0
        %v1443 = vadd.f32 0.0, %v1442
        %v1444 = vpop.f32.mrb[0].mxu0
        %1445 = vmatprep.mubr.f32.mxu0 0.0
        %1446 = vmatmul.mubr.f32.gmra.mrb[0].mxu0 %v784
        %v1447 = vpop.f32.mrb[0].mxu0
        %v1448 = vadd.f32 0.0, %v1447
        %v1449 = vpop.f32.mrb[0].mxu0
        %1450 = vmatprep.mubr.f32.mxu0 0.0
        %1451 = vmatmul.mubr.f32.gmra.mrb[0].mxu0 %v787
        %v1452 = vpop.f32.mrb[0].mxu0
        %v1453 = vadd.f32 0.0, %v1452
        %v1454 = vpop.f32.mrb[0].mxu0
        %1455 = vmatprep.mubr.f32.mxu0 0.0
        %1456 = vmatmul.mubr.f32.gmra.mrb[0].mxu0 %v790
        %v1457 = vpop.f32.mrb[0].mxu0
        %v1458 = vadd.f32 0.0, %v1457
        %v1459 = vpop.f32.mrb[0].mxu0
        %1460 = vmatprep.mubr.f32.mxu0 0.0
        %1461 = vmatmul.mubr.f32.gmra.mrb[0].mxu0 %v793
        %v1462 = vpop.f32.mrb[0].mxu0
        %v1463 = vadd.f32 0.0, %v1462
        %v1464 = vpop.f32.mrb[0].mxu0
        %1465 = vmatprep.mubr.f32.mxu0 0.0
        %1466 = vmatmul.mubr.f32.gmra.mrb[0].mxu0 %v796
        %v1467 = vpop.f32.mrb[0].mxu0
        %v1468 = vadd.f32 0.0, %v1467
        %v1469 = vpop.f32.mrb[0].mxu0
        %1470 = vmatprep.mubr.f32.mxu0 0.0
        %1471 = vmatmul.mubr.f32.gmra.mrb[0].mxu0 %v799
        %v1472 = vpop.f32.mrb[0].mxu0
        %v1473 = vadd.f32 0.0, %v1472
        %v1474 = vpop.f32.mrb[0].mxu0
        %1475 = vmatprep.mubr.f32.mxu0 0.0
        %1476 = vmatmul.mubr.f32.gmra.mrb[0].mxu0 %v802
        %v1477 = vpop.f32.mrb[0].mxu0
        %v1478 = vadd.f32 0.0, %v1477
        %v1479 = vpop.f32.mrb[0].mxu0
        %1480 = vmatprep.mubr.f32.mxu0 0.0
        %1481 = vmatmul.mubr.f32.gmra.mrb[0].mxu0 %v805
        %v1482 = vpop.f32.mrb[0].mxu0
        %v1483 = vadd.f32 0.0, %v1482
        %v1484 = vpop.f32.mrb[0].mxu0
        %1485 = vmatprep.mubr.f32.mxu0 0.0
        %1486 = vmatmul.mubr.f32.gmra.mrb[0].mxu0 %v808
        %v1487 = vpop.f32.mrb[0].mxu0
        %v1488 = vadd.f32 0.0, %v1487
        %v1489 = vpop.f32.mrb[0].mxu0
        %1490 = vmatprep.mubr.f32.mxu0 0.0
        %1491 = vmatmul.mubr.f32.gmra.mrb[0].mxu0 %v811
        %v1492 = vpop.f32.mrb[0].mxu0
        %v1493 = vadd.f32 0.0, %v1492
        %v1494 = vpop.f32.mrb[0].mxu0
        %1495 = vmatprep.mubr.f32.mxu0 0.0
        %1496 = vmatmul.mubr.f32.gmra.mrb[0].mxu0 %v814
        %v1497 = vpop.f32.mrb[0].mxu0
        %v1498 = vadd.f32 0.0, %v1497
        %v1499 = vpop.f32.mrb[0].mxu0
        %1500 = vmatprep.mubr.f32.mxu0 0.0
        %1501 = vmatmul.mubr.f32.gmra.mrb[0].mxu0 %v817
        %v1502 = vpop.f32.mrb[0].mxu0
        %v1503 = vadd.f32 0.0, %v1502
        %v1504 = vpop.f32.mrb[0].mxu0
        %1505 = vmatprep.mubr.f32.mxu0 0.0
        %1506 = vmatmul.mubr.f32.gmra.mrb[0].mxu0 %v820
        %v1507 = vpop.f32.mrb[0].mxu0
        %v1508 = vadd.f32 0.0, %v1507
        %v1509 = vpop.f32.mrb[0].mxu0
        %1510 = vmatprep.mubr.f32.mxu0 0.0
        %1511 = vmatmul.mubr.f32.gmra.mrb[0].mxu0 %v823
        %v1512 = vpop.f32.mrb[0].mxu0
        %v1513 = vadd.f32 0.0, %v1512
        %v1514 = vpop.f32.mrb[0].mxu0
        %1515 = vmatprep.mubr.f32.mxu0 0.0
        %1516 = vmatmul.mubr.f32.gmra.mrb[0].mxu0 %v826
        %v1517 = vpop.f32.mrb[0].mxu0
        %v1518 = vadd.f32 0.0, %v1517
        %v1519 = vpop.f32.mrb[0].mxu0
        %1520 = vmatprep.mubr.f32.mxu0 0.0
        %1521 = vmatmul.mubr.f32.gmra.mrb[0].mxu0 %v829
        %v1522 = vpop.f32.mrb[0].mxu0
        %v1523 = vadd.f32 0.0, %v1522
        %v1524 = vpop.f32.mrb[0].mxu0
        %1525 = vmatprep.mubr.f32.mxu0 0.0
        %1526 = vmatmul.mubr.f32.gmra.mrb[0].mxu0 %v832
        %v1527 = vpop.f32.mrb[0].mxu0
        %v1528 = vadd.f32 0.0, %v1527
        %v1529 = vpop.f32.mrb[0].mxu0
        %1530 = vmatprep.mubr.f32.mxu0 0.0
        %1531 = vmatmul.mubr.f32.gmra.mrb[0].mxu0 %v835
        %v1532 = vpop.f32.mrb[0].mxu0
        %v1533 = vadd.f32 0.0, %v1532
        %v1534 = vpop.f32.mrb[0].mxu0
        %1535 = vmatprep.mubr.f32.mxu0 0.0
        %1536 = vmatmul.mubr.f32.gmra.mrb[0].mxu0 %v838
        %v1537 = vpop.f32.mrb[0].mxu0
        %v1538 = vadd.f32 0.0, %v1537
        %v1539 = vpop.f32.mrb[0].mxu0
        %1540 = vmatprep.mubr.f32.mxu0 0.0
        %1541 = vmatmul.mubr.f32.gmra.mrb[0].mxu0 %v841
        %v1542 = vpop.f32.mrb[0].mxu0
        %v1543 = vadd.f32 0.0, %v1542
        %v1544 = vpop.f32.mrb[0].mxu0
        %1545 = vmatprep.mubr.f32.mxu0 0.0
        %1546 = vmatmul.mubr.f32.gmra.mrb[0].mxu0 %v844
        %v1547 = vpop.f32.mrb[0].mxu0
        %v1548 = vadd.f32 0.0, %v1547
        %v1549 = vpop.f32.mrb[0].mxu0
        %1550 = vdwg.mxu0
        %v1552 = vsel %vm461, %v202, 0
        %v1555 = vsel %vm461, %v203, 0
        %v1558 = vsel %vm461, %v204, 0
        %v1561 = vsel %vm461, %v205, 0
        %v1564 = vsel %vm461, %v206, 0
        %v1567 = vsel %vm461, %v207, 0
        %v1570 = vsel %vm461, %v208, 0
        %v1573 = vsel %vm461, %v209, 0
        %v1576 = vsel %vm461, %v210, 0
        %v1579 = vsel %vm461, %v211, 0
        %v1582 = vsel %vm461, %v212, 0
        %v1585 = vsel %vm461, %v213, 0
        %v1588 = vsel %vm461, %v214, 0
        %v1591 = vsel %vm461, %v215, 0
        %v1594 = vsel %vm461, %v216, 0
        %v1597 = vsel %vm461, %v217, 0
        %v1600 = vsel %vm461, %v218, 0
        %v1603 = vsel %vm461, %v219, 0
        %v1606 = vsel %vm461, %v220, 0
        %v1609 = vsel %vm461, %v221, 0
        %v1612 = vsel %vm461, %v222, 0
        %v1615 = vsel %vm461, %v223, 0
        %v1618 = vsel %vm461, %v224, 0
        %v1621 = vsel %vm461, %v225, 0
        %v1624 = vsel %vm461, %v226, 0
        %v1627 = vsel %vm461, %v227, 0
        %v1630 = vsel %vm461, %v228, 0
        %v1633 = vsel %vm461, %v229, 0
        %v1636 = vsel %vm461, %v230, 0
        %v1639 = vsel %vm461, %v231, 0
        %v1642 = vsel %vm461, %v232, 0
        %v1645 = vsel %vm461, %v233, 0
        %v1648 = vsel %vm461, %v234, 0
        %v1651 = vsel %vm461, %v235, 0
        %v1654 = vsel %vm461, %v236, 0
        %v1657 = vsel %vm461, %v237, 0
        %v1660 = vsel %vm461, %v238, 0
        %v1663 = vsel %vm461, %v239, 0
        %v1666 = vsel %vm461, %v240, 0
        %v1669 = vsel %vm461, %v241, 0
        %v1672 = vsel %vm461, %v242, 0
        %v1675 = vsel %vm461, %v243, 0
        %v1678 = vsel %vm461, %v244, 0
        %v1681 = vsel %vm461, %v245, 0
        %v1684 = vsel %vm461, %v246, 0
        %v1687 = vsel %vm461, %v247, 0
        %v1690 = vsel %vm461, %v248, 0
        %v1693 = vsel %vm461, %v249, 0
        %v1696 = vsel %vm461, %v250, 0
        %v1699 = vsel %vm461, %v251, 0
        %v1702 = vsel %vm461, %v252, 0
        %v1705 = vsel %vm461, %v253, 0
        %v1708 = vsel %vm461, %v254, 0
        %v1711 = vsel %vm461, %v255, 0
        %v1714 = vsel %vm461, %v256, 0
        %v1717 = vsel %vm461, %v257, 0
        %v1720 = vsel %vm461, %v258, 0
        %v1723 = vsel %vm461, %v259, 0
        %v1726 = vsel %vm461, %v260, 0
        %v1729 = vsel %vm461, %v261, 0
        %v1732 = vsel %vm461, %v262, 0
        %v1735 = vsel %vm461, %v263, 0
        %v1738 = vsel %vm461, %v264, 0
        %v1741 = vsel %vm461, %v265, 0
        %v1744 = vsel %vm461, %v266, 0
        %v1747 = vsel %vm461, %v267, 0
        %v1750 = vsel %vm461, %v268, 0
        %v1753 = vsel %vm461, %v269, 0
        %v1756 = vsel %vm461, %v270, 0
        %v1759 = vsel %vm461, %v271, 0
        %v1762 = vsel %vm461, %v272, 0
        %v1765 = vsel %vm461, %v273, 0
        %v1768 = vsel %vm461, %v274, 0
        %v1771 = vsel %vm461, %v275, 0
        %v1774 = vsel %vm461, %v276, 0
        %v1777 = vsel %vm461, %v277, 0
        %v1780 = vsel %vm461, %v278, 0
        %v1783 = vsel %vm461, %v279, 0
        %v1786 = vsel %vm461, %v280, 0
        %v1789 = vsel %vm461, %v281, 0
        %v1792 = vsel %vm461, %v282, 0
        %v1795 = vsel %vm461, %v283, 0
        %v1798 = vsel %vm461, %v284, 0
        %v1801 = vsel %vm461, %v285, 0
        %v1804 = vsel %vm461, %v286, 0
        %v1807 = vsel %vm461, %v287, 0
        %v1810 = vsel %vm461, %v288, 0
        %v1813 = vsel %vm461, %v289, 0
        %v1816 = vsel %vm461, %v290, 0
        %v1819 = vsel %vm461, %v291, 0
        %v1822 = vsel %vm461, %v292, 0
        %v1825 = vsel %vm461, %v293, 0
        %v1828 = vsel %vm461, %v294, 0
        %v1831 = vsel %vm461, %v295, 0
        %v1834 = vsel %vm461, %v296, 0
        %v1837 = vsel %vm461, %v297, 0
        %v1840 = vsel %vm461, %v298, 0
        %v1843 = vsel %vm461, %v299, 0
        %v1846 = vsel %vm461, %v300, 0
        %v1849 = vsel %vm461, %v301, 0
        %v1852 = vsel %vm461, %v302, 0
        %v1855 = vsel %vm461, %v303, 0
        %v1858 = vsel %vm461, %v304, 0
        %v1861 = vsel %vm461, %v305, 0
        %v1864 = vsel %vm461, %v306, 0
        %v1867 = vsel %vm461, %v307, 0
        %v1870 = vsel %vm461, %v308, 0
        %v1873 = vsel %vm461, %v309, 0
        %v1876 = vsel %vm461, %v310, 0
        %v1879 = vsel %vm461, %v311, 0
        %v1882 = vsel %vm461, %v312, 0
        %v1885 = vsel %vm461, %v313, 0
        %v1888 = vsel %vm461, %v314, 0
        %v1891 = vsel %vm461, %v315, 0
        %v1894 = vsel %vm461, %v316, 0
        %v1897 = vsel %vm461, %v317, 0
        %v1900 = vsel %vm461, %v318, 0
        %v1903 = vsel %vm461, %v319, 0
        %v1906 = vsel %vm461, %v320, 0
        %v1909 = vsel %vm461, %v321, 0
        %v1912 = vsel %vm461, %v322, 0
        %v1915 = vsel %vm461, %v323, 0
        %v1918 = vsel %vm461, %v324, 0
        %v1921 = vsel %vm461, %v325, 0
        %v1924 = vsel %vm461, %v326, 0
        %v1927 = vsel %vm461, %v327, 0
        %v1930 = vsel %vm461, %v328, 0
        %v1933 = vsel %vm461, %v329, 0
        %1935 = vmatprep.subr.mxu0 0.0
        %1936 = vmatpush1.msra.mxu0 %v330
        %1937 = vmatprep.subr.mxu0 0.0
        %1938 = vmatpush1.msra.mxu0 0.0
        %1939 = vmatprep.subr.mxu0 0.0
        %1940 = vmatpush1.msra.mxu0 0.0
        %1941 = vmatprep.subr.mxu0 0.0
        %1942 = vmatpush1.msra.mxu0 0.0
        %1943 = vmatprep.subr.mxu0 0.0
        %1944 = vmatpush1.msra.mxu0 0.0
        %1945 = vmatprep.subr.mxu0 0.0
        %1946 = vmatpush1.msra.mxu0 0.0
        %1947 = vmatprep.subr.mxu0 0.0
        %1948 = vmatpush1.msra.mxu0 0.0
        %1949 = vmatprep.subr.mxu0 0.0
        %1950 = vmatpush1.msra.mxu0 0.0
        %1951 = vmatprep.subr.mxu0 0.0
        %1952 = vmatpush1.msra.mxu0 0.0
        %1953 = vmatprep.subr.mxu0 0.0
        %1954 = vmatpush1.msra.mxu0 0.0
        %1955 = vmatprep.subr.mxu0 0.0
        %1956 = vmatpush1.msra.mxu0 0.0
        %1957 = vmatprep.subr.mxu0 0.0
        %1958 = vmatpush1.msra.mxu0 0.0
        %1959 = vmatprep.subr.mxu0 0.0
        %1960 = vmatpush1.msra.mxu0 0.0
        %1961 = vmatprep.subr.mxu0 0.0
        %1962 = vmatpush1.msra.mxu0 0.0
        %1963 = vmatprep.subr.mxu0 0.0
        %1964 = vmatpush1.msra.mxu0 0.0
        %1965 = vmatprep.subr.mxu0 0.0
        %1966 = vmatpush1.msra.mxu0 0.0
        %1967 = vmatprep.subr.mxu0 0.0
        %1968 = vmatpush1.msra.mxu0 0.0
        %1969 = vmatprep.subr.mxu0 0.0
        %1970 = vmatpush1.msra.mxu0 0.0
        %1971 = vmatprep.subr.mxu0 0.0
        %1972 = vmatpush1.msra.mxu0 0.0
        %1973 = vmatprep.subr.mxu0 0.0
        %1974 = vmatpush1.msra.mxu0 0.0
        %1975 = vmatprep.subr.mxu0 0.0
        %1976 = vmatpush1.msra.mxu0 0.0
        %1977 = vmatprep.subr.mxu0 0.0
        %1978 = vmatpush1.msra.mxu0 0.0
        %1979 = vmatprep.subr.mxu0 0.0
        %1980 = vmatpush1.msra.mxu0 0.0
        %1981 = vmatprep.subr.mxu0 0.0
        %1982 = vmatpush1.msra.mxu0 0.0
        %1983 = vmatprep.subr.mxu0 0.0
        %1984 = vmatpush1.msra.mxu0 0.0
        %1985 = vmatprep.subr.mxu0 0.0
        %1986 = vmatpush1.msra.mxu0 0.0
        %1987 = vmatprep.subr.mxu0 0.0
        %1988 = vmatpush1.msra.mxu0 0.0
        %1989 = vmatprep.subr.mxu0 0.0
        %1990 = vmatpush1.msra.mxu0 0.0
        %1991 = vmatprep.subr.mxu0 0.0
        %1992 = vmatpush1.msra.mxu0 0.0
        %1993 = vmatprep.subr.mxu0 0.0
        %1994 = vmatpush1.msra.mxu0 0.0
        %1995 = vmatprep.subr.mxu0 0.0
        %1996 = vmatpush1.msra.mxu0 0.0
        %1997 = vmatprep.subr.mxu0 0.0
        %1998 = vmatpush1.msra.mxu0 0.0
        %1999 = vmatprep.mubr.f32.mxu0 0.0
        %2000 = vmatmul.mubr.f32.gmra.mrb[0].mxu0 %v1552
        %v2001 = vpop.f32.mrb[0].mxu0
        %v2002 = vadd.f32 %v913, %v2001
        %v2003 = vpop.f32.mrb[0].mxu0
        %2004 = vmatprep.mubr.f32.mxu0 0.0
        %2005 = vmatmul.mubr.f32.gmra.mrb[0].mxu0 %v1555
        %v2006 = vpop.f32.mrb[0].mxu0
        %v2007 = vadd.f32 %v918, %v2006
        %v2008 = vpop.f32.mrb[0].mxu0
        %2009 = vmatprep.mubr.f32.mxu0 0.0
        %2010 = vmatmul.mubr.f32.gmra.mrb[0].mxu0 %v1558
        %v2011 = vpop.f32.mrb[0].mxu0
        %v2012 = vadd.f32 %v923, %v2011
        %v2013 = vpop.f32.mrb[0].mxu0
        %2014 = vmatprep.mubr.f32.mxu0 0.0
        %2015 = vmatmul.mubr.f32.gmra.mrb[0].mxu0 %v1561
        %v2016 = vpop.f32.mrb[0].mxu0
        %v2017 = vadd.f32 %v928, %v2016
        %v2018 = vpop.f32.mrb[0].mxu0
        %2019 = vmatprep.mubr.f32.mxu0 0.0
        %2020 = vmatmul.mubr.f32.gmra.mrb[0].mxu0 %v1564
        %v2021 = vpop.f32.mrb[0].mxu0
        %v2022 = vadd.f32 %v933, %v2021
        %v2023 = vpop.f32.mrb[0].mxu0
        %2024 = vmatprep.mubr.f32.mxu0 0.0
        %2025 = vmatmul.mubr.f32.gmra.mrb[0].mxu0 %v1567
        %v2026 = vpop.f32.mrb[0].mxu0
        %v2027 = vadd.f32 %v938, %v2026
        %v2028 = vpop.f32.mrb[0].mxu0
        %2029 = vmatprep.mubr.f32.mxu0 0.0
        %2030 = vmatmul.mubr.f32.gmra.mrb[0].mxu0 %v1570
        %v2031 = vpop.f32.mrb[0].mxu0
        %v2032 = vadd.f32 %v943, %v2031
        %v2033 = vpop.f32.mrb[0].mxu0
        %2034 = vmatprep.mubr.f32.mxu0 0.0
        %2035 = vmatmul.mubr.f32.gmra.mrb[0].mxu0 %v1573
        %v2036 = vpop.f32.mrb[0].mxu0
        %v2037 = vadd.f32 %v948, %v2036
        %v2038 = vpop.f32.mrb[0].mxu0
        %2039 = vmatprep.mubr.f32.mxu0 0.0
        %2040 = vmatmul.mubr.f32.gmra.mrb[0].mxu0 %v1576
        %v2041 = vpop.f32.mrb[0].mxu0
        %v2042 = vadd.f32 %v953, %v2041
        %v2043 = vpop.f32.mrb[0].mxu0
        %2044 = vmatprep.mubr.f32.mxu0 0.0
        %2045 = vmatmul.mubr.f32.gmra.mrb[0].mxu0 %v1579
        %v2046 = vpop.f32.mrb[0].mxu0
        %v2047 = vadd.f32 %v958, %v2046
        %v2048 = vpop.f32.mrb[0].mxu0
        %2049 = vmatprep.mubr.f32.mxu0 0.0
        %2050 = vmatmul.mubr.f32.gmra.mrb[0].mxu0 %v1582
        %v2051 = vpop.f32.mrb[0].mxu0
        %v2052 = vadd.f32 %v963, %v2051
        %v2053 = vpop.f32.mrb[0].mxu0
        %2054 = vmatprep.mubr.f32.mxu0 0.0
        %2055 = vmatmul.mubr.f32.gmra.mrb[0].mxu0 %v1585
        %v2056 = vpop.f32.mrb[0].mxu0
        %v2057 = vadd.f32 %v968, %v2056
        %v2058 = vpop.f32.mrb[0].mxu0
        %2059 = vmatprep.mubr.f32.mxu0 0.0
        %2060 = vmatmul.mubr.f32.gmra.mrb[0].mxu0 %v1588
        %v2061 = vpop.f32.mrb[0].mxu0
        %v2062 = vadd.f32 %v973, %v2061
        %v2063 = vpop.f32.mrb[0].mxu0
        %2064 = vmatprep.mubr.f32.mxu0 0.0
        %2065 = vmatmul.mubr.f32.gmra.mrb[0].mxu0 %v1591
        %v2066 = vpop.f32.mrb[0].mxu0
        %v2067 = vadd.f32 %v978, %v2066
        %v2068 = vpop.f32.mrb[0].mxu0
        %2069 = vmatprep.mubr.f32.mxu0 0.0
        %2070 = vmatmul.mubr.f32.gmra.mrb[0].mxu0 %v1594
        %v2071 = vpop.f32.mrb[0].mxu0
        %v2072 = vadd.f32 %v983, %v2071
        %v2073 = vpop.f32.mrb[0].mxu0
        %2074 = vmatprep.mubr.f32.mxu0 0.0
        %2075 = vmatmul.mubr.f32.gmra.mrb[0].mxu0 %v1597
        %v2076 = vpop.f32.mrb[0].mxu0
        %v2077 = vadd.f32 %v988, %v2076
        %v2078 = vpop.f32.mrb[0].mxu0
        %2079 = vmatprep.mubr.f32.mxu0 0.0
        %2080 = vmatmul.mubr.f32.gmra.mrb[0].mxu0 %v1600
        %v2081 = vpop.f32.mrb[0].mxu0
        %v2082 = vadd.f32 %v993, %v2081
        %v2083 = vpop.f32.mrb[0].mxu0
        %2084 = vmatprep.mubr.f32.mxu0 0.0
        %2085 = vmatmul.mubr.f32.gmra.mrb[0].mxu0 %v1603
        %v2086 = vpop.f32.mrb[0].mxu0
        %v2087 = vadd.f32 %v998, %v2086
        %v2088 = vpop.f32.mrb[0].mxu0
        %2089 = vmatprep.mubr.f32.mxu0 0.0
        %2090 = vmatmul.mubr.f32.gmra.mrb[0].mxu0 %v1606
        %v2091 = vpop.f32.mrb[0].mxu0
        %v2092 = vadd.f32 %v1003, %v2091
        %v2093 = vpop.f32.mrb[0].mxu0
        %2094 = vmatprep.mubr.f32.mxu0 0.0
        %2095 = vmatmul.mubr.f32.gmra.mrb[0].mxu0 %v1609
        %v2096 = vpop.f32.mrb[0].mxu0
        %v2097 = vadd.f32 %v1008, %v2096
        %v2098 = vpop.f32.mrb[0].mxu0
        %2099 = vmatprep.mubr.f32.mxu0 0.0
        %2100 = vmatmul.mubr.f32.gmra.mrb[0].mxu0 %v1612
        %v2101 = vpop.f32.mrb[0].mxu0
        %v2102 = vadd.f32 %v1013, %v2101
        %v2103 = vpop.f32.mrb[0].mxu0
        %2104 = vmatprep.mubr.f32.mxu0 0.0
        %2105 = vmatmul.mubr.f32.gmra.mrb[0].mxu0 %v1615
        %v2106 = vpop.f32.mrb[0].mxu0
        %v2107 = vadd.f32 %v1018, %v2106
        %v2108 = vpop.f32.mrb[0].mxu0
        %2109 = vmatprep.mubr.f32.mxu0 0.0
        %2110 = vmatmul.mubr.f32.gmra.mrb[0].mxu0 %v1618
        %v2111 = vpop.f32.mrb[0].mxu0
        %v2112 = vadd.f32 %v1023, %v2111
        %v2113 = vpop.f32.mrb[0].mxu0
        %2114 = vmatprep.mubr.f32.mxu0 0.0
        %2115 = vmatmul.mubr.f32.gmra.mrb[0].mxu0 %v1621
        %v2116 = vpop.f32.mrb[0].mxu0
        %v2117 = vadd.f32 %v1028, %v2116
        %v2118 = vpop.f32.mrb[0].mxu0
        %2119 = vmatprep.mubr.f32.mxu0 0.0
        %2120 = vmatmul.mubr.f32.gmra.mrb[0].mxu0 %v1624
        %v2121 = vpop.f32.mrb[0].mxu0
        %v2122 = vadd.f32 %v1033, %v2121
        %v2123 = vpop.f32.mrb[0].mxu0
        %2124 = vmatprep.mubr.f32.mxu0 0.0
        %2125 = vmatmul.mubr.f32.gmra.mrb[0].mxu0 %v1627
        %v2126 = vpop.f32.mrb[0].mxu0
        %v2127 = vadd.f32 %v1038, %v2126
        %v2128 = vpop.f32.mrb[0].mxu0
        %2129 = vmatprep.mubr.f32.mxu0 0.0
        %2130 = vmatmul.mubr.f32.gmra.mrb[0].mxu0 %v1630
        %v2131 = vpop.f32.mrb[0].mxu0
        %v2132 = vadd.f32 %v1043, %v2131
        %v2133 = vpop.f32.mrb[0].mxu0
        %2134 = vmatprep.mubr.f32.mxu0 0.0
        %2135 = vmatmul.mubr.f32.gmra.mrb[0].mxu0 %v1633
        %v2136 = vpop.f32.mrb[0].mxu0
        %v2137 = vadd.f32 %v1048, %v2136
        %v2138 = vpop.f32.mrb[0].mxu0
        %2139 = vmatprep.mubr.f32.mxu0 0.0
        %2140 = vmatmul.mubr.f32.gmra.mrb[0].mxu0 %v1636
        %v2141 = vpop.f32.mrb[0].mxu0
        %v2142 = vadd.f32 %v1053, %v2141
        %v2143 = vpop.f32.mrb[0].mxu0
        %2144 = vmatprep.mubr.f32.mxu0 0.0
        %2145 = vmatmul.mubr.f32.gmra.mrb[0].mxu0 %v1639
        %v2146 = vpop.f32.mrb[0].mxu0
        %v2147 = vadd.f32 %v1058, %v2146
        %v2148 = vpop.f32.mrb[0].mxu0
        %2149 = vmatprep.mubr.f32.mxu0 0.0
        %2150 = vmatmul.mubr.f32.gmra.mrb[0].mxu0 %v1642
        %v2151 = vpop.f32.mrb[0].mxu0
        %v2152 = vadd.f32 %v1063, %v2151
        %v2153 = vpop.f32.mrb[0].mxu0
        %2154 = vmatprep.mubr.f32.mxu0 0.0
        %2155 = vmatmul.mubr.f32.gmra.mrb[0].mxu0 %v1645
        %v2156 = vpop.f32.mrb[0].mxu0
        %v2157 = vadd.f32 %v1068, %v2156
        %v2158 = vpop.f32.mrb[0].mxu0
        %2159 = vmatprep.mubr.f32.mxu0 0.0
        %2160 = vmatmul.mubr.f32.gmra.mrb[0].mxu0 %v1648
        %v2161 = vpop.f32.mrb[0].mxu0
        %v2162 = vadd.f32 %v1073, %v2161
        %v2163 = vpop.f32.mrb[0].mxu0
        %2164 = vmatprep.mubr.f32.mxu0 0.0
        %2165 = vmatmul.mubr.f32.gmra.mrb[0].mxu0 %v1651
        %v2166 = vpop.f32.mrb[0].mxu0
        %v2167 = vadd.f32 %v1078, %v2166
        %v2168 = vpop.f32.mrb[0].mxu0
        %2169 = vmatprep.mubr.f32.mxu0 0.0
        %2170 = vmatmul.mubr.f32.gmra.mrb[0].mxu0 %v1654
        %v2171 = vpop.f32.mrb[0].mxu0
        %v2172 = vadd.f32 %v1083, %v2171
        %v2173 = vpop.f32.mrb[0].mxu0
        %2174 = vmatprep.mubr.f32.mxu0 0.0
        %2175 = vmatmul.mubr.f32.gmra.mrb[0].mxu0 %v1657
        %v2176 = vpop.f32.mrb[0].mxu0
        %v2177 = vadd.f32 %v1088, %v2176
        %v2178 = vpop.f32.mrb[0].mxu0
        %2179 = vmatprep.mubr.f32.mxu0 0.0
        %2180 = vmatmul.mubr.f32.gmra.mrb[0].mxu0 %v1660
        %v2181 = vpop.f32.mrb[0].mxu0
        %v2182 = vadd.f32 %v1093, %v2181
        %v2183 = vpop.f32.mrb[0].mxu0
        %2184 = vmatprep.mubr.f32.mxu0 0.0
        %2185 = vmatmul.mubr.f32.gmra.mrb[0].mxu0 %v1663
        %v2186 = vpop.f32.mrb[0].mxu0
        %v2187 = vadd.f32 %v1098, %v2186
        %v2188 = vpop.f32.mrb[0].mxu0
        %2189 = vmatprep.mubr.f32.mxu0 0.0
        %2190 = vmatmul.mubr.f32.gmra.mrb[0].mxu0 %v1666
        %v2191 = vpop.f32.mrb[0].mxu0
        %v2192 = vadd.f32 %v1103, %v2191
        %v2193 = vpop.f32.mrb[0].mxu0
        %2194 = vmatprep.mubr.f32.mxu0 0.0
        %2195 = vmatmul.mubr.f32.gmra.mrb[0].mxu0 %v1669
        %v2196 = vpop.f32.mrb[0].mxu0
        %v2197 = vadd.f32 %v1108, %v2196
        %v2198 = vpop.f32.mrb[0].mxu0
        %2199 = vmatprep.mubr.f32.mxu0 0.0
        %2200 = vmatmul.mubr.f32.gmra.mrb[0].mxu0 %v1672
        %v2201 = vpop.f32.mrb[0].mxu0
        %v2202 = vadd.f32 %v1113, %v2201
        %v2203 = vpop.f32.mrb[0].mxu0
        %2204 = vmatprep.mubr.f32.mxu0 0.0
        %2205 = vmatmul.mubr.f32.gmra.mrb[0].mxu0 %v1675
        %v2206 = vpop.f32.mrb[0].mxu0
        %v2207 = vadd.f32 %v1118, %v2206
        %v2208 = vpop.f32.mrb[0].mxu0
        %2209 = vmatprep.mubr.f32.mxu0 0.0
        %2210 = vmatmul.mubr.f32.gmra.mrb[0].mxu0 %v1678
        %v2211 = vpop.f32.mrb[0].mxu0
        %v2212 = vadd.f32 %v1123, %v2211
        %v2213 = vpop.f32.mrb[0].mxu0
        %2214 = vmatprep.mubr.f32.mxu0 0.0
        %2215 = vmatmul.mubr.f32.gmra.mrb[0].mxu0 %v1681
        %v2216 = vpop.f32.mrb[0].mxu0
        %v2217 = vadd.f32 %v1128, %v2216
        %v2218 = vpop.f32.mrb[0].mxu0
        %2219 = vmatprep.mubr.f32.mxu0 0.0
        %2220 = vmatmul.mubr.f32.gmra.mrb[0].mxu0 %v1684
        %v2221 = vpop.f32.mrb[0].mxu0
        %v2222 = vadd.f32 %v1133, %v2221
        %v2223 = vpop.f32.mrb[0].mxu0
        %2224 = vmatprep.mubr.f32.mxu0 0.0
        %2225 = vmatmul.mubr.f32.gmra.mrb[0].mxu0 %v1687
        %v2226 = vpop.f32.mrb[0].mxu0
        %v2227 = vadd.f32 %v1138, %v2226
        %v2228 = vpop.f32.mrb[0].mxu0
        %2229 = vmatprep.mubr.f32.mxu0 0.0
        %2230 = vmatmul.mubr.f32.gmra.mrb[0].mxu0 %v1690
        %v2231 = vpop.f32.mrb[0].mxu0
        %v2232 = vadd.f32 %v1143, %v2231
        %v2233 = vpop.f32.mrb[0].mxu0
        %2234 = vmatprep.mubr.f32.mxu0 0.0
        %2235 = vmatmul.mubr.f32.gmra.mrb[0].mxu0 %v1693
        %v2236 = vpop.f32.mrb[0].mxu0
        %v2237 = vadd.f32 %v1148, %v2236
        %v2238 = vpop.f32.mrb[0].mxu0
        %2239 = vmatprep.mubr.f32.mxu0 0.0
        %2240 = vmatmul.mubr.f32.gmra.mrb[0].mxu0 %v1696
        %v2241 = vpop.f32.mrb[0].mxu0
        %v2242 = vadd.f32 %v1153, %v2241
        %v2243 = vpop.f32.mrb[0].mxu0
        %2244 = vmatprep.mubr.f32.mxu0 0.0
        %2245 = vmatmul.mubr.f32.gmra.mrb[0].mxu0 %v1699
        %v2246 = vpop.f32.mrb[0].mxu0
        %v2247 = vadd.f32 %v1158, %v2246
        %v2248 = vpop.f32.mrb[0].mxu0
        %2249 = vmatprep.mubr.f32.mxu0 0.0
        %2250 = vmatmul.mubr.f32.gmra.mrb[0].mxu0 %v1702
        %v2251 = vpop.f32.mrb[0].mxu0
        %v2252 = vadd.f32 %v1163, %v2251
        %v2253 = vpop.f32.mrb[0].mxu0
        %2254 = vmatprep.mubr.f32.mxu0 0.0
        %2255 = vmatmul.mubr.f32.gmra.mrb[0].mxu0 %v1705
        %v2256 = vpop.f32.mrb[0].mxu0
        %v2257 = vadd.f32 %v1168, %v2256
        %v2258 = vpop.f32.mrb[0].mxu0
        %2259 = vmatprep.mubr.f32.mxu0 0.0
        %2260 = vmatmul.mubr.f32.gmra.mrb[0].mxu0 %v1708
        %v2261 = vpop.f32.mrb[0].mxu0
        %v2262 = vadd.f32 %v1173, %v2261
        %v2263 = vpop.f32.mrb[0].mxu0
        %2264 = vmatprep.mubr.f32.mxu0 0.0
        %2265 = vmatmul.mubr.f32.gmra.mrb[0].mxu0 %v1711
        %v2266 = vpop.f32.mrb[0].mxu0
        %v2267 = vadd.f32 %v1178, %v2266
        %v2268 = vpop.f32.mrb[0].mxu0
        %2269 = vmatprep.mubr.f32.mxu0 0.0
        %2270 = vmatmul.mubr.f32.gmra.mrb[0].mxu0 %v1714
        %v2271 = vpop.f32.mrb[0].mxu0
        %v2272 = vadd.f32 %v1183, %v2271
        %v2273 = vpop.f32.mrb[0].mxu0
        %2274 = vmatprep.mubr.f32.mxu0 0.0
        %2275 = vmatmul.mubr.f32.gmra.mrb[0].mxu0 %v1717
        %v2276 = vpop.f32.mrb[0].mxu0
        %v2277 = vadd.f32 %v1188, %v2276
        %v2278 = vpop.f32.mrb[0].mxu0
        %2279 = vmatprep.mubr.f32.mxu0 0.0
        %2280 = vmatmul.mubr.f32.gmra.mrb[0].mxu0 %v1720
        %v2281 = vpop.f32.mrb[0].mxu0
        %v2282 = vadd.f32 %v1193, %v2281
        %v2283 = vpop.f32.mrb[0].mxu0
        %2284 = vmatprep.mubr.f32.mxu0 0.0
        %2285 = vmatmul.mubr.f32.gmra.mrb[0].mxu0 %v1723
        %v2286 = vpop.f32.mrb[0].mxu0
        %v2287 = vadd.f32 %v1198, %v2286
        %v2288 = vpop.f32.mrb[0].mxu0
        %2289 = vmatprep.mubr.f32.mxu0 0.0
        %2290 = vmatmul.mubr.f32.gmra.mrb[0].mxu0 %v1726
        %v2291 = vpop.f32.mrb[0].mxu0
        %v2292 = vadd.f32 %v1203, %v2291
        %v2293 = vpop.f32.mrb[0].mxu0
        %2294 = vmatprep.mubr.f32.mxu0 0.0
        %2295 = vmatmul.mubr.f32.gmra.mrb[0].mxu0 %v1729
        %v2296 = vpop.f32.mrb[0].mxu0
        %v2297 = vadd.f32 %v1208, %v2296
        %v2298 = vpop.f32.mrb[0].mxu0
        %2299 = vmatprep.mubr.f32.mxu0 0.0
        %2300 = vmatmul.mubr.f32.gmra.mrb[0].mxu0 %v1732
        %v2301 = vpop.f32.mrb[0].mxu0
        %v2302 = vadd.f32 %v1213, %v2301
        %v2303 = vpop.f32.mrb[0].mxu0
        %2304 = vmatprep.mubr.f32.mxu0 0.0
        %2305 = vmatmul.mubr.f32.gmra.mrb[0].mxu0 %v1735
        %v2306 = vpop.f32.mrb[0].mxu0
        %v2307 = vadd.f32 %v1218, %v2306
        %v2308 = vpop.f32.mrb[0].mxu0
        %2309 = vmatprep.mubr.f32.mxu0 0.0
        %2310 = vmatmul.mubr.f32.gmra.mrb[0].mxu0 %v1738
        %v2311 = vpop.f32.mrb[0].mxu0
        %v2312 = vadd.f32 %v1223, %v2311
        %v2313 = vpop.f32.mrb[0].mxu0
        %2314 = vmatprep.mubr.f32.mxu0 0.0
        %2315 = vmatmul.mubr.f32.gmra.mrb[0].mxu0 %v1741
        %v2316 = vpop.f32.mrb[0].mxu0
        %v2317 = vadd.f32 %v1228, %v2316
        %v2318 = vpop.f32.mrb[0].mxu0
        %2319 = vmatprep.mubr.f32.mxu0 0.0
        %2320 = vmatmul.mubr.f32.gmra.mrb[0].mxu0 %v1744
        %v2321 = vpop.f32.mrb[0].mxu0
        %v2322 = vadd.f32 %v1233, %v2321
        %v2323 = vpop.f32.mrb[0].mxu0
        %2324 = vmatprep.mubr.f32.mxu0 0.0
        %2325 = vmatmul.mubr.f32.gmra.mrb[0].mxu0 %v1747
        %v2326 = vpop.f32.mrb[0].mxu0
        %v2327 = vadd.f32 %v1238, %v2326
        %v2328 = vpop.f32.mrb[0].mxu0
        %2329 = vmatprep.mubr.f32.mxu0 0.0
        %2330 = vmatmul.mubr.f32.gmra.mrb[0].mxu0 %v1750
        %v2331 = vpop.f32.mrb[0].mxu0
        %v2332 = vadd.f32 %v1243, %v2331
        %v2333 = vpop.f32.mrb[0].mxu0
        %2334 = vmatprep.mubr.f32.mxu0 0.0
        %2335 = vmatmul.mubr.f32.gmra.mrb[0].mxu0 %v1753
        %v2336 = vpop.f32.mrb[0].mxu0
        %v2337 = vadd.f32 %v1248, %v2336
        %v2338 = vpop.f32.mrb[0].mxu0
        %2339 = vmatprep.mubr.f32.mxu0 0.0
        %2340 = vmatmul.mubr.f32.gmra.mrb[0].mxu0 %v1756
        %v2341 = vpop.f32.mrb[0].mxu0
        %v2342 = vadd.f32 %v1253, %v2341
        %v2343 = vpop.f32.mrb[0].mxu0
        %2344 = vmatprep.mubr.f32.mxu0 0.0
        %2345 = vmatmul.mubr.f32.gmra.mrb[0].mxu0 %v1759
        %v2346 = vpop.f32.mrb[0].mxu0
        %v2347 = vadd.f32 %v1258, %v2346
        %v2348 = vpop.f32.mrb[0].mxu0
        %2349 = vmatprep.mubr.f32.mxu0 0.0
        %2350 = vmatmul.mubr.f32.gmra.mrb[0].mxu0 %v1762
        %v2351 = vpop.f32.mrb[0].mxu0
        %v2352 = vadd.f32 %v1263, %v2351
        %v2353 = vpop.f32.mrb[0].mxu0
        %2354 = vmatprep.mubr.f32.mxu0 0.0
        %2355 = vmatmul.mubr.f32.gmra.mrb[0].mxu0 %v1765
        %v2356 = vpop.f32.mrb[0].mxu0
        %v2357 = vadd.f32 %v1268, %v2356
        %v2358 = vpop.f32.mrb[0].mxu0
        %2359 = vmatprep.mubr.f32.mxu0 0.0
        %2360 = vmatmul.mubr.f32.gmra.mrb[0].mxu0 %v1768
        %v2361 = vpop.f32.mrb[0].mxu0
        %v2362 = vadd.f32 %v1273, %v2361
        %v2363 = vpop.f32.mrb[0].mxu0
        %2364 = vmatprep.mubr.f32.mxu0 0.0
        %2365 = vmatmul.mubr.f32.gmra.mrb[0].mxu0 %v1771
        %v2366 = vpop.f32.mrb[0].mxu0
        %v2367 = vadd.f32 %v1278, %v2366
        %v2368 = vpop.f32.mrb[0].mxu0
        %2369 = vmatprep.mubr.f32.mxu0 0.0
        %2370 = vmatmul.mubr.f32.gmra.mrb[0].mxu0 %v1774
        %v2371 = vpop.f32.mrb[0].mxu0
        %v2372 = vadd.f32 %v1283, %v2371
        %v2373 = vpop.f32.mrb[0].mxu0
        %2374 = vmatprep.mubr.f32.mxu0 0.0
        %2375 = vmatmul.mubr.f32.gmra.mrb[0].mxu0 %v1777
        %v2376 = vpop.f32.mrb[0].mxu0
        %v2377 = vadd.f32 %v1288, %v2376
        %v2378 = vpop.f32.mrb[0].mxu0
        %2379 = vmatprep.mubr.f32.mxu0 0.0
        %2380 = vmatmul.mubr.f32.gmra.mrb[0].mxu0 %v1780
        %v2381 = vpop.f32.mrb[0].mxu0
        %v2382 = vadd.f32 %v1293, %v2381
        %v2383 = vpop.f32.mrb[0].mxu0
        %2384 = vmatprep.mubr.f32.mxu0 0.0
        %2385 = vmatmul.mubr.f32.gmra.mrb[0].mxu0 %v1783
        %v2386 = vpop.f32.mrb[0].mxu0
        %v2387 = vadd.f32 %v1298, %v2386
        %v2388 = vpop.f32.mrb[0].mxu0
        %2389 = vmatprep.mubr.f32.mxu0 0.0
        %2390 = vmatmul.mubr.f32.gmra.mrb[0].mxu0 %v1786
        %v2391 = vpop.f32.mrb[0].mxu0
        %v2392 = vadd.f32 %v1303, %v2391
        %v2393 = vpop.f32.mrb[0].mxu0
        %2394 = vmatprep.mubr.f32.mxu0 0.0
        %2395 = vmatmul.mubr.f32.gmra.mrb[0].mxu0 %v1789
        %v2396 = vpop.f32.mrb[0].mxu0
        %v2397 = vadd.f32 %v1308, %v2396
        %v2398 = vpop.f32.mrb[0].mxu0
        %2399 = vmatprep.mubr.f32.mxu0 0.0
        %2400 = vmatmul.mubr.f32.gmra.mrb[0].mxu0 %v1792
        %v2401 = vpop.f32.mrb[0].mxu0
        %v2402 = vadd.f32 %v1313, %v2401
        %v2403 = vpop.f32.mrb[0].mxu0
        %2404 = vmatprep.mubr.f32.mxu0 0.0
        %2405 = vmatmul.mubr.f32.gmra.mrb[0].mxu0 %v1795
        %v2406 = vpop.f32.mrb[0].mxu0
        %v2407 = vadd.f32 %v1318, %v2406
        %v2408 = vpop.f32.mrb[0].mxu0
        %2409 = vmatprep.mubr.f32.mxu0 0.0
        %2410 = vmatmul.mubr.f32.gmra.mrb[0].mxu0 %v1798
        %v2411 = vpop.f32.mrb[0].mxu0
        %v2412 = vadd.f32 %v1323, %v2411
        %v2413 = vpop.f32.mrb[0].mxu0
        %2414 = vmatprep.mubr.f32.mxu0 0.0
        %2415 = vmatmul.mubr.f32.gmra.mrb[0].mxu0 %v1801
        %v2416 = vpop.f32.mrb[0].mxu0
        %v2417 = vadd.f32 %v1328, %v2416
        %v2418 = vpop.f32.mrb[0].mxu0
        %2419 = vmatprep.mubr.f32.mxu0 0.0
        %2420 = vmatmul.mubr.f32.gmra.mrb[0].mxu0 %v1804
        %v2421 = vpop.f32.mrb[0].mxu0
        %v2422 = vadd.f32 %v1333, %v2421
        %v2423 = vpop.f32.mrb[0].mxu0
        %2424 = vmatprep.mubr.f32.mxu0 0.0
        %2425 = vmatmul.mubr.f32.gmra.mrb[0].mxu0 %v1807
        %v2426 = vpop.f32.mrb[0].mxu0
        %v2427 = vadd.f32 %v1338, %v2426
        %v2428 = vpop.f32.mrb[0].mxu0
        %2429 = vmatprep.mubr.f32.mxu0 0.0
        %2430 = vmatmul.mubr.f32.gmra.mrb[0].mxu0 %v1810
        %v2431 = vpop.f32.mrb[0].mxu0
        %v2432 = vadd.f32 %v1343, %v2431
        %v2433 = vpop.f32.mrb[0].mxu0
        %2434 = vmatprep.mubr.f32.mxu0 0.0
        %2435 = vmatmul.mubr.f32.gmra.mrb[0].mxu0 %v1813
        %v2436 = vpop.f32.mrb[0].mxu0
        %v2437 = vadd.f32 %v1348, %v2436
        %v2438 = vpop.f32.mrb[0].mxu0
        %2439 = vmatprep.mubr.f32.mxu0 0.0
        %2440 = vmatmul.mubr.f32.gmra.mrb[0].mxu0 %v1816
        %v2441 = vpop.f32.mrb[0].mxu0
        %v2442 = vadd.f32 %v1353, %v2441
        %v2443 = vpop.f32.mrb[0].mxu0
        %2444 = vmatprep.mubr.f32.mxu0 0.0
        %2445 = vmatmul.mubr.f32.gmra.mrb[0].mxu0 %v1819
        %v2446 = vpop.f32.mrb[0].mxu0
        %v2447 = vadd.f32 %v1358, %v2446
        %v2448 = vpop.f32.mrb[0].mxu0
        %2449 = vmatprep.mubr.f32.mxu0 0.0
        %2450 = vmatmul.mubr.f32.gmra.mrb[0].mxu0 %v1822
        %v2451 = vpop.f32.mrb[0].mxu0
        %v2452 = vadd.f32 %v1363, %v2451
        %v2453 = vpop.f32.mrb[0].mxu0
        %2454 = vmatprep.mubr.f32.mxu0 0.0
        %2455 = vmatmul.mubr.f32.gmra.mrb[0].mxu0 %v1825
        %v2456 = vpop.f32.mrb[0].mxu0
        %v2457 = vadd.f32 %v1368, %v2456
        %v2458 = vpop.f32.mrb[0].mxu0
        %2459 = vmatprep.mubr.f32.mxu0 0.0
        %2460 = vmatmul.mubr.f32.gmra.mrb[0].mxu0 %v1828
        %v2461 = vpop.f32.mrb[0].mxu0
        %v2462 = vadd.f32 %v1373, %v2461
        %v2463 = vpop.f32.mrb[0].mxu0
        %2464 = vmatprep.mubr.f32.mxu0 0.0
        %2465 = vmatmul.mubr.f32.gmra.mrb[0].mxu0 %v1831
        %v2466 = vpop.f32.mrb[0].mxu0
        %v2467 = vadd.f32 %v1378, %v2466
        %v2468 = vpop.f32.mrb[0].mxu0
        %2469 = vmatprep.mubr.f32.mxu0 0.0
        %2470 = vmatmul.mubr.f32.gmra.mrb[0].mxu0 %v1834
        %v2471 = vpop.f32.mrb[0].mxu0
        %v2472 = vadd.f32 %v1383, %v2471
        %v2473 = vpop.f32.mrb[0].mxu0
        %2474 = vmatprep.mubr.f32.mxu0 0.0
        %2475 = vmatmul.mubr.f32.gmra.mrb[0].mxu0 %v1837
        %v2476 = vpop.f32.mrb[0].mxu0
        %v2477 = vadd.f32 %v1388, %v2476
        %v2478 = vpop.f32.mrb[0].mxu0
        %2479 = vmatprep.mubr.f32.mxu0 0.0
        %2480 = vmatmul.mubr.f32.gmra.mrb[0].mxu0 %v1840
        %v2481 = vpop.f32.mrb[0].mxu0
        %v2482 = vadd.f32 %v1393, %v2481
        %v2483 = vpop.f32.mrb[0].mxu0
        %2484 = vmatprep.mubr.f32.mxu0 0.0
        %2485 = vmatmul.mubr.f32.gmra.mrb[0].mxu0 %v1843
        %v2486 = vpop.f32.mrb[0].mxu0
        %v2487 = vadd.f32 %v1398, %v2486
        %v2488 = vpop.f32.mrb[0].mxu0
        %2489 = vmatprep.mubr.f32.mxu0 0.0
        %2490 = vmatmul.mubr.f32.gmra.mrb[0].mxu0 %v1846
        %v2491 = vpop.f32.mrb[0].mxu0
        %v2492 = vadd.f32 %v1403, %v2491
        %v2493 = vpop.f32.mrb[0].mxu0
        %2494 = vmatprep.mubr.f32.mxu0 0.0
        %2495 = vmatmul.mubr.f32.gmra.mrb[0].mxu0 %v1849
        %v2496 = vpop.f32.mrb[0].mxu0
        %v2497 = vadd.f32 %v1408, %v2496
        %v2498 = vpop.f32.mrb[0].mxu0
        %2499 = vmatprep.mubr.f32.mxu0 0.0
        %2500 = vmatmul.mubr.f32.gmra.mrb[0].mxu0 %v1852
        %v2501 = vpop.f32.mrb[0].mxu0
        %v2502 = vadd.f32 %v1413, %v2501
        %v2503 = vpop.f32.mrb[0].mxu0
        %2504 = vmatprep.mubr.f32.mxu0 0.0
        %2505 = vmatmul.mubr.f32.gmra.mrb[0].mxu0 %v1855
        %v2506 = vpop.f32.mrb[0].mxu0
        %v2507 = vadd.f32 %v1418, %v2506
        %v2508 = vpop.f32.mrb[0].mxu0
        %2509 = vmatprep.mubr.f32.mxu0 0.0
        %2510 = vmatmul.mubr.f32.gmra.mrb[0].mxu0 %v1858
        %v2511 = vpop.f32.mrb[0].mxu0
        %v2512 = vadd.f32 %v1423, %v2511
        %v2513 = vpop.f32.mrb[0].mxu0
        %2514 = vmatprep.mubr.f32.mxu0 0.0
        %2515 = vmatmul.mubr.f32.gmra.mrb[0].mxu0 %v1861
        %v2516 = vpop.f32.mrb[0].mxu0
        %v2517 = vadd.f32 %v1428, %v2516
        %v2518 = vpop.f32.mrb[0].mxu0
        %2519 = vmatprep.mubr.f32.mxu0 0.0
        %2520 = vmatmul.mubr.f32.gmra.mrb[0].mxu0 %v1864
        %v2521 = vpop.f32.mrb[0].mxu0
        %v2522 = vadd.f32 %v1433, %v2521
        %v2523 = vpop.f32.mrb[0].mxu0
        %2524 = vmatprep.mubr.f32.mxu0 0.0
        %2525 = vmatmul.mubr.f32.gmra.mrb[0].mxu0 %v1867
        %v2526 = vpop.f32.mrb[0].mxu0
        %v2527 = vadd.f32 %v1438, %v2526
        %v2528 = vpop.f32.mrb[0].mxu0
        %2529 = vmatprep.mubr.f32.mxu0 0.0
        %2530 = vmatmul.mubr.f32.gmra.mrb[0].mxu0 %v1870
        %v2531 = vpop.f32.mrb[0].mxu0
        %v2532 = vadd.f32 %v1443, %v2531
        %v2533 = vpop.f32.mrb[0].mxu0
        %2534 = vmatprep.mubr.f32.mxu0 0.0
        %2535 = vmatmul.mubr.f32.gmra.mrb[0].mxu0 %v1873
        %v2536 = vpop.f32.mrb[0].mxu0
        %v2537 = vadd.f32 %v1448, %v2536
        %v2538 = vpop.f32.mrb[0].mxu0
        %2539 = vmatprep.mubr.f32.mxu0 0.0
        %2540 = vmatmul.mubr.f32.gmra.mrb[0].mxu0 %v1876
        %v2541 = vpop.f32.mrb[0].mxu0
        %v2542 = vadd.f32 %v1453, %v2541
        %v2543 = vpop.f32.mrb[0].mxu0
        %2544 = vmatprep.mubr.f32.mxu0 0.0
        %2545 = vmatmul.mubr.f32.gmra.mrb[0].mxu0 %v1879
        %v2546 = vpop.f32.mrb[0].mxu0
        %v2547 = vadd.f32 %v1458, %v2546
        %v2548 = vpop.f32.mrb[0].mxu0
        %2549 = vmatprep.mubr.f32.mxu0 0.0
        %2550 = vmatmul.mubr.f32.gmra.mrb[0].mxu0 %v1882
        %v2551 = vpop.f32.mrb[0].mxu0
        %v2552 = vadd.f32 %v1463, %v2551
        %v2553 = vpop.f32.mrb[0].mxu0
        %2554 = vmatprep.mubr.f32.mxu0 0.0
        %2555 = vmatmul.mubr.f32.gmra.mrb[0].mxu0 %v1885
        %v2556 = vpop.f32.mrb[0].mxu0
        %v2557 = vadd.f32 %v1468, %v2556
        %v2558 = vpop.f32.mrb[0].mxu0
        %2559 = vmatprep.mubr.f32.mxu0 0.0
        %2560 = vmatmul.mubr.f32.gmra.mrb[0].mxu0 %v1888
        %v2561 = vpop.f32.mrb[0].mxu0
        %v2562 = vadd.f32 %v1473, %v2561
        %v2563 = vpop.f32.mrb[0].mxu0
        %2564 = vmatprep.mubr.f32.mxu0 0.0
        %2565 = vmatmul.mubr.f32.gmra.mrb[0].mxu0 %v1891
        %v2566 = vpop.f32.mrb[0].mxu0
        %v2567 = vadd.f32 %v1478, %v2566
        %v2568 = vpop.f32.mrb[0].mxu0
        %2569 = vmatprep.mubr.f32.mxu0 0.0
        %2570 = vmatmul.mubr.f32.gmra.mrb[0].mxu0 %v1894
        %v2571 = vpop.f32.mrb[0].mxu0
        %v2572 = vadd.f32 %v1483, %v2571
        %v2573 = vpop.f32.mrb[0].mxu0
        %2574 = vmatprep.mubr.f32.mxu0 0.0
        %2575 = vmatmul.mubr.f32.gmra.mrb[0].mxu0 %v1897
        %v2576 = vpop.f32.mrb[0].mxu0
        %v2577 = vadd.f32 %v1488, %v2576
        %v2578 = vpop.f32.mrb[0].mxu0
        %2579 = vmatprep.mubr.f32.mxu0 0.0
        %2580 = vmatmul.mubr.f32.gmra.mrb[0].mxu0 %v1900
        %v2581 = vpop.f32.mrb[0].mxu0
        %v2582 = vadd.f32 %v1493, %v2581
        %v2583 = vpop.f32.mrb[0].mxu0
        %2584 = vmatprep.mubr.f32.mxu0 0.0
        %2585 = vmatmul.mubr.f32.gmra.mrb[0].mxu0 %v1903
        %v2586 = vpop.f32.mrb[0].mxu0
        %v2587 = vadd.f32 %v1498, %v2586
        %v2588 = vpop.f32.mrb[0].mxu0
        %2589 = vmatprep.mubr.f32.mxu0 0.0
        %2590 = vmatmul.mubr.f32.gmra.mrb[0].mxu0 %v1906
        %v2591 = vpop.f32.mrb[0].mxu0
        %v2592 = vadd.f32 %v1503, %v2591
        %v2593 = vpop.f32.mrb[0].mxu0
        %2594 = vmatprep.mubr.f32.mxu0 0.0
        %2595 = vmatmul.mubr.f32.gmra.mrb[0].mxu0 %v1909
        %v2596 = vpop.f32.mrb[0].mxu0
        %v2597 = vadd.f32 %v1508, %v2596
        %v2598 = vpop.f32.mrb[0].mxu0
        %2599 = vmatprep.mubr.f32.mxu0 0.0
        %2600 = vmatmul.mubr.f32.gmra.mrb[0].mxu0 %v1912
        %v2601 = vpop.f32.mrb[0].mxu0
        %v2602 = vadd.f32 %v1513, %v2601
        %v2603 = vpop.f32.mrb[0].mxu0
        %2604 = vmatprep.mubr.f32.mxu0 0.0
        %2605 = vmatmul.mubr.f32.gmra.mrb[0].mxu0 %v1915
        %v2606 = vpop.f32.mrb[0].mxu0
        %v2607 = vadd.f32 %v1518, %v2606
        %v2608 = vpop.f32.mrb[0].mxu0
        %2609 = vmatprep.mubr.f32.mxu0 0.0
        %2610 = vmatmul.mubr.f32.gmra.mrb[0].mxu0 %v1918
        %v2611 = vpop.f32.mrb[0].mxu0
        %v2612 = vadd.f32 %v1523, %v2611
        %v2613 = vpop.f32.mrb[0].mxu0
        %2614 = vmatprep.mubr.f32.mxu0 0.0
        %2615 = vmatmul.mubr.f32.gmra.mrb[0].mxu0 %v1921
        %v2616 = vpop.f32.mrb[0].mxu0
        %v2617 = vadd.f32 %v1528, %v2616
        %v2618 = vpop.f32.mrb[0].mxu0
        %2619 = vmatprep.mubr.f32.mxu0 0.0
        %2620 = vmatmul.mubr.f32.gmra.mrb[0].mxu0 %v1924
        %v2621 = vpop.f32.mrb[0].mxu0
        %v2622 = vadd.f32 %v1533, %v2621
        %v2623 = vpop.f32.mrb[0].mxu0
        %2624 = vmatprep.mubr.f32.mxu0 0.0
        %2625 = vmatmul.mubr.f32.gmra.mrb[0].mxu0 %v1927
        %v2626 = vpop.f32.mrb[0].mxu0
        %v2627 = vadd.f32 %v1538, %v2626
        %v2628 = vpop.f32.mrb[0].mxu0
        %2629 = vmatprep.mubr.f32.mxu0 0.0
        %2630 = vmatmul.mubr.f32.gmra.mrb[0].mxu0 %v1930
        %v2631 = vpop.f32.mrb[0].mxu0
        %v2632 = vadd.f32 %v1543, %v2631
        %v2633 = vpop.f32.mrb[0].mxu0
        %2634 = vmatprep.mubr.f32.mxu0 0.0
        %2635 = vmatmul.mubr.f32.gmra.mrb[0].mxu0 %v1933
        %v2636 = vpop.f32.mrb[0].mxu0
        %v2637 = vadd.f32 %v1548, %v2636
        %v2638 = vpop.f32.mrb[0].mxu0
        %2639 = vdwg.mxu0
        %v2640 = vld [vmem:[%s199 + $0x2] sm:$0xff]
        %v2641 = vld [vmem:[%s199 + $0xa] sm:$0xff]
        %v2642 = vld [vmem:[%s199 + $0x1a] sm:$0xff]
        %v2643 = vld [vmem:[%s199 + $0x22] sm:$0xff]
        %v2644 = vld [vmem:[%s199 + $0x32] sm:$0xff]
        %v2645 = vld [vmem:[%s199 + $0x3a] sm:$0xff]
        %v2646 = vld [vmem:[%s199 + $0x4a] sm:$0xff]
        %v2647 = vld [vmem:[%s199 + $0x52] sm:$0xff]
        %v2648 = vld [vmem:[%s199 + $0x62] sm:$0xff]
        %v2649 = vld [vmem:[%s199 + $0x6a] sm:$0xff]
        %v2650 = vld [vmem:[%s199 + $0x7a] sm:$0xff]
        %v2651 = vld [vmem:[%s199 + $0x82] sm:$0xff]
        %v2652 = vld [vmem:[%s199 + $0x92] sm:$0xff]
        %v2653 = vld [vmem:[%s199 + $0x9a] sm:$0xff]
        %v2654 = vld [vmem:[%s199 + $0xaa] sm:$0xff]
        %v2655 = vld [vmem:[%s199 + $0xb2] sm:$0xff]
        %v2656 = vld [vmem:[%s199 + $0xc2] sm:$0xff]
        %v2657 = vld [vmem:[%s199 + $0xca] sm:$0xff]
        %v2658 = vld [vmem:[%s199 + $0xda] sm:$0xff]
        %v2659 = vld [vmem:[%s199 + $0xe2] sm:$0xff]
        %v2660 = vld [vmem:[%s199 + $0xf2] sm:$0xff]
        %v2661 = vld [vmem:[%s199 + $0xfa] sm:$0xff]
        %v2662 = vld [vmem:[%s199 + $0x10a] sm:$0xff]
        %v2663 = vld [vmem:[%s199 + $0x112] sm:$0xff]
        %v2664 = vld [vmem:[%s199 + $0x122] sm:$0xff]
        %v2665 = vld [vmem:[%s199 + $0x12a] sm:$0xff]
        %v2666 = vld [vmem:[%s199 + $0x13a] sm:$0xff]
        %v2667 = vld [vmem:[%s199 + $0x142] sm:$0xff]
        %v2668 = vld [vmem:[%s199 + $0x152] sm:$0xff]
        %v2669 = vld [vmem:[%s199 + $0x15a] sm:$0xff]
        %v2670 = vld [vmem:[%s199 + $0x16a] sm:$0xff]
        %v2671 = vld [vmem:[%s199 + $0x172] sm:$0xff]
        %v2672 = vld [vmem:[%s199 + $0x1b2] sm:$0xff]
        %v2673 = vld [vmem:[%s199 + $0x1ba] sm:$0xff]
        %v2674 = vld [vmem:[%s199 + $0x1ca] sm:$0xff]
        %v2675 = vld [vmem:[%s199 + $0x1d2] sm:$0xff]
        %v2676 = vld [vmem:[%s199 + $0x1e2] sm:$0xff]
        %v2677 = vld [vmem:[%s199 + $0x1ea] sm:$0xff]
        %v2678 = vld [vmem:[%s199 + $0x1fa] sm:$0xff]
        %v2679 = vld [vmem:[%s199 + $0x202] sm:$0xff]
        %v2680 = vld [vmem:[%s199 + $0x212] sm:$0xff]
        %v2681 = vld [vmem:[%s199 + $0x21a] sm:$0xff]
        %v2682 = vld [vmem:[%s199 + $0x22a] sm:$0xff]
        %v2683 = vld [vmem:[%s199 + $0x232] sm:$0xff]
        %v2684 = vld [vmem:[%s199 + $0x242] sm:$0xff]
        %v2685 = vld [vmem:[%s199 + $0x24a] sm:$0xff]
        %v2686 = vld [vmem:[%s199 + $0x25a] sm:$0xff]
        %v2687 = vld [vmem:[%s199 + $0x262] sm:$0xff]
        %v2688 = vld [vmem:[%s199 + $0x272] sm:$0xff]
        %v2689 = vld [vmem:[%s199 + $0x27a] sm:$0xff]
        %v2690 = vld [vmem:[%s199 + $0x28a] sm:$0xff]
        %v2691 = vld [vmem:[%s199 + $0x292] sm:$0xff]
        %v2692 = vld [vmem:[%s199 + $0x2a2] sm:$0xff]
        %v2693 = vld [vmem:[%s199 + $0x2aa] sm:$0xff]
        %v2694 = vld [vmem:[%s199 + $0x2ba] sm:$0xff]
        %v2695 = vld [vmem:[%s199 + $0x2c2] sm:$0xff]
        %v2696 = vld [vmem:[%s199 + $0x2d2] sm:$0xff]
        %v2697 = vld [vmem:[%s199 + $0x2da] sm:$0xff]
        %v2698 = vld [vmem:[%s199 + $0x2ea] sm:$0xff]
        %v2699 = vld [vmem:[%s199 + $0x2f2] sm:$0xff]
        %v2700 = vld [vmem:[%s199 + $0x302] sm:$0xff]
        %v2701 = vld [vmem:[%s199 + $0x30a] sm:$0xff]
        %v2702 = vld [vmem:[%s199 + $0x31a] sm:$0xff]
        %v2703 = vld [vmem:[%s199 + $0x322] sm:$0xff]
        %v2704 = vld [vmem:[%s199 + $0x362] sm:$0xff]
        %v2705 = vld [vmem:[%s199 + $0x36a] sm:$0xff]
        %v2706 = vld [vmem:[%s199 + $0x37a] sm:$0xff]
        %v2707 = vld [vmem:[%s199 + $0x382] sm:$0xff]
        %v2708 = vld [vmem:[%s199 + $0x392] sm:$0xff]
        %v2709 = vld [vmem:[%s199 + $0x39a] sm:$0xff]
        %v2710 = vld [vmem:[%s199 + $0x3aa] sm:$0xff]
        %v2711 = vld [vmem:[%s199 + $0x3b2] sm:$0xff]
        %v2712 = vld [vmem:[%s199 + $0x3c2] sm:$0xff]
        %v2713 = vld [vmem:[%s199 + $0x3ca] sm:$0xff]
        %v2714 = vld [vmem:[%s199 + $0x3da] sm:$0xff]
        %v2715 = vld [vmem:[%s199 + $0x3e2] sm:$0xff]
        %v2716 = vld [vmem:[%s199 + $0x3f2] sm:$0xff]
        %v2717 = vld [vmem:[%s199 + $0x3fa] sm:$0xff]
        %v2718 = vld [vmem:[%s199 + $0x40a] sm:$0xff]
        %v2719 = vld [vmem:[%s199 + $0x412] sm:$0xff]
        %v2720 = vld [vmem:[%s199 + $0x422] sm:$0xff]
        %v2721 = vld [vmem:[%s199 + $0x42a] sm:$0xff]
        %v2722 = vld [vmem:[%s199 + $0x43a] sm:$0xff]
        %v2723 = vld [vmem:[%s199 + $0x442] sm:$0xff]
        %v2724 = vld [vmem:[%s199 + $0x452] sm:$0xff]
        %v2725 = vld [vmem:[%s199 + $0x45a] sm:$0xff]
        %v2726 = vld [vmem:[%s199 + $0x46a] sm:$0xff]
        %v2727 = vld [vmem:[%s199 + $0x472] sm:$0xff]
        %v2728 = vld [vmem:[%s199 + $0x482] sm:$0xff]
        %v2729 = vld [vmem:[%s199 + $0x48a] sm:$0xff]
        %v2730 = vld [vmem:[%s199 + $0x49a] sm:$0xff]
        %v2731 = vld [vmem:[%s199 + $0x4a2] sm:$0xff]
        %v2732 = vld [vmem:[%s199 + $0x4b2] sm:$0xff]
        %v2733 = vld [vmem:[%s199 + $0x4ba] sm:$0xff]
        %v2734 = vld [vmem:[%s199 + $0x4ca] sm:$0xff]
        %v2735 = vld [vmem:[%s199 + $0x4d2] sm:$0xff]
        %v2736 = vld [vmem:[%s199 + $0x512] sm:$0xff]
        %v2737 = vld [vmem:[%s199 + $0x51a] sm:$0xff]
        %v2738 = vld [vmem:[%s199 + $0x52a] sm:$0xff]
        %v2739 = vld [vmem:[%s199 + $0x532] sm:$0xff]
        %v2740 = vld [vmem:[%s199 + $0x542] sm:$0xff]
        %v2741 = vld [vmem:[%s199 + $0x54a] sm:$0xff]
        %v2742 = vld [vmem:[%s199 + $0x55a] sm:$0xff]
        %v2743 = vld [vmem:[%s199 + $0x562] sm:$0xff]
        %v2744 = vld [vmem:[%s199 + $0x572] sm:$0xff]
        %v2745 = vld [vmem:[%s199 + $0x57a] sm:$0xff]
        %v2746 = vld [vmem:[%s199 + $0x58a] sm:$0xff]
        %v2747 = vld [vmem:[%s199 + $0x592] sm:$0xff]
        %v2748 = vld [vmem:[%s199 + $0x5a2] sm:$0xff]
        %v2749 = vld [vmem:[%s199 + $0x5aa] sm:$0xff]
        %v2750 = vld [vmem:[%s199 + $0x5ba] sm:$0xff]
        %v2751 = vld [vmem:[%s199 + $0x5c2] sm:$0xff]
        %v2752 = vld [vmem:[%s199 + $0x5d2] sm:$0xff]
        %v2753 = vld [vmem:[%s199 + $0x5da] sm:$0xff]
        %v2754 = vld [vmem:[%s199 + $0x5ea] sm:$0xff]
        %v2755 = vld [vmem:[%s199 + $0x5f2] sm:$0xff]
        %v2756 = vld [vmem:[%s199 + $0x602] sm:$0xff]
        %v2757 = vld [vmem:[%s199 + $0x60a] sm:$0xff]
        %v2758 = vld [vmem:[%s199 + $0x61a] sm:$0xff]
        %v2759 = vld [vmem:[%s199 + $0x622] sm:$0xff]
        %v2760 = vld [vmem:[%s199 + $0x632] sm:$0xff]
        %v2761 = vld [vmem:[%s199 + $0x63a] sm:$0xff]
        %v2762 = vld [vmem:[%s199 + $0x64a] sm:$0xff]
        %v2763 = vld [vmem:[%s199 + $0x652] sm:$0xff]
        %v2764 = vld [vmem:[%s199 + $0x662] sm:$0xff]
        %v2765 = vld [vmem:[%s199 + $0x66a] sm:$0xff]
        %v2766 = vld [vmem:[%s199 + $0x67a] sm:$0xff]
        %v2767 = vld [vmem:[%s199 + $0x682] sm:$0xff]
        %s2768 = scalar_lea.vmem %s1, 16
        %v2769 = vld [vmem:[%s2768] sm:$0xff]
        %v2771 = vsel %vm461, %v2640, 0
        %v2774 = vsel %vm461, %v2641, 0
        %v2777 = vsel %vm461, %v2642, 0
        %v2780 = vsel %vm461, %v2643, 0
        %v2783 = vsel %vm461, %v2644, 0
        %v2786 = vsel %vm461, %v2645, 0
        %v2789 = vsel %vm461, %v2646, 0
        %v2792 = vsel %vm461, %v2647, 0
        %v2795 = vsel %vm461, %v2648, 0
        %v2798 = vsel %vm461, %v2649, 0
        %v2801 = vsel %vm461, %v2650, 0
        %v2804 = vsel %vm461, %v2651, 0
        %v2807 = vsel %vm461, %v2652, 0
        %v2810 = vsel %vm461, %v2653, 0
        %v2813 = vsel %vm461, %v2654, 0
        %v2816 = vsel %vm461, %v2655, 0
        %v2819 = vsel %vm461, %v2656, 0
        %v2822 = vsel %vm461, %v2657, 0
        %v2825 = vsel %vm461, %v2658, 0
        %v2828 = vsel %vm461, %v2659, 0
        %v2831 = vsel %vm461, %v2660, 0
        %v2834 = vsel %vm461, %v2661, 0
        %v2837 = vsel %vm461, %v2662, 0
        %v2840 = vsel %vm461, %v2663, 0
        %v2843 = vsel %vm461, %v2664, 0
        %v2846 = vsel %vm461, %v2665, 0
        %v2849 = vsel %vm461, %v2666, 0
        %v2852 = vsel %vm461, %v2667, 0
        %v2855 = vsel %vm461, %v2668, 0
        %v2858 = vsel %vm461, %v2669, 0
        %v2861 = vsel %vm461, %v2670, 0
        %v2864 = vsel %vm461, %v2671, 0
        %v2867 = vsel %vm461, %v2672, 0
        %v2870 = vsel %vm461, %v2673, 0
        %v2873 = vsel %vm461, %v2674, 0
        %v2876 = vsel %vm461, %v2675, 0
        %v2879 = vsel %vm461, %v2676, 0
        %v2882 = vsel %vm461, %v2677, 0
        %v2885 = vsel %vm461, %v2678, 0
        %v2888 = vsel %vm461, %v2679, 0
        %v2891 = vsel %vm461, %v2680, 0
        %v2894 = vsel %vm461, %v2681, 0
        %v2897 = vsel %vm461, %v2682, 0
        %v2900 = vsel %vm461, %v2683, 0
        %v2903 = vsel %vm461, %v2684, 0
        %v2906 = vsel %vm461, %v2685, 0
        %v2909 = vsel %vm461, %v2686, 0
        %v2912 = vsel %vm461, %v2687, 0
        %v2915 = vsel %vm461, %v2688, 0
        %v2918 = vsel %vm461, %v2689, 0
        %v2921 = vsel %vm461, %v2690, 0
        %v2924 = vsel %vm461, %v2691, 0
        %v2927 = vsel %vm461, %v2692, 0
        %v2930 = vsel %vm461, %v2693, 0
        %v2933 = vsel %vm461, %v2694, 0
        %v2936 = vsel %vm461, %v2695, 0
        %v2939 = vsel %vm461, %v2696, 0
        %v2942 = vsel %vm461, %v2697, 0
        %v2945 = vsel %vm461, %v2698, 0
        %v2948 = vsel %vm461, %v2699, 0
        %v2951 = vsel %vm461, %v2700, 0
        %v2954 = vsel %vm461, %v2701, 0
        %v2957 = vsel %vm461, %v2702, 0
        %v2960 = vsel %vm461, %v2703, 0
        %v2963 = vsel %vm461, %v2704, 0
        %v2966 = vsel %vm461, %v2705, 0
        %v2969 = vsel %vm461, %v2706, 0
        %v2972 = vsel %vm461, %v2707, 0
        %v2975 = vsel %vm461, %v2708, 0
        %v2978 = vsel %vm461, %v2709, 0
        %v2981 = vsel %vm461, %v2710, 0
        %v2984 = vsel %vm461, %v2711, 0
        %v2987 = vsel %vm461, %v2712, 0
        %v2990 = vsel %vm461, %v2713, 0
        %v2993 = vsel %vm461, %v2714, 0
        %v2996 = vsel %vm461, %v2715, 0
        %v2999 = vsel %vm461, %v2716, 0
        %v3002 = vsel %vm461, %v2717, 0
        %v3005 = vsel %vm461, %v2718, 0
        %v3008 = vsel %vm461, %v2719, 0
        %v3011 = vsel %vm461, %v2720, 0
        %v3014 = vsel %vm461, %v2721, 0
        %v3017 = vsel %vm461, %v2722, 0
        %v3020 = vsel %vm461, %v2723, 0
        %v3023 = vsel %vm461, %v2724, 0
        %v3026 = vsel %vm461, %v2725, 0
        %v3029 = vsel %vm461, %v2726, 0
        %v3032 = vsel %vm461, %v2727, 0
        %v3035 = vsel %vm461, %v2728, 0
        %v3038 = vsel %vm461, %v2729, 0
        %v3041 = vsel %vm461, %v2730, 0
        %v3044 = vsel %vm461, %v2731, 0
        %v3047 = vsel %vm461, %v2732, 0
        %v3050 = vsel %vm461, %v2733, 0
        %v3053 = vsel %vm461, %v2734, 0
        %v3056 = vsel %vm461, %v2735, 0
        %v3059 = vsel %vm461, %v2736, 0
        %v3062 = vsel %vm461, %v2737, 0
        %v3065 = vsel %vm461, %v2738, 0
        %v3068 = vsel %vm461, %v2739, 0
        %v3071 = vsel %vm461, %v2740, 0
        %v3074 = vsel %vm461, %v2741, 0
        %v3077 = vsel %vm461, %v2742, 0
        %v3080 = vsel %vm461, %v2743, 0
        %v3083 = vsel %vm461, %v2744, 0
        %v3086 = vsel %vm461, %v2745, 0
        %v3089 = vsel %vm461, %v2746, 0
        %v3092 = vsel %vm461, %v2747, 0
        %v3095 = vsel %vm461, %v2748, 0
        %v3098 = vsel %vm461, %v2749, 0
        %v3101 = vsel %vm461, %v2750, 0
        %v3104 = vsel %vm461, %v2751, 0
        %v3107 = vsel %vm461, %v2752, 0
        %v3110 = vsel %vm461, %v2753, 0
        %v3113 = vsel %vm461, %v2754, 0
        %v3116 = vsel %vm461, %v2755, 0
        %v3119 = vsel %vm461, %v2756, 0
        %v3122 = vsel %vm461, %v2757, 0
        %v3125 = vsel %vm461, %v2758, 0
        %v3128 = vsel %vm461, %v2759, 0
        %v3131 = vsel %vm461, %v2760, 0
        %v3134 = vsel %vm461, %v2761, 0
        %v3137 = vsel %vm461, %v2762, 0
        %v3140 = vsel %vm461, %v2763, 0
        %v3143 = vsel %vm461, %v2764, 0
        %v3146 = vsel %vm461, %v2765, 0
        %v3149 = vsel %vm461, %v2766, 0
        %v3152 = vsel %vm461, %v2767, 0
        %3154 = vmatprep.subr.mxu0 0.0
        %3155 = vmatpush1.msra.mxu0 %v2769
        %3156 = vmatprep.subr.mxu0 0.0
        %3157 = vmatpush1.msra.mxu0 0.0
        %3158 = vmatprep.subr.mxu0 0.0
        %3159 = vmatpush1.msra.mxu0 0.0
        %3160 = vmatprep.subr.mxu0 0.0
        %3161 = vmatpush1.msra.mxu0 0.0
        %3162 = vmatprep.subr.mxu0 0.0
        %3163 = vmatpush1.msra.mxu0 0.0
        %3164 = vmatprep.subr.mxu0 0.0
        %3165 = vmatpush1.msra.mxu0 0.0
        %3166 = vmatprep.subr.mxu0 0.0
        %3167 = vmatpush1.msra.mxu0 0.0
        %3168 = vmatprep.subr.mxu0 0.0
        %3169 = vmatpush1.msra.mxu0 0.0
        %3170 = vmatprep.subr.mxu0 0.0
        %3171 = vmatpush1.msra.mxu0 0.0
        %3172 = vmatprep.subr.mxu0 0.0
        %3173 = vmatpush1.msra.mxu0 0.0
        %3174 = vmatprep.subr.mxu0 0.0
        %3175 = vmatpush1.msra.mxu0 0.0
        %3176 = vmatprep.subr.mxu0 0.0
        %3177 = vmatpush1.msra.mxu0 0.0
        %3178 = vmatprep.subr.mxu0 0.0
        %3179 = vmatpush1.msra.mxu0 0.0
        %3180 = vmatprep.subr.mxu0 0.0
        %3181 = vmatpush1.msra.mxu0 0.0
        %3182 = vmatprep.subr.mxu0 0.0
        %3183 = vmatpush1.msra.mxu0 0.0
        %3184 = vmatprep.subr.mxu0 0.0
        %3185 = vmatpush1.msra.mxu0 0.0
        %3186 = vmatprep.subr.mxu0 0.0
        %3187 = vmatpush1.msra.mxu0 0.0
        %3188 = vmatprep.subr.mxu0 0.0
        %3189 = vmatpush1.msra.mxu0 0.0
        %3190 = vmatprep.subr.mxu0 0.0
        %3191 = vmatpush1.msra.mxu0 0.0
        %3192 = vmatprep.subr.mxu0 0.0
        %3193 = vmatpush1.msra.mxu0 0.0
        %3194 = vmatprep.subr.mxu0 0.0
        %3195 = vmatpush1.msra.mxu0 0.0
        %3196 = vmatprep.subr.mxu0 0.0
        %3197 = vmatpush1.msra.mxu0 0.0
        %3198 = vmatprep.subr.mxu0 0.0
        %3199 = vmatpush1.msra.mxu0 0.0
        %3200 = vmatprep.subr.mxu0 0.0
        %3201 = vmatpush1.msra.mxu0 0.0
        %3202 = vmatprep.subr.mxu0 0.0
        %3203 = vmatpush1.msra.mxu0 0.0
        %3204 = vmatprep.subr.mxu0 0.0
        %3205 = vmatpush1.msra.mxu0 0.0
        %3206 = vmatprep.subr.mxu0 0.0
        %3207 = vmatpush1.msra.mxu0 0.0
        %3208 = vmatprep.subr.mxu0 0.0
        %3209 = vmatpush1.msra.mxu0 0.0
        %3210 = vmatprep.subr.mxu0 0.0
        %3211 = vmatpush1.msra.mxu0 0.0
        %3212 = vmatprep.subr.mxu0 0.0
        %3213 = vmatpush1.msra.mxu0 0.0
        %3214 = vmatprep.subr.mxu0 0.0
        %3215 = vmatpush1.msra.mxu0 0.0
        %3216 = vmatprep.subr.mxu0 0.0
        %3217 = vmatpush1.msra.mxu0 0.0
        %3218 = vmatprep.mubr.f32.mxu0 0.0
        %3219 = vmatmul.mubr.f32.gmra.mrb[0].mxu0 %v2771
        %v3220 = vpop.f32.mrb[0].mxu0
        %v3221 = vadd.f32 0.0, %v3220
        %v3222 = vpop.f32.mrb[0].mxu0
        %3223 = vmatprep.mubr.f32.mxu0 0.0
        %3224 = vmatmul.mubr.f32.gmra.mrb[0].mxu0 %v2774
        %v3225 = vpop.f32.mrb[0].mxu0
        %v3226 = vadd.f32 0.0, %v3225
        %v3227 = vpop.f32.mrb[0].mxu0
        %3228 = vmatprep.mubr.f32.mxu0 0.0
        %3229 = vmatmul.mubr.f32.gmra.mrb[0].mxu0 %v2777
        %v3230 = vpop.f32.mrb[0].mxu0
        %v3231 = vadd.f32 0.0, %v3230
        %v3232 = vpop.f32.mrb[0].mxu0
        %3233 = vmatprep.mubr.f32.mxu0 0.0
        %3234 = vmatmul.mubr.f32.gmra.mrb[0].mxu0 %v2780
        %v3235 = vpop.f32.mrb[0].mxu0
        %v3236 = vadd.f32 0.0, %v3235
        %v3237 = vpop.f32.mrb[0].mxu0
        %3238 = vmatprep.mubr.f32.mxu0 0.0
        %3239 = vmatmul.mubr.f32.gmra.mrb[0].mxu0 %v2783
        %v3240 = vpop.f32.mrb[0].mxu0
        %v3241 = vadd.f32 0.0, %v3240
        %v3242 = vpop.f32.mrb[0].mxu0
        %3243 = vmatprep.mubr.f32.mxu0 0.0
        %3244 = vmatmul.mubr.f32.gmra.mrb[0].mxu0 %v2786
        %v3245 = vpop.f32.mrb[0].mxu0
        %v3246 = vadd.f32 0.0, %v3245
        %v3247 = vpop.f32.mrb[0].mxu0
        %3248 = vmatprep.mubr.f32.mxu0 0.0
        %3249 = vmatmul.mubr.f32.gmra.mrb[0].mxu0 %v2789
        %v3250 = vpop.f32.mrb[0].mxu0
        %v3251 = vadd.f32 0.0, %v3250
        %v3252 = vpop.f32.mrb[0].mxu0
        %3253 = vmatprep.mubr.f32.mxu0 0.0
        %3254 = vmatmul.mubr.f32.gmra.mrb[0].mxu0 %v2792
        %v3255 = vpop.f32.mrb[0].mxu0
        %v3256 = vadd.f32 0.0, %v3255
        %v3257 = vpop.f32.mrb[0].mxu0
        %3258 = vmatprep.mubr.f32.mxu0 0.0
        %3259 = vmatmul.mubr.f32.gmra.mrb[0].mxu0 %v2795
        %v3260 = vpop.f32.mrb[0].mxu0
        %v3261 = vadd.f32 0.0, %v3260
        %v3262 = vpop.f32.mrb[0].mxu0
        %3263 = vmatprep.mubr.f32.mxu0 0.0
        %3264 = vmatmul.mubr.f32.gmra.mrb[0].mxu0 %v2798
        %v3265 = vpop.f32.mrb[0].mxu0
        %v3266 = vadd.f32 0.0, %v3265
        %v3267 = vpop.f32.mrb[0].mxu0
        %3268 = vmatprep.mubr.f32.mxu0 0.0
        %3269 = vmatmul.mubr.f32.gmra.mrb[0].mxu0 %v2801
        %v3270 = vpop.f32.mrb[0].mxu0
        %v3271 = vadd.f32 0.0, %v3270
        %v3272 = vpop.f32.mrb[0].mxu0
        %3273 = vmatprep.mubr.f32.mxu0 0.0
        %3274 = vmatmul.mubr.f32.gmra.mrb[0].mxu0 %v2804
        %v3275 = vpop.f32.mrb[0].mxu0
        %v3276 = vadd.f32 0.0, %v3275
        %v3277 = vpop.f32.mrb[0].mxu0
        %3278 = vmatprep.mubr.f32.mxu0 0.0
        %3279 = vmatmul.mubr.f32.gmra.mrb[0].mxu0 %v2807
        %v3280 = vpop.f32.mrb[0].mxu0
        %v3281 = vadd.f32 0.0, %v3280
        %v3282 = vpop.f32.mrb[0].mxu0
        %3283 = vmatprep.mubr.f32.mxu0 0.0
        %3284 = vmatmul.mubr.f32.gmra.mrb[0].mxu0 %v2810
        %v3285 = vpop.f32.mrb[0].mxu0
        %v3286 = vadd.f32 0.0, %v3285
        %v3287 = vpop.f32.mrb[0].mxu0
        %3288 = vmatprep.mubr.f32.mxu0 0.0
        %3289 = vmatmul.mubr.f32.gmra.mrb[0].mxu0 %v2813
        %v3290 = vpop.f32.mrb[0].mxu0
        %v3291 = vadd.f32 0.0, %v3290
        %v3292 = vpop.f32.mrb[0].mxu0
        %3293 = vmatprep.mubr.f32.mxu0 0.0
        %3294 = vmatmul.mubr.f32.gmra.mrb[0].mxu0 %v2816
        %v3295 = vpop.f32.mrb[0].mxu0
        %v3296 = vadd.f32 0.0, %v3295
        %v3297 = vpop.f32.mrb[0].mxu0
        %3298 = vmatprep.mubr.f32.mxu0 0.0
        %3299 = vmatmul.mubr.f32.gmra.mrb[0].mxu0 %v2819
        %v3300 = vpop.f32.mrb[0].mxu0
        %v3301 = vadd.f32 0.0, %v3300
        %v3302 = vpop.f32.mrb[0].mxu0
        %3303 = vmatprep.mubr.f32.mxu0 0.0
        %3304 = vmatmul.mubr.f32.gmra.mrb[0].mxu0 %v2822
        %v3305 = vpop.f32.mrb[0].mxu0
        %v3306 = vadd.f32 0.0, %v3305
        %v3307 = vpop.f32.mrb[0].mxu0
        %3308 = vmatprep.mubr.f32.mxu0 0.0
        %3309 = vmatmul.mubr.f32.gmra.mrb[0].mxu0 %v2825
        %v3310 = vpop.f32.mrb[0].mxu0
        %v3311 = vadd.f32 0.0, %v3310
        %v3312 = vpop.f32.mrb[0].mxu0
        %3313 = vmatprep.mubr.f32.mxu0 0.0
        %3314 = vmatmul.mubr.f32.gmra.mrb[0].mxu0 %v2828
        %v3315 = vpop.f32.mrb[0].mxu0
        %v3316 = vadd.f32 0.0, %v3315
        %v3317 = vpop.f32.mrb[0].mxu0
        %3318 = vmatprep.mubr.f32.mxu0 0.0
        %3319 = vmatmul.mubr.f32.gmra.mrb[0].mxu0 %v2831
        %v3320 = vpop.f32.mrb[0].mxu0
        %v3321 = vadd.f32 0.0, %v3320
        %v3322 = vpop.f32.mrb[0].mxu0
        %3323 = vmatprep.mubr.f32.mxu0 0.0
        %3324 = vmatmul.mubr.f32.gmra.mrb[0].mxu0 %v2834
        %v3325 = vpop.f32.mrb[0].mxu0
        %v3326 = vadd.f32 0.0, %v3325
        %v3327 = vpop.f32.mrb[0].mxu0
        %3328 = vmatprep.mubr.f32.mxu0 0.0
        %3329 = vmatmul.mubr.f32.gmra.mrb[0].mxu0 %v2837
        %v3330 = vpop.f32.mrb[0].mxu0
        %v3331 = vadd.f32 0.0, %v3330
        %v3332 = vpop.f32.mrb[0].mxu0
        %3333 = vmatprep.mubr.f32.mxu0 0.0
        %3334 = vmatmul.mubr.f32.gmra.mrb[0].mxu0 %v2840
        %v3335 = vpop.f32.mrb[0].mxu0
        %v3336 = vadd.f32 0.0, %v3335
        %v3337 = vpop.f32.mrb[0].mxu0
        %3338 = vmatprep.mubr.f32.mxu0 0.0
        %3339 = vmatmul.mubr.f32.gmra.mrb[0].mxu0 %v2843
        %v3340 = vpop.f32.mrb[0].mxu0
        %v3341 = vadd.f32 0.0, %v3340
        %v3342 = vpop.f32.mrb[0].mxu0
        %3343 = vmatprep.mubr.f32.mxu0 0.0
        %3344 = vmatmul.mubr.f32.gmra.mrb[0].mxu0 %v2846
        %v3345 = vpop.f32.mrb[0].mxu0
        %v3346 = vadd.f32 0.0, %v3345
        %v3347 = vpop.f32.mrb[0].mxu0
        %3348 = vmatprep.mubr.f32.mxu0 0.0
        %3349 = vmatmul.mubr.f32.gmra.mrb[0].mxu0 %v2849
        %v3350 = vpop.f32.mrb[0].mxu0
        %v3351 = vadd.f32 0.0, %v3350
        %v3352 = vpop.f32.mrb[0].mxu0
        %3353 = vmatprep.mubr.f32.mxu0 0.0
        %3354 = vmatmul.mubr.f32.gmra.mrb[0].mxu0 %v2852
        %v3355 = vpop.f32.mrb[0].mxu0
        %v3356 = vadd.f32 0.0, %v3355
        %v3357 = vpop.f32.mrb[0].mxu0
        %3358 = vmatprep.mubr.f32.mxu0 0.0
        %3359 = vmatmul.mubr.f32.gmra.mrb[0].mxu0 %v2855
        %v3360 = vpop.f32.mrb[0].mxu0
        %v3361 = vadd.f32 0.0, %v3360
        %v3362 = vpop.f32.mrb[0].mxu0
        %3363 = vmatprep.mubr.f32.mxu0 0.0
        %3364 = vmatmul.mubr.f32.gmra.mrb[0].mxu0 %v2858
        %v3365 = vpop.f32.mrb[0].mxu0
        %v3366 = vadd.f32 0.0, %v3365
        %v3367 = vpop.f32.mrb[0].mxu0
        %3368 = vmatprep.mubr.f32.mxu0 0.0
        %3369 = vmatmul.mubr.f32.gmra.mrb[0].mxu0 %v2861
        %v3370 = vpop.f32.mrb[0].mxu0
        %v3371 = vadd.f32 0.0, %v3370
        %v3372 = vpop.f32.mrb[0].mxu0
        %3373 = vmatprep.mubr.f32.mxu0 0.0
        %3374 = vmatmul.mubr.f32.gmra.mrb[0].mxu0 %v2864
        %v3375 = vpop.f32.mrb[0].mxu0
        %v3376 = vadd.f32 0.0, %v3375
        %v3377 = vpop.f32.mrb[0].mxu0
        %3378 = vmatprep.mubr.f32.mxu0 0.0
        %3379 = vmatmul.mubr.f32.gmra.mrb[0].mxu0 %v2867
        %v3380 = vpop.f32.mrb[0].mxu0
        %v3381 = vadd.f32 0.0, %v3380
        %v3382 = vpop.f32.mrb[0].mxu0
        %3383 = vmatprep.mubr.f32.mxu0 0.0
        %3384 = vmatmul.mubr.f32.gmra.mrb[0].mxu0 %v2870
        %v3385 = vpop.f32.mrb[0].mxu0
        %v3386 = vadd.f32 0.0, %v3385
        %v3387 = vpop.f32.mrb[0].mxu0
        %3388 = vmatprep.mubr.f32.mxu0 0.0
        %3389 = vmatmul.mubr.f32.gmra.mrb[0].mxu0 %v2873
        %v3390 = vpop.f32.mrb[0].mxu0
        %v3391 = vadd.f32 0.0, %v3390
        %v3392 = vpop.f32.mrb[0].mxu0
        %3393 = vmatprep.mubr.f32.mxu0 0.0
        %3394 = vmatmul.mubr.f32.gmra.mrb[0].mxu0 %v2876
        %v3395 = vpop.f32.mrb[0].mxu0
        %v3396 = vadd.f32 0.0, %v3395
        %v3397 = vpop.f32.mrb[0].mxu0
        %3398 = vmatprep.mubr.f32.mxu0 0.0
        %3399 = vmatmul.mubr.f32.gmra.mrb[0].mxu0 %v2879
        %v3400 = vpop.f32.mrb[0].mxu0
        %v3401 = vadd.f32 0.0, %v3400
        %v3402 = vpop.f32.mrb[0].mxu0
        %3403 = vmatprep.mubr.f32.mxu0 0.0
        %3404 = vmatmul.mubr.f32.gmra.mrb[0].mxu0 %v2882
        %v3405 = vpop.f32.mrb[0].mxu0
        %v3406 = vadd.f32 0.0, %v3405
        %v3407 = vpop.f32.mrb[0].mxu0
        %3408 = vmatprep.mubr.f32.mxu0 0.0
        %3409 = vmatmul.mubr.f32.gmra.mrb[0].mxu0 %v2885
        %v3410 = vpop.f32.mrb[0].mxu0
        %v3411 = vadd.f32 0.0, %v3410
        %v3412 = vpop.f32.mrb[0].mxu0
        %3413 = vmatprep.mubr.f32.mxu0 0.0
        %3414 = vmatmul.mubr.f32.gmra.mrb[0].mxu0 %v2888
        %v3415 = vpop.f32.mrb[0].mxu0
        %v3416 = vadd.f32 0.0, %v3415
        %v3417 = vpop.f32.mrb[0].mxu0
        %3418 = vmatprep.mubr.f32.mxu0 0.0
        %3419 = vmatmul.mubr.f32.gmra.mrb[0].mxu0 %v2891
        %v3420 = vpop.f32.mrb[0].mxu0
        %v3421 = vadd.f32 0.0, %v3420
        %v3422 = vpop.f32.mrb[0].mxu0
        %3423 = vmatprep.mubr.f32.mxu0 0.0
        %3424 = vmatmul.mubr.f32.gmra.mrb[0].mxu0 %v2894
        %v3425 = vpop.f32.mrb[0].mxu0
        %v3426 = vadd.f32 0.0, %v3425
        %v3427 = vpop.f32.mrb[0].mxu0
        %3428 = vmatprep.mubr.f32.mxu0 0.0
        %3429 = vmatmul.mubr.f32.gmra.mrb[0].mxu0 %v2897
        %v3430 = vpop.f32.mrb[0].mxu0
        %v3431 = vadd.f32 0.0, %v3430
        %v3432 = vpop.f32.mrb[0].mxu0
        %3433 = vmatprep.mubr.f32.mxu0 0.0
        %3434 = vmatmul.mubr.f32.gmra.mrb[0].mxu0 %v2900
        %v3435 = vpop.f32.mrb[0].mxu0
        %v3436 = vadd.f32 0.0, %v3435
        %v3437 = vpop.f32.mrb[0].mxu0
        %3438 = vmatprep.mubr.f32.mxu0 0.0
        %3439 = vmatmul.mubr.f32.gmra.mrb[0].mxu0 %v2903
        %v3440 = vpop.f32.mrb[0].mxu0
        %v3441 = vadd.f32 0.0, %v3440
        %v3442 = vpop.f32.mrb[0].mxu0
        %3443 = vmatprep.mubr.f32.mxu0 0.0
        %3444 = vmatmul.mubr.f32.gmra.mrb[0].mxu0 %v2906
        %v3445 = vpop.f32.mrb[0].mxu0
        %v3446 = vadd.f32 0.0, %v3445
        %v3447 = vpop.f32.mrb[0].mxu0
        %3448 = vmatprep.mubr.f32.mxu0 0.0
        %3449 = vmatmul.mubr.f32.gmra.mrb[0].mxu0 %v2909
        %v3450 = vpop.f32.mrb[0].mxu0
        %v3451 = vadd.f32 0.0, %v3450
        %v3452 = vpop.f32.mrb[0].mxu0
        %3453 = vmatprep.mubr.f32.mxu0 0.0
        %3454 = vmatmul.mubr.f32.gmra.mrb[0].mxu0 %v2912
        %v3455 = vpop.f32.mrb[0].mxu0
        %v3456 = vadd.f32 0.0, %v3455
        %v3457 = vpop.f32.mrb[0].mxu0
        %3458 = vmatprep.mubr.f32.mxu0 0.0
        %3459 = vmatmul.mubr.f32.gmra.mrb[0].mxu0 %v2915
        %v3460 = vpop.f32.mrb[0].mxu0
        %v3461 = vadd.f32 0.0, %v3460
        %v3462 = vpop.f32.mrb[0].mxu0
        %3463 = vmatprep.mubr.f32.mxu0 0.0
        %3464 = vmatmul.mubr.f32.gmra.mrb[0].mxu0 %v2918
        %v3465 = vpop.f32.mrb[0].mxu0
        %v3466 = vadd.f32 0.0, %v3465
        %v3467 = vpop.f32.mrb[0].mxu0
        %3468 = vmatprep.mubr.f32.mxu0 0.0
        %3469 = vmatmul.mubr.f32.gmra.mrb[0].mxu0 %v2921
        %v3470 = vpop.f32.mrb[0].mxu0
        %v3471 = vadd.f32 0.0, %v3470
        %v3472 = vpop.f32.mrb[0].mxu0
        %3473 = vmatprep.mubr.f32.mxu0 0.0
        %3474 = vmatmul.mubr.f32.gmra.mrb[0].mxu0 %v2924
        %v3475 = vpop.f32.mrb[0].mxu0
        %v3476 = vadd.f32 0.0, %v3475
        %v3477 = vpop.f32.mrb[0].mxu0
        %3478 = vmatprep.mubr.f32.mxu0 0.0
        %3479 = vmatmul.mubr.f32.gmra.mrb[0].mxu0 %v2927
        %v3480 = vpop.f32.mrb[0].mxu0
        %v3481 = vadd.f32 0.0, %v3480
        %v3482 = vpop.f32.mrb[0].mxu0
        %3483 = vmatprep.mubr.f32.mxu0 0.0
        %3484 = vmatmul.mubr.f32.gmra.mrb[0].mxu0 %v2930
        %v3485 = vpop.f32.mrb[0].mxu0
        %v3486 = vadd.f32 0.0, %v3485
        %v3487 = vpop.f32.mrb[0].mxu0
        %3488 = vmatprep.mubr.f32.mxu0 0.0
        %3489 = vmatmul.mubr.f32.gmra.mrb[0].mxu0 %v2933
        %v3490 = vpop.f32.mrb[0].mxu0
        %v3491 = vadd.f32 0.0, %v3490
        %v3492 = vpop.f32.mrb[0].mxu0
        %3493 = vmatprep.mubr.f32.mxu0 0.0
        %3494 = vmatmul.mubr.f32.gmra.mrb[0].mxu0 %v2936
        %v3495 = vpop.f32.mrb[0].mxu0
        %v3496 = vadd.f32 0.0, %v3495
        %v3497 = vpop.f32.mrb[0].mxu0
        %3498 = vmatprep.mubr.f32.mxu0 0.0
        %3499 = vmatmul.mubr.f32.gmra.mrb[0].mxu0 %v2939
        %v3500 = vpop.f32.mrb[0].mxu0
        %v3501 = vadd.f32 0.0, %v3500
        %v3502 = vpop.f32.mrb[0].mxu0
        %3503 = vmatprep.mubr.f32.mxu0 0.0
        %3504 = vmatmul.mubr.f32.gmra.mrb[0].mxu0 %v2942
        %v3505 = vpop.f32.mrb[0].mxu0
        %v3506 = vadd.f32 0.0, %v3505
        %v3507 = vpop.f32.mrb[0].mxu0
        %3508 = vmatprep.mubr.f32.mxu0 0.0
        %3509 = vmatmul.mubr.f32.gmra.mrb[0].mxu0 %v2945
        %v3510 = vpop.f32.mrb[0].mxu0
        %v3511 = vadd.f32 0.0, %v3510
        %v3512 = vpop.f32.mrb[0].mxu0
        %3513 = vmatprep.mubr.f32.mxu0 0.0
        %3514 = vmatmul.mubr.f32.gmra.mrb[0].mxu0 %v2948
        %v3515 = vpop.f32.mrb[0].mxu0
        %v3516 = vadd.f32 0.0, %v3515
        %v3517 = vpop.f32.mrb[0].mxu0
        %3518 = vmatprep.mubr.f32.mxu0 0.0
        %3519 = vmatmul.mubr.f32.gmra.mrb[0].mxu0 %v2951
        %v3520 = vpop.f32.mrb[0].mxu0
        %v3521 = vadd.f32 0.0, %v3520
        %v3522 = vpop.f32.mrb[0].mxu0
        %3523 = vmatprep.mubr.f32.mxu0 0.0
        %3524 = vmatmul.mubr.f32.gmra.mrb[0].mxu0 %v2954
        %v3525 = vpop.f32.mrb[0].mxu0
        %v3526 = vadd.f32 0.0, %v3525
        %v3527 = vpop.f32.mrb[0].mxu0
        %3528 = vmatprep.mubr.f32.mxu0 0.0
        %3529 = vmatmul.mubr.f32.gmra.mrb[0].mxu0 %v2957
        %v3530 = vpop.f32.mrb[0].mxu0
        %v3531 = vadd.f32 0.0, %v3530
        %v3532 = vpop.f32.mrb[0].mxu0
        %3533 = vmatprep.mubr.f32.mxu0 0.0
        %3534 = vmatmul.mubr.f32.gmra.mrb[0].mxu0 %v2960
        %v3535 = vpop.f32.mrb[0].mxu0
        %v3536 = vadd.f32 0.0, %v3535
        %v3537 = vpop.f32.mrb[0].mxu0
        %3538 = vmatprep.mubr.f32.mxu0 0.0
        %3539 = vmatmul.mubr.f32.gmra.mrb[0].mxu0 %v2963
        %v3540 = vpop.f32.mrb[0].mxu0
        %v3541 = vadd.f32 0.0, %v3540
        %v3542 = vpop.f32.mrb[0].mxu0
        %3543 = vmatprep.mubr.f32.mxu0 0.0
        %3544 = vmatmul.mubr.f32.gmra.mrb[0].mxu0 %v2966
        %v3545 = vpop.f32.mrb[0].mxu0
        %v3546 = vadd.f32 0.0, %v3545
        %v3547 = vpop.f32.mrb[0].mxu0
        %3548 = vmatprep.mubr.f32.mxu0 0.0
        %3549 = vmatmul.mubr.f32.gmra.mrb[0].mxu0 %v2969
        %v3550 = vpop.f32.mrb[0].mxu0
        %v3551 = vadd.f32 0.0, %v3550
        %v3552 = vpop.f32.mrb[0].mxu0
        %3553 = vmatprep.mubr.f32.mxu0 0.0
        %3554 = vmatmul.mubr.f32.gmra.mrb[0].mxu0 %v2972
        %v3555 = vpop.f32.mrb[0].mxu0
        %v3556 = vadd.f32 0.0, %v3555
        %v3557 = vpop.f32.mrb[0].mxu0
        %3558 = vmatprep.mubr.f32.mxu0 0.0
        %3559 = vmatmul.mubr.f32.gmra.mrb[0].mxu0 %v2975
        %v3560 = vpop.f32.mrb[0].mxu0
        %v3561 = vadd.f32 0.0, %v3560
        %v3562 = vpop.f32.mrb[0].mxu0
        %3563 = vmatprep.mubr.f32.mxu0 0.0
        %3564 = vmatmul.mubr.f32.gmra.mrb[0].mxu0 %v2978
        %v3565 = vpop.f32.mrb[0].mxu0
        %v3566 = vadd.f32 0.0, %v3565
        %v3567 = vpop.f32.mrb[0].mxu0
        %3568 = vmatprep.mubr.f32.mxu0 0.0
        %3569 = vmatmul.mubr.f32.gmra.mrb[0].mxu0 %v2981
        %v3570 = vpop.f32.mrb[0].mxu0
        %v3571 = vadd.f32 0.0, %v3570
        %v3572 = vpop.f32.mrb[0].mxu0
        %3573 = vmatprep.mubr.f32.mxu0 0.0
        %3574 = vmatmul.mubr.f32.gmra.mrb[0].mxu0 %v2984
        %v3575 = vpop.f32.mrb[0].mxu0
        %v3576 = vadd.f32 0.0, %v3575
        %v3577 = vpop.f32.mrb[0].mxu0
        %3578 = vmatprep.mubr.f32.mxu0 0.0
        %3579 = vmatmul.mubr.f32.gmra.mrb[0].mxu0 %v2987
        %v3580 = vpop.f32.mrb[0].mxu0
        %v3581 = vadd.f32 0.0, %v3580
        %v3582 = vpop.f32.mrb[0].mxu0
        %3583 = vmatprep.mubr.f32.mxu0 0.0
        %3584 = vmatmul.mubr.f32.gmra.mrb[0].mxu0 %v2990
        %v3585 = vpop.f32.mrb[0].mxu0
        %v3586 = vadd.f32 0.0, %v3585
        %v3587 = vpop.f32.mrb[0].mxu0
        %3588 = vmatprep.mubr.f32.mxu0 0.0
        %3589 = vmatmul.mubr.f32.gmra.mrb[0].mxu0 %v2993
        %v3590 = vpop.f32.mrb[0].mxu0
        %v3591 = vadd.f32 0.0, %v3590
        %v3592 = vpop.f32.mrb[0].mxu0
        %3593 = vmatprep.mubr.f32.mxu0 0.0
        %3594 = vmatmul.mubr.f32.gmra.mrb[0].mxu0 %v2996
        %v3595 = vpop.f32.mrb[0].mxu0
        %v3596 = vadd.f32 0.0, %v3595
        %v3597 = vpop.f32.mrb[0].mxu0
        %3598 = vmatprep.mubr.f32.mxu0 0.0
        %3599 = vmatmul.mubr.f32.gmra.mrb[0].mxu0 %v2999
        %v3600 = vpop.f32.mrb[0].mxu0
        %v3601 = vadd.f32 0.0, %v3600
        %v3602 = vpop.f32.mrb[0].mxu0
        %3603 = vmatprep.mubr.f32.mxu0 0.0
        %3604 = vmatmul.mubr.f32.gmra.mrb[0].mxu0 %v3002
        %v3605 = vpop.f32.mrb[0].mxu0
        %v3606 = vadd.f32 0.0, %v3605
        %v3607 = vpop.f32.mrb[0].mxu0
        %3608 = vmatprep.mubr.f32.mxu0 0.0
        %3609 = vmatmul.mubr.f32.gmra.mrb[0].mxu0 %v3005
        %v3610 = vpop.f32.mrb[0].mxu0
        %v3611 = vadd.f32 0.0, %v3610
        %v3612 = vpop.f32.mrb[0].mxu0
        %3613 = vmatprep.mubr.f32.mxu0 0.0
        %3614 = vmatmul.mubr.f32.gmra.mrb[0].mxu0 %v3008
        %v3615 = vpop.f32.mrb[0].mxu0
        %v3616 = vadd.f32 0.0, %v3615
        %v3617 = vpop.f32.mrb[0].mxu0
        %3618 = vmatprep.mubr.f32.mxu0 0.0
        %3619 = vmatmul.mubr.f32.gmra.mrb[0].mxu0 %v3011
        %v3620 = vpop.f32.mrb[0].mxu0
        %v3621 = vadd.f32 0.0, %v3620
        %v3622 = vpop.f32.mrb[0].mxu0
        %3623 = vmatprep.mubr.f32.mxu0 0.0
        %3624 = vmatmul.mubr.f32.gmra.mrb[0].mxu0 %v3014
        %v3625 = vpop.f32.mrb[0].mxu0
        %v3626 = vadd.f32 0.0, %v3625
        %v3627 = vpop.f32.mrb[0].mxu0
        %3628 = vmatprep.mubr.f32.mxu0 0.0
        %3629 = vmatmul.mubr.f32.gmra.mrb[0].mxu0 %v3017
        %v3630 = vpop.f32.mrb[0].mxu0
        %v3631 = vadd.f32 0.0, %v3630
        %v3632 = vpop.f32.mrb[0].mxu0
        %3633 = vmatprep.mubr.f32.mxu0 0.0
        %3634 = vmatmul.mubr.f32.gmra.mrb[0].mxu0 %v3020
        %v3635 = vpop.f32.mrb[0].mxu0
        %v3636 = vadd.f32 0.0, %v3635
        %v3637 = vpop.f32.mrb[0].mxu0
        %3638 = vmatprep.mubr.f32.mxu0 0.0
        %3639 = vmatmul.mubr.f32.gmra.mrb[0].mxu0 %v3023
        %v3640 = vpop.f32.mrb[0].mxu0
        %v3641 = vadd.f32 0.0, %v3640
        %v3642 = vpop.f32.mrb[0].mxu0
        %3643 = vmatprep.mubr.f32.mxu0 0.0
        %3644 = vmatmul.mubr.f32.gmra.mrb[0].mxu0 %v3026
        %v3645 = vpop.f32.mrb[0].mxu0
        %v3646 = vadd.f32 0.0, %v3645
        %v3647 = vpop.f32.mrb[0].mxu0
        %3648 = vmatprep.mubr.f32.mxu0 0.0
        %3649 = vmatmul.mubr.f32.gmra.mrb[0].mxu0 %v3029
        %v3650 = vpop.f32.mrb[0].mxu0
        %v3651 = vadd.f32 0.0, %v3650
        %v3652 = vpop.f32.mrb[0].mxu0
        %3653 = vmatprep.mubr.f32.mxu0 0.0
        %3654 = vmatmul.mubr.f32.gmra.mrb[0].mxu0 %v3032
        %v3655 = vpop.f32.mrb[0].mxu0
        %v3656 = vadd.f32 0.0, %v3655
        %v3657 = vpop.f32.mrb[0].mxu0
        %3658 = vmatprep.mubr.f32.mxu0 0.0
        %3659 = vmatmul.mubr.f32.gmra.mrb[0].mxu0 %v3035
        %v3660 = vpop.f32.mrb[0].mxu0
        %v3661 = vadd.f32 0.0, %v3660
        %v3662 = vpop.f32.mrb[0].mxu0
        %3663 = vmatprep.mubr.f32.mxu0 0.0
        %3664 = vmatmul.mubr.f32.gmra.mrb[0].mxu0 %v3038
        %v3665 = vpop.f32.mrb[0].mxu0
        %v3666 = vadd.f32 0.0, %v3665
        %v3667 = vpop.f32.mrb[0].mxu0
        %3668 = vmatprep.mubr.f32.mxu0 0.0
        %3669 = vmatmul.mubr.f32.gmra.mrb[0].mxu0 %v3041
        %v3670 = vpop.f32.mrb[0].mxu0
        %v3671 = vadd.f32 0.0, %v3670
        %v3672 = vpop.f32.mrb[0].mxu0
        %3673 = vmatprep.mubr.f32.mxu0 0.0
        %3674 = vmatmul.mubr.f32.gmra.mrb[0].mxu0 %v3044
        %v3675 = vpop.f32.mrb[0].mxu0
        %v3676 = vadd.f32 0.0, %v3675
        %v3677 = vpop.f32.mrb[0].mxu0
        %3678 = vmatprep.mubr.f32.mxu0 0.0
        %3679 = vmatmul.mubr.f32.gmra.mrb[0].mxu0 %v3047
        %v3680 = vpop.f32.mrb[0].mxu0
        %v3681 = vadd.f32 0.0, %v3680
        %v3682 = vpop.f32.mrb[0].mxu0
        %3683 = vmatprep.mubr.f32.mxu0 0.0
        %3684 = vmatmul.mubr.f32.gmra.mrb[0].mxu0 %v3050
        %v3685 = vpop.f32.mrb[0].mxu0
        %v3686 = vadd.f32 0.0, %v3685
        %v3687 = vpop.f32.mrb[0].mxu0
        %3688 = vmatprep.mubr.f32.mxu0 0.0
        %3689 = vmatmul.mubr.f32.gmra.mrb[0].mxu0 %v3053
        %v3690 = vpop.f32.mrb[0].mxu0
        %v3691 = vadd.f32 0.0, %v3690
        %v3692 = vpop.f32.mrb[0].mxu0
        %3693 = vmatprep.mubr.f32.mxu0 0.0
        %3694 = vmatmul.mubr.f32.gmra.mrb[0].mxu0 %v3056
        %v3695 = vpop.f32.mrb[0].mxu0
        %v3696 = vadd.f32 0.0, %v3695
        %v3697 = vpop.f32.mrb[0].mxu0
        %3698 = vmatprep.mubr.f32.mxu0 0.0
        %3699 = vmatmul.mubr.f32.gmra.mrb[0].mxu0 %v3059
        %v3700 = vpop.f32.mrb[0].mxu0
        %v3701 = vadd.f32 0.0, %v3700
        %v3702 = vpop.f32.mrb[0].mxu0
        %3703 = vmatprep.mubr.f32.mxu0 0.0
        %3704 = vmatmul.mubr.f32.gmra.mrb[0].mxu0 %v3062
        %v3705 = vpop.f32.mrb[0].mxu0
        %v3706 = vadd.f32 0.0, %v3705
        %v3707 = vpop.f32.mrb[0].mxu0
        %3708 = vmatprep.mubr.f32.mxu0 0.0
        %3709 = vmatmul.mubr.f32.gmra.mrb[0].mxu0 %v3065
        %v3710 = vpop.f32.mrb[0].mxu0
        %v3711 = vadd.f32 0.0, %v3710
        %v3712 = vpop.f32.mrb[0].mxu0
        %3713 = vmatprep.mubr.f32.mxu0 0.0
        %3714 = vmatmul.mubr.f32.gmra.mrb[0].mxu0 %v3068
        %v3715 = vpop.f32.mrb[0].mxu0
        %v3716 = vadd.f32 0.0, %v3715
        %v3717 = vpop.f32.mrb[0].mxu0
        %3718 = vmatprep.mubr.f32.mxu0 0.0
        %3719 = vmatmul.mubr.f32.gmra.mrb[0].mxu0 %v3071
        %v3720 = vpop.f32.mrb[0].mxu0
        %v3721 = vadd.f32 0.0, %v3720
        %v3722 = vpop.f32.mrb[0].mxu0
        %3723 = vmatprep.mubr.f32.mxu0 0.0
        %3724 = vmatmul.mubr.f32.gmra.mrb[0].mxu0 %v3074
        %v3725 = vpop.f32.mrb[0].mxu0
        %v3726 = vadd.f32 0.0, %v3725
        %v3727 = vpop.f32.mrb[0].mxu0
        %3728 = vmatprep.mubr.f32.mxu0 0.0
        %3729 = vmatmul.mubr.f32.gmra.mrb[0].mxu0 %v3077
        %v3730 = vpop.f32.mrb[0].mxu0
        %v3731 = vadd.f32 0.0, %v3730
        %v3732 = vpop.f32.mrb[0].mxu0
        %3733 = vmatprep.mubr.f32.mxu0 0.0
        %3734 = vmatmul.mubr.f32.gmra.mrb[0].mxu0 %v3080
        %v3735 = vpop.f32.mrb[0].mxu0
        %v3736 = vadd.f32 0.0, %v3735
        %v3737 = vpop.f32.mrb[0].mxu0
        %3738 = vmatprep.mubr.f32.mxu0 0.0
        %3739 = vmatmul.mubr.f32.gmra.mrb[0].mxu0 %v3083
        %v3740 = vpop.f32.mrb[0].mxu0
        %v3741 = vadd.f32 0.0, %v3740
        %v3742 = vpop.f32.mrb[0].mxu0
        %3743 = vmatprep.mubr.f32.mxu0 0.0
        %3744 = vmatmul.mubr.f32.gmra.mrb[0].mxu0 %v3086
        %v3745 = vpop.f32.mrb[0].mxu0
        %v3746 = vadd.f32 0.0, %v3745
        %v3747 = vpop.f32.mrb[0].mxu0
        %3748 = vmatprep.mubr.f32.mxu0 0.0
        %3749 = vmatmul.mubr.f32.gmra.mrb[0].mxu0 %v3089
        %v3750 = vpop.f32.mrb[0].mxu0
        %v3751 = vadd.f32 0.0, %v3750
        %v3752 = vpop.f32.mrb[0].mxu0
        %3753 = vmatprep.mubr.f32.mxu0 0.0
        %3754 = vmatmul.mubr.f32.gmra.mrb[0].mxu0 %v3092
        %v3755 = vpop.f32.mrb[0].mxu0
        %v3756 = vadd.f32 0.0, %v3755
        %v3757 = vpop.f32.mrb[0].mxu0
        %3758 = vmatprep.mubr.f32.mxu0 0.0
        %3759 = vmatmul.mubr.f32.gmra.mrb[0].mxu0 %v3095
        %v3760 = vpop.f32.mrb[0].mxu0
        %v3761 = vadd.f32 0.0, %v3760
        %v3762 = vpop.f32.mrb[0].mxu0
        %3763 = vmatprep.mubr.f32.mxu0 0.0
        %3764 = vmatmul.mubr.f32.gmra.mrb[0].mxu0 %v3098
        %v3765 = vpop.f32.mrb[0].mxu0
        %v3766 = vadd.f32 0.0, %v3765
        %v3767 = vpop.f32.mrb[0].mxu0
        %3768 = vmatprep.mubr.f32.mxu0 0.0
        %3769 = vmatmul.mubr.f32.gmra.mrb[0].mxu0 %v3101
        %v3770 = vpop.f32.mrb[0].mxu0
        %v3771 = vadd.f32 0.0, %v3770
        %v3772 = vpop.f32.mrb[0].mxu0
        %3773 = vmatprep.mubr.f32.mxu0 0.0
        %3774 = vmatmul.mubr.f32.gmra.mrb[0].mxu0 %v3104
        %v3775 = vpop.f32.mrb[0].mxu0
        %v3776 = vadd.f32 0.0, %v3775
        %v3777 = vpop.f32.mrb[0].mxu0
        %3778 = vmatprep.mubr.f32.mxu0 0.0
        %3779 = vmatmul.mubr.f32.gmra.mrb[0].mxu0 %v3107
        %v3780 = vpop.f32.mrb[0].mxu0
        %v3781 = vadd.f32 0.0, %v3780
        %v3782 = vpop.f32.mrb[0].mxu0
        %3783 = vmatprep.mubr.f32.mxu0 0.0
        %3784 = vmatmul.mubr.f32.gmra.mrb[0].mxu0 %v3110
        %v3785 = vpop.f32.mrb[0].mxu0
        %v3786 = vadd.f32 0.0, %v3785
        %v3787 = vpop.f32.mrb[0].mxu0
        %3788 = vmatprep.mubr.f32.mxu0 0.0
        %3789 = vmatmul.mubr.f32.gmra.mrb[0].mxu0 %v3113
        %v3790 = vpop.f32.mrb[0].mxu0
        %v3791 = vadd.f32 0.0, %v3790
        %v3792 = vpop.f32.mrb[0].mxu0
        %3793 = vmatprep.mubr.f32.mxu0 0.0
        %3794 = vmatmul.mubr.f32.gmra.mrb[0].mxu0 %v3116
        %v3795 = vpop.f32.mrb[0].mxu0
        %v3796 = vadd.f32 0.0, %v3795
        %v3797 = vpop.f32.mrb[0].mxu0
        %3798 = vmatprep.mubr.f32.mxu0 0.0
        %3799 = vmatmul.mubr.f32.gmra.mrb[0].mxu0 %v3119
        %v3800 = vpop.f32.mrb[0].mxu0
        %v3801 = vadd.f32 0.0, %v3800
        %v3802 = vpop.f32.mrb[0].mxu0
        %3803 = vmatprep.mubr.f32.mxu0 0.0
        %3804 = vmatmul.mubr.f32.gmra.mrb[0].mxu0 %v3122
        %v3805 = vpop.f32.mrb[0].mxu0
        %v3806 = vadd.f32 0.0, %v3805
        %v3807 = vpop.f32.mrb[0].mxu0
        %3808 = vmatprep.mubr.f32.mxu0 0.0
        %3809 = vmatmul.mubr.f32.gmra.mrb[0].mxu0 %v3125
        %v3810 = vpop.f32.mrb[0].mxu0
        %v3811 = vadd.f32 0.0, %v3810
        %v3812 = vpop.f32.mrb[0].mxu0
        %3813 = vmatprep.mubr.f32.mxu0 0.0
        %3814 = vmatmul.mubr.f32.gmra.mrb[0].mxu0 %v3128
        %v3815 = vpop.f32.mrb[0].mxu0
        %v3816 = vadd.f32 0.0, %v3815
        %v3817 = vpop.f32.mrb[0].mxu0
        %3818 = vmatprep.mubr.f32.mxu0 0.0
        %3819 = vmatmul.mubr.f32.gmra.mrb[0].mxu0 %v3131
        %v3820 = vpop.f32.mrb[0].mxu0
        %v3821 = vadd.f32 0.0, %v3820
        %v3822 = vpop.f32.mrb[0].mxu0
        %3823 = vmatprep.mubr.f32.mxu0 0.0
        %3824 = vmatmul.mubr.f32.gmra.mrb[0].mxu0 %v3134
        %v3825 = vpop.f32.mrb[0].mxu0
        %v3826 = vadd.f32 0.0, %v3825
        %v3827 = vpop.f32.mrb[0].mxu0
        %3828 = vmatprep.mubr.f32.mxu0 0.0
        %3829 = vmatmul.mubr.f32.gmra.mrb[0].mxu0 %v3137
        %v3830 = vpop.f32.mrb[0].mxu0
        %v3831 = vadd.f32 0.0, %v3830
        %v3832 = vpop.f32.mrb[0].mxu0
        %3833 = vmatprep.mubr.f32.mxu0 0.0
        %3834 = vmatmul.mubr.f32.gmra.mrb[0].mxu0 %v3140
        %v3835 = vpop.f32.mrb[0].mxu0
        %v3836 = vadd.f32 0.0, %v3835
        %v3837 = vpop.f32.mrb[0].mxu0
        %3838 = vmatprep.mubr.f32.mxu0 0.0
        %3839 = vmatmul.mubr.f32.gmra.mrb[0].mxu0 %v3143
        %v3840 = vpop.f32.mrb[0].mxu0
        %v3841 = vadd.f32 0.0, %v3840
        %v3842 = vpop.f32.mrb[0].mxu0
        %3843 = vmatprep.mubr.f32.mxu0 0.0
        %3844 = vmatmul.mubr.f32.gmra.mrb[0].mxu0 %v3146
        %v3845 = vpop.f32.mrb[0].mxu0
        %v3846 = vadd.f32 0.0, %v3845
        %v3847 = vpop.f32.mrb[0].mxu0
        %3848 = vmatprep.mubr.f32.mxu0 0.0
        %3849 = vmatmul.mubr.f32.gmra.mrb[0].mxu0 %v3149
        %v3850 = vpop.f32.mrb[0].mxu0
        %v3851 = vadd.f32 0.0, %v3850
        %v3852 = vpop.f32.mrb[0].mxu0
        %3853 = vmatprep.mubr.f32.mxu0 0.0
        %3854 = vmatmul.mubr.f32.gmra.mrb[0].mxu0 %v3152
        %v3855 = vpop.f32.mrb[0].mxu0
        %v3856 = vadd.f32 0.0, %v3855
        %v3857 = vpop.f32.mrb[0].mxu0
        %3858 = vdwg.mxu0
        %v3859 = vadd.f32 %v2002, %v3221
        %v3860 = vadd.f32 %v2007, %v3226
        %v3861 = vadd.f32 %v2012, %v3231
        %v3862 = vadd.f32 %v2017, %v3236
        %v3863 = vadd.f32 %v2022, %v3241
        %v3864 = vadd.f32 %v2027, %v3246
        %v3865 = vadd.f32 %v2032, %v3251
        %v3866 = vadd.f32 %v2037, %v3256
        %v3867 = vadd.f32 %v2042, %v3261
        %v3868 = vadd.f32 %v2047, %v3266
        %v3869 = vadd.f32 %v2052, %v3271
        %v3870 = vadd.f32 %v2057, %v3276
        %v3871 = vadd.f32 %v2062, %v3281
        %v3872 = vadd.f32 %v2067, %v3286
        %v3873 = vadd.f32 %v2072, %v3291
        %v3874 = vadd.f32 %v2077, %v3296
        %v3875 = vadd.f32 %v2082, %v3301
        %v3876 = vadd.f32 %v2087, %v3306
        %v3877 = vadd.f32 %v2092, %v3311
        %v3878 = vadd.f32 %v2097, %v3316
        %v3879 = vadd.f32 %v2102, %v3321
        %v3880 = vadd.f32 %v2107, %v3326
        %v3881 = vadd.f32 %v2112, %v3331
        %v3882 = vadd.f32 %v2117, %v3336
        %v3883 = vadd.f32 %v2122, %v3341
        %v3884 = vadd.f32 %v2127, %v3346
        %v3885 = vadd.f32 %v2132, %v3351
        %v3886 = vadd.f32 %v2137, %v3356
        %v3887 = vadd.f32 %v2142, %v3361
        %v3888 = vadd.f32 %v2147, %v3366
        %v3889 = vadd.f32 %v2152, %v3371
        %v3890 = vadd.f32 %v2157, %v3376
        %v3891 = vadd.f32 %v2162, %v3381
        %v3892 = vadd.f32 %v2167, %v3386
        %v3893 = vadd.f32 %v2172, %v3391
        %v3894 = vadd.f32 %v2177, %v3396
        %v3895 = vadd.f32 %v2182, %v3401
        %v3896 = vadd.f32 %v2187, %v3406
        %v3897 = vadd.f32 %v2192, %v3411
        %v3898 = vadd.f32 %v2197, %v3416
        %v3899 = vadd.f32 %v2202, %v3421
        %v3900 = vadd.f32 %v2207, %v3426
        %v3901 = vadd.f32 %v2212, %v3431
        %v3902 = vadd.f32 %v2217, %v3436
        %v3903 = vadd.f32 %v2222, %v3441
        %v3904 = vadd.f32 %v2227, %v3446
        %v3905 = vadd.f32 %v2232, %v3451
        %v3906 = vadd.f32 %v2237, %v3456
        %v3907 = vadd.f32 %v2242, %v3461
        %v3908 = vadd.f32 %v2247, %v3466
        %v3909 = vadd.f32 %v2252, %v3471
        %v3910 = vadd.f32 %v2257, %v3476
        %v3911 = vadd.f32 %v2262, %v3481
        %v3912 = vadd.f32 %v2267, %v3486
        %v3913 = vadd.f32 %v2272, %v3491
        %v3914 = vadd.f32 %v2277, %v3496
        %v3915 = vadd.f32 %v2282, %v3501
        %v3916 = vadd.f32 %v2287, %v3506
        %v3917 = vadd.f32 %v2292, %v3511
        %v3918 = vadd.f32 %v2297, %v3516
        %v3919 = vadd.f32 %v2302, %v3521
        %v3920 = vadd.f32 %v2307, %v3526
        %v3921 = vadd.f32 %v2312, %v3531
        %v3922 = vadd.f32 %v2317, %v3536
        %v3923 = vadd.f32 %v2322, %v3541
        %v3924 = vadd.f32 %v2327, %v3546
        %v3925 = vadd.f32 %v2332, %v3551
        %v3926 = vadd.f32 %v2337, %v3556
        %v3927 = vadd.f32 %v2342, %v3561
        %v3928 = vadd.f32 %v2347, %v3566
        %v3929 = vadd.f32 %v2352, %v3571
        %v3930 = vadd.f32 %v2357, %v3576
        %v3931 = vadd.f32 %v2362, %v3581
        %v3932 = vadd.f32 %v2367, %v3586
        %v3933 = vadd.f32 %v2372, %v3591
        %v3934 = vadd.f32 %v2377, %v3596
        %v3935 = vadd.f32 %v2382, %v3601
        %v3936 = vadd.f32 %v2387, %v3606
        %v3937 = vadd.f32 %v2392, %v3611
        %v3938 = vadd.f32 %v2397, %v3616
        %v3939 = vadd.f32 %v2402, %v3621
        %v3940 = vadd.f32 %v2407, %v3626
        %v3941 = vadd.f32 %v2412, %v3631
        %v3942 = vadd.f32 %v2417, %v3636
        %v3943 = vadd.f32 %v2422, %v3641
        %v3944 = vadd.f32 %v2427, %v3646
        %v3945 = vadd.f32 %v2432, %v3651
        %v3946 = vadd.f32 %v2437, %v3656
        %v3947 = vadd.f32 %v2442, %v3661
        %v3948 = vadd.f32 %v2447, %v3666
        %v3949 = vadd.f32 %v2452, %v3671
        %v3950 = vadd.f32 %v2457, %v3676
        %v3951 = vadd.f32 %v2462, %v3681
        %v3952 = vadd.f32 %v2467, %v3686
        %v3953 = vadd.f32 %v2472, %v3691
        %v3954 = vadd.f32 %v2477, %v3696
        %v3955 = vadd.f32 %v2482, %v3701
        %v3956 = vadd.f32 %v2487, %v3706
        %v3957 = vadd.f32 %v2492, %v3711
        %v3958 = vadd.f32 %v2497, %v3716
        %v3959 = vadd.f32 %v2502, %v3721
        %v3960 = vadd.f32 %v2507, %v3726
        %v3961 = vadd.f32 %v2512, %v3731
        %v3962 = vadd.f32 %v2517, %v3736
        %v3963 = vadd.f32 %v2522, %v3741
        %v3964 = vadd.f32 %v2527, %v3746
        %v3965 = vadd.f32 %v2532, %v3751
        %v3966 = vadd.f32 %v2537, %v3756
        %v3967 = vadd.f32 %v2542, %v3761
        %v3968 = vadd.f32 %v2547, %v3766
        %v3969 = vadd.f32 %v2552, %v3771
        %v3970 = vadd.f32 %v2557, %v3776
        %v3971 = vadd.f32 %v2562, %v3781
        %v3972 = vadd.f32 %v2567, %v3786
        %v3973 = vadd.f32 %v2572, %v3791
        %v3974 = vadd.f32 %v2577, %v3796
        %v3975 = vadd.f32 %v2582, %v3801
        %v3976 = vadd.f32 %v2587, %v3806
        %v3977 = vadd.f32 %v2592, %v3811
        %v3978 = vadd.f32 %v2597, %v3816
        %v3979 = vadd.f32 %v2602, %v3821
        %v3980 = vadd.f32 %v2607, %v3826
        %v3981 = vadd.f32 %v2612, %v3831
        %v3982 = vadd.f32 %v2617, %v3836
        %v3983 = vadd.f32 %v2622, %v3841
        %v3984 = vadd.f32 %v2627, %v3846
        %v3985 = vadd.f32 %v2632, %v3851
        %v3986 = vadd.f32 %v2637, %v3856
        %s3987 = scalar_lea.vmem %s199, 24
        %v3988 = vld [vmem:[%s3987] sm:$0xff]
        %v3989 = vld [vmem:[%s3987 + $0x8] sm:$0xff]
        %v3990 = vld [vmem:[%s3987 + $0x18] sm:$0xff]
        %v3991 = vld [vmem:[%s3987 + $0x20] sm:$0xff]
        %v3992 = vld [vmem:[%s3987 + $0x30] sm:$0xff]
        %v3993 = vld [vmem:[%s3987 + $0x38] sm:$0xff]
        %v3994 = vld [vmem:[%s3987 + $0x48] sm:$0xff]
        %v3995 = vld [vmem:[%s3987 + $0x50] sm:$0xff]
        %v3996 = vld [vmem:[%s3987 + $0x60] sm:$0xff]
        %v3997 = vld [vmem:[%s3987 + $0x68] sm:$0xff]
        %v3998 = vld [vmem:[%s3987 + $0x78] sm:$0xff]
        %v3999 = vld [vmem:[%s3987 + $0x80] sm:$0xff]
        %v4000 = vld [vmem:[%s3987 + $0x90] sm:$0xff]
        %v4001 = vld [vmem:[%s3987 + $0x98] sm:$0xff]
        %v4002 = vld [vmem:[%s3987 + $0xa8] sm:$0xff]
        %v4003 = vld [vmem:[%s3987 + $0xb0] sm:$0xff]
        %v4004 = vld [vmem:[%s3987 + $0xc0] sm:$0xff]
        %v4005 = vld [vmem:[%s3987 + $0xc8] sm:$0xff]
        %v4006 = vld [vmem:[%s3987 + $0xd8] sm:$0xff]
        %v4007 = vld [vmem:[%s3987 + $0xe0] sm:$0xff]
        %v4008 = vld [vmem:[%s3987 + $0xf0] sm:$0xff]
        %v4009 = vld [vmem:[%s3987 + $0xf8] sm:$0xff]
        %v4010 = vld [vmem:[%s3987 + $0x108] sm:$0xff]
        %v4011 = vld [vmem:[%s3987 + $0x110] sm:$0xff]
        %v4012 = vld [vmem:[%s3987 + $0x120] sm:$0xff]
        %v4013 = vld [vmem:[%s3987 + $0x128] sm:$0xff]
        %v4014 = vld [vmem:[%s3987 + $0x138] sm:$0xff]
        %v4015 = vld [vmem:[%s3987 + $0x140] sm:$0xff]
        %v4016 = vld [vmem:[%s3987 + $0x150] sm:$0xff]
        %v4017 = vld [vmem:[%s3987 + $0x158] sm:$0xff]
        %v4018 = vld [vmem:[%s3987 + $0x168] sm:$0xff]
        %v4019 = vld [vmem:[%s3987 + $0x170] sm:$0xff]
        %v4020 = vld [vmem:[%s3987 + $0x1b0] sm:$0xff]
        %v4021 = vld [vmem:[%s3987 + $0x1b8] sm:$0xff]
        %v4022 = vld [vmem:[%s3987 + $0x1c8] sm:$0xff]
        %v4023 = vld [vmem:[%s3987 + $0x1d0] sm:$0xff]
        %v4024 = vld [vmem:[%s3987 + $0x1e0] sm:$0xff]
        %v4025 = vld [vmem:[%s3987 + $0x1e8] sm:$0xff]
        %v4026 = vld [vmem:[%s3987 + $0x1f8] sm:$0xff]
        %v4027 = vld [vmem:[%s3987 + $0x200] sm:$0xff]
        %v4028 = vld [vmem:[%s3987 + $0x210] sm:$0xff]
        %v4029 = vld [vmem:[%s3987 + $0x218] sm:$0xff]
        %v4030 = vld [vmem:[%s3987 + $0x228] sm:$0xff]
        %v4031 = vld [vmem:[%s3987 + $0x230] sm:$0xff]
        %v4032 = vld [vmem:[%s3987 + $0x240] sm:$0xff]
        %v4033 = vld [vmem:[%s3987 + $0x248] sm:$0xff]
        %v4034 = vld [vmem:[%s3987 + $0x258] sm:$0xff]
        %v4035 = vld [vmem:[%s3987 + $0x260] sm:$0xff]
        %v4036 = vld [vmem:[%s3987 + $0x270] sm:$0xff]
        %v4037 = vld [vmem:[%s3987 + $0x278] sm:$0xff]
        %v4038 = vld [vmem:[%s3987 + $0x288] sm:$0xff]
        %v4039 = vld [vmem:[%s3987 + $0x290] sm:$0xff]
        %v4040 = vld [vmem:[%s3987 + $0x2a0] sm:$0xff]
        %v4041 = vld [vmem:[%s3987 + $0x2a8] sm:$0xff]
        %v4042 = vld [vmem:[%s3987 + $0x2b8] sm:$0xff]
        %v4043 = vld [vmem:[%s3987 + $0x2c0] sm:$0xff]
        %v4044 = vld [vmem:[%s3987 + $0x2d0] sm:$0xff]
        %v4045 = vld [vmem:[%s3987 + $0x2d8] sm:$0xff]
        %v4046 = vld [vmem:[%s3987 + $0x2e8] sm:$0xff]
        %v4047 = vld [vmem:[%s3987 + $0x2f0] sm:$0xff]
        %v4048 = vld [vmem:[%s3987 + $0x300] sm:$0xff]
        %v4049 = vld [vmem:[%s3987 + $0x308] sm:$0xff]
        %v4050 = vld [vmem:[%s3987 + $0x318] sm:$0xff]
        %v4051 = vld [vmem:[%s3987 + $0x320] sm:$0xff]
        %v4052 = vld [vmem:[%s3987 + $0x360] sm:$0xff]
        %v4053 = vld [vmem:[%s3987 + $0x368] sm:$0xff]
        %v4054 = vld [vmem:[%s3987 + $0x378] sm:$0xff]
        %v4055 = vld [vmem:[%s3987 + $0x380] sm:$0xff]
        %v4056 = vld [vmem:[%s3987 + $0x390] sm:$0xff]
        %v4057 = vld [vmem:[%s3987 + $0x398] sm:$0xff]
        %v4058 = vld [vmem:[%s3987 + $0x3a8] sm:$0xff]
        %v4059 = vld [vmem:[%s3987 + $0x3b0] sm:$0xff]
        %v4060 = vld [vmem:[%s3987 + $0x3c0] sm:$0xff]
        %v4061 = vld [vmem:[%s3987 + $0x3c8] sm:$0xff]
        %v4062 = vld [vmem:[%s3987 + $0x3d8] sm:$0xff]
        %v4063 = vld [vmem:[%s3987 + $0x3e0] sm:$0xff]
        %v4064 = vld [vmem:[%s3987 + $0x3f0] sm:$0xff]
        %v4065 = vld [vmem:[%s3987 + $0x3f8] sm:$0xff]
        %v4066 = vld [vmem:[%s3987 + $0x408] sm:$0xff]
        %v4067 = vld [vmem:[%s3987 + $0x410] sm:$0xff]
        %v4068 = vld [vmem:[%s3987 + $0x420] sm:$0xff]
        %v4069 = vld [vmem:[%s3987 + $0x428] sm:$0xff]
        %v4070 = vld [vmem:[%s3987 + $0x438] sm:$0xff]
        %v4071 = vld [vmem:[%s3987 + $0x440] sm:$0xff]
        %v4072 = vld [vmem:[%s3987 + $0x450] sm:$0xff]
        %v4073 = vld [vmem:[%s3987 + $0x458] sm:$0xff]
        %v4074 = vld [vmem:[%s3987 + $0x468] sm:$0xff]
        %v4075 = vld [vmem:[%s3987 + $0x470] sm:$0xff]
        %v4076 = vld [vmem:[%s3987 + $0x480] sm:$0xff]
        %v4077 = vld [vmem:[%s3987 + $0x488] sm:$0xff]
        %v4078 = vld [vmem:[%s3987 + $0x498] sm:$0xff]
        %v4079 = vld [vmem:[%s3987 + $0x4a0] sm:$0xff]
        %v4080 = vld [vmem:[%s3987 + $0x4b0] sm:$0xff]
        %v4081 = vld [vmem:[%s3987 + $0x4b8] sm:$0xff]
        %v4082 = vld [vmem:[%s3987 + $0x4c8] sm:$0xff]
        %v4083 = vld [vmem:[%s3987 + $0x4d0] sm:$0xff]
        %v4084 = vld [vmem:[%s3987 + $0x510] sm:$0xff]
        %v4085 = vld [vmem:[%s3987 + $0x518] sm:$0xff]
        %v4086 = vld [vmem:[%s3987 + $0x528] sm:$0xff]
        %v4087 = vld [vmem:[%s3987 + $0x530] sm:$0xff]
        %v4088 = vld [vmem:[%s3987 + $0x540] sm:$0xff]
        %v4089 = vld [vmem:[%s3987 + $0x548] sm:$0xff]
        %v4090 = vld [vmem:[%s3987 + $0x558] sm:$0xff]
        %v4091 = vld [vmem:[%s3987 + $0x560] sm:$0xff]
        %v4092 = vld [vmem:[%s3987 + $0x570] sm:$0xff]
        %v4093 = vld [vmem:[%s3987 + $0x578] sm:$0xff]
        %v4094 = vld [vmem:[%s3987 + $0x588] sm:$0xff]
        %v4095 = vld [vmem:[%s3987 + $0x590] sm:$0xff]
        %v4096 = vld [vmem:[%s3987 + $0x5a0] sm:$0xff]
        %v4097 = vld [vmem:[%s3987 + $0x5a8] sm:$0xff]
        %v4098 = vld [vmem:[%s3987 + $0x5b8] sm:$0xff]
        %v4099 = vld [vmem:[%s3987 + $0x5c0] sm:$0xff]
        %v4100 = vld [vmem:[%s3987 + $0x5d0] sm:$0xff]
        %v4101 = vld [vmem:[%s3987 + $0x5d8] sm:$0xff]
        %v4102 = vld [vmem:[%s3987 + $0x5e8] sm:$0xff]
        %v4103 = vld [vmem:[%s3987 + $0x5f0] sm:$0xff]
        %v4104 = vld [vmem:[%s3987 + $0x600] sm:$0xff]
        %v4105 = vld [vmem:[%s3987 + $0x608] sm:$0xff]
        %v4106 = vld [vmem:[%s3987 + $0x618] sm:$0xff]
        %v4107 = vld [vmem:[%s3987 + $0x620] sm:$0xff]
        %v4108 = vld [vmem:[%s3987 + $0x630] sm:$0xff]
        %v4109 = vld [vmem:[%s3987 + $0x638] sm:$0xff]
        %v4110 = vld [vmem:[%s3987 + $0x648] sm:$0xff]
        %v4111 = vld [vmem:[%s3987 + $0x650] sm:$0xff]
        %v4112 = vld [vmem:[%s3987 + $0x660] sm:$0xff]
        %v4113 = vld [vmem:[%s3987 + $0x668] sm:$0xff]
        %v4114 = vld [vmem:[%s3987 + $0x678] sm:$0xff]
        %v4115 = vld [vmem:[%s3987 + $0x680] sm:$0xff]
        %s4116 = scalar_lea.vmem %s1, 24
        %v4117 = vld [vmem:[%s4116] sm:$0xff]
        %v4119 = vsel %vm461, %v3988, 0
        %v4122 = vsel %vm461, %v3989, 0
        %v4125 = vsel %vm461, %v3990, 0
        %v4128 = vsel %vm461, %v3991, 0
        %v4131 = vsel %vm461, %v3992, 0
        %v4134 = vsel %vm461, %v3993, 0
        %v4137 = vsel %vm461, %v3994, 0
        %v4140 = vsel %vm461, %v3995, 0
        %v4143 = vsel %vm461, %v3996, 0
        %v4146 = vsel %vm461, %v3997, 0
        %v4149 = vsel %vm461, %v3998, 0
        %v4152 = vsel %vm461, %v3999, 0
        %v4155 = vsel %vm461, %v4000, 0
        %v4158 = vsel %vm461, %v4001, 0
        %v4161 = vsel %vm461, %v4002, 0
        %v4164 = vsel %vm461, %v4003, 0
        %v4167 = vsel %vm461, %v4004, 0
        %v4170 = vsel %vm461, %v4005, 0
        %v4173 = vsel %vm461, %v4006, 0
        %v4176 = vsel %vm461, %v4007, 0
        %v4179 = vsel %vm461, %v4008, 0
        %v4182 = vsel %vm461, %v4009, 0
        %v4185 = vsel %vm461, %v4010, 0
        %v4188 = vsel %vm461, %v4011, 0
        %v4191 = vsel %vm461, %v4012, 0
        %v4194 = vsel %vm461, %v4013, 0
        %v4197 = vsel %vm461, %v4014, 0
        %v4200 = vsel %vm461, %v4015, 0
        %v4203 = vsel %vm461, %v4016, 0
        %v4206 = vsel %vm461, %v4017, 0
        %v4209 = vsel %vm461, %v4018, 0
        %v4212 = vsel %vm461, %v4019, 0
        %v4215 = vsel %vm461, %v4020, 0
        %v4218 = vsel %vm461, %v4021, 0
        %v4221 = vsel %vm461, %v4022, 0
        %v4224 = vsel %vm461, %v4023, 0
        %v4227 = vsel %vm461, %v4024, 0
        %v4230 = vsel %vm461, %v4025, 0
        %v4233 = vsel %vm461, %v4026, 0
        %v4236 = vsel %vm461, %v4027, 0
        %v4239 = vsel %vm461, %v4028, 0
        %v4242 = vsel %vm461, %v4029, 0
        %v4245 = vsel %vm461, %v4030, 0
        %v4248 = vsel %vm461, %v4031, 0
        %v4251 = vsel %vm461, %v4032, 0
        %v4254 = vsel %vm461, %v4033, 0
        %v4257 = vsel %vm461, %v4034, 0
        %v4260 = vsel %vm461, %v4035, 0
        %v4263 = vsel %vm461, %v4036, 0
        %v4266 = vsel %vm461, %v4037, 0
        %v4269 = vsel %vm461, %v4038, 0
        %v4272 = vsel %vm461, %v4039, 0
        %v4275 = vsel %vm461, %v4040, 0
        %v4278 = vsel %vm461, %v4041, 0
        %v4281 = vsel %vm461, %v4042, 0
        %v4284 = vsel %vm461, %v4043, 0
        %v4287 = vsel %vm461, %v4044, 0
        %v4290 = vsel %vm461, %v4045, 0
        %v4293 = vsel %vm461, %v4046, 0
        %v4296 = vsel %vm461, %v4047, 0
        %v4299 = vsel %vm461, %v4048, 0
        %v4302 = vsel %vm461, %v4049, 0
        %v4305 = vsel %vm461, %v4050, 0
        %v4308 = vsel %vm461, %v4051, 0
        %v4311 = vsel %vm461, %v4052, 0
        %v4314 = vsel %vm461, %v4053, 0
        %v4317 = vsel %vm461, %v4054, 0
        %v4320 = vsel %vm461, %v4055, 0
        %v4323 = vsel %vm461, %v4056, 0
        %v4326 = vsel %vm461, %v4057, 0
        %v4329 = vsel %vm461, %v4058, 0
        %v4332 = vsel %vm461, %v4059, 0
        %v4335 = vsel %vm461, %v4060, 0
        %v4338 = vsel %vm461, %v4061, 0
        %v4341 = vsel %vm461, %v4062, 0
        %v4344 = vsel %vm461, %v4063, 0
        %v4347 = vsel %vm461, %v4064, 0
        %v4350 = vsel %vm461, %v4065, 0
        %v4353 = vsel %vm461, %v4066, 0
        %v4356 = vsel %vm461, %v4067, 0
        %v4359 = vsel %vm461, %v4068, 0
        %v4362 = vsel %vm461, %v4069, 0
        %v4365 = vsel %vm461, %v4070, 0
        %v4368 = vsel %vm461, %v4071, 0
        %v4371 = vsel %vm461, %v4072, 0
        %v4374 = vsel %vm461, %v4073, 0
        %v4377 = vsel %vm461, %v4074, 0
        %v4380 = vsel %vm461, %v4075, 0
        %v4383 = vsel %vm461, %v4076, 0
        %v4386 = vsel %vm461, %v4077, 0
        %v4389 = vsel %vm461, %v4078, 0
        %v4392 = vsel %vm461, %v4079, 0
        %v4395 = vsel %vm461, %v4080, 0
        %v4398 = vsel %vm461, %v4081, 0
        %v4401 = vsel %vm461, %v4082, 0
        %v4404 = vsel %vm461, %v4083, 0
        %v4407 = vsel %vm461, %v4084, 0
        %v4410 = vsel %vm461, %v4085, 0
        %v4413 = vsel %vm461, %v4086, 0
        %v4416 = vsel %vm461, %v4087, 0
        %v4419 = vsel %vm461, %v4088, 0
        %v4422 = vsel %vm461, %v4089, 0
        %v4425 = vsel %vm461, %v4090, 0
        %v4428 = vsel %vm461, %v4091, 0
        %v4431 = vsel %vm461, %v4092, 0
        %v4434 = vsel %vm461, %v4093, 0
        %v4437 = vsel %vm461, %v4094, 0
        %v4440 = vsel %vm461, %v4095, 0
        %v4443 = vsel %vm461, %v4096, 0
        %v4446 = vsel %vm461, %v4097, 0
        %v4449 = vsel %vm461, %v4098, 0
        %v4452 = vsel %vm461, %v4099, 0
        %v4455 = vsel %vm461, %v4100, 0
        %v4458 = vsel %vm461, %v4101, 0
        %v4461 = vsel %vm461, %v4102, 0
        %v4464 = vsel %vm461, %v4103, 0
        %v4467 = vsel %vm461, %v4104, 0
        %v4470 = vsel %vm461, %v4105, 0
        %v4473 = vsel %vm461, %v4106, 0
        %v4476 = vsel %vm461, %v4107, 0
        %v4479 = vsel %vm461, %v4108, 0
        %v4482 = vsel %vm461, %v4109, 0
        %v4485 = vsel %vm461, %v4110, 0
        %v4488 = vsel %vm461, %v4111, 0
        %v4491 = vsel %vm461, %v4112, 0
        %v4494 = vsel %vm461, %v4113, 0
        %v4497 = vsel %vm461, %v4114, 0
        %v4500 = vsel %vm461, %v4115, 0
        %4502 = vmatprep.subr.mxu0 0.0
        %4503 = vmatpush1.msra.mxu0 %v4117
        %4504 = vmatprep.subr.mxu0 0.0
        %4505 = vmatpush1.msra.mxu0 0.0
        %4506 = vmatprep.subr.mxu0 0.0
        %4507 = vmatpush1.msra.mxu0 0.0
        %4508 = vmatprep.subr.mxu0 0.0
        %4509 = vmatpush1.msra.mxu0 0.0
        %4510 = vmatprep.subr.mxu0 0.0
        %4511 = vmatpush1.msra.mxu0 0.0
        %4512 = vmatprep.subr.mxu0 0.0
        %4513 = vmatpush1.msra.mxu0 0.0
        %4514 = vmatprep.subr.mxu0 0.0
        %4515 = vmatpush1.msra.mxu0 0.0
        %4516 = vmatprep.subr.mxu0 0.0
        %4517 = vmatpush1.msra.mxu0 0.0
        %4518 = vmatprep.subr.mxu0 0.0
        %4519 = vmatpush1.msra.mxu0 0.0
        %4520 = vmatprep.subr.mxu0 0.0
        %4521 = vmatpush1.msra.mxu0 0.0
        %4522 = vmatprep.subr.mxu0 0.0
        %4523 = vmatpush1.msra.mxu0 0.0
        %4524 = vmatprep.subr.mxu0 0.0
        %4525 = vmatpush1.msra.mxu0 0.0
        %4526 = vmatprep.subr.mxu0 0.0
        %4527 = vmatpush1.msra.mxu0 0.0
        %4528 = vmatprep.subr.mxu0 0.0
        %4529 = vmatpush1.msra.mxu0 0.0
        %4530 = vmatprep.subr.mxu0 0.0
        %4531 = vmatpush1.msra.mxu0 0.0
        %4532 = vmatprep.subr.mxu0 0.0
        %4533 = vmatpush1.msra.mxu0 0.0
        %4534 = vmatprep.subr.mxu0 0.0
        %4535 = vmatpush1.msra.mxu0 0.0
        %4536 = vmatprep.subr.mxu0 0.0
        %4537 = vmatpush1.msra.mxu0 0.0
        %4538 = vmatprep.subr.mxu0 0.0
        %4539 = vmatpush1.msra.mxu0 0.0
        %4540 = vmatprep.subr.mxu0 0.0
        %4541 = vmatpush1.msra.mxu0 0.0
        %4542 = vmatprep.subr.mxu0 0.0
        %4543 = vmatpush1.msra.mxu0 0.0
        %4544 = vmatprep.subr.mxu0 0.0
        %4545 = vmatpush1.msra.mxu0 0.0
        %4546 = vmatprep.subr.mxu0 0.0
        %4547 = vmatpush1.msra.mxu0 0.0
        %4548 = vmatprep.subr.mxu0 0.0
        %4549 = vmatpush1.msra.mxu0 0.0
        %4550 = vmatprep.subr.mxu0 0.0
        %4551 = vmatpush1.msra.mxu0 0.0
        %4552 = vmatprep.subr.mxu0 0.0
        %4553 = vmatpush1.msra.mxu0 0.0
        %4554 = vmatprep.subr.mxu0 0.0
        %4555 = vmatpush1.msra.mxu0 0.0
        %4556 = vmatprep.subr.mxu0 0.0
        %4557 = vmatpush1.msra.mxu0 0.0
        %4558 = vmatprep.subr.mxu0 0.0
        %4559 = vmatpush1.msra.mxu0 0.0
        %4560 = vmatprep.subr.mxu0 0.0
        %4561 = vmatpush1.msra.mxu0 0.0
        %4562 = vmatprep.subr.mxu0 0.0
        %4563 = vmatpush1.msra.mxu0 0.0
        %4564 = vmatprep.subr.mxu0 0.0
        %4565 = vmatpush1.msra.mxu0 0.0
        %4566 = vmatprep.mubr.f32.mxu0 0.0
        %4567 = vmatmul.mubr.f32.gmra.mrb[0].mxu0 %v4119
        %v4568 = vpop.f32.mrb[0].mxu0
        %v4569 = vadd.f32 0.0, %v4568
        %v4570 = vpop.f32.mrb[0].mxu0
        %4571 = vmatprep.mubr.f32.mxu0 0.0
        %4572 = vmatmul.mubr.f32.gmra.mrb[0].mxu0 %v4122
        %v4573 = vpop.f32.mrb[0].mxu0
        %v4574 = vadd.f32 0.0, %v4573
        %v4575 = vpop.f32.mrb[0].mxu0
        %4576 = vmatprep.mubr.f32.mxu0 0.0
        %4577 = vmatmul.mubr.f32.gmra.mrb[0].mxu0 %v4125
        %v4578 = vpop.f32.mrb[0].mxu0
        %v4579 = vadd.f32 0.0, %v4578
        %v4580 = vpop.f32.mrb[0].mxu0
        %4581 = vmatprep.mubr.f32.mxu0 0.0
        %4582 = vmatmul.mubr.f32.gmra.mrb[0].mxu0 %v4128
        %v4583 = vpop.f32.mrb[0].mxu0
        %v4584 = vadd.f32 0.0, %v4583
        %v4585 = vpop.f32.mrb[0].mxu0
        %4586 = vmatprep.mubr.f32.mxu0 0.0
        %4587 = vmatmul.mubr.f32.gmra.mrb[0].mxu0 %v4131
        %v4588 = vpop.f32.mrb[0].mxu0
        %v4589 = vadd.f32 0.0, %v4588
        %v4590 = vpop.f32.mrb[0].mxu0
        %4591 = vmatprep.mubr.f32.mxu0 0.0
        %4592 = vmatmul.mubr.f32.gmra.mrb[0].mxu0 %v4134
        %v4593 = vpop.f32.mrb[0].mxu0
        %v4594 = vadd.f32 0.0, %v4593
        %v4595 = vpop.f32.mrb[0].mxu0
        %4596 = vmatprep.mubr.f32.mxu0 0.0
        %4597 = vmatmul.mubr.f32.gmra.mrb[0].mxu0 %v4137
        %v4598 = vpop.f32.mrb[0].mxu0
        %v4599 = vadd.f32 0.0, %v4598
        %v4600 = vpop.f32.mrb[0].mxu0
        %4601 = vmatprep.mubr.f32.mxu0 0.0
        %4602 = vmatmul.mubr.f32.gmra.mrb[0].mxu0 %v4140
        %v4603 = vpop.f32.mrb[0].mxu0
        %v4604 = vadd.f32 0.0, %v4603
        %v4605 = vpop.f32.mrb[0].mxu0
        %4606 = vmatprep.mubr.f32.mxu0 0.0
        %4607 = vmatmul.mubr.f32.gmra.mrb[0].mxu0 %v4143
        %v4608 = vpop.f32.mrb[0].mxu0
        %v4609 = vadd.f32 0.0, %v4608
        %v4610 = vpop.f32.mrb[0].mxu0
        %4611 = vmatprep.mubr.f32.mxu0 0.0
        %4612 = vmatmul.mubr.f32.gmra.mrb[0].mxu0 %v4146
        %v4613 = vpop.f32.mrb[0].mxu0
        %v4614 = vadd.f32 0.0, %v4613
        %v4615 = vpop.f32.mrb[0].mxu0
        %4616 = vmatprep.mubr.f32.mxu0 0.0
        %4617 = vmatmul.mubr.f32.gmra.mrb[0].mxu0 %v4149
        %v4618 = vpop.f32.mrb[0].mxu0
        %v4619 = vadd.f32 0.0, %v4618
        %v4620 = vpop.f32.mrb[0].mxu0
        %4621 = vmatprep.mubr.f32.mxu0 0.0
        %4622 = vmatmul.mubr.f32.gmra.mrb[0].mxu0 %v4152
        %v4623 = vpop.f32.mrb[0].mxu0
        %v4624 = vadd.f32 0.0, %v4623
        %v4625 = vpop.f32.mrb[0].mxu0
        %4626 = vmatprep.mubr.f32.mxu0 0.0
        %4627 = vmatmul.mubr.f32.gmra.mrb[0].mxu0 %v4155
        %v4628 = vpop.f32.mrb[0].mxu0
        %v4629 = vadd.f32 0.0, %v4628
        %v4630 = vpop.f32.mrb[0].mxu0
        %4631 = vmatprep.mubr.f32.mxu0 0.0
        %4632 = vmatmul.mubr.f32.gmra.mrb[0].mxu0 %v4158
        %v4633 = vpop.f32.mrb[0].mxu0
        %v4634 = vadd.f32 0.0, %v4633
        %v4635 = vpop.f32.mrb[0].mxu0
        %4636 = vmatprep.mubr.f32.mxu0 0.0
        %4637 = vmatmul.mubr.f32.gmra.mrb[0].mxu0 %v4161
        %v4638 = vpop.f32.mrb[0].mxu0
        %v4639 = vadd.f32 0.0, %v4638
        %v4640 = vpop.f32.mrb[0].mxu0
        %4641 = vmatprep.mubr.f32.mxu0 0.0
        %4642 = vmatmul.mubr.f32.gmra.mrb[0].mxu0 %v4164
        %v4643 = vpop.f32.mrb[0].mxu0
        %v4644 = vadd.f32 0.0, %v4643
        %v4645 = vpop.f32.mrb[0].mxu0
        %4646 = vmatprep.mubr.f32.mxu0 0.0
        %4647 = vmatmul.mubr.f32.gmra.mrb[0].mxu0 %v4167
        %v4648 = vpop.f32.mrb[0].mxu0
        %v4649 = vadd.f32 0.0, %v4648
        %v4650 = vpop.f32.mrb[0].mxu0
        %4651 = vmatprep.mubr.f32.mxu0 0.0
        %4652 = vmatmul.mubr.f32.gmra.mrb[0].mxu0 %v4170
        %v4653 = vpop.f32.mrb[0].mxu0
        %v4654 = vadd.f32 0.0, %v4653
        %v4655 = vpop.f32.mrb[0].mxu0
        %4656 = vmatprep.mubr.f32.mxu0 0.0
        %4657 = vmatmul.mubr.f32.gmra.mrb[0].mxu0 %v4173
        %v4658 = vpop.f32.mrb[0].mxu0
        %v4659 = vadd.f32 0.0, %v4658
        %v4660 = vpop.f32.mrb[0].mxu0
        %4661 = vmatprep.mubr.f32.mxu0 0.0
        %4662 = vmatmul.mubr.f32.gmra.mrb[0].mxu0 %v4176
        %v4663 = vpop.f32.mrb[0].mxu0
        %v4664 = vadd.f32 0.0, %v4663
        %v4665 = vpop.f32.mrb[0].mxu0
        %4666 = vmatprep.mubr.f32.mxu0 0.0
        %4667 = vmatmul.mubr.f32.gmra.mrb[0].mxu0 %v4179
        %v4668 = vpop.f32.mrb[0].mxu0
        %v4669 = vadd.f32 0.0, %v4668
        %v4670 = vpop.f32.mrb[0].mxu0
        %4671 = vmatprep.mubr.f32.mxu0 0.0
        %4672 = vmatmul.mubr.f32.gmra.mrb[0].mxu0 %v4182
        %v4673 = vpop.f32.mrb[0].mxu0
        %v4674 = vadd.f32 0.0, %v4673
        %v4675 = vpop.f32.mrb[0].mxu0
        %4676 = vmatprep.mubr.f32.mxu0 0.0
        %4677 = vmatmul.mubr.f32.gmra.mrb[0].mxu0 %v4185
        %v4678 = vpop.f32.mrb[0].mxu0
        %v4679 = vadd.f32 0.0, %v4678
        %v4680 = vpop.f32.mrb[0].mxu0
        %4681 = vmatprep.mubr.f32.mxu0 0.0
        %4682 = vmatmul.mubr.f32.gmra.mrb[0].mxu0 %v4188
        %v4683 = vpop.f32.mrb[0].mxu0
        %v4684 = vadd.f32 0.0, %v4683
        %v4685 = vpop.f32.mrb[0].mxu0
        %4686 = vmatprep.mubr.f32.mxu0 0.0
        %4687 = vmatmul.mubr.f32.gmra.mrb[0].mxu0 %v4191
        %v4688 = vpop.f32.mrb[0].mxu0
        %v4689 = vadd.f32 0.0, %v4688
        %v4690 = vpop.f32.mrb[0].mxu0
        %4691 = vmatprep.mubr.f32.mxu0 0.0
        %4692 = vmatmul.mubr.f32.gmra.mrb[0].mxu0 %v4194
        %v4693 = vpop.f32.mrb[0].mxu0
        %v4694 = vadd.f32 0.0, %v4693
        %v4695 = vpop.f32.mrb[0].mxu0
        %4696 = vmatprep.mubr.f32.mxu0 0.0
        %4697 = vmatmul.mubr.f32.gmra.mrb[0].mxu0 %v4197
        %v4698 = vpop.f32.mrb[0].mxu0
        %v4699 = vadd.f32 0.0, %v4698
        %v4700 = vpop.f32.mrb[0].mxu0
        %4701 = vmatprep.mubr.f32.mxu0 0.0
        %4702 = vmatmul.mubr.f32.gmra.mrb[0].mxu0 %v4200
        %v4703 = vpop.f32.mrb[0].mxu0
        %v4704 = vadd.f32 0.0, %v4703
        %v4705 = vpop.f32.mrb[0].mxu0
        %4706 = vmatprep.mubr.f32.mxu0 0.0
        %4707 = vmatmul.mubr.f32.gmra.mrb[0].mxu0 %v4203
        %v4708 = vpop.f32.mrb[0].mxu0
        %v4709 = vadd.f32 0.0, %v4708
        %v4710 = vpop.f32.mrb[0].mxu0
        %4711 = vmatprep.mubr.f32.mxu0 0.0
        %4712 = vmatmul.mubr.f32.gmra.mrb[0].mxu0 %v4206
        %v4713 = vpop.f32.mrb[0].mxu0
        %v4714 = vadd.f32 0.0, %v4713
        %v4715 = vpop.f32.mrb[0].mxu0
        %4716 = vmatprep.mubr.f32.mxu0 0.0
        %4717 = vmatmul.mubr.f32.gmra.mrb[0].mxu0 %v4209
        %v4718 = vpop.f32.mrb[0].mxu0
        %v4719 = vadd.f32 0.0, %v4718
        %v4720 = vpop.f32.mrb[0].mxu0
        %4721 = vmatprep.mubr.f32.mxu0 0.0
        %4722 = vmatmul.mubr.f32.gmra.mrb[0].mxu0 %v4212
        %v4723 = vpop.f32.mrb[0].mxu0
        %v4724 = vadd.f32 0.0, %v4723
        %v4725 = vpop.f32.mrb[0].mxu0
        %4726 = vmatprep.mubr.f32.mxu0 0.0
        %4727 = vmatmul.mubr.f32.gmra.mrb[0].mxu0 %v4215
        %v4728 = vpop.f32.mrb[0].mxu0
        %v4729 = vadd.f32 0.0, %v4728
        %v4730 = vpop.f32.mrb[0].mxu0
        %4731 = vmatprep.mubr.f32.mxu0 0.0
        %4732 = vmatmul.mubr.f32.gmra.mrb[0].mxu0 %v4218
        %v4733 = vpop.f32.mrb[0].mxu0
        %v4734 = vadd.f32 0.0, %v4733
        %v4735 = vpop.f32.mrb[0].mxu0
        %4736 = vmatprep.mubr.f32.mxu0 0.0
        %4737 = vmatmul.mubr.f32.gmra.mrb[0].mxu0 %v4221
        %v4738 = vpop.f32.mrb[0].mxu0
        %v4739 = vadd.f32 0.0, %v4738
        %v4740 = vpop.f32.mrb[0].mxu0
        %4741 = vmatprep.mubr.f32.mxu0 0.0
        %4742 = vmatmul.mubr.f32.gmra.mrb[0].mxu0 %v4224
        %v4743 = vpop.f32.mrb[0].mxu0
        %v4744 = vadd.f32 0.0, %v4743
        %v4745 = vpop.f32.mrb[0].mxu0
        %4746 = vmatprep.mubr.f32.mxu0 0.0
        %4747 = vmatmul.mubr.f32.gmra.mrb[0].mxu0 %v4227
        %v4748 = vpop.f32.mrb[0].mxu0
        %v4749 = vadd.f32 0.0, %v4748
        %v4750 = vpop.f32.mrb[0].mxu0
        %4751 = vmatprep.mubr.f32.mxu0 0.0
        %4752 = vmatmul.mubr.f32.gmra.mrb[0].mxu0 %v4230
        %v4753 = vpop.f32.mrb[0].mxu0
        %v4754 = vadd.f32 0.0, %v4753
        %v4755 = vpop.f32.mrb[0].mxu0
        %4756 = vmatprep.mubr.f32.mxu0 0.0
        %4757 = vmatmul.mubr.f32.gmra.mrb[0].mxu0 %v4233
        %v4758 = vpop.f32.mrb[0].mxu0
        %v4759 = vadd.f32 0.0, %v4758
        %v4760 = vpop.f32.mrb[0].mxu0
        %4761 = vmatprep.mubr.f32.mxu0 0.0
        %4762 = vmatmul.mubr.f32.gmra.mrb[0].mxu0 %v4236
        %v4763 = vpop.f32.mrb[0].mxu0
        %v4764 = vadd.f32 0.0, %v4763
        %v4765 = vpop.f32.mrb[0].mxu0
        %4766 = vmatprep.mubr.f32.mxu0 0.0
        %4767 = vmatmul.mubr.f32.gmra.mrb[0].mxu0 %v4239
        %v4768 = vpop.f32.mrb[0].mxu0
        %v4769 = vadd.f32 0.0, %v4768
        %v4770 = vpop.f32.mrb[0].mxu0
        %4771 = vmatprep.mubr.f32.mxu0 0.0
        %4772 = vmatmul.mubr.f32.gmra.mrb[0].mxu0 %v4242
        %v4773 = vpop.f32.mrb[0].mxu0
        %v4774 = vadd.f32 0.0, %v4773
        %v4775 = vpop.f32.mrb[0].mxu0
        %4776 = vmatprep.mubr.f32.mxu0 0.0
        %4777 = vmatmul.mubr.f32.gmra.mrb[0].mxu0 %v4245
        %v4778 = vpop.f32.mrb[0].mxu0
        %v4779 = vadd.f32 0.0, %v4778
        %v4780 = vpop.f32.mrb[0].mxu0
        %4781 = vmatprep.mubr.f32.mxu0 0.0
        %4782 = vmatmul.mubr.f32.gmra.mrb[0].mxu0 %v4248
        %v4783 = vpop.f32.mrb[0].mxu0
        %v4784 = vadd.f32 0.0, %v4783
        %v4785 = vpop.f32.mrb[0].mxu0
        %4786 = vmatprep.mubr.f32.mxu0 0.0
        %4787 = vmatmul.mubr.f32.gmra.mrb[0].mxu0 %v4251
        %v4788 = vpop.f32.mrb[0].mxu0
        %v4789 = vadd.f32 0.0, %v4788
        %v4790 = vpop.f32.mrb[0].mxu0
        %4791 = vmatprep.mubr.f32.mxu0 0.0
        %4792 = vmatmul.mubr.f32.gmra.mrb[0].mxu0 %v4254
        %v4793 = vpop.f32.mrb[0].mxu0
        %v4794 = vadd.f32 0.0, %v4793
        %v4795 = vpop.f32.mrb[0].mxu0
        %4796 = vmatprep.mubr.f32.mxu0 0.0
        %4797 = vmatmul.mubr.f32.gmra.mrb[0].mxu0 %v4257
        %v4798 = vpop.f32.mrb[0].mxu0
        %v4799 = vadd.f32 0.0, %v4798
        %v4800 = vpop.f32.mrb[0].mxu0
        %4801 = vmatprep.mubr.f32.mxu0 0.0
        %4802 = vmatmul.mubr.f32.gmra.mrb[0].mxu0 %v4260
        %v4803 = vpop.f32.mrb[0].mxu0
        %v4804 = vadd.f32 0.0, %v4803
        %v4805 = vpop.f32.mrb[0].mxu0
        %4806 = vmatprep.mubr.f32.mxu0 0.0
        %4807 = vmatmul.mubr.f32.gmra.mrb[0].mxu0 %v4263
        %v4808 = vpop.f32.mrb[0].mxu0
        %v4809 = vadd.f32 0.0, %v4808
        %v4810 = vpop.f32.mrb[0].mxu0
        %4811 = vmatprep.mubr.f32.mxu0 0.0
        %4812 = vmatmul.mubr.f32.gmra.mrb[0].mxu0 %v4266
        %v4813 = vpop.f32.mrb[0].mxu0
        %v4814 = vadd.f32 0.0, %v4813
        %v4815 = vpop.f32.mrb[0].mxu0
        %4816 = vmatprep.mubr.f32.mxu0 0.0
        %4817 = vmatmul.mubr.f32.gmra.mrb[0].mxu0 %v4269
        %v4818 = vpop.f32.mrb[0].mxu0
        %v4819 = vadd.f32 0.0, %v4818
        %v4820 = vpop.f32.mrb[0].mxu0
        %4821 = vmatprep.mubr.f32.mxu0 0.0
        %4822 = vmatmul.mubr.f32.gmra.mrb[0].mxu0 %v4272
        %v4823 = vpop.f32.mrb[0].mxu0
        %v4824 = vadd.f32 0.0, %v4823
        %v4825 = vpop.f32.mrb[0].mxu0
        %4826 = vmatprep.mubr.f32.mxu0 0.0
        %4827 = vmatmul.mubr.f32.gmra.mrb[0].mxu0 %v4275
        %v4828 = vpop.f32.mrb[0].mxu0
        %v4829 = vadd.f32 0.0, %v4828
        %v4830 = vpop.f32.mrb[0].mxu0
        %4831 = vmatprep.mubr.f32.mxu0 0.0
        %4832 = vmatmul.mubr.f32.gmra.mrb[0].mxu0 %v4278
        %v4833 = vpop.f32.mrb[0].mxu0
        %v4834 = vadd.f32 0.0, %v4833
        %v4835 = vpop.f32.mrb[0].mxu0
        %4836 = vmatprep.mubr.f32.mxu0 0.0
        %4837 = vmatmul.mubr.f32.gmra.mrb[0].mxu0 %v4281
        %v4838 = vpop.f32.mrb[0].mxu0
        %v4839 = vadd.f32 0.0, %v4838
        %v4840 = vpop.f32.mrb[0].mxu0
        %4841 = vmatprep.mubr.f32.mxu0 0.0
        %4842 = vmatmul.mubr.f32.gmra.mrb[0].mxu0 %v4284
        %v4843 = vpop.f32.mrb[0].mxu0
        %v4844 = vadd.f32 0.0, %v4843
        %v4845 = vpop.f32.mrb[0].mxu0
        %4846 = vmatprep.mubr.f32.mxu0 0.0
        %4847 = vmatmul.mubr.f32.gmra.mrb[0].mxu0 %v4287
        %v4848 = vpop.f32.mrb[0].mxu0
        %v4849 = vadd.f32 0.0, %v4848
        %v4850 = vpop.f32.mrb[0].mxu0
        %4851 = vmatprep.mubr.f32.mxu0 0.0
        %4852 = vmatmul.mubr.f32.gmra.mrb[0].mxu0 %v4290
        %v4853 = vpop.f32.mrb[0].mxu0
        %v4854 = vadd.f32 0.0, %v4853
        %v4855 = vpop.f32.mrb[0].mxu0
        %4856 = vmatprep.mubr.f32.mxu0 0.0
        %4857 = vmatmul.mubr.f32.gmra.mrb[0].mxu0 %v4293
        %v4858 = vpop.f32.mrb[0].mxu0
        %v4859 = vadd.f32 0.0, %v4858
        %v4860 = vpop.f32.mrb[0].mxu0
        %4861 = vmatprep.mubr.f32.mxu0 0.0
        %4862 = vmatmul.mubr.f32.gmra.mrb[0].mxu0 %v4296
        %v4863 = vpop.f32.mrb[0].mxu0
        %v4864 = vadd.f32 0.0, %v4863
        %v4865 = vpop.f32.mrb[0].mxu0
        %4866 = vmatprep.mubr.f32.mxu0 0.0
        %4867 = vmatmul.mubr.f32.gmra.mrb[0].mxu0 %v4299
        %v4868 = vpop.f32.mrb[0].mxu0
        %v4869 = vadd.f32 0.0, %v4868
        %v4870 = vpop.f32.mrb[0].mxu0
        %4871 = vmatprep.mubr.f32.mxu0 0.0
        %4872 = vmatmul.mubr.f32.gmra.mrb[0].mxu0 %v4302
        %v4873 = vpop.f32.mrb[0].mxu0
        %v4874 = vadd.f32 0.0, %v4873
        %v4875 = vpop.f32.mrb[0].mxu0
        %4876 = vmatprep.mubr.f32.mxu0 0.0
        %4877 = vmatmul.mubr.f32.gmra.mrb[0].mxu0 %v4305
        %v4878 = vpop.f32.mrb[0].mxu0
        %v4879 = vadd.f32 0.0, %v4878
        %v4880 = vpop.f32.mrb[0].mxu0
        %4881 = vmatprep.mubr.f32.mxu0 0.0
        %4882 = vmatmul.mubr.f32.gmra.mrb[0].mxu0 %v4308
        %v4883 = vpop.f32.mrb[0].mxu0
        %v4884 = vadd.f32 0.0, %v4883
        %v4885 = vpop.f32.mrb[0].mxu0
        %4886 = vmatprep.mubr.f32.mxu0 0.0
        %4887 = vmatmul.mubr.f32.gmra.mrb[0].mxu0 %v4311
        %v4888 = vpop.f32.mrb[0].mxu0
        %v4889 = vadd.f32 0.0, %v4888
        %v4890 = vpop.f32.mrb[0].mxu0
        %4891 = vmatprep.mubr.f32.mxu0 0.0
        %4892 = vmatmul.mubr.f32.gmra.mrb[0].mxu0 %v4314
        %v4893 = vpop.f32.mrb[0].mxu0
        %v4894 = vadd.f32 0.0, %v4893
        %v4895 = vpop.f32.mrb[0].mxu0
        %4896 = vmatprep.mubr.f32.mxu0 0.0
        %4897 = vmatmul.mubr.f32.gmra.mrb[0].mxu0 %v4317
        %v4898 = vpop.f32.mrb[0].mxu0
        %v4899 = vadd.f32 0.0, %v4898
        %v4900 = vpop.f32.mrb[0].mxu0
        %4901 = vmatprep.mubr.f32.mxu0 0.0
        %4902 = vmatmul.mubr.f32.gmra.mrb[0].mxu0 %v4320
        %v4903 = vpop.f32.mrb[0].mxu0
        %v4904 = vadd.f32 0.0, %v4903
        %v4905 = vpop.f32.mrb[0].mxu0
        %4906 = vmatprep.mubr.f32.mxu0 0.0
        %4907 = vmatmul.mubr.f32.gmra.mrb[0].mxu0 %v4323
        %v4908 = vpop.f32.mrb[0].mxu0
        %v4909 = vadd.f32 0.0, %v4908
        %v4910 = vpop.f32.mrb[0].mxu0
        %4911 = vmatprep.mubr.f32.mxu0 0.0
        %4912 = vmatmul.mubr.f32.gmra.mrb[0].mxu0 %v4326
        %v4913 = vpop.f32.mrb[0].mxu0
        %v4914 = vadd.f32 0.0, %v4913
        %v4915 = vpop.f32.mrb[0].mxu0
        %4916 = vmatprep.mubr.f32.mxu0 0.0
        %4917 = vmatmul.mubr.f32.gmra.mrb[0].mxu0 %v4329
        %v4918 = vpop.f32.mrb[0].mxu0
        %v4919 = vadd.f32 0.0, %v4918
        %v4920 = vpop.f32.mrb[0].mxu0
        %4921 = vmatprep.mubr.f32.mxu0 0.0
        %4922 = vmatmul.mubr.f32.gmra.mrb[0].mxu0 %v4332
        %v4923 = vpop.f32.mrb[0].mxu0
        %v4924 = vadd.f32 0.0, %v4923
        %v4925 = vpop.f32.mrb[0].mxu0
        %4926 = vmatprep.mubr.f32.mxu0 0.0
        %4927 = vmatmul.mubr.f32.gmra.mrb[0].mxu0 %v4335
        %v4928 = vpop.f32.mrb[0].mxu0
        %v4929 = vadd.f32 0.0, %v4928
        %v4930 = vpop.f32.mrb[0].mxu0
        %4931 = vmatprep.mubr.f32.mxu0 0.0
        %4932 = vmatmul.mubr.f32.gmra.mrb[0].mxu0 %v4338
        %v4933 = vpop.f32.mrb[0].mxu0
        %v4934 = vadd.f32 0.0, %v4933
        %v4935 = vpop.f32.mrb[0].mxu0
        %4936 = vmatprep.mubr.f32.mxu0 0.0
        %4937 = vmatmul.mubr.f32.gmra.mrb[0].mxu0 %v4341
        %v4938 = vpop.f32.mrb[0].mxu0
        %v4939 = vadd.f32 0.0, %v4938
        %v4940 = vpop.f32.mrb[0].mxu0
        %4941 = vmatprep.mubr.f32.mxu0 0.0
        %4942 = vmatmul.mubr.f32.gmra.mrb[0].mxu0 %v4344
        %v4943 = vpop.f32.mrb[0].mxu0
        %v4944 = vadd.f32 0.0, %v4943
        %v4945 = vpop.f32.mrb[0].mxu0
        %4946 = vmatprep.mubr.f32.mxu0 0.0
        %4947 = vmatmul.mubr.f32.gmra.mrb[0].mxu0 %v4347
        %v4948 = vpop.f32.mrb[0].mxu0
        %v4949 = vadd.f32 0.0, %v4948
        %v4950 = vpop.f32.mrb[0].mxu0
        %4951 = vmatprep.mubr.f32.mxu0 0.0
        %4952 = vmatmul.mubr.f32.gmra.mrb[0].mxu0 %v4350
        %v4953 = vpop.f32.mrb[0].mxu0
        %v4954 = vadd.f32 0.0, %v4953
        %v4955 = vpop.f32.mrb[0].mxu0
        %4956 = vmatprep.mubr.f32.mxu0 0.0
        %4957 = vmatmul.mubr.f32.gmra.mrb[0].mxu0 %v4353
        %v4958 = vpop.f32.mrb[0].mxu0
        %v4959 = vadd.f32 0.0, %v4958
        %v4960 = vpop.f32.mrb[0].mxu0
        %4961 = vmatprep.mubr.f32.mxu0 0.0
        %4962 = vmatmul.mubr.f32.gmra.mrb[0].mxu0 %v4356
        %v4963 = vpop.f32.mrb[0].mxu0
        %v4964 = vadd.f32 0.0, %v4963
        %v4965 = vpop.f32.mrb[0].mxu0
        %4966 = vmatprep.mubr.f32.mxu0 0.0
        %4967 = vmatmul.mubr.f32.gmra.mrb[0].mxu0 %v4359
        %v4968 = vpop.f32.mrb[0].mxu0
        %v4969 = vadd.f32 0.0, %v4968
        %v4970 = vpop.f32.mrb[0].mxu0
        %4971 = vmatprep.mubr.f32.mxu0 0.0
        %4972 = vmatmul.mubr.f32.gmra.mrb[0].mxu0 %v4362
        %v4973 = vpop.f32.mrb[0].mxu0
        %v4974 = vadd.f32 0.0, %v4973
        %v4975 = vpop.f32.mrb[0].mxu0
        %4976 = vmatprep.mubr.f32.mxu0 0.0
        %4977 = vmatmul.mubr.f32.gmra.mrb[0].mxu0 %v4365
        %v4978 = vpop.f32.mrb[0].mxu0
        %v4979 = vadd.f32 0.0, %v4978
        %v4980 = vpop.f32.mrb[0].mxu0
        %4981 = vmatprep.mubr.f32.mxu0 0.0
        %4982 = vmatmul.mubr.f32.gmra.mrb[0].mxu0 %v4368
        %v4983 = vpop.f32.mrb[0].mxu0
        %v4984 = vadd.f32 0.0, %v4983
        %v4985 = vpop.f32.mrb[0].mxu0
        %4986 = vmatprep.mubr.f32.mxu0 0.0
        %4987 = vmatmul.mubr.f32.gmra.mrb[0].mxu0 %v4371
        %v4988 = vpop.f32.mrb[0].mxu0
        %v4989 = vadd.f32 0.0, %v4988
        %v4990 = vpop.f32.mrb[0].mxu0
        %4991 = vmatprep.mubr.f32.mxu0 0.0
        %4992 = vmatmul.mubr.f32.gmra.mrb[0].mxu0 %v4374
        %v4993 = vpop.f32.mrb[0].mxu0
        %v4994 = vadd.f32 0.0, %v4993
        %v4995 = vpop.f32.mrb[0].mxu0
        %4996 = vmatprep.mubr.f32.mxu0 0.0
        %4997 = vmatmul.mubr.f32.gmra.mrb[0].mxu0 %v4377
        %v4998 = vpop.f32.mrb[0].mxu0
        %v4999 = vadd.f32 0.0, %v4998
        %v5000 = vpop.f32.mrb[0].mxu0
        %5001 = vmatprep.mubr.f32.mxu0 0.0
        %5002 = vmatmul.mubr.f32.gmra.mrb[0].mxu0 %v4380
        %v5003 = vpop.f32.mrb[0].mxu0
        %v5004 = vadd.f32 0.0, %v5003
        %v5005 = vpop.f32.mrb[0].mxu0
        %5006 = vmatprep.mubr.f32.mxu0 0.0
        %5007 = vmatmul.mubr.f32.gmra.mrb[0].mxu0 %v4383
        %v5008 = vpop.f32.mrb[0].mxu0
        %v5009 = vadd.f32 0.0, %v5008
        %v5010 = vpop.f32.mrb[0].mxu0
        %5011 = vmatprep.mubr.f32.mxu0 0.0
        %5012 = vmatmul.mubr.f32.gmra.mrb[0].mxu0 %v4386
        %v5013 = vpop.f32.mrb[0].mxu0
        %v5014 = vadd.f32 0.0, %v5013
        %v5015 = vpop.f32.mrb[0].mxu0
        %5016 = vmatprep.mubr.f32.mxu0 0.0
        %5017 = vmatmul.mubr.f32.gmra.mrb[0].mxu0 %v4389
        %v5018 = vpop.f32.mrb[0].mxu0
        %v5019 = vadd.f32 0.0, %v5018
        %v5020 = vpop.f32.mrb[0].mxu0
        %5021 = vmatprep.mubr.f32.mxu0 0.0
        %5022 = vmatmul.mubr.f32.gmra.mrb[0].mxu0 %v4392
        %v5023 = vpop.f32.mrb[0].mxu0
        %v5024 = vadd.f32 0.0, %v5023
        %v5025 = vpop.f32.mrb[0].mxu0
        %5026 = vmatprep.mubr.f32.mxu0 0.0
        %5027 = vmatmul.mubr.f32.gmra.mrb[0].mxu0 %v4395
        %v5028 = vpop.f32.mrb[0].mxu0
        %v5029 = vadd.f32 0.0, %v5028
        %v5030 = vpop.f32.mrb[0].mxu0
        %5031 = vmatprep.mubr.f32.mxu0 0.0
        %5032 = vmatmul.mubr.f32.gmra.mrb[0].mxu0 %v4398
        %v5033 = vpop.f32.mrb[0].mxu0
        %v5034 = vadd.f32 0.0, %v5033
        %v5035 = vpop.f32.mrb[0].mxu0
        %5036 = vmatprep.mubr.f32.mxu0 0.0
        %5037 = vmatmul.mubr.f32.gmra.mrb[0].mxu0 %v4401
        %v5038 = vpop.f32.mrb[0].mxu0
        %v5039 = vadd.f32 0.0, %v5038
        %v5040 = vpop.f32.mrb[0].mxu0
        %5041 = vmatprep.mubr.f32.mxu0 0.0
        %5042 = vmatmul.mubr.f32.gmra.mrb[0].mxu0 %v4404
        %v5043 = vpop.f32.mrb[0].mxu0
        %v5044 = vadd.f32 0.0, %v5043
        %v5045 = vpop.f32.mrb[0].mxu0
        %5046 = vmatprep.mubr.f32.mxu0 0.0
        %5047 = vmatmul.mubr.f32.gmra.mrb[0].mxu0 %v4407
        %v5048 = vpop.f32.mrb[0].mxu0
        %v5049 = vadd.f32 0.0, %v5048
        %v5050 = vpop.f32.mrb[0].mxu0
        %5051 = vmatprep.mubr.f32.mxu0 0.0
        %5052 = vmatmul.mubr.f32.gmra.mrb[0].mxu0 %v4410
        %v5053 = vpop.f32.mrb[0].mxu0
        %v5054 = vadd.f32 0.0, %v5053
        %v5055 = vpop.f32.mrb[0].mxu0
        %5056 = vmatprep.mubr.f32.mxu0 0.0
        %5057 = vmatmul.mubr.f32.gmra.mrb[0].mxu0 %v4413
        %v5058 = vpop.f32.mrb[0].mxu0
        %v5059 = vadd.f32 0.0, %v5058
        %v5060 = vpop.f32.mrb[0].mxu0
        %5061 = vmatprep.mubr.f32.mxu0 0.0
        %5062 = vmatmul.mubr.f32.gmra.mrb[0].mxu0 %v4416
        %v5063 = vpop.f32.mrb[0].mxu0
        %v5064 = vadd.f32 0.0, %v5063
        %v5065 = vpop.f32.mrb[0].mxu0
        %5066 = vmatprep.mubr.f32.mxu0 0.0
        %5067 = vmatmul.mubr.f32.gmra.mrb[0].mxu0 %v4419
        %v5068 = vpop.f32.mrb[0].mxu0
        %v5069 = vadd.f32 0.0, %v5068
        %v5070 = vpop.f32.mrb[0].mxu0
        %5071 = vmatprep.mubr.f32.mxu0 0.0
        %5072 = vmatmul.mubr.f32.gmra.mrb[0].mxu0 %v4422
        %v5073 = vpop.f32.mrb[0].mxu0
        %v5074 = vadd.f32 0.0, %v5073
        %v5075 = vpop.f32.mrb[0].mxu0
        %5076 = vmatprep.mubr.f32.mxu0 0.0
        %5077 = vmatmul.mubr.f32.gmra.mrb[0].mxu0 %v4425
        %v5078 = vpop.f32.mrb[0].mxu0
        %v5079 = vadd.f32 0.0, %v5078
        %v5080 = vpop.f32.mrb[0].mxu0
        %5081 = vmatprep.mubr.f32.mxu0 0.0
        %5082 = vmatmul.mubr.f32.gmra.mrb[0].mxu0 %v4428
        %v5083 = vpop.f32.mrb[0].mxu0
        %v5084 = vadd.f32 0.0, %v5083
        %v5085 = vpop.f32.mrb[0].mxu0
        %5086 = vmatprep.mubr.f32.mxu0 0.0
        %5087 = vmatmul.mubr.f32.gmra.mrb[0].mxu0 %v4431
        %v5088 = vpop.f32.mrb[0].mxu0
        %v5089 = vadd.f32 0.0, %v5088
        %v5090 = vpop.f32.mrb[0].mxu0
        %5091 = vmatprep.mubr.f32.mxu0 0.0
        %5092 = vmatmul.mubr.f32.gmra.mrb[0].mxu0 %v4434
        %v5093 = vpop.f32.mrb[0].mxu0
        %v5094 = vadd.f32 0.0, %v5093
        %v5095 = vpop.f32.mrb[0].mxu0
        %5096 = vmatprep.mubr.f32.mxu0 0.0
        %5097 = vmatmul.mubr.f32.gmra.mrb[0].mxu0 %v4437
        %v5098 = vpop.f32.mrb[0].mxu0
        %v5099 = vadd.f32 0.0, %v5098
        %v5100 = vpop.f32.mrb[0].mxu0
        %5101 = vmatprep.mubr.f32.mxu0 0.0
        %5102 = vmatmul.mubr.f32.gmra.mrb[0].mxu0 %v4440
        %v5103 = vpop.f32.mrb[0].mxu0
        %v5104 = vadd.f32 0.0, %v5103
        %v5105 = vpop.f32.mrb[0].mxu0
        %5106 = vmatprep.mubr.f32.mxu0 0.0
        %5107 = vmatmul.mubr.f32.gmra.mrb[0].mxu0 %v4443
        %v5108 = vpop.f32.mrb[0].mxu0
        %v5109 = vadd.f32 0.0, %v5108
        %v5110 = vpop.f32.mrb[0].mxu0
        %5111 = vmatprep.mubr.f32.mxu0 0.0
        %5112 = vmatmul.mubr.f32.gmra.mrb[0].mxu0 %v4446
        %v5113 = vpop.f32.mrb[0].mxu0
        %v5114 = vadd.f32 0.0, %v5113
        %v5115 = vpop.f32.mrb[0].mxu0
        %5116 = vmatprep.mubr.f32.mxu0 0.0
        %5117 = vmatmul.mubr.f32.gmra.mrb[0].mxu0 %v4449
        %v5118 = vpop.f32.mrb[0].mxu0
        %v5119 = vadd.f32 0.0, %v5118
        %v5120 = vpop.f32.mrb[0].mxu0
        %5121 = vmatprep.mubr.f32.mxu0 0.0
        %5122 = vmatmul.mubr.f32.gmra.mrb[0].mxu0 %v4452
        %v5123 = vpop.f32.mrb[0].mxu0
        %v5124 = vadd.f32 0.0, %v5123
        %v5125 = vpop.f32.mrb[0].mxu0
        %5126 = vmatprep.mubr.f32.mxu0 0.0
        %5127 = vmatmul.mubr.f32.gmra.mrb[0].mxu0 %v4455
        %v5128 = vpop.f32.mrb[0].mxu0
        %v5129 = vadd.f32 0.0, %v5128
        %v5130 = vpop.f32.mrb[0].mxu0
        %5131 = vmatprep.mubr.f32.mxu0 0.0
        %5132 = vmatmul.mubr.f32.gmra.mrb[0].mxu0 %v4458
        %v5133 = vpop.f32.mrb[0].mxu0
        %v5134 = vadd.f32 0.0, %v5133
        %v5135 = vpop.f32.mrb[0].mxu0
        %5136 = vmatprep.mubr.f32.mxu0 0.0
        %5137 = vmatmul.mubr.f32.gmra.mrb[0].mxu0 %v4461
        %v5138 = vpop.f32.mrb[0].mxu0
        %v5139 = vadd.f32 0.0, %v5138
        %v5140 = vpop.f32.mrb[0].mxu0
        %5141 = vmatprep.mubr.f32.mxu0 0.0
        %5142 = vmatmul.mubr.f32.gmra.mrb[0].mxu0 %v4464
        %v5143 = vpop.f32.mrb[0].mxu0
        %v5144 = vadd.f32 0.0, %v5143
        %v5145 = vpop.f32.mrb[0].mxu0
        %5146 = vmatprep.mubr.f32.mxu0 0.0
        %5147 = vmatmul.mubr.f32.gmra.mrb[0].mxu0 %v4467
        %v5148 = vpop.f32.mrb[0].mxu0
        %v5149 = vadd.f32 0.0, %v5148
        %v5150 = vpop.f32.mrb[0].mxu0
        %5151 = vmatprep.mubr.f32.mxu0 0.0
        %5152 = vmatmul.mubr.f32.gmra.mrb[0].mxu0 %v4470
        %v5153 = vpop.f32.mrb[0].mxu0
        %v5154 = vadd.f32 0.0, %v5153
        %v5155 = vpop.f32.mrb[0].mxu0
        %5156 = vmatprep.mubr.f32.mxu0 0.0
        %5157 = vmatmul.mubr.f32.gmra.mrb[0].mxu0 %v4473
        %v5158 = vpop.f32.mrb[0].mxu0
        %v5159 = vadd.f32 0.0, %v5158
        %v5160 = vpop.f32.mrb[0].mxu0
        %5161 = vmatprep.mubr.f32.mxu0 0.0
        %5162 = vmatmul.mubr.f32.gmra.mrb[0].mxu0 %v4476
        %v5163 = vpop.f32.mrb[0].mxu0
        %v5164 = vadd.f32 0.0, %v5163
        %v5165 = vpop.f32.mrb[0].mxu0
        %5166 = vmatprep.mubr.f32.mxu0 0.0
        %5167 = vmatmul.mubr.f32.gmra.mrb[0].mxu0 %v4479
        %v5168 = vpop.f32.mrb[0].mxu0
        %v5169 = vadd.f32 0.0, %v5168
        %v5170 = vpop.f32.mrb[0].mxu0
        %5171 = vmatprep.mubr.f32.mxu0 0.0
        %5172 = vmatmul.mubr.f32.gmra.mrb[0].mxu0 %v4482
        %v5173 = vpop.f32.mrb[0].mxu0
        %v5174 = vadd.f32 0.0, %v5173
        %v5175 = vpop.f32.mrb[0].mxu0
        %5176 = vmatprep.mubr.f32.mxu0 0.0
        %5177 = vmatmul.mubr.f32.gmra.mrb[0].mxu0 %v4485
        %v5178 = vpop.f32.mrb[0].mxu0
        %v5179 = vadd.f32 0.0, %v5178
        %v5180 = vpop.f32.mrb[0].mxu0
        %5181 = vmatprep.mubr.f32.mxu0 0.0
        %5182 = vmatmul.mubr.f32.gmra.mrb[0].mxu0 %v4488
        %v5183 = vpop.f32.mrb[0].mxu0
        %v5184 = vadd.f32 0.0, %v5183
        %v5185 = vpop.f32.mrb[0].mxu0
        %5186 = vmatprep.mubr.f32.mxu0 0.0
        %5187 = vmatmul.mubr.f32.gmra.mrb[0].mxu0 %v4491
        %v5188 = vpop.f32.mrb[0].mxu0
        %v5189 = vadd.f32 0.0, %v5188
        %v5190 = vpop.f32.mrb[0].mxu0
        %5191 = vmatprep.mubr.f32.mxu0 0.0
        %5192 = vmatmul.mubr.f32.gmra.mrb[0].mxu0 %v4494
        %v5193 = vpop.f32.mrb[0].mxu0
        %v5194 = vadd.f32 0.0, %v5193
        %v5195 = vpop.f32.mrb[0].mxu0
        %5196 = vmatprep.mubr.f32.mxu0 0.0
        %5197 = vmatmul.mubr.f32.gmra.mrb[0].mxu0 %v4497
        %v5198 = vpop.f32.mrb[0].mxu0
        %v5199 = vadd.f32 0.0, %v5198
        %v5200 = vpop.f32.mrb[0].mxu0
        %5201 = vmatprep.mubr.f32.mxu0 0.0
        %5202 = vmatmul.mubr.f32.gmra.mrb[0].mxu0 %v4500
        %v5203 = vpop.f32.mrb[0].mxu0
        %v5204 = vadd.f32 0.0, %v5203
        %v5205 = vpop.f32.mrb[0].mxu0
        %5206 = vdwg.mxu0
        %v5207 = vadd.f32 %v3859, %v4569
        %v5208 = vadd.f32 %v3860, %v4574
        %v5209 = vadd.f32 %v3861, %v4579
        %v5210 = vadd.f32 %v3862, %v4584
        %v5211 = vadd.f32 %v3863, %v4589
        %v5212 = vadd.f32 %v3864, %v4594
        %v5213 = vadd.f32 %v3865, %v4599
        %v5214 = vadd.f32 %v3866, %v4604
        %v5215 = vadd.f32 %v3867, %v4609
        %v5216 = vadd.f32 %v3868, %v4614
        %v5217 = vadd.f32 %v3869, %v4619
        %v5218 = vadd.f32 %v3870, %v4624
        %v5219 = vadd.f32 %v3871, %v4629
        %v5220 = vadd.f32 %v3872, %v4634
        %v5221 = vadd.f32 %v3873, %v4639
        %v5222 = vadd.f32 %v3874, %v4644
        %v5223 = vadd.f32 %v3875, %v4649
        %v5224 = vadd.f32 %v3876, %v4654
        %v5225 = vadd.f32 %v3877, %v4659
        %v5226 = vadd.f32 %v3878, %v4664
        %v5227 = vadd.f32 %v3879, %v4669
        %v5228 = vadd.f32 %v3880, %v4674
        %v5229 = vadd.f32 %v3881, %v4679
        %v5230 = vadd.f32 %v3882, %v4684
        %v5231 = vadd.f32 %v3883, %v4689
        %v5232 = vadd.f32 %v3884, %v4694
        %v5233 = vadd.f32 %v3885, %v4699
        %v5234 = vadd.f32 %v3886, %v4704
        %v5235 = vadd.f32 %v3887, %v4709
        %v5236 = vadd.f32 %v3888, %v4714
        %v5237 = vadd.f32 %v3889, %v4719
        %v5238 = vadd.f32 %v3890, %v4724
        %v5239 = vadd.f32 %v3891, %v4729
        %v5240 = vadd.f32 %v3892, %v4734
        %v5241 = vadd.f32 %v3893, %v4739
        %v5242 = vadd.f32 %v3894, %v4744
        %v5243 = vadd.f32 %v3895, %v4749
        %v5244 = vadd.f32 %v3896, %v4754
        %v5245 = vadd.f32 %v3897, %v4759
        %v5246 = vadd.f32 %v3898, %v4764
        %v5247 = vadd.f32 %v3899, %v4769
        %v5248 = vadd.f32 %v3900, %v4774
        %v5249 = vadd.f32 %v3901, %v4779
        %v5250 = vadd.f32 %v3902, %v4784
        %v5251 = vadd.f32 %v3903, %v4789
        %v5252 = vadd.f32 %v3904, %v4794
        %v5253 = vadd.f32 %v3905, %v4799
        %v5254 = vadd.f32 %v3906, %v4804
        %v5255 = vadd.f32 %v3907, %v4809
        %v5256 = vadd.f32 %v3908, %v4814
        %v5257 = vadd.f32 %v3909, %v4819
        %v5258 = vadd.f32 %v3910, %v4824
        %v5259 = vadd.f32 %v3911, %v4829
        %v5260 = vadd.f32 %v3912, %v4834
        %v5261 = vadd.f32 %v3913, %v4839
        %v5262 = vadd.f32 %v3914, %v4844
        %v5263 = vadd.f32 %v3915, %v4849
        %v5264 = vadd.f32 %v3916, %v4854
        %v5265 = vadd.f32 %v3917, %v4859
        %v5266 = vadd.f32 %v3918, %v4864
        %v5267 = vadd.f32 %v3919, %v4869
        %v5268 = vadd.f32 %v3920, %v4874
        %v5269 = vadd.f32 %v3921, %v4879
        %v5270 = vadd.f32 %v3922, %v4884
        %v5271 = vadd.f32 %v3923, %v4889
        %v5272 = vadd.f32 %v3924, %v4894
        %v5273 = vadd.f32 %v3925, %v4899
        %v5274 = vadd.f32 %v3926, %v4904
        %v5275 = vadd.f32 %v3927, %v4909
        %v5276 = vadd.f32 %v3928, %v4914
        %v5277 = vadd.f32 %v3929, %v4919
        %v5278 = vadd.f32 %v3930, %v4924
        %v5279 = vadd.f32 %v3931, %v4929
        %v5280 = vadd.f32 %v3932, %v4934
        %v5281 = vadd.f32 %v3933, %v4939
        %v5282 = vadd.f32 %v3934, %v4944
        %v5283 = vadd.f32 %v3935, %v4949
        %v5284 = vadd.f32 %v3936, %v4954
        %v5285 = vadd.f32 %v3937, %v4959
        %v5286 = vadd.f32 %v3938, %v4964
        %v5287 = vadd.f32 %v3939, %v4969
        %v5288 = vadd.f32 %v3940, %v4974
        %v5289 = vadd.f32 %v3941, %v4979
        %v5290 = vadd.f32 %v3942, %v4984
        %v5291 = vadd.f32 %v3943, %v4989
        %v5292 = vadd.f32 %v3944, %v4994
        %v5293 = vadd.f32 %v3945, %v4999
        %v5294 = vadd.f32 %v3946, %v5004
        %v5295 = vadd.f32 %v3947, %v5009
        %v5296 = vadd.f32 %v3948, %v5014
        %v5297 = vadd.f32 %v3949, %v5019
        %v5298 = vadd.f32 %v3950, %v5024
        %v5299 = vadd.f32 %v3951, %v5029
        %v5300 = vadd.f32 %v3952, %v5034
        %v5301 = vadd.f32 %v3953, %v5039
        %v5302 = vadd.f32 %v3954, %v5044
        %v5303 = vadd.f32 %v3955, %v5049
        %v5304 = vadd.f32 %v3956, %v5054
        %v5305 = vadd.f32 %v3957, %v5059
        %v5306 = vadd.f32 %v3958, %v5064
        %v5307 = vadd.f32 %v3959, %v5069
        %v5308 = vadd.f32 %v3960, %v5074
        %v5309 = vadd.f32 %v3961, %v5079
        %v5310 = vadd.f32 %v3962, %v5084
        %v5311 = vadd.f32 %v3963, %v5089
        %v5312 = vadd.f32 %v3964, %v5094
        %v5313 = vadd.f32 %v3965, %v5099
        %v5314 = vadd.f32 %v3966, %v5104
        %v5315 = vadd.f32 %v3967, %v5109
        %v5316 = vadd.f32 %v3968, %v5114
        %v5317 = vadd.f32 %v3969, %v5119
        %v5318 = vadd.f32 %v3970, %v5124
        %v5319 = vadd.f32 %v3971, %v5129
        %v5320 = vadd.f32 %v3972, %v5134
        %v5321 = vadd.f32 %v3973, %v5139
        %v5322 = vadd.f32 %v3974, %v5144
        %v5323 = vadd.f32 %v3975, %v5149
        %v5324 = vadd.f32 %v3976, %v5154
        %v5325 = vadd.f32 %v3977, %v5159
        %v5326 = vadd.f32 %v3978, %v5164
        %v5327 = vadd.f32 %v3979, %v5169
        %v5328 = vadd.f32 %v3980, %v5174
        %v5329 = vadd.f32 %v3981, %v5179
        %v5330 = vadd.f32 %v3982, %v5184
        %v5331 = vadd.f32 %v3983, %v5189
        %v5332 = vadd.f32 %v3984, %v5194
        %v5333 = vadd.f32 %v3985, %v5199
        %v5334 = vadd.f32 %v3986, %v5204
        %v5335 = vld [vmem:[%s3987 + $0x1] sm:$0xff]
        %v5336 = vld [vmem:[%s3987 + $0x9] sm:$0xff]
        %v5337 = vld [vmem:[%s3987 + $0x19] sm:$0xff]
        %v5338 = vld [vmem:[%s3987 + $0x21] sm:$0xff]
        %v5339 = vld [vmem:[%s3987 + $0x31] sm:$0xff]
        %v5340 = vld [vmem:[%s3987 + $0x39] sm:$0xff]
        %v5341 = vld [vmem:[%s3987 + $0x49] sm:$0xff]
        %v5342 = vld [vmem:[%s3987 + $0x51] sm:$0xff]
        %v5343 = vld [vmem:[%s3987 + $0x61] sm:$0xff]
        %v5344 = vld [vmem:[%s3987 + $0x69] sm:$0xff]
        %v5345 = vld [vmem:[%s3987 + $0x79] sm:$0xff]
        %v5346 = vld [vmem:[%s3987 + $0x81] sm:$0xff]
        %v5347 = vld [vmem:[%s3987 + $0x91] sm:$0xff]
        %v5348 = vld [vmem:[%s3987 + $0x99] sm:$0xff]
        %v5349 = vld [vmem:[%s3987 + $0xa9] sm:$0xff]
        %v5350 = vld [vmem:[%s3987 + $0xb1] sm:$0xff]
        %v5351 = vld [vmem:[%s3987 + $0xc1] sm:$0xff]
        %v5352 = vld [vmem:[%s3987 + $0xc9] sm:$0xff]
        %v5353 = vld [vmem:[%s3987 + $0xd9] sm:$0xff]
        %v5354 = vld [vmem:[%s3987 + $0xe1] sm:$0xff]
        %v5355 = vld [vmem:[%s3987 + $0xf1] sm:$0xff]
        %v5356 = vld [vmem:[%s3987 + $0xf9] sm:$0xff]
        %v5357 = vld [vmem:[%s3987 + $0x109] sm:$0xff]
        %v5358 = vld [vmem:[%s3987 + $0x111] sm:$0xff]
        %v5359 = vld [vmem:[%s3987 + $0x121] sm:$0xff]
        %v5360 = vld [vmem:[%s3987 + $0x129] sm:$0xff]
        %v5361 = vld [vmem:[%s3987 + $0x139] sm:$0xff]
        %v5362 = vld [vmem:[%s3987 + $0x141] sm:$0xff]
        %v5363 = vld [vmem:[%s3987 + $0x151] sm:$0xff]
        %v5364 = vld [vmem:[%s3987 + $0x159] sm:$0xff]
        %v5365 = vld [vmem:[%s3987 + $0x169] sm:$0xff]
        %v5366 = vld [vmem:[%s3987 + $0x171] sm:$0xff]
        %v5367 = vld [vmem:[%s3987 + $0x1b1] sm:$0xff]
        %v5368 = vld [vmem:[%s3987 + $0x1b9] sm:$0xff]
        %v5369 = vld [vmem:[%s3987 + $0x1c9] sm:$0xff]
        %v5370 = vld [vmem:[%s3987 + $0x1d1] sm:$0xff]
        %v5371 = vld [vmem:[%s3987 + $0x1e1] sm:$0xff]
        %v5372 = vld [vmem:[%s3987 + $0x1e9] sm:$0xff]
        %v5373 = vld [vmem:[%s3987 + $0x1f9] sm:$0xff]
        %v5374 = vld [vmem:[%s3987 + $0x201] sm:$0xff]
        %v5375 = vld [vmem:[%s3987 + $0x211] sm:$0xff]
        %v5376 = vld [vmem:[%s3987 + $0x219] sm:$0xff]
        %v5377 = vld [vmem:[%s3987 + $0x229] sm:$0xff]
        %v5378 = vld [vmem:[%s3987 + $0x231] sm:$0xff]
        %v5379 = vld [vmem:[%s3987 + $0x241] sm:$0xff]
        %v5380 = vld [vmem:[%s3987 + $0x249] sm:$0xff]
        %v5381 = vld [vmem:[%s3987 + $0x259] sm:$0xff]
        %v5382 = vld [vmem:[%s3987 + $0x261] sm:$0xff]
        %v5383 = vld [vmem:[%s3987 + $0x271] sm:$0xff]
        %v5384 = vld [vmem:[%s3987 + $0x279] sm:$0xff]
        %v5385 = vld [vmem:[%s3987 + $0x289] sm:$0xff]
        %v5386 = vld [vmem:[%s3987 + $0x291] sm:$0xff]
        %v5387 = vld [vmem:[%s3987 + $0x2a1] sm:$0xff]
        %v5388 = vld [vmem:[%s3987 + $0x2a9] sm:$0xff]
        %v5389 = vld [vmem:[%s3987 + $0x2b9] sm:$0xff]
        %v5390 = vld [vmem:[%s3987 + $0x2c1] sm:$0xff]
        %v5391 = vld [vmem:[%s3987 + $0x2d1] sm:$0xff]
        %v5392 = vld [vmem:[%s3987 + $0x2d9] sm:$0xff]
        %v5393 = vld [vmem:[%s3987 + $0x2e9] sm:$0xff]
        %v5394 = vld [vmem:[%s3987 + $0x2f1] sm:$0xff]
        %v5395 = vld [vmem:[%s3987 + $0x301] sm:$0xff]
        %v5396 = vld [vmem:[%s3987 + $0x309] sm:$0xff]
        %v5397 = vld [vmem:[%s3987 + $0x319] sm:$0xff]
        %v5398 = vld [vmem:[%s3987 + $0x321] sm:$0xff]
        %v5399 = vld [vmem:[%s3987 + $0x361] sm:$0xff]
        %v5400 = vld [vmem:[%s3987 + $0x369] sm:$0xff]
        %v5401 = vld [vmem:[%s3987 + $0x379] sm:$0xff]
        %v5402 = vld [vmem:[%s3987 + $0x381] sm:$0xff]
        %v5403 = vld [vmem:[%s3987 + $0x391] sm:$0xff]
        %v5404 = vld [vmem:[%s3987 + $0x399] sm:$0xff]
        %v5405 = vld [vmem:[%s3987 + $0x3a9] sm:$0xff]
        %v5406 = vld [vmem:[%s3987 + $0x3b1] sm:$0xff]
        %v5407 = vld [vmem:[%s3987 + $0x3c1] sm:$0xff]
        %v5408 = vld [vmem:[%s3987 + $0x3c9] sm:$0xff]
        %v5409 = vld [vmem:[%s3987 + $0x3d9] sm:$0xff]
        %v5410 = vld [vmem:[%s3987 + $0x3e1] sm:$0xff]
        %v5411 = vld [vmem:[%s3987 + $0x3f1] sm:$0xff]
        %v5412 = vld [vmem:[%s3987 + $0x3f9] sm:$0xff]
        %v5413 = vld [vmem:[%s3987 + $0x409] sm:$0xff]
        %v5414 = vld [vmem:[%s3987 + $0x411] sm:$0xff]
        %v5415 = vld [vmem:[%s3987 + $0x421] sm:$0xff]
        %v5416 = vld [vmem:[%s3987 + $0x429] sm:$0xff]
        %v5417 = vld [vmem:[%s3987 + $0x439] sm:$0xff]
        %v5418 = vld [vmem:[%s3987 + $0x441] sm:$0xff]
        %v5419 = vld [vmem:[%s3987 + $0x451] sm:$0xff]
        %v5420 = vld [vmem:[%s3987 + $0x459] sm:$0xff]
        %v5421 = vld [vmem:[%s3987 + $0x469] sm:$0xff]
        %v5422 = vld [vmem:[%s3987 + $0x471] sm:$0xff]
        %v5423 = vld [vmem:[%s3987 + $0x481] sm:$0xff]
        %v5424 = vld [vmem:[%s3987 + $0x489] sm:$0xff]
        %v5425 = vld [vmem:[%s3987 + $0x499] sm:$0xff]
        %v5426 = vld [vmem:[%s3987 + $0x4a1] sm:$0xff]
        %v5427 = vld [vmem:[%s3987 + $0x4b1] sm:$0xff]
        %v5428 = vld [vmem:[%s3987 + $0x4b9] sm:$0xff]
        %v5429 = vld [vmem:[%s3987 + $0x4c9] sm:$0xff]
        %v5430 = vld [vmem:[%s3987 + $0x4d1] sm:$0xff]
        %v5431 = vld [vmem:[%s3987 + $0x511] sm:$0xff]
        %v5432 = vld [vmem:[%s3987 + $0x519] sm:$0xff]
        %v5433 = vld [vmem:[%s3987 + $0x529] sm:$0xff]
        %v5434 = vld [vmem:[%s3987 + $0x531] sm:$0xff]
        %v5435 = vld [vmem:[%s3987 + $0x541] sm:$0xff]
        %v5436 = vld [vmem:[%s3987 + $0x549] sm:$0xff]
        %v5437 = vld [vmem:[%s3987 + $0x559] sm:$0xff]
        %v5438 = vld [vmem:[%s3987 + $0x561] sm:$0xff]
        %v5439 = vld [vmem:[%s3987 + $0x571] sm:$0xff]
        %v5440 = vld [vmem:[%s3987 + $0x579] sm:$0xff]
        %v5441 = vld [vmem:[%s3987 + $0x589] sm:$0xff]
        %v5442 = vld [vmem:[%s3987 + $0x591] sm:$0xff]
        %v5443 = vld [vmem:[%s3987 + $0x5a1] sm:$0xff]
        %v5444 = vld [vmem:[%s3987 + $0x5a9] sm:$0xff]
        %v5445 = vld [vmem:[%s3987 + $0x5b9] sm:$0xff]
        %v5446 = vld [vmem:[%s3987 + $0x5c1] sm:$0xff]
        %v5447 = vld [vmem:[%s3987 + $0x5d1] sm:$0xff]
        %v5448 = vld [vmem:[%s3987 + $0x5d9] sm:$0xff]
        %v5449 = vld [vmem:[%s3987 + $0x5e9] sm:$0xff]
        %v5450 = vld [vmem:[%s3987 + $0x5f1] sm:$0xff]
        %v5451 = vld [vmem:[%s3987 + $0x601] sm:$0xff]
        %v5452 = vld [vmem:[%s3987 + $0x609] sm:$0xff]
        %v5453 = vld [vmem:[%s3987 + $0x619] sm:$0xff]
        %v5454 = vld [vmem:[%s3987 + $0x621] sm:$0xff]
        %v5455 = vld [vmem:[%s3987 + $0x631] sm:$0xff]
        %v5456 = vld [vmem:[%s3987 + $0x639] sm:$0xff]
        %v5457 = vld [vmem:[%s3987 + $0x649] sm:$0xff]
        %v5458 = vld [vmem:[%s3987 + $0x651] sm:$0xff]
        %v5459 = vld [vmem:[%s3987 + $0x661] sm:$0xff]
        %v5460 = vld [vmem:[%s3987 + $0x669] sm:$0xff]
        %v5461 = vld [vmem:[%s3987 + $0x679] sm:$0xff]
        %v5462 = vld [vmem:[%s3987 + $0x681] sm:$0xff]
        %s5463 = scalar_lea.vmem %s1, 32
        %v5464 = vld [vmem:[%s5463] sm:$0xff]
        %v5466 = vsel %vm461, %v5335, 0
        %v5469 = vsel %vm461, %v5336, 0
        %v5472 = vsel %vm461, %v5337, 0
        %v5475 = vsel %vm461, %v5338, 0
        %v5478 = vsel %vm461, %v5339, 0
        %v5481 = vsel %vm461, %v5340, 0
        %v5484 = vsel %vm461, %v5341, 0
        %v5487 = vsel %vm461, %v5342, 0
        %v5490 = vsel %vm461, %v5343, 0
        %v5493 = vsel %vm461, %v5344, 0
        %v5496 = vsel %vm461, %v5345, 0
        %v5499 = vsel %vm461, %v5346, 0
        %v5502 = vsel %vm461, %v5347, 0
        %v5505 = vsel %vm461, %v5348, 0
        %v5508 = vsel %vm461, %v5349, 0
        %v5511 = vsel %vm461, %v5350, 0
        %v5514 = vsel %vm461, %v5351, 0
        %v5517 = vsel %vm461, %v5352, 0
        %v5520 = vsel %vm461, %v5353, 0
        %v5523 = vsel %vm461, %v5354, 0
        %v5526 = vsel %vm461, %v5355, 0
        %v5529 = vsel %vm461, %v5356, 0
        %v5532 = vsel %vm461, %v5357, 0
        %v5535 = vsel %vm461, %v5358, 0
        %v5538 = vsel %vm461, %v5359, 0
        %v5541 = vsel %vm461, %v5360, 0
        %v5544 = vsel %vm461, %v5361, 0
        %v5547 = vsel %vm461, %v5362, 0
        %v5550 = vsel %vm461, %v5363, 0
        %v5553 = vsel %vm461, %v5364, 0
        %v5556 = vsel %vm461, %v5365, 0
        %v5559 = vsel %vm461, %v5366, 0
        %v5562 = vsel %vm461, %v5367, 0
        %v5565 = vsel %vm461, %v5368, 0
        %v5568 = vsel %vm461, %v5369, 0
        %v5571 = vsel %vm461, %v5370, 0
        %v5574 = vsel %vm461, %v5371, 0
        %v5577 = vsel %vm461, %v5372, 0
        %v5580 = vsel %vm461, %v5373, 0
        %v5583 = vsel %vm461, %v5374, 0
        %v5586 = vsel %vm461, %v5375, 0
        %v5589 = vsel %vm461, %v5376, 0
        %v5592 = vsel %vm461, %v5377, 0
        %v5595 = vsel %vm461, %v5378, 0
        %v5598 = vsel %vm461, %v5379, 0
        %v5601 = vsel %vm461, %v5380, 0
        %v5604 = vsel %vm461, %v5381, 0
        %v5607 = vsel %vm461, %v5382, 0
        %v5610 = vsel %vm461, %v5383, 0
        %v5613 = vsel %vm461, %v5384, 0
        %v5616 = vsel %vm461, %v5385, 0
        %v5619 = vsel %vm461, %v5386, 0
        %v5622 = vsel %vm461, %v5387, 0
        %v5625 = vsel %vm461, %v5388, 0
        %v5628 = vsel %vm461, %v5389, 0
        %v5631 = vsel %vm461, %v5390, 0
        %v5634 = vsel %vm461, %v5391, 0
        %v5637 = vsel %vm461, %v5392, 0
        %v5640 = vsel %vm461, %v5393, 0
        %v5643 = vsel %vm461, %v5394, 0
        %v5646 = vsel %vm461, %v5395, 0
        %v5649 = vsel %vm461, %v5396, 0
        %v5652 = vsel %vm461, %v5397, 0
        %v5655 = vsel %vm461, %v5398, 0
        %v5658 = vsel %vm461, %v5399, 0
        %v5661 = vsel %vm461, %v5400, 0
        %v5664 = vsel %vm461, %v5401, 0
        %v5667 = vsel %vm461, %v5402, 0
        %v5670 = vsel %vm461, %v5403, 0
        %v5673 = vsel %vm461, %v5404, 0
        %v5676 = vsel %vm461, %v5405, 0
        %v5679 = vsel %vm461, %v5406, 0
        %v5682 = vsel %vm461, %v5407, 0
        %v5685 = vsel %vm461, %v5408, 0
        %v5688 = vsel %vm461, %v5409, 0
        %v5691 = vsel %vm461, %v5410, 0
        %v5694 = vsel %vm461, %v5411, 0
        %v5697 = vsel %vm461, %v5412, 0
        %v5700 = vsel %vm461, %v5413, 0
        %v5703 = vsel %vm461, %v5414, 0
        %v5706 = vsel %vm461, %v5415, 0
        %v5709 = vsel %vm461, %v5416, 0
        %v5712 = vsel %vm461, %v5417, 0
        %v5715 = vsel %vm461, %v5418, 0
        %v5718 = vsel %vm461, %v5419, 0
        %v5721 = vsel %vm461, %v5420, 0
        %v5724 = vsel %vm461, %v5421, 0
        %v5727 = vsel %vm461, %v5422, 0
        %v5730 = vsel %vm461, %v5423, 0
        %v5733 = vsel %vm461, %v5424, 0
        %v5736 = vsel %vm461, %v5425, 0
        %v5739 = vsel %vm461, %v5426, 0
        %v5742 = vsel %vm461, %v5427, 0
        %v5745 = vsel %vm461, %v5428, 0
        %v5748 = vsel %vm461, %v5429, 0
        %v5751 = vsel %vm461, %v5430, 0
        %v5754 = vsel %vm461, %v5431, 0
        %v5757 = vsel %vm461, %v5432, 0
        %v5760 = vsel %vm461, %v5433, 0
        %v5763 = vsel %vm461, %v5434, 0
        %v5766 = vsel %vm461, %v5435, 0
        %v5769 = vsel %vm461, %v5436, 0
        %v5772 = vsel %vm461, %v5437, 0
        %v5775 = vsel %vm461, %v5438, 0
        %v5778 = vsel %vm461, %v5439, 0
        %v5781 = vsel %vm461, %v5440, 0
        %v5784 = vsel %vm461, %v5441, 0
        %v5787 = vsel %vm461, %v5442, 0
        %v5790 = vsel %vm461, %v5443, 0
        %v5793 = vsel %vm461, %v5444, 0
        %v5796 = vsel %vm461, %v5445, 0
        %v5799 = vsel %vm461, %v5446, 0
        %v5802 = vsel %vm461, %v5447, 0
        %v5805 = vsel %vm461, %v5448, 0
        %v5808 = vsel %vm461, %v5449, 0
        %v5811 = vsel %vm461, %v5450, 0
        %v5814 = vsel %vm461, %v5451, 0
        %v5817 = vsel %vm461, %v5452, 0
        %v5820 = vsel %vm461, %v5453, 0
        %v5823 = vsel %vm461, %v5454, 0
        %v5826 = vsel %vm461, %v5455, 0
        %v5829 = vsel %vm461, %v5456, 0
        %v5832 = vsel %vm461, %v5457, 0
        %v5835 = vsel %vm461, %v5458, 0
        %v5838 = vsel %vm461, %v5459, 0
        %v5841 = vsel %vm461, %v5460, 0
        %v5844 = vsel %vm461, %v5461, 0
        %v5847 = vsel %vm461, %v5462, 0
        %5849 = vmatprep.subr.mxu0 0.0
        %5850 = vmatpush1.msra.mxu0 %v5464
        %5851 = vmatprep.subr.mxu0 0.0
        %5852 = vmatpush1.msra.mxu0 0.0
        %5853 = vmatprep.subr.mxu0 0.0
        %5854 = vmatpush1.msra.mxu0 0.0
        %5855 = vmatprep.subr.mxu0 0.0
        %5856 = vmatpush1.msra.mxu0 0.0
        %5857 = vmatprep.subr.mxu0 0.0
        %5858 = vmatpush1.msra.mxu0 0.0
        %5859 = vmatprep.subr.mxu0 0.0
        %5860 = vmatpush1.msra.mxu0 0.0
        %5861 = vmatprep.subr.mxu0 0.0
        %5862 = vmatpush1.msra.mxu0 0.0
        %5863 = vmatprep.subr.mxu0 0.0
        %5864 = vmatpush1.msra.mxu0 0.0
        %5865 = vmatprep.subr.mxu0 0.0
        %5866 = vmatpush1.msra.mxu0 0.0
        %5867 = vmatprep.subr.mxu0 0.0
        %5868 = vmatpush1.msra.mxu0 0.0
        %5869 = vmatprep.subr.mxu0 0.0
        %5870 = vmatpush1.msra.mxu0 0.0
        %5871 = vmatprep.subr.mxu0 0.0
        %5872 = vmatpush1.msra.mxu0 0.0
        %5873 = vmatprep.subr.mxu0 0.0
        %5874 = vmatpush1.msra.mxu0 0.0
        %5875 = vmatprep.subr.mxu0 0.0
        %5876 = vmatpush1.msra.mxu0 0.0
        %5877 = vmatprep.subr.mxu0 0.0
        %5878 = vmatpush1.msra.mxu0 0.0
        %5879 = vmatprep.subr.mxu0 0.0
        %5880 = vmatpush1.msra.mxu0 0.0
        %5881 = vmatprep.subr.mxu0 0.0
        %5882 = vmatpush1.msra.mxu0 0.0
        %5883 = vmatprep.subr.mxu0 0.0
        %5884 = vmatpush1.msra.mxu0 0.0
        %5885 = vmatprep.subr.mxu0 0.0
        %5886 = vmatpush1.msra.mxu0 0.0
        %5887 = vmatprep.subr.mxu0 0.0
        %5888 = vmatpush1.msra.mxu0 0.0
        %5889 = vmatprep.subr.mxu0 0.0
        %5890 = vmatpush1.msra.mxu0 0.0
        %5891 = vmatprep.subr.mxu0 0.0
        %5892 = vmatpush1.msra.mxu0 0.0
        %5893 = vmatprep.subr.mxu0 0.0
        %5894 = vmatpush1.msra.mxu0 0.0
        %5895 = vmatprep.subr.mxu0 0.0
        %5896 = vmatpush1.msra.mxu0 0.0
        %5897 = vmatprep.subr.mxu0 0.0
        %5898 = vmatpush1.msra.mxu0 0.0
        %5899 = vmatprep.subr.mxu0 0.0
        %5900 = vmatpush1.msra.mxu0 0.0
        %5901 = vmatprep.subr.mxu0 0.0
        %5902 = vmatpush1.msra.mxu0 0.0
        %5903 = vmatprep.subr.mxu0 0.0
        %5904 = vmatpush1.msra.mxu0 0.0
        %5905 = vmatprep.subr.mxu0 0.0
        %5906 = vmatpush1.msra.mxu0 0.0
        %5907 = vmatprep.subr.mxu0 0.0
        %5908 = vmatpush1.msra.mxu0 0.0
        %5909 = vmatprep.subr.mxu0 0.0
        %5910 = vmatpush1.msra.mxu0 0.0
        %5911 = vmatprep.subr.mxu0 0.0
        %5912 = vmatpush1.msra.mxu0 0.0
        %5913 = vmatprep.mubr.f32.mxu0 0.0
        %5914 = vmatmul.mubr.f32.gmra.mrb[0].mxu0 %v5466
        %v5915 = vpop.f32.mrb[0].mxu0
        %v5916 = vadd.f32 0.0, %v5915
        %v5917 = vpop.f32.mrb[0].mxu0
        %5918 = vmatprep.mubr.f32.mxu0 0.0
        %5919 = vmatmul.mubr.f32.gmra.mrb[0].mxu0 %v5469
        %v5920 = vpop.f32.mrb[0].mxu0
        %v5921 = vadd.f32 0.0, %v5920
        %v5922 = vpop.f32.mrb[0].mxu0
        %5923 = vmatprep.mubr.f32.mxu0 0.0
        %5924 = vmatmul.mubr.f32.gmra.mrb[0].mxu0 %v5472
        %v5925 = vpop.f32.mrb[0].mxu0
        %v5926 = vadd.f32 0.0, %v5925
        %v5927 = vpop.f32.mrb[0].mxu0
        %5928 = vmatprep.mubr.f32.mxu0 0.0
        %5929 = vmatmul.mubr.f32.gmra.mrb[0].mxu0 %v5475
        %v5930 = vpop.f32.mrb[0].mxu0
        %v5931 = vadd.f32 0.0, %v5930
        %v5932 = vpop.f32.mrb[0].mxu0
        %5933 = vmatprep.mubr.f32.mxu0 0.0
        %5934 = vmatmul.mubr.f32.gmra.mrb[0].mxu0 %v5478
        %v5935 = vpop.f32.mrb[0].mxu0
        %v5936 = vadd.f32 0.0, %v5935
        %v5937 = vpop.f32.mrb[0].mxu0
        %5938 = vmatprep.mubr.f32.mxu0 0.0
        %5939 = vmatmul.mubr.f32.gmra.mrb[0].mxu0 %v5481
        %v5940 = vpop.f32.mrb[0].mxu0
        %v5941 = vadd.f32 0.0, %v5940
        %v5942 = vpop.f32.mrb[0].mxu0
        %5943 = vmatprep.mubr.f32.mxu0 0.0
        %5944 = vmatmul.mubr.f32.gmra.mrb[0].mxu0 %v5484
        %v5945 = vpop.f32.mrb[0].mxu0
        %v5946 = vadd.f32 0.0, %v5945
        %v5947 = vpop.f32.mrb[0].mxu0
        %5948 = vmatprep.mubr.f32.mxu0 0.0
        %5949 = vmatmul.mubr.f32.gmra.mrb[0].mxu0 %v5487
        %v5950 = vpop.f32.mrb[0].mxu0
        %v5951 = vadd.f32 0.0, %v5950
        %v5952 = vpop.f32.mrb[0].mxu0
        %5953 = vmatprep.mubr.f32.mxu0 0.0
        %5954 = vmatmul.mubr.f32.gmra.mrb[0].mxu0 %v5490
        %v5955 = vpop.f32.mrb[0].mxu0
        %v5956 = vadd.f32 0.0, %v5955
        %v5957 = vpop.f32.mrb[0].mxu0
        %5958 = vmatprep.mubr.f32.mxu0 0.0
        %5959 = vmatmul.mubr.f32.gmra.mrb[0].mxu0 %v5493
        %v5960 = vpop.f32.mrb[0].mxu0
        %v5961 = vadd.f32 0.0, %v5960
        %v5962 = vpop.f32.mrb[0].mxu0
        %5963 = vmatprep.mubr.f32.mxu0 0.0
        %5964 = vmatmul.mubr.f32.gmra.mrb[0].mxu0 %v5496
        %v5965 = vpop.f32.mrb[0].mxu0
        %v5966 = vadd.f32 0.0, %v5965
        %v5967 = vpop.f32.mrb[0].mxu0
        %5968 = vmatprep.mubr.f32.mxu0 0.0
        %5969 = vmatmul.mubr.f32.gmra.mrb[0].mxu0 %v5499
        %v5970 = vpop.f32.mrb[0].mxu0
        %v5971 = vadd.f32 0.0, %v5970
        %v5972 = vpop.f32.mrb[0].mxu0
        %5973 = vmatprep.mubr.f32.mxu0 0.0
        %5974 = vmatmul.mubr.f32.gmra.mrb[0].mxu0 %v5502
        %v5975 = vpop.f32.mrb[0].mxu0
        %v5976 = vadd.f32 0.0, %v5975
        %v5977 = vpop.f32.mrb[0].mxu0
        %5978 = vmatprep.mubr.f32.mxu0 0.0
        %5979 = vmatmul.mubr.f32.gmra.mrb[0].mxu0 %v5505
        %v5980 = vpop.f32.mrb[0].mxu0
        %v5981 = vadd.f32 0.0, %v5980
        %v5982 = vpop.f32.mrb[0].mxu0
        %5983 = vmatprep.mubr.f32.mxu0 0.0
        %5984 = vmatmul.mubr.f32.gmra.mrb[0].mxu0 %v5508
        %v5985 = vpop.f32.mrb[0].mxu0
        %v5986 = vadd.f32 0.0, %v5985
        %v5987 = vpop.f32.mrb[0].mxu0
        %5988 = vmatprep.mubr.f32.mxu0 0.0
        %5989 = vmatmul.mubr.f32.gmra.mrb[0].mxu0 %v5511
        %v5990 = vpop.f32.mrb[0].mxu0
        %v5991 = vadd.f32 0.0, %v5990
        %v5992 = vpop.f32.mrb[0].mxu0
        %5993 = vmatprep.mubr.f32.mxu0 0.0
        %5994 = vmatmul.mubr.f32.gmra.mrb[0].mxu0 %v5514
        %v5995 = vpop.f32.mrb[0].mxu0
        %v5996 = vadd.f32 0.0, %v5995
        %v5997 = vpop.f32.mrb[0].mxu0
        %5998 = vmatprep.mubr.f32.mxu0 0.0
        %5999 = vmatmul.mubr.f32.gmra.mrb[0].mxu0 %v5517
        %v6000 = vpop.f32.mrb[0].mxu0
        %v6001 = vadd.f32 0.0, %v6000
        %v6002 = vpop.f32.mrb[0].mxu0
        %6003 = vmatprep.mubr.f32.mxu0 0.0
        %6004 = vmatmul.mubr.f32.gmra.mrb[0].mxu0 %v5520
        %v6005 = vpop.f32.mrb[0].mxu0
        %v6006 = vadd.f32 0.0, %v6005
        %v6007 = vpop.f32.mrb[0].mxu0
        %6008 = vmatprep.mubr.f32.mxu0 0.0
        %6009 = vmatmul.mubr.f32.gmra.mrb[0].mxu0 %v5523
        %v6010 = vpop.f32.mrb[0].mxu0
        %v6011 = vadd.f32 0.0, %v6010
        %v6012 = vpop.f32.mrb[0].mxu0
        %6013 = vmatprep.mubr.f32.mxu0 0.0
        %6014 = vmatmul.mubr.f32.gmra.mrb[0].mxu0 %v5526
        %v6015 = vpop.f32.mrb[0].mxu0
        %v6016 = vadd.f32 0.0, %v6015
        %v6017 = vpop.f32.mrb[0].mxu0
        %6018 = vmatprep.mubr.f32.mxu0 0.0
        %6019 = vmatmul.mubr.f32.gmra.mrb[0].mxu0 %v5529
        %v6020 = vpop.f32.mrb[0].mxu0
        %v6021 = vadd.f32 0.0, %v6020
        %v6022 = vpop.f32.mrb[0].mxu0
        %6023 = vmatprep.mubr.f32.mxu0 0.0
        %6024 = vmatmul.mubr.f32.gmra.mrb[0].mxu0 %v5532
        %v6025 = vpop.f32.mrb[0].mxu0
        %v6026 = vadd.f32 0.0, %v6025
        %v6027 = vpop.f32.mrb[0].mxu0
        %6028 = vmatprep.mubr.f32.mxu0 0.0
        %6029 = vmatmul.mubr.f32.gmra.mrb[0].mxu0 %v5535
        %v6030 = vpop.f32.mrb[0].mxu0
        %v6031 = vadd.f32 0.0, %v6030
        %v6032 = vpop.f32.mrb[0].mxu0
        %6033 = vmatprep.mubr.f32.mxu0 0.0
        %6034 = vmatmul.mubr.f32.gmra.mrb[0].mxu0 %v5538
        %v6035 = vpop.f32.mrb[0].mxu0
        %v6036 = vadd.f32 0.0, %v6035
        %v6037 = vpop.f32.mrb[0].mxu0
        %6038 = vmatprep.mubr.f32.mxu0 0.0
        %6039 = vmatmul.mubr.f32.gmra.mrb[0].mxu0 %v5541
        %v6040 = vpop.f32.mrb[0].mxu0
        %v6041 = vadd.f32 0.0, %v6040
        %v6042 = vpop.f32.mrb[0].mxu0
        %6043 = vmatprep.mubr.f32.mxu0 0.0
        %6044 = vmatmul.mubr.f32.gmra.mrb[0].mxu0 %v5544
        %v6045 = vpop.f32.mrb[0].mxu0
        %v6046 = vadd.f32 0.0, %v6045
        %v6047 = vpop.f32.mrb[0].mxu0
        %6048 = vmatprep.mubr.f32.mxu0 0.0
        %6049 = vmatmul.mubr.f32.gmra.mrb[0].mxu0 %v5547
        %v6050 = vpop.f32.mrb[0].mxu0
        %v6051 = vadd.f32 0.0, %v6050
        %v6052 = vpop.f32.mrb[0].mxu0
        %6053 = vmatprep.mubr.f32.mxu0 0.0
        %6054 = vmatmul.mubr.f32.gmra.mrb[0].mxu0 %v5550
        %v6055 = vpop.f32.mrb[0].mxu0
        %v6056 = vadd.f32 0.0, %v6055
        %v6057 = vpop.f32.mrb[0].mxu0
        %6058 = vmatprep.mubr.f32.mxu0 0.0
        %6059 = vmatmul.mubr.f32.gmra.mrb[0].mxu0 %v5553
        %v6060 = vpop.f32.mrb[0].mxu0
        %v6061 = vadd.f32 0.0, %v6060
        %v6062 = vpop.f32.mrb[0].mxu0
        %6063 = vmatprep.mubr.f32.mxu0 0.0
        %6064 = vmatmul.mubr.f32.gmra.mrb[0].mxu0 %v5556
        %v6065 = vpop.f32.mrb[0].mxu0
        %v6066 = vadd.f32 0.0, %v6065
        %v6067 = vpop.f32.mrb[0].mxu0
        %6068 = vmatprep.mubr.f32.mxu0 0.0
        %6069 = vmatmul.mubr.f32.gmra.mrb[0].mxu0 %v5559
        %v6070 = vpop.f32.mrb[0].mxu0
        %v6071 = vadd.f32 0.0, %v6070
        %v6072 = vpop.f32.mrb[0].mxu0
        %6073 = vmatprep.mubr.f32.mxu0 0.0
        %6074 = vmatmul.mubr.f32.gmra.mrb[0].mxu0 %v5562
        %v6075 = vpop.f32.mrb[0].mxu0
        %v6076 = vadd.f32 0.0, %v6075
        %v6077 = vpop.f32.mrb[0].mxu0
        %6078 = vmatprep.mubr.f32.mxu0 0.0
        %6079 = vmatmul.mubr.f32.gmra.mrb[0].mxu0 %v5565
        %v6080 = vpop.f32.mrb[0].mxu0
        %v6081 = vadd.f32 0.0, %v6080
        %v6082 = vpop.f32.mrb[0].mxu0
        %6083 = vmatprep.mubr.f32.mxu0 0.0
        %6084 = vmatmul.mubr.f32.gmra.mrb[0].mxu0 %v5568
        %v6085 = vpop.f32.mrb[0].mxu0
        %v6086 = vadd.f32 0.0, %v6085
        %v6087 = vpop.f32.mrb[0].mxu0
        %6088 = vmatprep.mubr.f32.mxu0 0.0
        %6089 = vmatmul.mubr.f32.gmra.mrb[0].mxu0 %v5571
        %v6090 = vpop.f32.mrb[0].mxu0
        %v6091 = vadd.f32 0.0, %v6090
        %v6092 = vpop.f32.mrb[0].mxu0
        %6093 = vmatprep.mubr.f32.mxu0 0.0
        %6094 = vmatmul.mubr.f32.gmra.mrb[0].mxu0 %v5574
        %v6095 = vpop.f32.mrb[0].mxu0
        %v6096 = vadd.f32 0.0, %v6095
        %v6097 = vpop.f32.mrb[0].mxu0
        %6098 = vmatprep.mubr.f32.mxu0 0.0
        %6099 = vmatmul.mubr.f32.gmra.mrb[0].mxu0 %v5577
        %v6100 = vpop.f32.mrb[0].mxu0
        %v6101 = vadd.f32 0.0, %v6100
        %v6102 = vpop.f32.mrb[0].mxu0
        %6103 = vmatprep.mubr.f32.mxu0 0.0
        %6104 = vmatmul.mubr.f32.gmra.mrb[0].mxu0 %v5580
        %v6105 = vpop.f32.mrb[0].mxu0
        %v6106 = vadd.f32 0.0, %v6105
        %v6107 = vpop.f32.mrb[0].mxu0
        %6108 = vmatprep.mubr.f32.mxu0 0.0
        %6109 = vmatmul.mubr.f32.gmra.mrb[0].mxu0 %v5583
        %v6110 = vpop.f32.mrb[0].mxu0
        %v6111 = vadd.f32 0.0, %v6110
        %v6112 = vpop.f32.mrb[0].mxu0
        %6113 = vmatprep.mubr.f32.mxu0 0.0
        %6114 = vmatmul.mubr.f32.gmra.mrb[0].mxu0 %v5586
        %v6115 = vpop.f32.mrb[0].mxu0
        %v6116 = vadd.f32 0.0, %v6115
        %v6117 = vpop.f32.mrb[0].mxu0
        %6118 = vmatprep.mubr.f32.mxu0 0.0
        %6119 = vmatmul.mubr.f32.gmra.mrb[0].mxu0 %v5589
        %v6120 = vpop.f32.mrb[0].mxu0
        %v6121 = vadd.f32 0.0, %v6120
        %v6122 = vpop.f32.mrb[0].mxu0
        %6123 = vmatprep.mubr.f32.mxu0 0.0
        %6124 = vmatmul.mubr.f32.gmra.mrb[0].mxu0 %v5592
        %v6125 = vpop.f32.mrb[0].mxu0
        %v6126 = vadd.f32 0.0, %v6125
        %v6127 = vpop.f32.mrb[0].mxu0
        %6128 = vmatprep.mubr.f32.mxu0 0.0
        %6129 = vmatmul.mubr.f32.gmra.mrb[0].mxu0 %v5595
        %v6130 = vpop.f32.mrb[0].mxu0
        %v6131 = vadd.f32 0.0, %v6130
        %v6132 = vpop.f32.mrb[0].mxu0
        %6133 = vmatprep.mubr.f32.mxu0 0.0
        %6134 = vmatmul.mubr.f32.gmra.mrb[0].mxu0 %v5598
        %v6135 = vpop.f32.mrb[0].mxu0
        %v6136 = vadd.f32 0.0, %v6135
        %v6137 = vpop.f32.mrb[0].mxu0
        %6138 = vmatprep.mubr.f32.mxu0 0.0
        %6139 = vmatmul.mubr.f32.gmra.mrb[0].mxu0 %v5601
        %v6140 = vpop.f32.mrb[0].mxu0
        %v6141 = vadd.f32 0.0, %v6140
        %v6142 = vpop.f32.mrb[0].mxu0
        %6143 = vmatprep.mubr.f32.mxu0 0.0
        %6144 = vmatmul.mubr.f32.gmra.mrb[0].mxu0 %v5604
        %v6145 = vpop.f32.mrb[0].mxu0
        %v6146 = vadd.f32 0.0, %v6145
        %v6147 = vpop.f32.mrb[0].mxu0
        %6148 = vmatprep.mubr.f32.mxu0 0.0
        %6149 = vmatmul.mubr.f32.gmra.mrb[0].mxu0 %v5607
        %v6150 = vpop.f32.mrb[0].mxu0
        %v6151 = vadd.f32 0.0, %v6150
        %v6152 = vpop.f32.mrb[0].mxu0
        %6153 = vmatprep.mubr.f32.mxu0 0.0
        %6154 = vmatmul.mubr.f32.gmra.mrb[0].mxu0 %v5610
        %v6155 = vpop.f32.mrb[0].mxu0
        %v6156 = vadd.f32 0.0, %v6155
        %v6157 = vpop.f32.mrb[0].mxu0
        %6158 = vmatprep.mubr.f32.mxu0 0.0
        %6159 = vmatmul.mubr.f32.gmra.mrb[0].mxu0 %v5613
        %v6160 = vpop.f32.mrb[0].mxu0
        %v6161 = vadd.f32 0.0, %v6160
        %v6162 = vpop.f32.mrb[0].mxu0
        %6163 = vmatprep.mubr.f32.mxu0 0.0
        %6164 = vmatmul.mubr.f32.gmra.mrb[0].mxu0 %v5616
        %v6165 = vpop.f32.mrb[0].mxu0
        %v6166 = vadd.f32 0.0, %v6165
        %v6167 = vpop.f32.mrb[0].mxu0
        %6168 = vmatprep.mubr.f32.mxu0 0.0
        %6169 = vmatmul.mubr.f32.gmra.mrb[0].mxu0 %v5619
        %v6170 = vpop.f32.mrb[0].mxu0
        %v6171 = vadd.f32 0.0, %v6170
        %v6172 = vpop.f32.mrb[0].mxu0
        %6173 = vmatprep.mubr.f32.mxu0 0.0
        %6174 = vmatmul.mubr.f32.gmra.mrb[0].mxu0 %v5622
        %v6175 = vpop.f32.mrb[0].mxu0
        %v6176 = vadd.f32 0.0, %v6175
        %v6177 = vpop.f32.mrb[0].mxu0
        %6178 = vmatprep.mubr.f32.mxu0 0.0
        %6179 = vmatmul.mubr.f32.gmra.mrb[0].mxu0 %v5625
        %v6180 = vpop.f32.mrb[0].mxu0
        %v6181 = vadd.f32 0.0, %v6180
        %v6182 = vpop.f32.mrb[0].mxu0
        %6183 = vmatprep.mubr.f32.mxu0 0.0
        %6184 = vmatmul.mubr.f32.gmra.mrb[0].mxu0 %v5628
        %v6185 = vpop.f32.mrb[0].mxu0
        %v6186 = vadd.f32 0.0, %v6185
        %v6187 = vpop.f32.mrb[0].mxu0
        %6188 = vmatprep.mubr.f32.mxu0 0.0
        %6189 = vmatmul.mubr.f32.gmra.mrb[0].mxu0 %v5631
        %v6190 = vpop.f32.mrb[0].mxu0
        %v6191 = vadd.f32 0.0, %v6190
        %v6192 = vpop.f32.mrb[0].mxu0
        %6193 = vmatprep.mubr.f32.mxu0 0.0
        %6194 = vmatmul.mubr.f32.gmra.mrb[0].mxu0 %v5634
        %v6195 = vpop.f32.mrb[0].mxu0
        %v6196 = vadd.f32 0.0, %v6195
        %v6197 = vpop.f32.mrb[0].mxu0
        %6198 = vmatprep.mubr.f32.mxu0 0.0
        %6199 = vmatmul.mubr.f32.gmra.mrb[0].mxu0 %v5637
        %v6200 = vpop.f32.mrb[0].mxu0
        %v6201 = vadd.f32 0.0, %v6200
        %v6202 = vpop.f32.mrb[0].mxu0
        %6203 = vmatprep.mubr.f32.mxu0 0.0
        %6204 = vmatmul.mubr.f32.gmra.mrb[0].mxu0 %v5640
        %v6205 = vpop.f32.mrb[0].mxu0
        %v6206 = vadd.f32 0.0, %v6205
        %v6207 = vpop.f32.mrb[0].mxu0
        %6208 = vmatprep.mubr.f32.mxu0 0.0
        %6209 = vmatmul.mubr.f32.gmra.mrb[0].mxu0 %v5643
        %v6210 = vpop.f32.mrb[0].mxu0
        %v6211 = vadd.f32 0.0, %v6210
        %v6212 = vpop.f32.mrb[0].mxu0
        %6213 = vmatprep.mubr.f32.mxu0 0.0
        %6214 = vmatmul.mubr.f32.gmra.mrb[0].mxu0 %v5646
        %v6215 = vpop.f32.mrb[0].mxu0
        %v6216 = vadd.f32 0.0, %v6215
        %v6217 = vpop.f32.mrb[0].mxu0
        %6218 = vmatprep.mubr.f32.mxu0 0.0
        %6219 = vmatmul.mubr.f32.gmra.mrb[0].mxu0 %v5649
        %v6220 = vpop.f32.mrb[0].mxu0
        %v6221 = vadd.f32 0.0, %v6220
        %v6222 = vpop.f32.mrb[0].mxu0
        %6223 = vmatprep.mubr.f32.mxu0 0.0
        %6224 = vmatmul.mubr.f32.gmra.mrb[0].mxu0 %v5652
        %v6225 = vpop.f32.mrb[0].mxu0
        %v6226 = vadd.f32 0.0, %v6225
        %v6227 = vpop.f32.mrb[0].mxu0
        %6228 = vmatprep.mubr.f32.mxu0 0.0
        %6229 = vmatmul.mubr.f32.gmra.mrb[0].mxu0 %v5655
        %v6230 = vpop.f32.mrb[0].mxu0
        %v6231 = vadd.f32 0.0, %v6230
        %v6232 = vpop.f32.mrb[0].mxu0
        %6233 = vmatprep.mubr.f32.mxu0 0.0
        %6234 = vmatmul.mubr.f32.gmra.mrb[0].mxu0 %v5658
        %v6235 = vpop.f32.mrb[0].mxu0
        %v6236 = vadd.f32 0.0, %v6235
        %v6237 = vpop.f32.mrb[0].mxu0
        %6238 = vmatprep.mubr.f32.mxu0 0.0
        %6239 = vmatmul.mubr.f32.gmra.mrb[0].mxu0 %v5661
        %v6240 = vpop.f32.mrb[0].mxu0
        %v6241 = vadd.f32 0.0, %v6240
        %v6242 = vpop.f32.mrb[0].mxu0
        %6243 = vmatprep.mubr.f32.mxu0 0.0
        %6244 = vmatmul.mubr.f32.gmra.mrb[0].mxu0 %v5664
        %v6245 = vpop.f32.mrb[0].mxu0
        %v6246 = vadd.f32 0.0, %v6245
        %v6247 = vpop.f32.mrb[0].mxu0
        %6248 = vmatprep.mubr.f32.mxu0 0.0
        %6249 = vmatmul.mubr.f32.gmra.mrb[0].mxu0 %v5667
        %v6250 = vpop.f32.mrb[0].mxu0
        %v6251 = vadd.f32 0.0, %v6250
        %v6252 = vpop.f32.mrb[0].mxu0
        %6253 = vmatprep.mubr.f32.mxu0 0.0
        %6254 = vmatmul.mubr.f32.gmra.mrb[0].mxu0 %v5670
        %v6255 = vpop.f32.mrb[0].mxu0
        %v6256 = vadd.f32 0.0, %v6255
        %v6257 = vpop.f32.mrb[0].mxu0
        %6258 = vmatprep.mubr.f32.mxu0 0.0
        %6259 = vmatmul.mubr.f32.gmra.mrb[0].mxu0 %v5673
        %v6260 = vpop.f32.mrb[0].mxu0
        %v6261 = vadd.f32 0.0, %v6260
        %v6262 = vpop.f32.mrb[0].mxu0
        %6263 = vmatprep.mubr.f32.mxu0 0.0
        %6264 = vmatmul.mubr.f32.gmra.mrb[0].mxu0 %v5676
        %v6265 = vpop.f32.mrb[0].mxu0
        %v6266 = vadd.f32 0.0, %v6265
        %v6267 = vpop.f32.mrb[0].mxu0
        %6268 = vmatprep.mubr.f32.mxu0 0.0
        %6269 = vmatmul.mubr.f32.gmra.mrb[0].mxu0 %v5679
        %v6270 = vpop.f32.mrb[0].mxu0
        %v6271 = vadd.f32 0.0, %v6270
        %v6272 = vpop.f32.mrb[0].mxu0
        %6273 = vmatprep.mubr.f32.mxu0 0.0
        %6274 = vmatmul.mubr.f32.gmra.mrb[0].mxu0 %v5682
        %v6275 = vpop.f32.mrb[0].mxu0
        %v6276 = vadd.f32 0.0, %v6275
        %v6277 = vpop.f32.mrb[0].mxu0
        %6278 = vmatprep.mubr.f32.mxu0 0.0
        %6279 = vmatmul.mubr.f32.gmra.mrb[0].mxu0 %v5685
        %v6280 = vpop.f32.mrb[0].mxu0
        %v6281 = vadd.f32 0.0, %v6280
        %v6282 = vpop.f32.mrb[0].mxu0
        %6283 = vmatprep.mubr.f32.mxu0 0.0
        %6284 = vmatmul.mubr.f32.gmra.mrb[0].mxu0 %v5688
        %v6285 = vpop.f32.mrb[0].mxu0
        %v6286 = vadd.f32 0.0, %v6285
        %v6287 = vpop.f32.mrb[0].mxu0
        %6288 = vmatprep.mubr.f32.mxu0 0.0
        %6289 = vmatmul.mubr.f32.gmra.mrb[0].mxu0 %v5691
        %v6290 = vpop.f32.mrb[0].mxu0
        %v6291 = vadd.f32 0.0, %v6290
        %v6292 = vpop.f32.mrb[0].mxu0
        %6293 = vmatprep.mubr.f32.mxu0 0.0
        %6294 = vmatmul.mubr.f32.gmra.mrb[0].mxu0 %v5694
        %v6295 = vpop.f32.mrb[0].mxu0
        %v6296 = vadd.f32 0.0, %v6295
        %v6297 = vpop.f32.mrb[0].mxu0
        %6298 = vmatprep.mubr.f32.mxu0 0.0
        %6299 = vmatmul.mubr.f32.gmra.mrb[0].mxu0 %v5697
        %v6300 = vpop.f32.mrb[0].mxu0
        %v6301 = vadd.f32 0.0, %v6300
        %v6302 = vpop.f32.mrb[0].mxu0
        %6303 = vmatprep.mubr.f32.mxu0 0.0
        %6304 = vmatmul.mubr.f32.gmra.mrb[0].mxu0 %v5700
        %v6305 = vpop.f32.mrb[0].mxu0
        %v6306 = vadd.f32 0.0, %v6305
        %v6307 = vpop.f32.mrb[0].mxu0
        %6308 = vmatprep.mubr.f32.mxu0 0.0
        %6309 = vmatmul.mubr.f32.gmra.mrb[0].mxu0 %v5703
        %v6310 = vpop.f32.mrb[0].mxu0
        %v6311 = vadd.f32 0.0, %v6310
        %v6312 = vpop.f32.mrb[0].mxu0
        %6313 = vmatprep.mubr.f32.mxu0 0.0
        %6314 = vmatmul.mubr.f32.gmra.mrb[0].mxu0 %v5706
        %v6315 = vpop.f32.mrb[0].mxu0
        %v6316 = vadd.f32 0.0, %v6315
        %v6317 = vpop.f32.mrb[0].mxu0
        %6318 = vmatprep.mubr.f32.mxu0 0.0
        %6319 = vmatmul.mubr.f32.gmra.mrb[0].mxu0 %v5709
        %v6320 = vpop.f32.mrb[0].mxu0
        %v6321 = vadd.f32 0.0, %v6320
        %v6322 = vpop.f32.mrb[0].mxu0
        %6323 = vmatprep.mubr.f32.mxu0 0.0
        %6324 = vmatmul.mubr.f32.gmra.mrb[0].mxu0 %v5712
        %v6325 = vpop.f32.mrb[0].mxu0
        %v6326 = vadd.f32 0.0, %v6325
        %v6327 = vpop.f32.mrb[0].mxu0
        %6328 = vmatprep.mubr.f32.mxu0 0.0
        %6329 = vmatmul.mubr.f32.gmra.mrb[0].mxu0 %v5715
        %v6330 = vpop.f32.mrb[0].mxu0
        %v6331 = vadd.f32 0.0, %v6330
        %v6332 = vpop.f32.mrb[0].mxu0
        %6333 = vmatprep.mubr.f32.mxu0 0.0
        %6334 = vmatmul.mubr.f32.gmra.mrb[0].mxu0 %v5718
        %v6335 = vpop.f32.mrb[0].mxu0
        %v6336 = vadd.f32 0.0, %v6335
        %v6337 = vpop.f32.mrb[0].mxu0
        %6338 = vmatprep.mubr.f32.mxu0 0.0
        %6339 = vmatmul.mubr.f32.gmra.mrb[0].mxu0 %v5721
        %v6340 = vpop.f32.mrb[0].mxu0
        %v6341 = vadd.f32 0.0, %v6340
        %v6342 = vpop.f32.mrb[0].mxu0
        %6343 = vmatprep.mubr.f32.mxu0 0.0
        %6344 = vmatmul.mubr.f32.gmra.mrb[0].mxu0 %v5724
        %v6345 = vpop.f32.mrb[0].mxu0
        %v6346 = vadd.f32 0.0, %v6345
        %v6347 = vpop.f32.mrb[0].mxu0
        %6348 = vmatprep.mubr.f32.mxu0 0.0
        %6349 = vmatmul.mubr.f32.gmra.mrb[0].mxu0 %v5727
        %v6350 = vpop.f32.mrb[0].mxu0
        %v6351 = vadd.f32 0.0, %v6350
        %v6352 = vpop.f32.mrb[0].mxu0
        %6353 = vmatprep.mubr.f32.mxu0 0.0
        %6354 = vmatmul.mubr.f32.gmra.mrb[0].mxu0 %v5730
        %v6355 = vpop.f32.mrb[0].mxu0
        %v6356 = vadd.f32 0.0, %v6355
        %v6357 = vpop.f32.mrb[0].mxu0
        %6358 = vmatprep.mubr.f32.mxu0 0.0
        %6359 = vmatmul.mubr.f32.gmra.mrb[0].mxu0 %v5733
        %v6360 = vpop.f32.mrb[0].mxu0
        %v6361 = vadd.f32 0.0, %v6360
        %v6362 = vpop.f32.mrb[0].mxu0
        %6363 = vmatprep.mubr.f32.mxu0 0.0
        %6364 = vmatmul.mubr.f32.gmra.mrb[0].mxu0 %v5736
        %v6365 = vpop.f32.mrb[0].mxu0
        %v6366 = vadd.f32 0.0, %v6365
        %v6367 = vpop.f32.mrb[0].mxu0
        %6368 = vmatprep.mubr.f32.mxu0 0.0
        %6369 = vmatmul.mubr.f32.gmra.mrb[0].mxu0 %v5739
        %v6370 = vpop.f32.mrb[0].mxu0
        %v6371 = vadd.f32 0.0, %v6370
        %v6372 = vpop.f32.mrb[0].mxu0
        %6373 = vmatprep.mubr.f32.mxu0 0.0
        %6374 = vmatmul.mubr.f32.gmra.mrb[0].mxu0 %v5742
        %v6375 = vpop.f32.mrb[0].mxu0
        %v6376 = vadd.f32 0.0, %v6375
        %v6377 = vpop.f32.mrb[0].mxu0
        %6378 = vmatprep.mubr.f32.mxu0 0.0
        %6379 = vmatmul.mubr.f32.gmra.mrb[0].mxu0 %v5745
        %v6380 = vpop.f32.mrb[0].mxu0
        %v6381 = vadd.f32 0.0, %v6380
        %v6382 = vpop.f32.mrb[0].mxu0
        %6383 = vmatprep.mubr.f32.mxu0 0.0
        %6384 = vmatmul.mubr.f32.gmra.mrb[0].mxu0 %v5748
        %v6385 = vpop.f32.mrb[0].mxu0
        %v6386 = vadd.f32 0.0, %v6385
        %v6387 = vpop.f32.mrb[0].mxu0
        %6388 = vmatprep.mubr.f32.mxu0 0.0
        %6389 = vmatmul.mubr.f32.gmra.mrb[0].mxu0 %v5751
        %v6390 = vpop.f32.mrb[0].mxu0
        %v6391 = vadd.f32 0.0, %v6390
        %v6392 = vpop.f32.mrb[0].mxu0
        %6393 = vmatprep.mubr.f32.mxu0 0.0
        %6394 = vmatmul.mubr.f32.gmra.mrb[0].mxu0 %v5754
        %v6395 = vpop.f32.mrb[0].mxu0
        %v6396 = vadd.f32 0.0, %v6395
        %v6397 = vpop.f32.mrb[0].mxu0
        %6398 = vmatprep.mubr.f32.mxu0 0.0
        %6399 = vmatmul.mubr.f32.gmra.mrb[0].mxu0 %v5757
        %v6400 = vpop.f32.mrb[0].mxu0
        %v6401 = vadd.f32 0.0, %v6400
        %v6402 = vpop.f32.mrb[0].mxu0
        %6403 = vmatprep.mubr.f32.mxu0 0.0
        %6404 = vmatmul.mubr.f32.gmra.mrb[0].mxu0 %v5760
        %v6405 = vpop.f32.mrb[0].mxu0
        %v6406 = vadd.f32 0.0, %v6405
        %v6407 = vpop.f32.mrb[0].mxu0
        %6408 = vmatprep.mubr.f32.mxu0 0.0
        %6409 = vmatmul.mubr.f32.gmra.mrb[0].mxu0 %v5763
        %v6410 = vpop.f32.mrb[0].mxu0
        %v6411 = vadd.f32 0.0, %v6410
        %v6412 = vpop.f32.mrb[0].mxu0
        %6413 = vmatprep.mubr.f32.mxu0 0.0
        %6414 = vmatmul.mubr.f32.gmra.mrb[0].mxu0 %v5766
        %v6415 = vpop.f32.mrb[0].mxu0
        %v6416 = vadd.f32 0.0, %v6415
        %v6417 = vpop.f32.mrb[0].mxu0
        %6418 = vmatprep.mubr.f32.mxu0 0.0
        %6419 = vmatmul.mubr.f32.gmra.mrb[0].mxu0 %v5769
        %v6420 = vpop.f32.mrb[0].mxu0
        %v6421 = vadd.f32 0.0, %v6420
        %v6422 = vpop.f32.mrb[0].mxu0
        %6423 = vmatprep.mubr.f32.mxu0 0.0
        %6424 = vmatmul.mubr.f32.gmra.mrb[0].mxu0 %v5772
        %v6425 = vpop.f32.mrb[0].mxu0
        %v6426 = vadd.f32 0.0, %v6425
        %v6427 = vpop.f32.mrb[0].mxu0
        %6428 = vmatprep.mubr.f32.mxu0 0.0
        %6429 = vmatmul.mubr.f32.gmra.mrb[0].mxu0 %v5775
        %v6430 = vpop.f32.mrb[0].mxu0
        %v6431 = vadd.f32 0.0, %v6430
        %v6432 = vpop.f32.mrb[0].mxu0
        %6433 = vmatprep.mubr.f32.mxu0 0.0
        %6434 = vmatmul.mubr.f32.gmra.mrb[0].mxu0 %v5778
        %v6435 = vpop.f32.mrb[0].mxu0
        %v6436 = vadd.f32 0.0, %v6435
        %v6437 = vpop.f32.mrb[0].mxu0
        %6438 = vmatprep.mubr.f32.mxu0 0.0
        %6439 = vmatmul.mubr.f32.gmra.mrb[0].mxu0 %v5781
        %v6440 = vpop.f32.mrb[0].mxu0
        %v6441 = vadd.f32 0.0, %v6440
        %v6442 = vpop.f32.mrb[0].mxu0
        %6443 = vmatprep.mubr.f32.mxu0 0.0
        %6444 = vmatmul.mubr.f32.gmra.mrb[0].mxu0 %v5784
        %v6445 = vpop.f32.mrb[0].mxu0
        %v6446 = vadd.f32 0.0, %v6445
        %v6447 = vpop.f32.mrb[0].mxu0
        %6448 = vmatprep.mubr.f32.mxu0 0.0
        %6449 = vmatmul.mubr.f32.gmra.mrb[0].mxu0 %v5787
        %v6450 = vpop.f32.mrb[0].mxu0
        %v6451 = vadd.f32 0.0, %v6450
        %v6452 = vpop.f32.mrb[0].mxu0
        %6453 = vmatprep.mubr.f32.mxu0 0.0
        %6454 = vmatmul.mubr.f32.gmra.mrb[0].mxu0 %v5790
        %v6455 = vpop.f32.mrb[0].mxu0
        %v6456 = vadd.f32 0.0, %v6455
        %v6457 = vpop.f32.mrb[0].mxu0
        %6458 = vmatprep.mubr.f32.mxu0 0.0
        %6459 = vmatmul.mubr.f32.gmra.mrb[0].mxu0 %v5793
        %v6460 = vpop.f32.mrb[0].mxu0
        %v6461 = vadd.f32 0.0, %v6460
        %v6462 = vpop.f32.mrb[0].mxu0
        %6463 = vmatprep.mubr.f32.mxu0 0.0
        %6464 = vmatmul.mubr.f32.gmra.mrb[0].mxu0 %v5796
        %v6465 = vpop.f32.mrb[0].mxu0
        %v6466 = vadd.f32 0.0, %v6465
        %v6467 = vpop.f32.mrb[0].mxu0
        %6468 = vmatprep.mubr.f32.mxu0 0.0
        %6469 = vmatmul.mubr.f32.gmra.mrb[0].mxu0 %v5799
        %v6470 = vpop.f32.mrb[0].mxu0
        %v6471 = vadd.f32 0.0, %v6470
        %v6472 = vpop.f32.mrb[0].mxu0
        %6473 = vmatprep.mubr.f32.mxu0 0.0
        %6474 = vmatmul.mubr.f32.gmra.mrb[0].mxu0 %v5802
        %v6475 = vpop.f32.mrb[0].mxu0
        %v6476 = vadd.f32 0.0, %v6475
        %v6477 = vpop.f32.mrb[0].mxu0
        %6478 = vmatprep.mubr.f32.mxu0 0.0
        %6479 = vmatmul.mubr.f32.gmra.mrb[0].mxu0 %v5805
        %v6480 = vpop.f32.mrb[0].mxu0
        %v6481 = vadd.f32 0.0, %v6480
        %v6482 = vpop.f32.mrb[0].mxu0
        %6483 = vmatprep.mubr.f32.mxu0 0.0
        %6484 = vmatmul.mubr.f32.gmra.mrb[0].mxu0 %v5808
        %v6485 = vpop.f32.mrb[0].mxu0
        %v6486 = vadd.f32 0.0, %v6485
        %v6487 = vpop.f32.mrb[0].mxu0
        %6488 = vmatprep.mubr.f32.mxu0 0.0
        %6489 = vmatmul.mubr.f32.gmra.mrb[0].mxu0 %v5811
        %v6490 = vpop.f32.mrb[0].mxu0
        %v6491 = vadd.f32 0.0, %v6490
        %v6492 = vpop.f32.mrb[0].mxu0
        %6493 = vmatprep.mubr.f32.mxu0 0.0
        %6494 = vmatmul.mubr.f32.gmra.mrb[0].mxu0 %v5814
        %v6495 = vpop.f32.mrb[0].mxu0
        %v6496 = vadd.f32 0.0, %v6495
        %v6497 = vpop.f32.mrb[0].mxu0
        %6498 = vmatprep.mubr.f32.mxu0 0.0
        %6499 = vmatmul.mubr.f32.gmra.mrb[0].mxu0 %v5817
        %v6500 = vpop.f32.mrb[0].mxu0
        %v6501 = vadd.f32 0.0, %v6500
        %v6502 = vpop.f32.mrb[0].mxu0
        %6503 = vmatprep.mubr.f32.mxu0 0.0
        %6504 = vmatmul.mubr.f32.gmra.mrb[0].mxu0 %v5820
        %v6505 = vpop.f32.mrb[0].mxu0
        %v6506 = vadd.f32 0.0, %v6505
        %v6507 = vpop.f32.mrb[0].mxu0
        %6508 = vmatprep.mubr.f32.mxu0 0.0
        %6509 = vmatmul.mubr.f32.gmra.mrb[0].mxu0 %v5823
        %v6510 = vpop.f32.mrb[0].mxu0
        %v6511 = vadd.f32 0.0, %v6510
        %v6512 = vpop.f32.mrb[0].mxu0
        %6513 = vmatprep.mubr.f32.mxu0 0.0
        %6514 = vmatmul.mubr.f32.gmra.mrb[0].mxu0 %v5826
        %v6515 = vpop.f32.mrb[0].mxu0
        %v6516 = vadd.f32 0.0, %v6515
        %v6517 = vpop.f32.mrb[0].mxu0
        %6518 = vmatprep.mubr.f32.mxu0 0.0
        %6519 = vmatmul.mubr.f32.gmra.mrb[0].mxu0 %v5829
        %v6520 = vpop.f32.mrb[0].mxu0
        %v6521 = vadd.f32 0.0, %v6520
        %v6522 = vpop.f32.mrb[0].mxu0
        %6523 = vmatprep.mubr.f32.mxu0 0.0
        %6524 = vmatmul.mubr.f32.gmra.mrb[0].mxu0 %v5832
        %v6525 = vpop.f32.mrb[0].mxu0
        %v6526 = vadd.f32 0.0, %v6525
        %v6527 = vpop.f32.mrb[0].mxu0
        %6528 = vmatprep.mubr.f32.mxu0 0.0
        %6529 = vmatmul.mubr.f32.gmra.mrb[0].mxu0 %v5835
        %v6530 = vpop.f32.mrb[0].mxu0
        %v6531 = vadd.f32 0.0, %v6530
        %v6532 = vpop.f32.mrb[0].mxu0
        %6533 = vmatprep.mubr.f32.mxu0 0.0
        %6534 = vmatmul.mubr.f32.gmra.mrb[0].mxu0 %v5838
        %v6535 = vpop.f32.mrb[0].mxu0
        %v6536 = vadd.f32 0.0, %v6535
        %v6537 = vpop.f32.mrb[0].mxu0
        %6538 = vmatprep.mubr.f32.mxu0 0.0
        %6539 = vmatmul.mubr.f32.gmra.mrb[0].mxu0 %v5841
        %v6540 = vpop.f32.mrb[0].mxu0
        %v6541 = vadd.f32 0.0, %v6540
        %v6542 = vpop.f32.mrb[0].mxu0
        %6543 = vmatprep.mubr.f32.mxu0 0.0
        %6544 = vmatmul.mubr.f32.gmra.mrb[0].mxu0 %v5844
        %v6545 = vpop.f32.mrb[0].mxu0
        %v6546 = vadd.f32 0.0, %v6545
        %v6547 = vpop.f32.mrb[0].mxu0
        %6548 = vmatprep.mubr.f32.mxu0 0.0
        %6549 = vmatmul.mubr.f32.gmra.mrb[0].mxu0 %v5847
        %v6550 = vpop.f32.mrb[0].mxu0
        %v6551 = vadd.f32 0.0, %v6550
        %v6552 = vpop.f32.mrb[0].mxu0
        %6553 = vdwg.mxu0
        %v6554 = vadd.f32 %v5207, %v5916
        %v6555 = vadd.f32 %v5208, %v5921
        %v6556 = vadd.f32 %v5209, %v5926
        %v6557 = vadd.f32 %v5210, %v5931
        %v6558 = vadd.f32 %v5211, %v5936
        %v6559 = vadd.f32 %v5212, %v5941
        %v6560 = vadd.f32 %v5213, %v5946
        %v6561 = vadd.f32 %v5214, %v5951
        %v6562 = vadd.f32 %v5215, %v5956
        %v6563 = vadd.f32 %v5216, %v5961
        %v6564 = vadd.f32 %v5217, %v5966
        %v6565 = vadd.f32 %v5218, %v5971
        %v6566 = vadd.f32 %v5219, %v5976
        %v6567 = vadd.f32 %v5220, %v5981
        %v6568 = vadd.f32 %v5221, %v5986
        %v6569 = vadd.f32 %v5222, %v5991
        %v6570 = vadd.f32 %v5223, %v5996
        %v6571 = vadd.f32 %v5224, %v6001
        %v6572 = vadd.f32 %v5225, %v6006
        %v6573 = vadd.f32 %v5226, %v6011
        %v6574 = vadd.f32 %v5227, %v6016
        %v6575 = vadd.f32 %v5228, %v6021
        %v6576 = vadd.f32 %v5229, %v6026
        %v6577 = vadd.f32 %v5230, %v6031
        %v6578 = vadd.f32 %v5231, %v6036
        %v6579 = vadd.f32 %v5232, %v6041
        %v6580 = vadd.f32 %v5233, %v6046
        %v6581 = vadd.f32 %v5234, %v6051
        %v6582 = vadd.f32 %v5235, %v6056
        %v6583 = vadd.f32 %v5236, %v6061
        %v6584 = vadd.f32 %v5237, %v6066
        %v6585 = vadd.f32 %v5238, %v6071
        %v6586 = vadd.f32 %v5239, %v6076
        %v6587 = vadd.f32 %v5240, %v6081
        %v6588 = vadd.f32 %v5241, %v6086
        %v6589 = vadd.f32 %v5242, %v6091
        %v6590 = vadd.f32 %v5243, %v6096
        %v6591 = vadd.f32 %v5244, %v6101
        %v6592 = vadd.f32 %v5245, %v6106
        %v6593 = vadd.f32 %v5246, %v6111
        %v6594 = vadd.f32 %v5247, %v6116
        %v6595 = vadd.f32 %v5248, %v6121
        %v6596 = vadd.f32 %v5249, %v6126
        %v6597 = vadd.f32 %v5250, %v6131
        %v6598 = vadd.f32 %v5251, %v6136
        %v6599 = vadd.f32 %v5252, %v6141
        %v6600 = vadd.f32 %v5253, %v6146
        %v6601 = vadd.f32 %v5254, %v6151
        %v6602 = vadd.f32 %v5255, %v6156
        %v6603 = vadd.f32 %v5256, %v6161
        %v6604 = vadd.f32 %v5257, %v6166
        %v6605 = vadd.f32 %v5258, %v6171
        %v6606 = vadd.f32 %v5259, %v6176
        %v6607 = vadd.f32 %v5260, %v6181
        %v6608 = vadd.f32 %v5261, %v6186
        %v6609 = vadd.f32 %v5262, %v6191
        %v6610 = vadd.f32 %v5263, %v6196
        %v6611 = vadd.f32 %v5264, %v6201
        %v6612 = vadd.f32 %v5265, %v6206
        %v6613 = vadd.f32 %v5266, %v6211
        %v6614 = vadd.f32 %v5267, %v6216
        %v6615 = vadd.f32 %v5268, %v6221
        %v6616 = vadd.f32 %v5269, %v6226
        %v6617 = vadd.f32 %v5270, %v6231
        %v6618 = vadd.f32 %v5271, %v6236
        %v6619 = vadd.f32 %v5272, %v6241
        %v6620 = vadd.f32 %v5273, %v6246
        %v6621 = vadd.f32 %v5274, %v6251
        %v6622 = vadd.f32 %v5275, %v6256
        %v6623 = vadd.f32 %v5276, %v6261
        %v6624 = vadd.f32 %v5277, %v6266
        %v6625 = vadd.f32 %v5278, %v6271
        %v6626 = vadd.f32 %v5279, %v6276
        %v6627 = vadd.f32 %v5280, %v6281
        %v6628 = vadd.f32 %v5281, %v6286
        %v6629 = vadd.f32 %v5282, %v6291
        %v6630 = vadd.f32 %v5283, %v6296
        %v6631 = vadd.f32 %v5284, %v6301
        %v6632 = vadd.f32 %v5285, %v6306
        %v6633 = vadd.f32 %v5286, %v6311
        %v6634 = vadd.f32 %v5287, %v6316
        %v6635 = vadd.f32 %v5288, %v6321
        %v6636 = vadd.f32 %v5289, %v6326
        %v6637 = vadd.f32 %v5290, %v6331
        %v6638 = vadd.f32 %v5291, %v6336
        %v6639 = vadd.f32 %v5292, %v6341
        %v6640 = vadd.f32 %v5293, %v6346
        %v6641 = vadd.f32 %v5294, %v6351
        %v6642 = vadd.f32 %v5295, %v6356
        %v6643 = vadd.f32 %v5296, %v6361
        %v6644 = vadd.f32 %v5297, %v6366
        %v6645 = vadd.f32 %v5298, %v6371
        %v6646 = vadd.f32 %v5299, %v6376
        %v6647 = vadd.f32 %v5300, %v6381
        %v6648 = vadd.f32 %v5301, %v6386
        %v6649 = vadd.f32 %v5302, %v6391
        %v6650 = vadd.f32 %v5303, %v6396
        %v6651 = vadd.f32 %v5304, %v6401
        %v6652 = vadd.f32 %v5305, %v6406
        %v6653 = vadd.f32 %v5306, %v6411
        %v6654 = vadd.f32 %v5307, %v6416
        %v6655 = vadd.f32 %v5308, %v6421
        %v6656 = vadd.f32 %v5309, %v6426
        %v6657 = vadd.f32 %v5310, %v6431
        %v6658 = vadd.f32 %v5311, %v6436
        %v6659 = vadd.f32 %v5312, %v6441
        %v6660 = vadd.f32 %v5313, %v6446
        %v6661 = vadd.f32 %v5314, %v6451
        %v6662 = vadd.f32 %v5315, %v6456
        %v6663 = vadd.f32 %v5316, %v6461
        %v6664 = vadd.f32 %v5317, %v6466
        %v6665 = vadd.f32 %v5318, %v6471
        %v6666 = vadd.f32 %v5319, %v6476
        %v6667 = vadd.f32 %v5320, %v6481
        %v6668 = vadd.f32 %v5321, %v6486
        %v6669 = vadd.f32 %v5322, %v6491
        %v6670 = vadd.f32 %v5323, %v6496
        %v6671 = vadd.f32 %v5324, %v6501
        %v6672 = vadd.f32 %v5325, %v6506
        %v6673 = vadd.f32 %v5326, %v6511
        %v6674 = vadd.f32 %v5327, %v6516
        %v6675 = vadd.f32 %v5328, %v6521
        %v6676 = vadd.f32 %v5329, %v6526
        %v6677 = vadd.f32 %v5330, %v6531
        %v6678 = vadd.f32 %v5331, %v6536
        %v6679 = vadd.f32 %v5332, %v6541
        %v6680 = vadd.f32 %v5333, %v6546
        %v6681 = vadd.f32 %v5334, %v6551
        %v6682 = vld [vmem:[%s3987 + $0x2] sm:$0xff]
        %v6683 = vld [vmem:[%s3987 + $0xa] sm:$0xff]
        %v6684 = vld [vmem:[%s3987 + $0x1a] sm:$0xff]
        %v6685 = vld [vmem:[%s3987 + $0x22] sm:$0xff]
        %v6686 = vld [vmem:[%s3987 + $0x32] sm:$0xff]
        %v6687 = vld [vmem:[%s3987 + $0x3a] sm:$0xff]
        %v6688 = vld [vmem:[%s3987 + $0x4a] sm:$0xff]
        %v6689 = vld [vmem:[%s3987 + $0x52] sm:$0xff]
        %v6690 = vld [vmem:[%s3987 + $0x62] sm:$0xff]
        %v6691 = vld [vmem:[%s3987 + $0x6a] sm:$0xff]
        %v6692 = vld [vmem:[%s3987 + $0x7a] sm:$0xff]
        %v6693 = vld [vmem:[%s3987 + $0x82] sm:$0xff]
        %v6694 = vld [vmem:[%s3987 + $0x92] sm:$0xff]
        %v6695 = vld [vmem:[%s3987 + $0x9a] sm:$0xff]
        %v6696 = vld [vmem:[%s3987 + $0xaa] sm:$0xff]
        %v6697 = vld [vmem:[%s3987 + $0xb2] sm:$0xff]
        %v6698 = vld [vmem:[%s3987 + $0xc2] sm:$0xff]
        %v6699 = vld [vmem:[%s3987 + $0xca] sm:$0xff]
        %v6700 = vld [vmem:[%s3987 + $0xda] sm:$0xff]
        %v6701 = vld [vmem:[%s3987 + $0xe2] sm:$0xff]
        %v6702 = vld [vmem:[%s3987 + $0xf2] sm:$0xff]
        %v6703 = vld [vmem:[%s3987 + $0xfa] sm:$0xff]
        %v6704 = vld [vmem:[%s3987 + $0x10a] sm:$0xff]
        %v6705 = vld [vmem:[%s3987 + $0x112] sm:$0xff]
        %v6706 = vld [vmem:[%s3987 + $0x122] sm:$0xff]
        %v6707 = vld [vmem:[%s3987 + $0x12a] sm:$0xff]
        %v6708 = vld [vmem:[%s3987 + $0x13a] sm:$0xff]
        %v6709 = vld [vmem:[%s3987 + $0x142] sm:$0xff]
        %v6710 = vld [vmem:[%s3987 + $0x152] sm:$0xff]
        %v6711 = vld [vmem:[%s3987 + $0x15a] sm:$0xff]
        %v6712 = vld [vmem:[%s3987 + $0x16a] sm:$0xff]
        %v6713 = vld [vmem:[%s3987 + $0x172] sm:$0xff]
        %v6714 = vld [vmem:[%s3987 + $0x1b2] sm:$0xff]
        %v6715 = vld [vmem:[%s3987 + $0x1ba] sm:$0xff]
        %v6716 = vld [vmem:[%s3987 + $0x1ca] sm:$0xff]
        %v6717 = vld [vmem:[%s3987 + $0x1d2] sm:$0xff]
        %v6718 = vld [vmem:[%s3987 + $0x1e2] sm:$0xff]
        %v6719 = vld [vmem:[%s3987 + $0x1ea] sm:$0xff]
        %v6720 = vld [vmem:[%s3987 + $0x1fa] sm:$0xff]
        %v6721 = vld [vmem:[%s3987 + $0x202] sm:$0xff]
        %v6722 = vld [vmem:[%s3987 + $0x212] sm:$0xff]
        %v6723 = vld [vmem:[%s3987 + $0x21a] sm:$0xff]
        %v6724 = vld [vmem:[%s3987 + $0x22a] sm:$0xff]
        %v6725 = vld [vmem:[%s3987 + $0x232] sm:$0xff]
        %v6726 = vld [vmem:[%s3987 + $0x242] sm:$0xff]
        %v6727 = vld [vmem:[%s3987 + $0x24a] sm:$0xff]
        %v6728 = vld [vmem:[%s3987 + $0x25a] sm:$0xff]
        %v6729 = vld [vmem:[%s3987 + $0x262] sm:$0xff]
        %v6730 = vld [vmem:[%s3987 + $0x272] sm:$0xff]
        %v6731 = vld [vmem:[%s3987 + $0x27a] sm:$0xff]
        %v6732 = vld [vmem:[%s3987 + $0x28a] sm:$0xff]
        %v6733 = vld [vmem:[%s3987 + $0x292] sm:$0xff]
        %v6734 = vld [vmem:[%s3987 + $0x2a2] sm:$0xff]
        %v6735 = vld [vmem:[%s3987 + $0x2aa] sm:$0xff]
        %v6736 = vld [vmem:[%s3987 + $0x2ba] sm:$0xff]
        %v6737 = vld [vmem:[%s3987 + $0x2c2] sm:$0xff]
        %v6738 = vld [vmem:[%s3987 + $0x2d2] sm:$0xff]
        %v6739 = vld [vmem:[%s3987 + $0x2da] sm:$0xff]
        %v6740 = vld [vmem:[%s3987 + $0x2ea] sm:$0xff]
        %v6741 = vld [vmem:[%s3987 + $0x2f2] sm:$0xff]
        %v6742 = vld [vmem:[%s3987 + $0x302] sm:$0xff]
        %v6743 = vld [vmem:[%s3987 + $0x30a] sm:$0xff]
        %v6744 = vld [vmem:[%s3987 + $0x31a] sm:$0xff]
        %v6745 = vld [vmem:[%s3987 + $0x322] sm:$0xff]
        %v6746 = vld [vmem:[%s3987 + $0x362] sm:$0xff]
        %v6747 = vld [vmem:[%s3987 + $0x36a] sm:$0xff]
        %v6748 = vld [vmem:[%s3987 + $0x37a] sm:$0xff]
        %v6749 = vld [vmem:[%s3987 + $0x382] sm:$0xff]
        %v6750 = vld [vmem:[%s3987 + $0x392] sm:$0xff]
        %v6751 = vld [vmem:[%s3987 + $0x39a] sm:$0xff]
        %v6752 = vld [vmem:[%s3987 + $0x3aa] sm:$0xff]
        %v6753 = vld [vmem:[%s3987 + $0x3b2] sm:$0xff]
        %v6754 = vld [vmem:[%s3987 + $0x3c2] sm:$0xff]
        %v6755 = vld [vmem:[%s3987 + $0x3ca] sm:$0xff]
        %v6756 = vld [vmem:[%s3987 + $0x3da] sm:$0xff]
        %v6757 = vld [vmem:[%s3987 + $0x3e2] sm:$0xff]
        %v6758 = vld [vmem:[%s3987 + $0x3f2] sm:$0xff]
        %v6759 = vld [vmem:[%s3987 + $0x3fa] sm:$0xff]
        %v6760 = vld [vmem:[%s3987 + $0x40a] sm:$0xff]
        %v6761 = vld [vmem:[%s3987 + $0x412] sm:$0xff]
        %v6762 = vld [vmem:[%s3987 + $0x422] sm:$0xff]
        %v6763 = vld [vmem:[%s3987 + $0x42a] sm:$0xff]
        %v6764 = vld [vmem:[%s3987 + $0x43a] sm:$0xff]
        %v6765 = vld [vmem:[%s3987 + $0x442] sm:$0xff]
        %v6766 = vld [vmem:[%s3987 + $0x452] sm:$0xff]
        %v6767 = vld [vmem:[%s3987 + $0x45a] sm:$0xff]
        %v6768 = vld [vmem:[%s3987 + $0x46a] sm:$0xff]
        %v6769 = vld [vmem:[%s3987 + $0x472] sm:$0xff]
        %v6770 = vld [vmem:[%s3987 + $0x482] sm:$0xff]
        %v6771 = vld [vmem:[%s3987 + $0x48a] sm:$0xff]
        %v6772 = vld [vmem:[%s3987 + $0x49a] sm:$0xff]
        %v6773 = vld [vmem:[%s3987 + $0x4a2] sm:$0xff]
        %v6774 = vld [vmem:[%s3987 + $0x4b2] sm:$0xff]
        %v6775 = vld [vmem:[%s3987 + $0x4ba] sm:$0xff]
        %v6776 = vld [vmem:[%s3987 + $0x4ca] sm:$0xff]
        %v6777 = vld [vmem:[%s3987 + $0x4d2] sm:$0xff]
        %v6778 = vld [vmem:[%s3987 + $0x512] sm:$0xff]
        %v6779 = vld [vmem:[%s3987 + $0x51a] sm:$0xff]
        %v6780 = vld [vmem:[%s3987 + $0x52a] sm:$0xff]
        %v6781 = vld [vmem:[%s3987 + $0x532] sm:$0xff]
        %v6782 = vld [vmem:[%s3987 + $0x542] sm:$0xff]
        %v6783 = vld [vmem:[%s3987 + $0x54a] sm:$0xff]
        %v6784 = vld [vmem:[%s3987 + $0x55a] sm:$0xff]
        %v6785 = vld [vmem:[%s3987 + $0x562] sm:$0xff]
        %v6786 = vld [vmem:[%s3987 + $0x572] sm:$0xff]
        %v6787 = vld [vmem:[%s3987 + $0x57a] sm:$0xff]
        %v6788 = vld [vmem:[%s3987 + $0x58a] sm:$0xff]
        %v6789 = vld [vmem:[%s3987 + $0x592] sm:$0xff]
        %v6790 = vld [vmem:[%s3987 + $0x5a2] sm:$0xff]
        %v6791 = vld [vmem:[%s3987 + $0x5aa] sm:$0xff]
        %v6792 = vld [vmem:[%s3987 + $0x5ba] sm:$0xff]
        %v6793 = vld [vmem:[%s3987 + $0x5c2] sm:$0xff]
        %v6794 = vld [vmem:[%s3987 + $0x5d2] sm:$0xff]
        %v6795 = vld [vmem:[%s3987 + $0x5da] sm:$0xff]
        %v6796 = vld [vmem:[%s3987 + $0x5ea] sm:$0xff]
        %v6797 = vld [vmem:[%s3987 + $0x5f2] sm:$0xff]
        %v6798 = vld [vmem:[%s3987 + $0x602] sm:$0xff]
        %v6799 = vld [vmem:[%s3987 + $0x60a] sm:$0xff]
        %v6800 = vld [vmem:[%s3987 + $0x61a] sm:$0xff]
        %v6801 = vld [vmem:[%s3987 + $0x622] sm:$0xff]
        %v6802 = vld [vmem:[%s3987 + $0x632] sm:$0xff]
        %v6803 = vld [vmem:[%s3987 + $0x63a] sm:$0xff]
        %v6804 = vld [vmem:[%s3987 + $0x64a] sm:$0xff]
        %v6805 = vld [vmem:[%s3987 + $0x652] sm:$0xff]
        %v6806 = vld [vmem:[%s3987 + $0x662] sm:$0xff]
        %v6807 = vld [vmem:[%s3987 + $0x66a] sm:$0xff]
        %v6808 = vld [vmem:[%s3987 + $0x67a] sm:$0xff]
        %v6809 = vld [vmem:[%s3987 + $0x682] sm:$0xff]
        %s6810 = scalar_lea.vmem %s1, 40
        %v6811 = vld [vmem:[%s6810] sm:$0xff]
        %v6813 = vsel %vm461, %v6682, 0
        %v6816 = vsel %vm461, %v6683, 0
        %v6819 = vsel %vm461, %v6684, 0
        %v6822 = vsel %vm461, %v6685, 0
        %v6825 = vsel %vm461, %v6686, 0
        %v6828 = vsel %vm461, %v6687, 0
        %v6831 = vsel %vm461, %v6688, 0
        %v6834 = vsel %vm461, %v6689, 0
        %v6837 = vsel %vm461, %v6690, 0
        %v6840 = vsel %vm461, %v6691, 0
        %v6843 = vsel %vm461, %v6692, 0
        %v6846 = vsel %vm461, %v6693, 0
        %v6849 = vsel %vm461, %v6694, 0
        %v6852 = vsel %vm461, %v6695, 0
        %v6855 = vsel %vm461, %v6696, 0
        %v6858 = vsel %vm461, %v6697, 0
        %v6861 = vsel %vm461, %v6698, 0
        %v6864 = vsel %vm461, %v6699, 0
        %v6867 = vsel %vm461, %v6700, 0
        %v6870 = vsel %vm461, %v6701, 0
        %v6873 = vsel %vm461, %v6702, 0
        %v6876 = vsel %vm461, %v6703, 0
        %v6879 = vsel %vm461, %v6704, 0
        %v6882 = vsel %vm461, %v6705, 0
        %v6885 = vsel %vm461, %v6706, 0
        %v6888 = vsel %vm461, %v6707, 0
        %v6891 = vsel %vm461, %v6708, 0
        %v6894 = vsel %vm461, %v6709, 0
        %v6897 = vsel %vm461, %v6710, 0
        %v6900 = vsel %vm461, %v6711, 0
        %v6903 = vsel %vm461, %v6712, 0
        %v6906 = vsel %vm461, %v6713, 0
        %v6909 = vsel %vm461, %v6714, 0
        %v6912 = vsel %vm461, %v6715, 0
        %v6915 = vsel %vm461, %v6716, 0
        %v6918 = vsel %vm461, %v6717, 0
        %v6921 = vsel %vm461, %v6718, 0
        %v6924 = vsel %vm461, %v6719, 0
        %v6927 = vsel %vm461, %v6720, 0
        %v6930 = vsel %vm461, %v6721, 0
        %v6933 = vsel %vm461, %v6722, 0
        %v6936 = vsel %vm461, %v6723, 0
        %v6939 = vsel %vm461, %v6724, 0
        %v6942 = vsel %vm461, %v6725, 0
        %v6945 = vsel %vm461, %v6726, 0
        %v6948 = vsel %vm461, %v6727, 0
        %v6951 = vsel %vm461, %v6728, 0
        %v6954 = vsel %vm461, %v6729, 0
        %v6957 = vsel %vm461, %v6730, 0
        %v6960 = vsel %vm461, %v6731, 0
        %v6963 = vsel %vm461, %v6732, 0
        %v6966 = vsel %vm461, %v6733, 0
        %v6969 = vsel %vm461, %v6734, 0
        %v6972 = vsel %vm461, %v6735, 0
        %v6975 = vsel %vm461, %v6736, 0
        %v6978 = vsel %vm461, %v6737, 0
        %v6981 = vsel %vm461, %v6738, 0
        %v6984 = vsel %vm461, %v6739, 0
        %v6987 = vsel %vm461, %v6740, 0
        %v6990 = vsel %vm461, %v6741, 0
        %v6993 = vsel %vm461, %v6742, 0
        %v6996 = vsel %vm461, %v6743, 0
        %v6999 = vsel %vm461, %v6744, 0
        %v7002 = vsel %vm461, %v6745, 0
        %v7005 = vsel %vm461, %v6746, 0
        %v7008 = vsel %vm461, %v6747, 0
        %v7011 = vsel %vm461, %v6748, 0
        %v7014 = vsel %vm461, %v6749, 0
        %v7017 = vsel %vm461, %v6750, 0
        %v7020 = vsel %vm461, %v6751, 0
        %v7023 = vsel %vm461, %v6752, 0
        %v7026 = vsel %vm461, %v6753, 0
        %v7029 = vsel %vm461, %v6754, 0
        %v7032 = vsel %vm461, %v6755, 0
        %v7035 = vsel %vm461, %v6756, 0
        %v7038 = vsel %vm461, %v6757, 0
        %v7041 = vsel %vm461, %v6758, 0
        %v7044 = vsel %vm461, %v6759, 0
        %v7047 = vsel %vm461, %v6760, 0
        %v7050 = vsel %vm461, %v6761, 0
        %v7053 = vsel %vm461, %v6762, 0
        %v7056 = vsel %vm461, %v6763, 0
        %v7059 = vsel %vm461, %v6764, 0
        %v7062 = vsel %vm461, %v6765, 0
        %v7065 = vsel %vm461, %v6766, 0
        %v7068 = vsel %vm461, %v6767, 0
        %v7071 = vsel %vm461, %v6768, 0
        %v7074 = vsel %vm461, %v6769, 0
        %v7077 = vsel %vm461, %v6770, 0
        %v7080 = vsel %vm461, %v6771, 0
        %v7083 = vsel %vm461, %v6772, 0
        %v7086 = vsel %vm461, %v6773, 0
        %v7089 = vsel %vm461, %v6774, 0
        %v7092 = vsel %vm461, %v6775, 0
        %v7095 = vsel %vm461, %v6776, 0
        %v7098 = vsel %vm461, %v6777, 0
        %v7101 = vsel %vm461, %v6778, 0
        %v7104 = vsel %vm461, %v6779, 0
        %v7107 = vsel %vm461, %v6780, 0
        %v7110 = vsel %vm461, %v6781, 0
        %v7113 = vsel %vm461, %v6782, 0
        %v7116 = vsel %vm461, %v6783, 0
        %v7119 = vsel %vm461, %v6784, 0
        %v7122 = vsel %vm461, %v6785, 0
        %v7125 = vsel %vm461, %v6786, 0
        %v7128 = vsel %vm461, %v6787, 0
        %v7131 = vsel %vm461, %v6788, 0
        %v7134 = vsel %vm461, %v6789, 0
        %v7137 = vsel %vm461, %v6790, 0
        %v7140 = vsel %vm461, %v6791, 0
        %v7143 = vsel %vm461, %v6792, 0
        %v7146 = vsel %vm461, %v6793, 0
        %v7149 = vsel %vm461, %v6794, 0
        %v7152 = vsel %vm461, %v6795, 0
        %v7155 = vsel %vm461, %v6796, 0
        %v7158 = vsel %vm461, %v6797, 0
        %v7161 = vsel %vm461, %v6798, 0
        %v7164 = vsel %vm461, %v6799, 0
        %v7167 = vsel %vm461, %v6800, 0
        %v7170 = vsel %vm461, %v6801, 0
        %v7173 = vsel %vm461, %v6802, 0
        %v7176 = vsel %vm461, %v6803, 0
        %v7179 = vsel %vm461, %v6804, 0
        %v7182 = vsel %vm461, %v6805, 0
        %v7185 = vsel %vm461, %v6806, 0
        %v7188 = vsel %vm461, %v6807, 0
        %v7191 = vsel %vm461, %v6808, 0
        %v7194 = vsel %vm461, %v6809, 0
        %7196 = vmatprep.subr.mxu0 0.0
        %7197 = vmatpush1.msra.mxu0 %v6811
        %7198 = vmatprep.subr.mxu0 0.0
        %7199 = vmatpush1.msra.mxu0 0.0
        %7200 = vmatprep.subr.mxu0 0.0
        %7201 = vmatpush1.msra.mxu0 0.0
        %7202 = vmatprep.subr.mxu0 0.0
        %7203 = vmatpush1.msra.mxu0 0.0
        %7204 = vmatprep.subr.mxu0 0.0
        %7205 = vmatpush1.msra.mxu0 0.0
        %7206 = vmatprep.subr.mxu0 0.0
        %7207 = vmatpush1.msra.mxu0 0.0
        %7208 = vmatprep.subr.mxu0 0.0
        %7209 = vmatpush1.msra.mxu0 0.0
        %7210 = vmatprep.subr.mxu0 0.0
        %7211 = vmatpush1.msra.mxu0 0.0
        %7212 = vmatprep.subr.mxu0 0.0
        %7213 = vmatpush1.msra.mxu0 0.0
        %7214 = vmatprep.subr.mxu0 0.0
        %7215 = vmatpush1.msra.mxu0 0.0
        %7216 = vmatprep.subr.mxu0 0.0
        %7217 = vmatpush1.msra.mxu0 0.0
        %7218 = vmatprep.subr.mxu0 0.0
        %7219 = vmatpush1.msra.mxu0 0.0
        %7220 = vmatprep.subr.mxu0 0.0
        %7221 = vmatpush1.msra.mxu0 0.0
        %7222 = vmatprep.subr.mxu0 0.0
        %7223 = vmatpush1.msra.mxu0 0.0
        %7224 = vmatprep.subr.mxu0 0.0
        %7225 = vmatpush1.msra.mxu0 0.0
        %7226 = vmatprep.subr.mxu0 0.0
        %7227 = vmatpush1.msra.mxu0 0.0
        %7228 = vmatprep.subr.mxu0 0.0
        %7229 = vmatpush1.msra.mxu0 0.0
        %7230 = vmatprep.subr.mxu0 0.0
        %7231 = vmatpush1.msra.mxu0 0.0
        %7232 = vmatprep.subr.mxu0 0.0
        %7233 = vmatpush1.msra.mxu0 0.0
        %7234 = vmatprep.subr.mxu0 0.0
        %7235 = vmatpush1.msra.mxu0 0.0
        %7236 = vmatprep.subr.mxu0 0.0
        %7237 = vmatpush1.msra.mxu0 0.0
        %7238 = vmatprep.subr.mxu0 0.0
        %7239 = vmatpush1.msra.mxu0 0.0
        %7240 = vmatprep.subr.mxu0 0.0
        %7241 = vmatpush1.msra.mxu0 0.0
        %7242 = vmatprep.subr.mxu0 0.0
        %7243 = vmatpush1.msra.mxu0 0.0
        %7244 = vmatprep.subr.mxu0 0.0
        %7245 = vmatpush1.msra.mxu0 0.0
        %7246 = vmatprep.subr.mxu0 0.0
        %7247 = vmatpush1.msra.mxu0 0.0
        %7248 = vmatprep.subr.mxu0 0.0
        %7249 = vmatpush1.msra.mxu0 0.0
        %7250 = vmatprep.subr.mxu0 0.0
        %7251 = vmatpush1.msra.mxu0 0.0
        %7252 = vmatprep.subr.mxu0 0.0
        %7253 = vmatpush1.msra.mxu0 0.0
        %7254 = vmatprep.subr.mxu0 0.0
        %7255 = vmatpush1.msra.mxu0 0.0
        %7256 = vmatprep.subr.mxu0 0.0
        %7257 = vmatpush1.msra.mxu0 0.0
        %7258 = vmatprep.subr.mxu0 0.0
        %7259 = vmatpush1.msra.mxu0 0.0
        %7260 = vmatprep.mubr.f32.mxu0 0.0
        %7261 = vmatmul.mubr.f32.gmra.mrb[0].mxu0 %v6813
        %v7262 = vpop.f32.mrb[0].mxu0
        %v7263 = vadd.f32 0.0, %v7262
        %v7264 = vpop.f32.mrb[0].mxu0
        %7265 = vmatprep.mubr.f32.mxu0 0.0
        %7266 = vmatmul.mubr.f32.gmra.mrb[0].mxu0 %v6816
        %v7267 = vpop.f32.mrb[0].mxu0
        %v7268 = vadd.f32 0.0, %v7267
        %v7269 = vpop.f32.mrb[0].mxu0
        %7270 = vmatprep.mubr.f32.mxu0 0.0
        %7271 = vmatmul.mubr.f32.gmra.mrb[0].mxu0 %v6819
        %v7272 = vpop.f32.mrb[0].mxu0
        %v7273 = vadd.f32 0.0, %v7272
        %v7274 = vpop.f32.mrb[0].mxu0
        %7275 = vmatprep.mubr.f32.mxu0 0.0
        %7276 = vmatmul.mubr.f32.gmra.mrb[0].mxu0 %v6822
        %v7277 = vpop.f32.mrb[0].mxu0
        %v7278 = vadd.f32 0.0, %v7277
        %v7279 = vpop.f32.mrb[0].mxu0
        %7280 = vmatprep.mubr.f32.mxu0 0.0
        %7281 = vmatmul.mubr.f32.gmra.mrb[0].mxu0 %v6825
        %v7282 = vpop.f32.mrb[0].mxu0
        %v7283 = vadd.f32 0.0, %v7282
        %v7284 = vpop.f32.mrb[0].mxu0
        %7285 = vmatprep.mubr.f32.mxu0 0.0
        %7286 = vmatmul.mubr.f32.gmra.mrb[0].mxu0 %v6828
        %v7287 = vpop.f32.mrb[0].mxu0
        %v7288 = vadd.f32 0.0, %v7287
        %v7289 = vpop.f32.mrb[0].mxu0
        %7290 = vmatprep.mubr.f32.mxu0 0.0
        %7291 = vmatmul.mubr.f32.gmra.mrb[0].mxu0 %v6831
        %v7292 = vpop.f32.mrb[0].mxu0
        %v7293 = vadd.f32 0.0, %v7292
        %v7294 = vpop.f32.mrb[0].mxu0
        %7295 = vmatprep.mubr.f32.mxu0 0.0
        %7296 = vmatmul.mubr.f32.gmra.mrb[0].mxu0 %v6834
        %v7297 = vpop.f32.mrb[0].mxu0
        %v7298 = vadd.f32 0.0, %v7297
        %v7299 = vpop.f32.mrb[0].mxu0
        %7300 = vmatprep.mubr.f32.mxu0 0.0
        %7301 = vmatmul.mubr.f32.gmra.mrb[0].mxu0 %v6837
        %v7302 = vpop.f32.mrb[0].mxu0
        %v7303 = vadd.f32 0.0, %v7302
        %v7304 = vpop.f32.mrb[0].mxu0
        %7305 = vmatprep.mubr.f32.mxu0 0.0
        %7306 = vmatmul.mubr.f32.gmra.mrb[0].mxu0 %v6840
        %v7307 = vpop.f32.mrb[0].mxu0
        %v7308 = vadd.f32 0.0, %v7307
        %v7309 = vpop.f32.mrb[0].mxu0
        %7310 = vmatprep.mubr.f32.mxu0 0.0
        %7311 = vmatmul.mubr.f32.gmra.mrb[0].mxu0 %v6843
        %v7312 = vpop.f32.mrb[0].mxu0
        %v7313 = vadd.f32 0.0, %v7312
        %v7314 = vpop.f32.mrb[0].mxu0
        %7315 = vmatprep.mubr.f32.mxu0 0.0
        %7316 = vmatmul.mubr.f32.gmra.mrb[0].mxu0 %v6846
        %v7317 = vpop.f32.mrb[0].mxu0
        %v7318 = vadd.f32 0.0, %v7317
        %v7319 = vpop.f32.mrb[0].mxu0
        %7320 = vmatprep.mubr.f32.mxu0 0.0
        %7321 = vmatmul.mubr.f32.gmra.mrb[0].mxu0 %v6849
        %v7322 = vpop.f32.mrb[0].mxu0
        %v7323 = vadd.f32 0.0, %v7322
        %v7324 = vpop.f32.mrb[0].mxu0
        %7325 = vmatprep.mubr.f32.mxu0 0.0
        %7326 = vmatmul.mubr.f32.gmra.mrb[0].mxu0 %v6852
        %v7327 = vpop.f32.mrb[0].mxu0
        %v7328 = vadd.f32 0.0, %v7327
        %v7329 = vpop.f32.mrb[0].mxu0
        %7330 = vmatprep.mubr.f32.mxu0 0.0
        %7331 = vmatmul.mubr.f32.gmra.mrb[0].mxu0 %v6855
        %v7332 = vpop.f32.mrb[0].mxu0
        %v7333 = vadd.f32 0.0, %v7332
        %v7334 = vpop.f32.mrb[0].mxu0
        %7335 = vmatprep.mubr.f32.mxu0 0.0
        %7336 = vmatmul.mubr.f32.gmra.mrb[0].mxu0 %v6858
        %v7337 = vpop.f32.mrb[0].mxu0
        %v7338 = vadd.f32 0.0, %v7337
        %v7339 = vpop.f32.mrb[0].mxu0
        %7340 = vmatprep.mubr.f32.mxu0 0.0
        %7341 = vmatmul.mubr.f32.gmra.mrb[0].mxu0 %v6861
        %v7342 = vpop.f32.mrb[0].mxu0
        %v7343 = vadd.f32 0.0, %v7342
        %v7344 = vpop.f32.mrb[0].mxu0
        %7345 = vmatprep.mubr.f32.mxu0 0.0
        %7346 = vmatmul.mubr.f32.gmra.mrb[0].mxu0 %v6864
        %v7347 = vpop.f32.mrb[0].mxu0
        %v7348 = vadd.f32 0.0, %v7347
        %v7349 = vpop.f32.mrb[0].mxu0
        %7350 = vmatprep.mubr.f32.mxu0 0.0
        %7351 = vmatmul.mubr.f32.gmra.mrb[0].mxu0 %v6867
        %v7352 = vpop.f32.mrb[0].mxu0
        %v7353 = vadd.f32 0.0, %v7352
        %v7354 = vpop.f32.mrb[0].mxu0
        %7355 = vmatprep.mubr.f32.mxu0 0.0
        %7356 = vmatmul.mubr.f32.gmra.mrb[0].mxu0 %v6870
        %v7357 = vpop.f32.mrb[0].mxu0
        %v7358 = vadd.f32 0.0, %v7357
        %v7359 = vpop.f32.mrb[0].mxu0
        %7360 = vmatprep.mubr.f32.mxu0 0.0
        %7361 = vmatmul.mubr.f32.gmra.mrb[0].mxu0 %v6873
        %v7362 = vpop.f32.mrb[0].mxu0
        %v7363 = vadd.f32 0.0, %v7362
        %v7364 = vpop.f32.mrb[0].mxu0
        %7365 = vmatprep.mubr.f32.mxu0 0.0
        %7366 = vmatmul.mubr.f32.gmra.mrb[0].mxu0 %v6876
        %v7367 = vpop.f32.mrb[0].mxu0
        %v7368 = vadd.f32 0.0, %v7367
        %v7369 = vpop.f32.mrb[0].mxu0
        %7370 = vmatprep.mubr.f32.mxu0 0.0
        %7371 = vmatmul.mubr.f32.gmra.mrb[0].mxu0 %v6879
        %v7372 = vpop.f32.mrb[0].mxu0
        %v7373 = vadd.f32 0.0, %v7372
        %v7374 = vpop.f32.mrb[0].mxu0
        %7375 = vmatprep.mubr.f32.mxu0 0.0
        %7376 = vmatmul.mubr.f32.gmra.mrb[0].mxu0 %v6882
        %v7377 = vpop.f32.mrb[0].mxu0
        %v7378 = vadd.f32 0.0, %v7377
        %v7379 = vpop.f32.mrb[0].mxu0
        %7380 = vmatprep.mubr.f32.mxu0 0.0
        %7381 = vmatmul.mubr.f32.gmra.mrb[0].mxu0 %v6885
        %v7382 = vpop.f32.mrb[0].mxu0
        %v7383 = vadd.f32 0.0, %v7382
        %v7384 = vpop.f32.mrb[0].mxu0
        %7385 = vmatprep.mubr.f32.mxu0 0.0
        %7386 = vmatmul.mubr.f32.gmra.mrb[0].mxu0 %v6888
        %v7387 = vpop.f32.mrb[0].mxu0
        %v7388 = vadd.f32 0.0, %v7387
        %v7389 = vpop.f32.mrb[0].mxu0
        %7390 = vmatprep.mubr.f32.mxu0 0.0
        %7391 = vmatmul.mubr.f32.gmra.mrb[0].mxu0 %v6891
        %v7392 = vpop.f32.mrb[0].mxu0
        %v7393 = vadd.f32 0.0, %v7392
        %v7394 = vpop.f32.mrb[0].mxu0
        %7395 = vmatprep.mubr.f32.mxu0 0.0
        %7396 = vmatmul.mubr.f32.gmra.mrb[0].mxu0 %v6894
        %v7397 = vpop.f32.mrb[0].mxu0
        %v7398 = vadd.f32 0.0, %v7397
        %v7399 = vpop.f32.mrb[0].mxu0
        %7400 = vmatprep.mubr.f32.mxu0 0.0
        %7401 = vmatmul.mubr.f32.gmra.mrb[0].mxu0 %v6897
        %v7402 = vpop.f32.mrb[0].mxu0
        %v7403 = vadd.f32 0.0, %v7402
        %v7404 = vpop.f32.mrb[0].mxu0
        %7405 = vmatprep.mubr.f32.mxu0 0.0
        %7406 = vmatmul.mubr.f32.gmra.mrb[0].mxu0 %v6900
        %v7407 = vpop.f32.mrb[0].mxu0
        %v7408 = vadd.f32 0.0, %v7407
        %v7409 = vpop.f32.mrb[0].mxu0
        %7410 = vmatprep.mubr.f32.mxu0 0.0
        %7411 = vmatmul.mubr.f32.gmra.mrb[0].mxu0 %v6903
        %v7412 = vpop.f32.mrb[0].mxu0
        %v7413 = vadd.f32 0.0, %v7412
        %v7414 = vpop.f32.mrb[0].mxu0
        %7415 = vmatprep.mubr.f32.mxu0 0.0
        %7416 = vmatmul.mubr.f32.gmra.mrb[0].mxu0 %v6906
        %v7417 = vpop.f32.mrb[0].mxu0
        %v7418 = vadd.f32 0.0, %v7417
        %v7419 = vpop.f32.mrb[0].mxu0
        %7420 = vmatprep.mubr.f32.mxu0 0.0
        %7421 = vmatmul.mubr.f32.gmra.mrb[0].mxu0 %v6909
        %v7422 = vpop.f32.mrb[0].mxu0
        %v7423 = vadd.f32 0.0, %v7422
        %v7424 = vpop.f32.mrb[0].mxu0
        %7425 = vmatprep.mubr.f32.mxu0 0.0
        %7426 = vmatmul.mubr.f32.gmra.mrb[0].mxu0 %v6912
        %v7427 = vpop.f32.mrb[0].mxu0
        %v7428 = vadd.f32 0.0, %v7427
        %v7429 = vpop.f32.mrb[0].mxu0
        %7430 = vmatprep.mubr.f32.mxu0 0.0
        %7431 = vmatmul.mubr.f32.gmra.mrb[0].mxu0 %v6915
        %v7432 = vpop.f32.mrb[0].mxu0
        %v7433 = vadd.f32 0.0, %v7432
        %v7434 = vpop.f32.mrb[0].mxu0
        %7435 = vmatprep.mubr.f32.mxu0 0.0
        %7436 = vmatmul.mubr.f32.gmra.mrb[0].mxu0 %v6918
        %v7437 = vpop.f32.mrb[0].mxu0
        %v7438 = vadd.f32 0.0, %v7437
        %v7439 = vpop.f32.mrb[0].mxu0
        %7440 = vmatprep.mubr.f32.mxu0 0.0
        %7441 = vmatmul.mubr.f32.gmra.mrb[0].mxu0 %v6921
        %v7442 = vpop.f32.mrb[0].mxu0
        %v7443 = vadd.f32 0.0, %v7442
        %v7444 = vpop.f32.mrb[0].mxu0
        %7445 = vmatprep.mubr.f32.mxu0 0.0
        %7446 = vmatmul.mubr.f32.gmra.mrb[0].mxu0 %v6924
        %v7447 = vpop.f32.mrb[0].mxu0
        %v7448 = vadd.f32 0.0, %v7447
        %v7449 = vpop.f32.mrb[0].mxu0
        %7450 = vmatprep.mubr.f32.mxu0 0.0
        %7451 = vmatmul.mubr.f32.gmra.mrb[0].mxu0 %v6927
        %v7452 = vpop.f32.mrb[0].mxu0
        %v7453 = vadd.f32 0.0, %v7452
        %v7454 = vpop.f32.mrb[0].mxu0
        %7455 = vmatprep.mubr.f32.mxu0 0.0
        %7456 = vmatmul.mubr.f32.gmra.mrb[0].mxu0 %v6930
        %v7457 = vpop.f32.mrb[0].mxu0
        %v7458 = vadd.f32 0.0, %v7457
        %v7459 = vpop.f32.mrb[0].mxu0
        %7460 = vmatprep.mubr.f32.mxu0 0.0
        %7461 = vmatmul.mubr.f32.gmra.mrb[0].mxu0 %v6933
        %v7462 = vpop.f32.mrb[0].mxu0
        %v7463 = vadd.f32 0.0, %v7462
        %v7464 = vpop.f32.mrb[0].mxu0
        %7465 = vmatprep.mubr.f32.mxu0 0.0
        %7466 = vmatmul.mubr.f32.gmra.mrb[0].mxu0 %v6936
        %v7467 = vpop.f32.mrb[0].mxu0
        %v7468 = vadd.f32 0.0, %v7467
        %v7469 = vpop.f32.mrb[0].mxu0
        %7470 = vmatprep.mubr.f32.mxu0 0.0
        %7471 = vmatmul.mubr.f32.gmra.mrb[0].mxu0 %v6939
        %v7472 = vpop.f32.mrb[0].mxu0
        %v7473 = vadd.f32 0.0, %v7472
        %v7474 = vpop.f32.mrb[0].mxu0
        %7475 = vmatprep.mubr.f32.mxu0 0.0
        %7476 = vmatmul.mubr.f32.gmra.mrb[0].mxu0 %v6942
        %v7477 = vpop.f32.mrb[0].mxu0
        %v7478 = vadd.f32 0.0, %v7477
        %v7479 = vpop.f32.mrb[0].mxu0
        %7480 = vmatprep.mubr.f32.mxu0 0.0
        %7481 = vmatmul.mubr.f32.gmra.mrb[0].mxu0 %v6945
        %v7482 = vpop.f32.mrb[0].mxu0
        %v7483 = vadd.f32 0.0, %v7482
        %v7484 = vpop.f32.mrb[0].mxu0
        %7485 = vmatprep.mubr.f32.mxu0 0.0
        %7486 = vmatmul.mubr.f32.gmra.mrb[0].mxu0 %v6948
        %v7487 = vpop.f32.mrb[0].mxu0
        %v7488 = vadd.f32 0.0, %v7487
        %v7489 = vpop.f32.mrb[0].mxu0
        %7490 = vmatprep.mubr.f32.mxu0 0.0
        %7491 = vmatmul.mubr.f32.gmra.mrb[0].mxu0 %v6951
        %v7492 = vpop.f32.mrb[0].mxu0
        %v7493 = vadd.f32 0.0, %v7492
        %v7494 = vpop.f32.mrb[0].mxu0
        %7495 = vmatprep.mubr.f32.mxu0 0.0
        %7496 = vmatmul.mubr.f32.gmra.mrb[0].mxu0 %v6954
        %v7497 = vpop.f32.mrb[0].mxu0
        %v7498 = vadd.f32 0.0, %v7497
        %v7499 = vpop.f32.mrb[0].mxu0
        %7500 = vmatprep.mubr.f32.mxu0 0.0
        %7501 = vmatmul.mubr.f32.gmra.mrb[0].mxu0 %v6957
        %v7502 = vpop.f32.mrb[0].mxu0
        %v7503 = vadd.f32 0.0, %v7502
        %v7504 = vpop.f32.mrb[0].mxu0
        %7505 = vmatprep.mubr.f32.mxu0 0.0
        %7506 = vmatmul.mubr.f32.gmra.mrb[0].mxu0 %v6960
        %v7507 = vpop.f32.mrb[0].mxu0
        %v7508 = vadd.f32 0.0, %v7507
        %v7509 = vpop.f32.mrb[0].mxu0
        %7510 = vmatprep.mubr.f32.mxu0 0.0
        %7511 = vmatmul.mubr.f32.gmra.mrb[0].mxu0 %v6963
        %v7512 = vpop.f32.mrb[0].mxu0
        %v7513 = vadd.f32 0.0, %v7512
        %v7514 = vpop.f32.mrb[0].mxu0
        %7515 = vmatprep.mubr.f32.mxu0 0.0
        %7516 = vmatmul.mubr.f32.gmra.mrb[0].mxu0 %v6966
        %v7517 = vpop.f32.mrb[0].mxu0
        %v7518 = vadd.f32 0.0, %v7517
        %v7519 = vpop.f32.mrb[0].mxu0
        %7520 = vmatprep.mubr.f32.mxu0 0.0
        %7521 = vmatmul.mubr.f32.gmra.mrb[0].mxu0 %v6969
        %v7522 = vpop.f32.mrb[0].mxu0
        %v7523 = vadd.f32 0.0, %v7522
        %v7524 = vpop.f32.mrb[0].mxu0
        %7525 = vmatprep.mubr.f32.mxu0 0.0
        %7526 = vmatmul.mubr.f32.gmra.mrb[0].mxu0 %v6972
        %v7527 = vpop.f32.mrb[0].mxu0
        %v7528 = vadd.f32 0.0, %v7527
        %v7529 = vpop.f32.mrb[0].mxu0
        %7530 = vmatprep.mubr.f32.mxu0 0.0
        %7531 = vmatmul.mubr.f32.gmra.mrb[0].mxu0 %v6975
        %v7532 = vpop.f32.mrb[0].mxu0
        %v7533 = vadd.f32 0.0, %v7532
        %v7534 = vpop.f32.mrb[0].mxu0
        %7535 = vmatprep.mubr.f32.mxu0 0.0
        %7536 = vmatmul.mubr.f32.gmra.mrb[0].mxu0 %v6978
        %v7537 = vpop.f32.mrb[0].mxu0
        %v7538 = vadd.f32 0.0, %v7537
        %v7539 = vpop.f32.mrb[0].mxu0
        %7540 = vmatprep.mubr.f32.mxu0 0.0
        %7541 = vmatmul.mubr.f32.gmra.mrb[0].mxu0 %v6981
        %v7542 = vpop.f32.mrb[0].mxu0
        %v7543 = vadd.f32 0.0, %v7542
        %v7544 = vpop.f32.mrb[0].mxu0
        %7545 = vmatprep.mubr.f32.mxu0 0.0
        %7546 = vmatmul.mubr.f32.gmra.mrb[0].mxu0 %v6984
        %v7547 = vpop.f32.mrb[0].mxu0
        %v7548 = vadd.f32 0.0, %v7547
        %v7549 = vpop.f32.mrb[0].mxu0
        %7550 = vmatprep.mubr.f32.mxu0 0.0
        %7551 = vmatmul.mubr.f32.gmra.mrb[0].mxu0 %v6987
        %v7552 = vpop.f32.mrb[0].mxu0
        %v7553 = vadd.f32 0.0, %v7552
        %v7554 = vpop.f32.mrb[0].mxu0
        %7555 = vmatprep.mubr.f32.mxu0 0.0
        %7556 = vmatmul.mubr.f32.gmra.mrb[0].mxu0 %v6990
        %v7557 = vpop.f32.mrb[0].mxu0
        %v7558 = vadd.f32 0.0, %v7557
        %v7559 = vpop.f32.mrb[0].mxu0
        %7560 = vmatprep.mubr.f32.mxu0 0.0
        %7561 = vmatmul.mubr.f32.gmra.mrb[0].mxu0 %v6993
        %v7562 = vpop.f32.mrb[0].mxu0
        %v7563 = vadd.f32 0.0, %v7562
        %v7564 = vpop.f32.mrb[0].mxu0
        %7565 = vmatprep.mubr.f32.mxu0 0.0
        %7566 = vmatmul.mubr.f32.gmra.mrb[0].mxu0 %v6996
        %v7567 = vpop.f32.mrb[0].mxu0
        %v7568 = vadd.f32 0.0, %v7567
        %v7569 = vpop.f32.mrb[0].mxu0
        %7570 = vmatprep.mubr.f32.mxu0 0.0
        %7571 = vmatmul.mubr.f32.gmra.mrb[0].mxu0 %v6999
        %v7572 = vpop.f32.mrb[0].mxu0
        %v7573 = vadd.f32 0.0, %v7572
        %v7574 = vpop.f32.mrb[0].mxu0
        %7575 = vmatprep.mubr.f32.mxu0 0.0
        %7576 = vmatmul.mubr.f32.gmra.mrb[0].mxu0 %v7002
        %v7577 = vpop.f32.mrb[0].mxu0
        %v7578 = vadd.f32 0.0, %v7577
        %v7579 = vpop.f32.mrb[0].mxu0
        %7580 = vmatprep.mubr.f32.mxu0 0.0
        %7581 = vmatmul.mubr.f32.gmra.mrb[0].mxu0 %v7005
        %v7582 = vpop.f32.mrb[0].mxu0
        %v7583 = vadd.f32 0.0, %v7582
        %v7584 = vpop.f32.mrb[0].mxu0
        %7585 = vmatprep.mubr.f32.mxu0 0.0
        %7586 = vmatmul.mubr.f32.gmra.mrb[0].mxu0 %v7008
        %v7587 = vpop.f32.mrb[0].mxu0
        %v7588 = vadd.f32 0.0, %v7587
        %v7589 = vpop.f32.mrb[0].mxu0
        %7590 = vmatprep.mubr.f32.mxu0 0.0
        %7591 = vmatmul.mubr.f32.gmra.mrb[0].mxu0 %v7011
        %v7592 = vpop.f32.mrb[0].mxu0
        %v7593 = vadd.f32 0.0, %v7592
        %v7594 = vpop.f32.mrb[0].mxu0
        %7595 = vmatprep.mubr.f32.mxu0 0.0
        %7596 = vmatmul.mubr.f32.gmra.mrb[0].mxu0 %v7014
        %v7597 = vpop.f32.mrb[0].mxu0
        %v7598 = vadd.f32 0.0, %v7597
        %v7599 = vpop.f32.mrb[0].mxu0
        %7600 = vmatprep.mubr.f32.mxu0 0.0
        %7601 = vmatmul.mubr.f32.gmra.mrb[0].mxu0 %v7017
        %v7602 = vpop.f32.mrb[0].mxu0
        %v7603 = vadd.f32 0.0, %v7602
        %v7604 = vpop.f32.mrb[0].mxu0
        %7605 = vmatprep.mubr.f32.mxu0 0.0
        %7606 = vmatmul.mubr.f32.gmra.mrb[0].mxu0 %v7020
        %v7607 = vpop.f32.mrb[0].mxu0
        %v7608 = vadd.f32 0.0, %v7607
        %v7609 = vpop.f32.mrb[0].mxu0
        %7610 = vmatprep.mubr.f32.mxu0 0.0
        %7611 = vmatmul.mubr.f32.gmra.mrb[0].mxu0 %v7023
        %v7612 = vpop.f32.mrb[0].mxu0
        %v7613 = vadd.f32 0.0, %v7612
        %v7614 = vpop.f32.mrb[0].mxu0
        %7615 = vmatprep.mubr.f32.mxu0 0.0
        %7616 = vmatmul.mubr.f32.gmra.mrb[0].mxu0 %v7026
        %v7617 = vpop.f32.mrb[0].mxu0
        %v7618 = vadd.f32 0.0, %v7617
        %v7619 = vpop.f32.mrb[0].mxu0
        %7620 = vmatprep.mubr.f32.mxu0 0.0
        %7621 = vmatmul.mubr.f32.gmra.mrb[0].mxu0 %v7029
        %v7622 = vpop.f32.mrb[0].mxu0
        %v7623 = vadd.f32 0.0, %v7622
        %v7624 = vpop.f32.mrb[0].mxu0
        %7625 = vmatprep.mubr.f32.mxu0 0.0
        %7626 = vmatmul.mubr.f32.gmra.mrb[0].mxu0 %v7032
        %v7627 = vpop.f32.mrb[0].mxu0
        %v7628 = vadd.f32 0.0, %v7627
        %v7629 = vpop.f32.mrb[0].mxu0
        %7630 = vmatprep.mubr.f32.mxu0 0.0
        %7631 = vmatmul.mubr.f32.gmra.mrb[0].mxu0 %v7035
        %v7632 = vpop.f32.mrb[0].mxu0
        %v7633 = vadd.f32 0.0, %v7632
        %v7634 = vpop.f32.mrb[0].mxu0
        %7635 = vmatprep.mubr.f32.mxu0 0.0
        %7636 = vmatmul.mubr.f32.gmra.mrb[0].mxu0 %v7038
        %v7637 = vpop.f32.mrb[0].mxu0
        %v7638 = vadd.f32 0.0, %v7637
        %v7639 = vpop.f32.mrb[0].mxu0
        %7640 = vmatprep.mubr.f32.mxu0 0.0
        %7641 = vmatmul.mubr.f32.gmra.mrb[0].mxu0 %v7041
        %v7642 = vpop.f32.mrb[0].mxu0
        %v7643 = vadd.f32 0.0, %v7642
        %v7644 = vpop.f32.mrb[0].mxu0
        %7645 = vmatprep.mubr.f32.mxu0 0.0
        %7646 = vmatmul.mubr.f32.gmra.mrb[0].mxu0 %v7044
        %v7647 = vpop.f32.mrb[0].mxu0
        %v7648 = vadd.f32 0.0, %v7647
        %v7649 = vpop.f32.mrb[0].mxu0
        %7650 = vmatprep.mubr.f32.mxu0 0.0
        %7651 = vmatmul.mubr.f32.gmra.mrb[0].mxu0 %v7047
        %v7652 = vpop.f32.mrb[0].mxu0
        %v7653 = vadd.f32 0.0, %v7652
        %v7654 = vpop.f32.mrb[0].mxu0
        %7655 = vmatprep.mubr.f32.mxu0 0.0
        %7656 = vmatmul.mubr.f32.gmra.mrb[0].mxu0 %v7050
        %v7657 = vpop.f32.mrb[0].mxu0
        %v7658 = vadd.f32 0.0, %v7657
        %v7659 = vpop.f32.mrb[0].mxu0
        %7660 = vmatprep.mubr.f32.mxu0 0.0
        %7661 = vmatmul.mubr.f32.gmra.mrb[0].mxu0 %v7053
        %v7662 = vpop.f32.mrb[0].mxu0
        %v7663 = vadd.f32 0.0, %v7662
        %v7664 = vpop.f32.mrb[0].mxu0
        %7665 = vmatprep.mubr.f32.mxu0 0.0
        %7666 = vmatmul.mubr.f32.gmra.mrb[0].mxu0 %v7056
        %v7667 = vpop.f32.mrb[0].mxu0
        %v7668 = vadd.f32 0.0, %v7667
        %v7669 = vpop.f32.mrb[0].mxu0
        %7670 = vmatprep.mubr.f32.mxu0 0.0
        %7671 = vmatmul.mubr.f32.gmra.mrb[0].mxu0 %v7059
        %v7672 = vpop.f32.mrb[0].mxu0
        %v7673 = vadd.f32 0.0, %v7672
        %v7674 = vpop.f32.mrb[0].mxu0
        %7675 = vmatprep.mubr.f32.mxu0 0.0
        %7676 = vmatmul.mubr.f32.gmra.mrb[0].mxu0 %v7062
        %v7677 = vpop.f32.mrb[0].mxu0
        %v7678 = vadd.f32 0.0, %v7677
        %v7679 = vpop.f32.mrb[0].mxu0
        %7680 = vmatprep.mubr.f32.mxu0 0.0
        %7681 = vmatmul.mubr.f32.gmra.mrb[0].mxu0 %v7065
        %v7682 = vpop.f32.mrb[0].mxu0
        %v7683 = vadd.f32 0.0, %v7682
        %v7684 = vpop.f32.mrb[0].mxu0
        %7685 = vmatprep.mubr.f32.mxu0 0.0
        %7686 = vmatmul.mubr.f32.gmra.mrb[0].mxu0 %v7068
        %v7687 = vpop.f32.mrb[0].mxu0
        %v7688 = vadd.f32 0.0, %v7687
        %v7689 = vpop.f32.mrb[0].mxu0
        %7690 = vmatprep.mubr.f32.mxu0 0.0
        %7691 = vmatmul.mubr.f32.gmra.mrb[0].mxu0 %v7071
        %v7692 = vpop.f32.mrb[0].mxu0
        %v7693 = vadd.f32 0.0, %v7692
        %v7694 = vpop.f32.mrb[0].mxu0
        %7695 = vmatprep.mubr.f32.mxu0 0.0
        %7696 = vmatmul.mubr.f32.gmra.mrb[0].mxu0 %v7074
        %v7697 = vpop.f32.mrb[0].mxu0
        %v7698 = vadd.f32 0.0, %v7697
        %v7699 = vpop.f32.mrb[0].mxu0
        %7700 = vmatprep.mubr.f32.mxu0 0.0
        %7701 = vmatmul.mubr.f32.gmra.mrb[0].mxu0 %v7077
        %v7702 = vpop.f32.mrb[0].mxu0
        %v7703 = vadd.f32 0.0, %v7702
        %v7704 = vpop.f32.mrb[0].mxu0
        %7705 = vmatprep.mubr.f32.mxu0 0.0
        %7706 = vmatmul.mubr.f32.gmra.mrb[0].mxu0 %v7080
        %v7707 = vpop.f32.mrb[0].mxu0
        %v7708 = vadd.f32 0.0, %v7707
        %v7709 = vpop.f32.mrb[0].mxu0
        %7710 = vmatprep.mubr.f32.mxu0 0.0
        %7711 = vmatmul.mubr.f32.gmra.mrb[0].mxu0 %v7083
        %v7712 = vpop.f32.mrb[0].mxu0
        %v7713 = vadd.f32 0.0, %v7712
        %v7714 = vpop.f32.mrb[0].mxu0
        %7715 = vmatprep.mubr.f32.mxu0 0.0
        %7716 = vmatmul.mubr.f32.gmra.mrb[0].mxu0 %v7086
        %v7717 = vpop.f32.mrb[0].mxu0
        %v7718 = vadd.f32 0.0, %v7717
        %v7719 = vpop.f32.mrb[0].mxu0
        %7720 = vmatprep.mubr.f32.mxu0 0.0
        %7721 = vmatmul.mubr.f32.gmra.mrb[0].mxu0 %v7089
        %v7722 = vpop.f32.mrb[0].mxu0
        %v7723 = vadd.f32 0.0, %v7722
        %v7724 = vpop.f32.mrb[0].mxu0
        %7725 = vmatprep.mubr.f32.mxu0 0.0
        %7726 = vmatmul.mubr.f32.gmra.mrb[0].mxu0 %v7092
        %v7727 = vpop.f32.mrb[0].mxu0
        %v7728 = vadd.f32 0.0, %v7727
        %v7729 = vpop.f32.mrb[0].mxu0
        %7730 = vmatprep.mubr.f32.mxu0 0.0
        %7731 = vmatmul.mubr.f32.gmra.mrb[0].mxu0 %v7095
        %v7732 = vpop.f32.mrb[0].mxu0
        %v7733 = vadd.f32 0.0, %v7732
        %v7734 = vpop.f32.mrb[0].mxu0
        %7735 = vmatprep.mubr.f32.mxu0 0.0
        %7736 = vmatmul.mubr.f32.gmra.mrb[0].mxu0 %v7098
        %v7737 = vpop.f32.mrb[0].mxu0
        %v7738 = vadd.f32 0.0, %v7737
        %v7739 = vpop.f32.mrb[0].mxu0
        %7740 = vmatprep.mubr.f32.mxu0 0.0
        %7741 = vmatmul.mubr.f32.gmra.mrb[0].mxu0 %v7101
        %v7742 = vpop.f32.mrb[0].mxu0
        %v7743 = vadd.f32 0.0, %v7742
        %v7744 = vpop.f32.mrb[0].mxu0
        %7745 = vmatprep.mubr.f32.mxu0 0.0
        %7746 = vmatmul.mubr.f32.gmra.mrb[0].mxu0 %v7104
        %v7747 = vpop.f32.mrb[0].mxu0
        %v7748 = vadd.f32 0.0, %v7747
        %v7749 = vpop.f32.mrb[0].mxu0
        %7750 = vmatprep.mubr.f32.mxu0 0.0
        %7751 = vmatmul.mubr.f32.gmra.mrb[0].mxu0 %v7107
        %v7752 = vpop.f32.mrb[0].mxu0
        %v7753 = vadd.f32 0.0, %v7752
        %v7754 = vpop.f32.mrb[0].mxu0
        %7755 = vmatprep.mubr.f32.mxu0 0.0
        %7756 = vmatmul.mubr.f32.gmra.mrb[0].mxu0 %v7110
        %v7757 = vpop.f32.mrb[0].mxu0
        %v7758 = vadd.f32 0.0, %v7757
        %v7759 = vpop.f32.mrb[0].mxu0
        %7760 = vmatprep.mubr.f32.mxu0 0.0
        %7761 = vmatmul.mubr.f32.gmra.mrb[0].mxu0 %v7113
        %v7762 = vpop.f32.mrb[0].mxu0
        %v7763 = vadd.f32 0.0, %v7762
        %v7764 = vpop.f32.mrb[0].mxu0
        %7765 = vmatprep.mubr.f32.mxu0 0.0
        %7766 = vmatmul.mubr.f32.gmra.mrb[0].mxu0 %v7116
        %v7767 = vpop.f32.mrb[0].mxu0
        %v7768 = vadd.f32 0.0, %v7767
        %v7769 = vpop.f32.mrb[0].mxu0
        %7770 = vmatprep.mubr.f32.mxu0 0.0
        %7771 = vmatmul.mubr.f32.gmra.mrb[0].mxu0 %v7119
        %v7772 = vpop.f32.mrb[0].mxu0
        %v7773 = vadd.f32 0.0, %v7772
        %v7774 = vpop.f32.mrb[0].mxu0
        %7775 = vmatprep.mubr.f32.mxu0 0.0
        %7776 = vmatmul.mubr.f32.gmra.mrb[0].mxu0 %v7122
        %v7777 = vpop.f32.mrb[0].mxu0
        %v7778 = vadd.f32 0.0, %v7777
        %v7779 = vpop.f32.mrb[0].mxu0
        %7780 = vmatprep.mubr.f32.mxu0 0.0
        %7781 = vmatmul.mubr.f32.gmra.mrb[0].mxu0 %v7125
        %v7782 = vpop.f32.mrb[0].mxu0
        %v7783 = vadd.f32 0.0, %v7782
        %v7784 = vpop.f32.mrb[0].mxu0
        %7785 = vmatprep.mubr.f32.mxu0 0.0
        %7786 = vmatmul.mubr.f32.gmra.mrb[0].mxu0 %v7128
        %v7787 = vpop.f32.mrb[0].mxu0
        %v7788 = vadd.f32 0.0, %v7787
        %v7789 = vpop.f32.mrb[0].mxu0
        %7790 = vmatprep.mubr.f32.mxu0 0.0
        %7791 = vmatmul.mubr.f32.gmra.mrb[0].mxu0 %v7131
        %v7792 = vpop.f32.mrb[0].mxu0
        %v7793 = vadd.f32 0.0, %v7792
        %v7794 = vpop.f32.mrb[0].mxu0
        %7795 = vmatprep.mubr.f32.mxu0 0.0
        %7796 = vmatmul.mubr.f32.gmra.mrb[0].mxu0 %v7134
        %v7797 = vpop.f32.mrb[0].mxu0
        %v7798 = vadd.f32 0.0, %v7797
        %v7799 = vpop.f32.mrb[0].mxu0
        %7800 = vmatprep.mubr.f32.mxu0 0.0
        %7801 = vmatmul.mubr.f32.gmra.mrb[0].mxu0 %v7137
        %v7802 = vpop.f32.mrb[0].mxu0
        %v7803 = vadd.f32 0.0, %v7802
        %v7804 = vpop.f32.mrb[0].mxu0
        %7805 = vmatprep.mubr.f32.mxu0 0.0
        %7806 = vmatmul.mubr.f32.gmra.mrb[0].mxu0 %v7140
        %v7807 = vpop.f32.mrb[0].mxu0
        %v7808 = vadd.f32 0.0, %v7807
        %v7809 = vpop.f32.mrb[0].mxu0
        %7810 = vmatprep.mubr.f32.mxu0 0.0
        %7811 = vmatmul.mubr.f32.gmra.mrb[0].mxu0 %v7143
        %v7812 = vpop.f32.mrb[0].mxu0
        %v7813 = vadd.f32 0.0, %v7812
        %v7814 = vpop.f32.mrb[0].mxu0
        %7815 = vmatprep.mubr.f32.mxu0 0.0
        %7816 = vmatmul.mubr.f32.gmra.mrb[0].mxu0 %v7146
        %v7817 = vpop.f32.mrb[0].mxu0
        %v7818 = vadd.f32 0.0, %v7817
        %v7819 = vpop.f32.mrb[0].mxu0
        %7820 = vmatprep.mubr.f32.mxu0 0.0
        %7821 = vmatmul.mubr.f32.gmra.mrb[0].mxu0 %v7149
        %v7822 = vpop.f32.mrb[0].mxu0
        %v7823 = vadd.f32 0.0, %v7822
        %v7824 = vpop.f32.mrb[0].mxu0
        %7825 = vmatprep.mubr.f32.mxu0 0.0
        %7826 = vmatmul.mubr.f32.gmra.mrb[0].mxu0 %v7152
        %v7827 = vpop.f32.mrb[0].mxu0
        %v7828 = vadd.f32 0.0, %v7827
        %v7829 = vpop.f32.mrb[0].mxu0
        %7830 = vmatprep.mubr.f32.mxu0 0.0
        %7831 = vmatmul.mubr.f32.gmra.mrb[0].mxu0 %v7155
        %v7832 = vpop.f32.mrb[0].mxu0
        %v7833 = vadd.f32 0.0, %v7832
        %v7834 = vpop.f32.mrb[0].mxu0
        %7835 = vmatprep.mubr.f32.mxu0 0.0
        %7836 = vmatmul.mubr.f32.gmra.mrb[0].mxu0 %v7158
        %v7837 = vpop.f32.mrb[0].mxu0
        %v7838 = vadd.f32 0.0, %v7837
        %v7839 = vpop.f32.mrb[0].mxu0
        %7840 = vmatprep.mubr.f32.mxu0 0.0
        %7841 = vmatmul.mubr.f32.gmra.mrb[0].mxu0 %v7161
        %v7842 = vpop.f32.mrb[0].mxu0
        %v7843 = vadd.f32 0.0, %v7842
        %v7844 = vpop.f32.mrb[0].mxu0
        %7845 = vmatprep.mubr.f32.mxu0 0.0
        %7846 = vmatmul.mubr.f32.gmra.mrb[0].mxu0 %v7164
        %v7847 = vpop.f32.mrb[0].mxu0
        %v7848 = vadd.f32 0.0, %v7847
        %v7849 = vpop.f32.mrb[0].mxu0
        %7850 = vmatprep.mubr.f32.mxu0 0.0
        %7851 = vmatmul.mubr.f32.gmra.mrb[0].mxu0 %v7167
        %v7852 = vpop.f32.mrb[0].mxu0
        %v7853 = vadd.f32 0.0, %v7852
        %v7854 = vpop.f32.mrb[0].mxu0
        %7855 = vmatprep.mubr.f32.mxu0 0.0
        %7856 = vmatmul.mubr.f32.gmra.mrb[0].mxu0 %v7170
        %v7857 = vpop.f32.mrb[0].mxu0
        %v7858 = vadd.f32 0.0, %v7857
        %v7859 = vpop.f32.mrb[0].mxu0
        %7860 = vmatprep.mubr.f32.mxu0 0.0
        %7861 = vmatmul.mubr.f32.gmra.mrb[0].mxu0 %v7173
        %v7862 = vpop.f32.mrb[0].mxu0
        %v7863 = vadd.f32 0.0, %v7862
        %v7864 = vpop.f32.mrb[0].mxu0
        %7865 = vmatprep.mubr.f32.mxu0 0.0
        %7866 = vmatmul.mubr.f32.gmra.mrb[0].mxu0 %v7176
        %v7867 = vpop.f32.mrb[0].mxu0
        %v7868 = vadd.f32 0.0, %v7867
        %v7869 = vpop.f32.mrb[0].mxu0
        %7870 = vmatprep.mubr.f32.mxu0 0.0
        %7871 = vmatmul.mubr.f32.gmra.mrb[0].mxu0 %v7179
        %v7872 = vpop.f32.mrb[0].mxu0
        %v7873 = vadd.f32 0.0, %v7872
        %v7874 = vpop.f32.mrb[0].mxu0
        %7875 = vmatprep.mubr.f32.mxu0 0.0
        %7876 = vmatmul.mubr.f32.gmra.mrb[0].mxu0 %v7182
        %v7877 = vpop.f32.mrb[0].mxu0
        %v7878 = vadd.f32 0.0, %v7877
        %v7879 = vpop.f32.mrb[0].mxu0
        %7880 = vmatprep.mubr.f32.mxu0 0.0
        %7881 = vmatmul.mubr.f32.gmra.mrb[0].mxu0 %v7185
        %v7882 = vpop.f32.mrb[0].mxu0
        %v7883 = vadd.f32 0.0, %v7882
        %v7884 = vpop.f32.mrb[0].mxu0
        %7885 = vmatprep.mubr.f32.mxu0 0.0
        %7886 = vmatmul.mubr.f32.gmra.mrb[0].mxu0 %v7188
        %v7887 = vpop.f32.mrb[0].mxu0
        %v7888 = vadd.f32 0.0, %v7887
        %v7889 = vpop.f32.mrb[0].mxu0
        %7890 = vmatprep.mubr.f32.mxu0 0.0
        %7891 = vmatmul.mubr.f32.gmra.mrb[0].mxu0 %v7191
        %v7892 = vpop.f32.mrb[0].mxu0
        %v7893 = vadd.f32 0.0, %v7892
        %v7894 = vpop.f32.mrb[0].mxu0
        %7895 = vmatprep.mubr.f32.mxu0 0.0
        %7896 = vmatmul.mubr.f32.gmra.mrb[0].mxu0 %v7194
        %v7897 = vpop.f32.mrb[0].mxu0
        %v7898 = vadd.f32 0.0, %v7897
        %v7899 = vpop.f32.mrb[0].mxu0
        %7900 = vdwg.mxu0
        %v7901 = vadd.f32 %v6554, %v7263
        %v7902 = vadd.f32 %v6555, %v7268
        %v7903 = vadd.f32 %v6556, %v7273
        %v7904 = vadd.f32 %v6557, %v7278
        %v7905 = vadd.f32 %v6558, %v7283
        %v7906 = vadd.f32 %v6559, %v7288
        %v7907 = vadd.f32 %v6560, %v7293
        %v7908 = vadd.f32 %v6561, %v7298
        %v7909 = vadd.f32 %v6562, %v7303
        %v7910 = vadd.f32 %v6563, %v7308
        %v7911 = vadd.f32 %v6564, %v7313
        %v7912 = vadd.f32 %v6565, %v7318
        %v7913 = vadd.f32 %v6566, %v7323
        %v7914 = vadd.f32 %v6567, %v7328
        %v7915 = vadd.f32 %v6568, %v7333
        %v7916 = vadd.f32 %v6569, %v7338
        %v7917 = vadd.f32 %v6570, %v7343
        %v7918 = vadd.f32 %v6571, %v7348
        %v7919 = vadd.f32 %v6572, %v7353
        %v7920 = vadd.f32 %v6573, %v7358
        %v7921 = vadd.f32 %v6574, %v7363
        %v7922 = vadd.f32 %v6575, %v7368
        %v7923 = vadd.f32 %v6576, %v7373
        %v7924 = vadd.f32 %v6577, %v7378
        %v7925 = vadd.f32 %v6578, %v7383
        %v7926 = vadd.f32 %v6579, %v7388
        %v7927 = vadd.f32 %v6580, %v7393
        %v7928 = vadd.f32 %v6581, %v7398
        %v7929 = vadd.f32 %v6582, %v7403
        %v7930 = vadd.f32 %v6583, %v7408
        %v7931 = vadd.f32 %v6584, %v7413
        %v7932 = vadd.f32 %v6585, %v7418
        %v7933 = vadd.f32 %v6586, %v7423
        %v7934 = vadd.f32 %v6587, %v7428
        %v7935 = vadd.f32 %v6588, %v7433
        %v7936 = vadd.f32 %v6589, %v7438
        %v7937 = vadd.f32 %v6590, %v7443
        %v7938 = vadd.f32 %v6591, %v7448
        %v7939 = vadd.f32 %v6592, %v7453
        %v7940 = vadd.f32 %v6593, %v7458
        %v7941 = vadd.f32 %v6594, %v7463
        %v7942 = vadd.f32 %v6595, %v7468
        %v7943 = vadd.f32 %v6596, %v7473
        %v7944 = vadd.f32 %v6597, %v7478
        %v7945 = vadd.f32 %v6598, %v7483
        %v7946 = vadd.f32 %v6599, %v7488
        %v7947 = vadd.f32 %v6600, %v7493
        %v7948 = vadd.f32 %v6601, %v7498
        %v7949 = vadd.f32 %v6602, %v7503
        %v7950 = vadd.f32 %v6603, %v7508
        %v7951 = vadd.f32 %v6604, %v7513
        %v7952 = vadd.f32 %v6605, %v7518
        %v7953 = vadd.f32 %v6606, %v7523
        %v7954 = vadd.f32 %v6607, %v7528
        %v7955 = vadd.f32 %v6608, %v7533
        %v7956 = vadd.f32 %v6609, %v7538
        %v7957 = vadd.f32 %v6610, %v7543
        %v7958 = vadd.f32 %v6611, %v7548
        %v7959 = vadd.f32 %v6612, %v7553
        %v7960 = vadd.f32 %v6613, %v7558
        %v7961 = vadd.f32 %v6614, %v7563
        %v7962 = vadd.f32 %v6615, %v7568
        %v7963 = vadd.f32 %v6616, %v7573
        %v7964 = vadd.f32 %v6617, %v7578
        %v7965 = vadd.f32 %v6618, %v7583
        %v7966 = vadd.f32 %v6619, %v7588
        %v7967 = vadd.f32 %v6620, %v7593
        %v7968 = vadd.f32 %v6621, %v7598
        %v7969 = vadd.f32 %v6622, %v7603
        %v7970 = vadd.f32 %v6623, %v7608
        %v7971 = vadd.f32 %v6624, %v7613
        %v7972 = vadd.f32 %v6625, %v7618
        %v7973 = vadd.f32 %v6626, %v7623
        %v7974 = vadd.f32 %v6627, %v7628
        %v7975 = vadd.f32 %v6628, %v7633
        %v7976 = vadd.f32 %v6629, %v7638
        %v7977 = vadd.f32 %v6630, %v7643
        %v7978 = vadd.f32 %v6631, %v7648
        %v7979 = vadd.f32 %v6632, %v7653
        %v7980 = vadd.f32 %v6633, %v7658
        %v7981 = vadd.f32 %v6634, %v7663
        %v7982 = vadd.f32 %v6635, %v7668
        %v7983 = vadd.f32 %v6636, %v7673
        %v7984 = vadd.f32 %v6637, %v7678
        %v7985 = vadd.f32 %v6638, %v7683
        %v7986 = vadd.f32 %v6639, %v7688
        %v7987 = vadd.f32 %v6640, %v7693
        %v7988 = vadd.f32 %v6641, %v7698
        %v7989 = vadd.f32 %v6642, %v7703
        %v7990 = vadd.f32 %v6643, %v7708
        %v7991 = vadd.f32 %v6644, %v7713
        %v7992 = vadd.f32 %v6645, %v7718
        %v7993 = vadd.f32 %v6646, %v7723
        %v7994 = vadd.f32 %v6647, %v7728
        %v7995 = vadd.f32 %v6648, %v7733
        %v7996 = vadd.f32 %v6649, %v7738
        %v7997 = vadd.f32 %v6650, %v7743
        %v7998 = vadd.f32 %v6651, %v7748
        %v7999 = vadd.f32 %v6652, %v7753
        %v8000 = vadd.f32 %v6653, %v7758
        %v8001 = vadd.f32 %v6654, %v7763
        %v8002 = vadd.f32 %v6655, %v7768
        %v8003 = vadd.f32 %v6656, %v7773
        %v8004 = vadd.f32 %v6657, %v7778
        %v8005 = vadd.f32 %v6658, %v7783
        %v8006 = vadd.f32 %v6659, %v7788
        %v8007 = vadd.f32 %v6660, %v7793
        %v8008 = vadd.f32 %v6661, %v7798
        %v8009 = vadd.f32 %v6662, %v7803
        %v8010 = vadd.f32 %v6663, %v7808
        %v8011 = vadd.f32 %v6664, %v7813
        %v8012 = vadd.f32 %v6665, %v7818
        %v8013 = vadd.f32 %v6666, %v7823
        %v8014 = vadd.f32 %v6667, %v7828
        %v8015 = vadd.f32 %v6668, %v7833
        %v8016 = vadd.f32 %v6669, %v7838
        %v8017 = vadd.f32 %v6670, %v7843
        %v8018 = vadd.f32 %v6671, %v7848
        %v8019 = vadd.f32 %v6672, %v7853
        %v8020 = vadd.f32 %v6673, %v7858
        %v8021 = vadd.f32 %v6674, %v7863
        %v8022 = vadd.f32 %v6675, %v7868
        %v8023 = vadd.f32 %v6676, %v7873
        %v8024 = vadd.f32 %v6677, %v7878
        %v8025 = vadd.f32 %v6678, %v7883
        %v8026 = vadd.f32 %v6679, %v7888
        %v8027 = vadd.f32 %v6680, %v7893
        %v8028 = vadd.f32 %v6681, %v7898
        %s8029 = scalar_lea.vmem %s199, 48
        %v8030 = vld [vmem:[%s8029] sm:$0xff]
        %v8031 = vld [vmem:[%s8029 + $0x8] sm:$0xff]
        %v8032 = vld [vmem:[%s8029 + $0x18] sm:$0xff]
        %v8033 = vld [vmem:[%s8029 + $0x20] sm:$0xff]
        %v8034 = vld [vmem:[%s8029 + $0x30] sm:$0xff]
        %v8035 = vld [vmem:[%s8029 + $0x38] sm:$0xff]
        %v8036 = vld [vmem:[%s8029 + $0x48] sm:$0xff]
        %v8037 = vld [vmem:[%s8029 + $0x50] sm:$0xff]
        %v8038 = vld [vmem:[%s8029 + $0x60] sm:$0xff]
        %v8039 = vld [vmem:[%s8029 + $0x68] sm:$0xff]
        %v8040 = vld [vmem:[%s8029 + $0x78] sm:$0xff]
        %v8041 = vld [vmem:[%s8029 + $0x80] sm:$0xff]
        %v8042 = vld [vmem:[%s8029 + $0x90] sm:$0xff]
        %v8043 = vld [vmem:[%s8029 + $0x98] sm:$0xff]
        %v8044 = vld [vmem:[%s8029 + $0xa8] sm:$0xff]
        %v8045 = vld [vmem:[%s8029 + $0xb0] sm:$0xff]
        %v8046 = vld [vmem:[%s8029 + $0xc0] sm:$0xff]
        %v8047 = vld [vmem:[%s8029 + $0xc8] sm:$0xff]
        %v8048 = vld [vmem:[%s8029 + $0xd8] sm:$0xff]
        %v8049 = vld [vmem:[%s8029 + $0xe0] sm:$0xff]
        %v8050 = vld [vmem:[%s8029 + $0xf0] sm:$0xff]
        %v8051 = vld [vmem:[%s8029 + $0xf8] sm:$0xff]
        %v8052 = vld [vmem:[%s8029 + $0x108] sm:$0xff]
        %v8053 = vld [vmem:[%s8029 + $0x110] sm:$0xff]
        %v8054 = vld [vmem:[%s8029 + $0x120] sm:$0xff]
        %v8055 = vld [vmem:[%s8029 + $0x128] sm:$0xff]
        %v8056 = vld [vmem:[%s8029 + $0x138] sm:$0xff]
        %v8057 = vld [vmem:[%s8029 + $0x140] sm:$0xff]
        %v8058 = vld [vmem:[%s8029 + $0x150] sm:$0xff]
        %v8059 = vld [vmem:[%s8029 + $0x158] sm:$0xff]
        %v8060 = vld [vmem:[%s8029 + $0x168] sm:$0xff]
        %v8061 = vld [vmem:[%s8029 + $0x170] sm:$0xff]
        %v8062 = vld [vmem:[%s8029 + $0x1b0] sm:$0xff]
        %v8063 = vld [vmem:[%s8029 + $0x1b8] sm:$0xff]
        %v8064 = vld [vmem:[%s8029 + $0x1c8] sm:$0xff]
        %v8065 = vld [vmem:[%s8029 + $0x1d0] sm:$0xff]
        %v8066 = vld [vmem:[%s8029 + $0x1e0] sm:$0xff]
        %v8067 = vld [vmem:[%s8029 + $0x1e8] sm:$0xff]
        %v8068 = vld [vmem:[%s8029 + $0x1f8] sm:$0xff]
        %v8069 = vld [vmem:[%s8029 + $0x200] sm:$0xff]
        %v8070 = vld [vmem:[%s8029 + $0x210] sm:$0xff]
        %v8071 = vld [vmem:[%s8029 + $0x218] sm:$0xff]
        %v8072 = vld [vmem:[%s8029 + $0x228] sm:$0xff]
        %v8073 = vld [vmem:[%s8029 + $0x230] sm:$0xff]
        %v8074 = vld [vmem:[%s8029 + $0x240] sm:$0xff]
        %v8075 = vld [vmem:[%s8029 + $0x248] sm:$0xff]
        %v8076 = vld [vmem:[%s8029 + $0x258] sm:$0xff]
        %v8077 = vld [vmem:[%s8029 + $0x260] sm:$0xff]
        %v8078 = vld [vmem:[%s8029 + $0x270] sm:$0xff]
        %v8079 = vld [vmem:[%s8029 + $0x278] sm:$0xff]
        %v8080 = vld [vmem:[%s8029 + $0x288] sm:$0xff]
        %v8081 = vld [vmem:[%s8029 + $0x290] sm:$0xff]
        %v8082 = vld [vmem:[%s8029 + $0x2a0] sm:$0xff]
        %v8083 = vld [vmem:[%s8029 + $0x2a8] sm:$0xff]
        %v8084 = vld [vmem:[%s8029 + $0x2b8] sm:$0xff]
        %v8085 = vld [vmem:[%s8029 + $0x2c0] sm:$0xff]
        %v8086 = vld [vmem:[%s8029 + $0x2d0] sm:$0xff]
        %v8087 = vld [vmem:[%s8029 + $0x2d8] sm:$0xff]
        %v8088 = vld [vmem:[%s8029 + $0x2e8] sm:$0xff]
        %v8089 = vld [vmem:[%s8029 + $0x2f0] sm:$0xff]
        %v8090 = vld [vmem:[%s8029 + $0x300] sm:$0xff]
        %v8091 = vld [vmem:[%s8029 + $0x308] sm:$0xff]
        %v8092 = vld [vmem:[%s8029 + $0x318] sm:$0xff]
        %v8093 = vld [vmem:[%s8029 + $0x320] sm:$0xff]
        %v8094 = vld [vmem:[%s8029 + $0x360] sm:$0xff]
        %v8095 = vld [vmem:[%s8029 + $0x368] sm:$0xff]
        %v8096 = vld [vmem:[%s8029 + $0x378] sm:$0xff]
        %v8097 = vld [vmem:[%s8029 + $0x380] sm:$0xff]
        %v8098 = vld [vmem:[%s8029 + $0x390] sm:$0xff]
        %v8099 = vld [vmem:[%s8029 + $0x398] sm:$0xff]
        %v8100 = vld [vmem:[%s8029 + $0x3a8] sm:$0xff]
        %v8101 = vld [vmem:[%s8029 + $0x3b0] sm:$0xff]
        %v8102 = vld [vmem:[%s8029 + $0x3c0] sm:$0xff]
        %v8103 = vld [vmem:[%s8029 + $0x3c8] sm:$0xff]
        %v8104 = vld [vmem:[%s8029 + $0x3d8] sm:$0xff]
        %v8105 = vld [vmem:[%s8029 + $0x3e0] sm:$0xff]
        %v8106 = vld [vmem:[%s8029 + $0x3f0] sm:$0xff]
        %v8107 = vld [vmem:[%s8029 + $0x3f8] sm:$0xff]
        %v8108 = vld [vmem:[%s8029 + $0x408] sm:$0xff]
        %v8109 = vld [vmem:[%s8029 + $0x410] sm:$0xff]
        %v8110 = vld [vmem:[%s8029 + $0x420] sm:$0xff]
        %v8111 = vld [vmem:[%s8029 + $0x428] sm:$0xff]
        %v8112 = vld [vmem:[%s8029 + $0x438] sm:$0xff]
        %v8113 = vld [vmem:[%s8029 + $0x440] sm:$0xff]
        %v8114 = vld [vmem:[%s8029 + $0x450] sm:$0xff]
        %v8115 = vld [vmem:[%s8029 + $0x458] sm:$0xff]
        %v8116 = vld [vmem:[%s8029 + $0x468] sm:$0xff]
        %v8117 = vld [vmem:[%s8029 + $0x470] sm:$0xff]
        %v8118 = vld [vmem:[%s8029 + $0x480] sm:$0xff]
        %v8119 = vld [vmem:[%s8029 + $0x488] sm:$0xff]
        %v8120 = vld [vmem:[%s8029 + $0x498] sm:$0xff]
        %v8121 = vld [vmem:[%s8029 + $0x4a0] sm:$0xff]
        %v8122 = vld [vmem:[%s8029 + $0x4b0] sm:$0xff]
        %v8123 = vld [vmem:[%s8029 + $0x4b8] sm:$0xff]
        %v8124 = vld [vmem:[%s8029 + $0x4c8] sm:$0xff]
        %v8125 = vld [vmem:[%s8029 + $0x4d0] sm:$0xff]
        %v8126 = vld [vmem:[%s8029 + $0x510] sm:$0xff]
        %v8127 = vld [vmem:[%s8029 + $0x518] sm:$0xff]
        %v8128 = vld [vmem:[%s8029 + $0x528] sm:$0xff]
        %v8129 = vld [vmem:[%s8029 + $0x530] sm:$0xff]
        %v8130 = vld [vmem:[%s8029 + $0x540] sm:$0xff]
        %v8131 = vld [vmem:[%s8029 + $0x548] sm:$0xff]
        %v8132 = vld [vmem:[%s8029 + $0x558] sm:$0xff]
        %v8133 = vld [vmem:[%s8029 + $0x560] sm:$0xff]
        %v8134 = vld [vmem:[%s8029 + $0x570] sm:$0xff]
        %v8135 = vld [vmem:[%s8029 + $0x578] sm:$0xff]
        %v8136 = vld [vmem:[%s8029 + $0x588] sm:$0xff]
        %v8137 = vld [vmem:[%s8029 + $0x590] sm:$0xff]
        %v8138 = vld [vmem:[%s8029 + $0x5a0] sm:$0xff]
        %v8139 = vld [vmem:[%s8029 + $0x5a8] sm:$0xff]
        %v8140 = vld [vmem:[%s8029 + $0x5b8] sm:$0xff]
        %v8141 = vld [vmem:[%s8029 + $0x5c0] sm:$0xff]
        %v8142 = vld [vmem:[%s8029 + $0x5d0] sm:$0xff]
        %v8143 = vld [vmem:[%s8029 + $0x5d8] sm:$0xff]
        %v8144 = vld [vmem:[%s8029 + $0x5e8] sm:$0xff]
        %v8145 = vld [vmem:[%s8029 + $0x5f0] sm:$0xff]
        %v8146 = vld [vmem:[%s8029 + $0x600] sm:$0xff]
        %v8147 = vld [vmem:[%s8029 + $0x608] sm:$0xff]
        %v8148 = vld [vmem:[%s8029 + $0x618] sm:$0xff]
        %v8149 = vld [vmem:[%s8029 + $0x620] sm:$0xff]
        %v8150 = vld [vmem:[%s8029 + $0x630] sm:$0xff]
        %v8151 = vld [vmem:[%s8029 + $0x638] sm:$0xff]
        %v8152 = vld [vmem:[%s8029 + $0x648] sm:$0xff]
        %v8153 = vld [vmem:[%s8029 + $0x650] sm:$0xff]
        %v8154 = vld [vmem:[%s8029 + $0x660] sm:$0xff]
        %v8155 = vld [vmem:[%s8029 + $0x668] sm:$0xff]
        %v8156 = vld [vmem:[%s8029 + $0x678] sm:$0xff]
        %v8157 = vld [vmem:[%s8029 + $0x680] sm:$0xff]
        %s8158 = scalar_lea.vmem %s1, 48
        %v8159 = vld [vmem:[%s8158] sm:$0xff]
        %v8161 = vsel %vm461, %v8030, 0
        %v8164 = vsel %vm461, %v8031, 0
        %v8167 = vsel %vm461, %v8032, 0
        %v8170 = vsel %vm461, %v8033, 0
        %v8173 = vsel %vm461, %v8034, 0
        %v8176 = vsel %vm461, %v8035, 0
        %v8179 = vsel %vm461, %v8036, 0
        %v8182 = vsel %vm461, %v8037, 0
        %v8185 = vsel %vm461, %v8038, 0
        %v8188 = vsel %vm461, %v8039, 0
        %v8191 = vsel %vm461, %v8040, 0
        %v8194 = vsel %vm461, %v8041, 0
        %v8197 = vsel %vm461, %v8042, 0
        %v8200 = vsel %vm461, %v8043, 0
        %v8203 = vsel %vm461, %v8044, 0
        %v8206 = vsel %vm461, %v8045, 0
        %v8209 = vsel %vm461, %v8046, 0
        %v8212 = vsel %vm461, %v8047, 0
        %v8215 = vsel %vm461, %v8048, 0
        %v8218 = vsel %vm461, %v8049, 0
        %v8221 = vsel %vm461, %v8050, 0
        %v8224 = vsel %vm461, %v8051, 0
        %v8227 = vsel %vm461, %v8052, 0
        %v8230 = vsel %vm461, %v8053, 0
        %v8233 = vsel %vm461, %v8054, 0
        %v8236 = vsel %vm461, %v8055, 0
        %v8239 = vsel %vm461, %v8056, 0
        %v8242 = vsel %vm461, %v8057, 0
        %v8245 = vsel %vm461, %v8058, 0
        %v8248 = vsel %vm461, %v8059, 0
        %v8251 = vsel %vm461, %v8060, 0
        %v8254 = vsel %vm461, %v8061, 0
        %v8257 = vsel %vm461, %v8062, 0
        %v8260 = vsel %vm461, %v8063, 0
        %v8263 = vsel %vm461, %v8064, 0
        %v8266 = vsel %vm461, %v8065, 0
        %v8269 = vsel %vm461, %v8066, 0
        %v8272 = vsel %vm461, %v8067, 0
        %v8275 = vsel %vm461, %v8068, 0
        %v8278 = vsel %vm461, %v8069, 0
        %v8281 = vsel %vm461, %v8070, 0
        %v8284 = vsel %vm461, %v8071, 0
        %v8287 = vsel %vm461, %v8072, 0
        %v8290 = vsel %vm461, %v8073, 0
        %v8293 = vsel %vm461, %v8074, 0
        %v8296 = vsel %vm461, %v8075, 0
        %v8299 = vsel %vm461, %v8076, 0
        %v8302 = vsel %vm461, %v8077, 0
        %v8305 = vsel %vm461, %v8078, 0
        %v8308 = vsel %vm461, %v8079, 0
        %v8311 = vsel %vm461, %v8080, 0
        %v8314 = vsel %vm461, %v8081, 0
        %v8317 = vsel %vm461, %v8082, 0
        %v8320 = vsel %vm461, %v8083, 0
        %v8323 = vsel %vm461, %v8084, 0
        %v8326 = vsel %vm461, %v8085, 0
        %v8329 = vsel %vm461, %v8086, 0
        %v8332 = vsel %vm461, %v8087, 0
        %v8335 = vsel %vm461, %v8088, 0
        %v8338 = vsel %vm461, %v8089, 0
        %v8341 = vsel %vm461, %v8090, 0
        %v8344 = vsel %vm461, %v8091, 0
        %v8347 = vsel %vm461, %v8092, 0
        %v8350 = vsel %vm461, %v8093, 0
        %v8353 = vsel %vm461, %v8094, 0
        %v8356 = vsel %vm461, %v8095, 0
        %v8359 = vsel %vm461, %v8096, 0
        %v8362 = vsel %vm461, %v8097, 0
        %v8365 = vsel %vm461, %v8098, 0
        %v8368 = vsel %vm461, %v8099, 0
        %v8371 = vsel %vm461, %v8100, 0
        %v8374 = vsel %vm461, %v8101, 0
        %v8377 = vsel %vm461, %v8102, 0
        %v8380 = vsel %vm461, %v8103, 0
        %v8383 = vsel %vm461, %v8104, 0
        %v8386 = vsel %vm461, %v8105, 0
        %v8389 = vsel %vm461, %v8106, 0
        %v8392 = vsel %vm461, %v8107, 0
        %v8395 = vsel %vm461, %v8108, 0
        %v8398 = vsel %vm461, %v8109, 0
        %v8401 = vsel %vm461, %v8110, 0
        %v8404 = vsel %vm461, %v8111, 0
        %v8407 = vsel %vm461, %v8112, 0
        %v8410 = vsel %vm461, %v8113, 0
        %v8413 = vsel %vm461, %v8114, 0
        %v8416 = vsel %vm461, %v8115, 0
        %v8419 = vsel %vm461, %v8116, 0
        %v8422 = vsel %vm461, %v8117, 0
        %v8425 = vsel %vm461, %v8118, 0
        %v8428 = vsel %vm461, %v8119, 0
        %v8431 = vsel %vm461, %v8120, 0
        %v8434 = vsel %vm461, %v8121, 0
        %v8437 = vsel %vm461, %v8122, 0
        %v8440 = vsel %vm461, %v8123, 0
        %v8443 = vsel %vm461, %v8124, 0
        %v8446 = vsel %vm461, %v8125, 0
        %v8449 = vsel %vm461, %v8126, 0
        %v8452 = vsel %vm461, %v8127, 0
        %v8455 = vsel %vm461, %v8128, 0
        %v8458 = vsel %vm461, %v8129, 0
        %v8461 = vsel %vm461, %v8130, 0
        %v8464 = vsel %vm461, %v8131, 0
        %v8467 = vsel %vm461, %v8132, 0
        %v8470 = vsel %vm461, %v8133, 0
        %v8473 = vsel %vm461, %v8134, 0
        %v8476 = vsel %vm461, %v8135, 0
        %v8479 = vsel %vm461, %v8136, 0
        %v8482 = vsel %vm461, %v8137, 0
        %v8485 = vsel %vm461, %v8138, 0
        %v8488 = vsel %vm461, %v8139, 0
        %v8491 = vsel %vm461, %v8140, 0
        %v8494 = vsel %vm461, %v8141, 0
        %v8497 = vsel %vm461, %v8142, 0
        %v8500 = vsel %vm461, %v8143, 0
        %v8503 = vsel %vm461, %v8144, 0
        %v8506 = vsel %vm461, %v8145, 0
        %v8509 = vsel %vm461, %v8146, 0
        %v8512 = vsel %vm461, %v8147, 0
        %v8515 = vsel %vm461, %v8148, 0
        %v8518 = vsel %vm461, %v8149, 0
        %v8521 = vsel %vm461, %v8150, 0
        %v8524 = vsel %vm461, %v8151, 0
        %v8527 = vsel %vm461, %v8152, 0
        %v8530 = vsel %vm461, %v8153, 0
        %v8533 = vsel %vm461, %v8154, 0
        %v8536 = vsel %vm461, %v8155, 0
        %v8539 = vsel %vm461, %v8156, 0
        %v8542 = vsel %vm461, %v8157, 0
        %8544 = vmatprep.subr.mxu0 0.0
        %8545 = vmatpush1.msra.mxu0 %v8159
        %8546 = vmatprep.subr.mxu0 0.0
        %8547 = vmatpush1.msra.mxu0 0.0
        %8548 = vmatprep.subr.mxu0 0.0
        %8549 = vmatpush1.msra.mxu0 0.0
        %8550 = vmatprep.subr.mxu0 0.0
        %8551 = vmatpush1.msra.mxu0 0.0
        %8552 = vmatprep.subr.mxu0 0.0
        %8553 = vmatpush1.msra.mxu0 0.0
        %8554 = vmatprep.subr.mxu0 0.0
        %8555 = vmatpush1.msra.mxu0 0.0
        %8556 = vmatprep.subr.mxu0 0.0
        %8557 = vmatpush1.msra.mxu0 0.0
        %8558 = vmatprep.subr.mxu0 0.0
        %8559 = vmatpush1.msra.mxu0 0.0
        %8560 = vmatprep.subr.mxu0 0.0
        %8561 = vmatpush1.msra.mxu0 0.0
        %8562 = vmatprep.subr.mxu0 0.0
        %8563 = vmatpush1.msra.mxu0 0.0
        %8564 = vmatprep.subr.mxu0 0.0
        %8565 = vmatpush1.msra.mxu0 0.0
        %8566 = vmatprep.subr.mxu0 0.0
        %8567 = vmatpush1.msra.mxu0 0.0
        %8568 = vmatprep.subr.mxu0 0.0
        %8569 = vmatpush1.msra.mxu0 0.0
        %8570 = vmatprep.subr.mxu0 0.0
        %8571 = vmatpush1.msra.mxu0 0.0
        %8572 = vmatprep.subr.mxu0 0.0
        %8573 = vmatpush1.msra.mxu0 0.0
        %8574 = vmatprep.subr.mxu0 0.0
        %8575 = vmatpush1.msra.mxu0 0.0
        %8576 = vmatprep.subr.mxu0 0.0
        %8577 = vmatpush1.msra.mxu0 0.0
        %8578 = vmatprep.subr.mxu0 0.0
        %8579 = vmatpush1.msra.mxu0 0.0
        %8580 = vmatprep.subr.mxu0 0.0
        %8581 = vmatpush1.msra.mxu0 0.0
        %8582 = vmatprep.subr.mxu0 0.0
        %8583 = vmatpush1.msra.mxu0 0.0
        %8584 = vmatprep.subr.mxu0 0.0
        %8585 = vmatpush1.msra.mxu0 0.0
        %8586 = vmatprep.subr.mxu0 0.0
        %8587 = vmatpush1.msra.mxu0 0.0
        %8588 = vmatprep.subr.mxu0 0.0
        %8589 = vmatpush1.msra.mxu0 0.0
        %8590 = vmatprep.subr.mxu0 0.0
        %8591 = vmatpush1.msra.mxu0 0.0
        %8592 = vmatprep.subr.mxu0 0.0
        %8593 = vmatpush1.msra.mxu0 0.0
        %8594 = vmatprep.subr.mxu0 0.0
        %8595 = vmatpush1.msra.mxu0 0.0
        %8596 = vmatprep.subr.mxu0 0.0
        %8597 = vmatpush1.msra.mxu0 0.0
        %8598 = vmatprep.subr.mxu0 0.0
        %8599 = vmatpush1.msra.mxu0 0.0
        %8600 = vmatprep.subr.mxu0 0.0
        %8601 = vmatpush1.msra.mxu0 0.0
        %8602 = vmatprep.subr.mxu0 0.0
        %8603 = vmatpush1.msra.mxu0 0.0
        %8604 = vmatprep.subr.mxu0 0.0
        %8605 = vmatpush1.msra.mxu0 0.0
        %8606 = vmatprep.subr.mxu0 0.0
        %8607 = vmatpush1.msra.mxu0 0.0
        %8608 = vmatprep.mubr.f32.mxu0 0.0
        %8609 = vmatmul.mubr.f32.gmra.mrb[0].mxu0 %v8161
        %v8610 = vpop.f32.mrb[0].mxu0
        %v8611 = vadd.f32 0.0, %v8610
        %v8612 = vpop.f32.mrb[0].mxu0
        %8613 = vmatprep.mubr.f32.mxu0 0.0
        %8614 = vmatmul.mubr.f32.gmra.mrb[0].mxu0 %v8164
        %v8615 = vpop.f32.mrb[0].mxu0
        %v8616 = vadd.f32 0.0, %v8615
        %v8617 = vpop.f32.mrb[0].mxu0
        %8618 = vmatprep.mubr.f32.mxu0 0.0
        %8619 = vmatmul.mubr.f32.gmra.mrb[0].mxu0 %v8167
        %v8620 = vpop.f32.mrb[0].mxu0
        %v8621 = vadd.f32 0.0, %v8620
        %v8622 = vpop.f32.mrb[0].mxu0
        %8623 = vmatprep.mubr.f32.mxu0 0.0
        %8624 = vmatmul.mubr.f32.gmra.mrb[0].mxu0 %v8170
        %v8625 = vpop.f32.mrb[0].mxu0
        %v8626 = vadd.f32 0.0, %v8625
        %v8627 = vpop.f32.mrb[0].mxu0
        %8628 = vmatprep.mubr.f32.mxu0 0.0
        %8629 = vmatmul.mubr.f32.gmra.mrb[0].mxu0 %v8173
        %v8630 = vpop.f32.mrb[0].mxu0
        %v8631 = vadd.f32 0.0, %v8630
        %v8632 = vpop.f32.mrb[0].mxu0
        %8633 = vmatprep.mubr.f32.mxu0 0.0
        %8634 = vmatmul.mubr.f32.gmra.mrb[0].mxu0 %v8176
        %v8635 = vpop.f32.mrb[0].mxu0
        %v8636 = vadd.f32 0.0, %v8635
        %v8637 = vpop.f32.mrb[0].mxu0
        %8638 = vmatprep.mubr.f32.mxu0 0.0
        %8639 = vmatmul.mubr.f32.gmra.mrb[0].mxu0 %v8179
        %v8640 = vpop.f32.mrb[0].mxu0
        %v8641 = vadd.f32 0.0, %v8640
        %v8642 = vpop.f32.mrb[0].mxu0
        %8643 = vmatprep.mubr.f32.mxu0 0.0
        %8644 = vmatmul.mubr.f32.gmra.mrb[0].mxu0 %v8182
        %v8645 = vpop.f32.mrb[0].mxu0
        %v8646 = vadd.f32 0.0, %v8645
        %v8647 = vpop.f32.mrb[0].mxu0
        %8648 = vmatprep.mubr.f32.mxu0 0.0
        %8649 = vmatmul.mubr.f32.gmra.mrb[0].mxu0 %v8185
        %v8650 = vpop.f32.mrb[0].mxu0
        %v8651 = vadd.f32 0.0, %v8650
        %v8652 = vpop.f32.mrb[0].mxu0
        %8653 = vmatprep.mubr.f32.mxu0 0.0
        %8654 = vmatmul.mubr.f32.gmra.mrb[0].mxu0 %v8188
        %v8655 = vpop.f32.mrb[0].mxu0
        %v8656 = vadd.f32 0.0, %v8655
        %v8657 = vpop.f32.mrb[0].mxu0
        %8658 = vmatprep.mubr.f32.mxu0 0.0
        %8659 = vmatmul.mubr.f32.gmra.mrb[0].mxu0 %v8191
        %v8660 = vpop.f32.mrb[0].mxu0
        %v8661 = vadd.f32 0.0, %v8660
        %v8662 = vpop.f32.mrb[0].mxu0
        %8663 = vmatprep.mubr.f32.mxu0 0.0
        %8664 = vmatmul.mubr.f32.gmra.mrb[0].mxu0 %v8194
        %v8665 = vpop.f32.mrb[0].mxu0
        %v8666 = vadd.f32 0.0, %v8665
        %v8667 = vpop.f32.mrb[0].mxu0
        %8668 = vmatprep.mubr.f32.mxu0 0.0
        %8669 = vmatmul.mubr.f32.gmra.mrb[0].mxu0 %v8197
        %v8670 = vpop.f32.mrb[0].mxu0
        %v8671 = vadd.f32 0.0, %v8670
        %v8672 = vpop.f32.mrb[0].mxu0
        %8673 = vmatprep.mubr.f32.mxu0 0.0
        %8674 = vmatmul.mubr.f32.gmra.mrb[0].mxu0 %v8200
        %v8675 = vpop.f32.mrb[0].mxu0
        %v8676 = vadd.f32 0.0, %v8675
        %v8677 = vpop.f32.mrb[0].mxu0
        %8678 = vmatprep.mubr.f32.mxu0 0.0
        %8679 = vmatmul.mubr.f32.gmra.mrb[0].mxu0 %v8203
        %v8680 = vpop.f32.mrb[0].mxu0
        %v8681 = vadd.f32 0.0, %v8680
        %v8682 = vpop.f32.mrb[0].mxu0
        %8683 = vmatprep.mubr.f32.mxu0 0.0
        %8684 = vmatmul.mubr.f32.gmra.mrb[0].mxu0 %v8206
        %v8685 = vpop.f32.mrb[0].mxu0
        %v8686 = vadd.f32 0.0, %v8685
        %v8687 = vpop.f32.mrb[0].mxu0
        %8688 = vmatprep.mubr.f32.mxu0 0.0
        %8689 = vmatmul.mubr.f32.gmra.mrb[0].mxu0 %v8209
        %v8690 = vpop.f32.mrb[0].mxu0
        %v8691 = vadd.f32 0.0, %v8690
        %v8692 = vpop.f32.mrb[0].mxu0
        %8693 = vmatprep.mubr.f32.mxu0 0.0
        %8694 = vmatmul.mubr.f32.gmra.mrb[0].mxu0 %v8212
        %v8695 = vpop.f32.mrb[0].mxu0
        %v8696 = vadd.f32 0.0, %v8695
        %v8697 = vpop.f32.mrb[0].mxu0
        %8698 = vmatprep.mubr.f32.mxu0 0.0
        %8699 = vmatmul.mubr.f32.gmra.mrb[0].mxu0 %v8215
        %v8700 = vpop.f32.mrb[0].mxu0
        %v8701 = vadd.f32 0.0, %v8700
        %v8702 = vpop.f32.mrb[0].mxu0
        %8703 = vmatprep.mubr.f32.mxu0 0.0
        %8704 = vmatmul.mubr.f32.gmra.mrb[0].mxu0 %v8218
        %v8705 = vpop.f32.mrb[0].mxu0
        %v8706 = vadd.f32 0.0, %v8705
        %v8707 = vpop.f32.mrb[0].mxu0
        %8708 = vmatprep.mubr.f32.mxu0 0.0
        %8709 = vmatmul.mubr.f32.gmra.mrb[0].mxu0 %v8221
        %v8710 = vpop.f32.mrb[0].mxu0
        %v8711 = vadd.f32 0.0, %v8710
        %v8712 = vpop.f32.mrb[0].mxu0
        %8713 = vmatprep.mubr.f32.mxu0 0.0
        %8714 = vmatmul.mubr.f32.gmra.mrb[0].mxu0 %v8224
        %v8715 = vpop.f32.mrb[0].mxu0
        %v8716 = vadd.f32 0.0, %v8715
        %v8717 = vpop.f32.mrb[0].mxu0
        %8718 = vmatprep.mubr.f32.mxu0 0.0
        %8719 = vmatmul.mubr.f32.gmra.mrb[0].mxu0 %v8227
        %v8720 = vpop.f32.mrb[0].mxu0
        %v8721 = vadd.f32 0.0, %v8720
        %v8722 = vpop.f32.mrb[0].mxu0
        %8723 = vmatprep.mubr.f32.mxu0 0.0
        %8724 = vmatmul.mubr.f32.gmra.mrb[0].mxu0 %v8230
        %v8725 = vpop.f32.mrb[0].mxu0
        %v8726 = vadd.f32 0.0, %v8725
        %v8727 = vpop.f32.mrb[0].mxu0
        %8728 = vmatprep.mubr.f32.mxu0 0.0
        %8729 = vmatmul.mubr.f32.gmra.mrb[0].mxu0 %v8233
        %v8730 = vpop.f32.mrb[0].mxu0
        %v8731 = vadd.f32 0.0, %v8730
        %v8732 = vpop.f32.mrb[0].mxu0
        %8733 = vmatprep.mubr.f32.mxu0 0.0
        %8734 = vmatmul.mubr.f32.gmra.mrb[0].mxu0 %v8236
        %v8735 = vpop.f32.mrb[0].mxu0
        %v8736 = vadd.f32 0.0, %v8735
        %v8737 = vpop.f32.mrb[0].mxu0
        %8738 = vmatprep.mubr.f32.mxu0 0.0
        %8739 = vmatmul.mubr.f32.gmra.mrb[0].mxu0 %v8239
        %v8740 = vpop.f32.mrb[0].mxu0
        %v8741 = vadd.f32 0.0, %v8740
        %v8742 = vpop.f32.mrb[0].mxu0
        %8743 = vmatprep.mubr.f32.mxu0 0.0
        %8744 = vmatmul.mubr.f32.gmra.mrb[0].mxu0 %v8242
        %v8745 = vpop.f32.mrb[0].mxu0
        %v8746 = vadd.f32 0.0, %v8745
        %v8747 = vpop.f32.mrb[0].mxu0
        %8748 = vmatprep.mubr.f32.mxu0 0.0
        %8749 = vmatmul.mubr.f32.gmra.mrb[0].mxu0 %v8245
        %v8750 = vpop.f32.mrb[0].mxu0
        %v8751 = vadd.f32 0.0, %v8750
        %v8752 = vpop.f32.mrb[0].mxu0
        %8753 = vmatprep.mubr.f32.mxu0 0.0
        %8754 = vmatmul.mubr.f32.gmra.mrb[0].mxu0 %v8248
        %v8755 = vpop.f32.mrb[0].mxu0
        %v8756 = vadd.f32 0.0, %v8755
        %v8757 = vpop.f32.mrb[0].mxu0
        %8758 = vmatprep.mubr.f32.mxu0 0.0
        %8759 = vmatmul.mubr.f32.gmra.mrb[0].mxu0 %v8251
        %v8760 = vpop.f32.mrb[0].mxu0
        %v8761 = vadd.f32 0.0, %v8760
        %v8762 = vpop.f32.mrb[0].mxu0
        %8763 = vmatprep.mubr.f32.mxu0 0.0
        %8764 = vmatmul.mubr.f32.gmra.mrb[0].mxu0 %v8254
        %v8765 = vpop.f32.mrb[0].mxu0
        %v8766 = vadd.f32 0.0, %v8765
        %v8767 = vpop.f32.mrb[0].mxu0
        %8768 = vmatprep.mubr.f32.mxu0 0.0
        %8769 = vmatmul.mubr.f32.gmra.mrb[0].mxu0 %v8257
        %v8770 = vpop.f32.mrb[0].mxu0
        %v8771 = vadd.f32 0.0, %v8770
        %v8772 = vpop.f32.mrb[0].mxu0
        %8773 = vmatprep.mubr.f32.mxu0 0.0
        %8774 = vmatmul.mubr.f32.gmra.mrb[0].mxu0 %v8260
        %v8775 = vpop.f32.mrb[0].mxu0
        %v8776 = vadd.f32 0.0, %v8775
        %v8777 = vpop.f32.mrb[0].mxu0
        %8778 = vmatprep.mubr.f32.mxu0 0.0
        %8779 = vmatmul.mubr.f32.gmra.mrb[0].mxu0 %v8263
        %v8780 = vpop.f32.mrb[0].mxu0
        %v8781 = vadd.f32 0.0, %v8780
        %v8782 = vpop.f32.mrb[0].mxu0
        %8783 = vmatprep.mubr.f32.mxu0 0.0
        %8784 = vmatmul.mubr.f32.gmra.mrb[0].mxu0 %v8266
        %v8785 = vpop.f32.mrb[0].mxu0
        %v8786 = vadd.f32 0.0, %v8785
        %v8787 = vpop.f32.mrb[0].mxu0
        %8788 = vmatprep.mubr.f32.mxu0 0.0
        %8789 = vmatmul.mubr.f32.gmra.mrb[0].mxu0 %v8269
        %v8790 = vpop.f32.mrb[0].mxu0
        %v8791 = vadd.f32 0.0, %v8790
        %v8792 = vpop.f32.mrb[0].mxu0
        %8793 = vmatprep.mubr.f32.mxu0 0.0
        %8794 = vmatmul.mubr.f32.gmra.mrb[0].mxu0 %v8272
        %v8795 = vpop.f32.mrb[0].mxu0
        %v8796 = vadd.f32 0.0, %v8795
        %v8797 = vpop.f32.mrb[0].mxu0
        %8798 = vmatprep.mubr.f32.mxu0 0.0
        %8799 = vmatmul.mubr.f32.gmra.mrb[0].mxu0 %v8275
        %v8800 = vpop.f32.mrb[0].mxu0
        %v8801 = vadd.f32 0.0, %v8800
        %v8802 = vpop.f32.mrb[0].mxu0
        %8803 = vmatprep.mubr.f32.mxu0 0.0
        %8804 = vmatmul.mubr.f32.gmra.mrb[0].mxu0 %v8278
        %v8805 = vpop.f32.mrb[0].mxu0
        %v8806 = vadd.f32 0.0, %v8805
        %v8807 = vpop.f32.mrb[0].mxu0
        %8808 = vmatprep.mubr.f32.mxu0 0.0
        %8809 = vmatmul.mubr.f32.gmra.mrb[0].mxu0 %v8281
        %v8810 = vpop.f32.mrb[0].mxu0
        %v8811 = vadd.f32 0.0, %v8810
        %v8812 = vpop.f32.mrb[0].mxu0
        %8813 = vmatprep.mubr.f32.mxu0 0.0
        %8814 = vmatmul.mubr.f32.gmra.mrb[0].mxu0 %v8284
        %v8815 = vpop.f32.mrb[0].mxu0
        %v8816 = vadd.f32 0.0, %v8815
        %v8817 = vpop.f32.mrb[0].mxu0
        %8818 = vmatprep.mubr.f32.mxu0 0.0
        %8819 = vmatmul.mubr.f32.gmra.mrb[0].mxu0 %v8287
        %v8820 = vpop.f32.mrb[0].mxu0
        %v8821 = vadd.f32 0.0, %v8820
        %v8822 = vpop.f32.mrb[0].mxu0
        %8823 = vmatprep.mubr.f32.mxu0 0.0
        %8824 = vmatmul.mubr.f32.gmra.mrb[0].mxu0 %v8290
        %v8825 = vpop.f32.mrb[0].mxu0
        %v8826 = vadd.f32 0.0, %v8825
        %v8827 = vpop.f32.mrb[0].mxu0
        %8828 = vmatprep.mubr.f32.mxu0 0.0
        %8829 = vmatmul.mubr.f32.gmra.mrb[0].mxu0 %v8293
        %v8830 = vpop.f32.mrb[0].mxu0
        %v8831 = vadd.f32 0.0, %v8830
        %v8832 = vpop.f32.mrb[0].mxu0
        %8833 = vmatprep.mubr.f32.mxu0 0.0
        %8834 = vmatmul.mubr.f32.gmra.mrb[0].mxu0 %v8296
        %v8835 = vpop.f32.mrb[0].mxu0
        %v8836 = vadd.f32 0.0, %v8835
        %v8837 = vpop.f32.mrb[0].mxu0
        %8838 = vmatprep.mubr.f32.mxu0 0.0
        %8839 = vmatmul.mubr.f32.gmra.mrb[0].mxu0 %v8299
        %v8840 = vpop.f32.mrb[0].mxu0
        %v8841 = vadd.f32 0.0, %v8840
        %v8842 = vpop.f32.mrb[0].mxu0
        %8843 = vmatprep.mubr.f32.mxu0 0.0
        %8844 = vmatmul.mubr.f32.gmra.mrb[0].mxu0 %v8302
        %v8845 = vpop.f32.mrb[0].mxu0
        %v8846 = vadd.f32 0.0, %v8845
        %v8847 = vpop.f32.mrb[0].mxu0
        %8848 = vmatprep.mubr.f32.mxu0 0.0
        %8849 = vmatmul.mubr.f32.gmra.mrb[0].mxu0 %v8305
        %v8850 = vpop.f32.mrb[0].mxu0
        %v8851 = vadd.f32 0.0, %v8850
        %v8852 = vpop.f32.mrb[0].mxu0
        %8853 = vmatprep.mubr.f32.mxu0 0.0
        %8854 = vmatmul.mubr.f32.gmra.mrb[0].mxu0 %v8308
        %v8855 = vpop.f32.mrb[0].mxu0
        %v8856 = vadd.f32 0.0, %v8855
        %v8857 = vpop.f32.mrb[0].mxu0
        %8858 = vmatprep.mubr.f32.mxu0 0.0
        %8859 = vmatmul.mubr.f32.gmra.mrb[0].mxu0 %v8311
        %v8860 = vpop.f32.mrb[0].mxu0
        %v8861 = vadd.f32 0.0, %v8860
        %v8862 = vpop.f32.mrb[0].mxu0
        %8863 = vmatprep.mubr.f32.mxu0 0.0
        %8864 = vmatmul.mubr.f32.gmra.mrb[0].mxu0 %v8314
        %v8865 = vpop.f32.mrb[0].mxu0
        %v8866 = vadd.f32 0.0, %v8865
        %v8867 = vpop.f32.mrb[0].mxu0
        %8868 = vmatprep.mubr.f32.mxu0 0.0
        %8869 = vmatmul.mubr.f32.gmra.mrb[0].mxu0 %v8317
        %v8870 = vpop.f32.mrb[0].mxu0
        %v8871 = vadd.f32 0.0, %v8870
        %v8872 = vpop.f32.mrb[0].mxu0
        %8873 = vmatprep.mubr.f32.mxu0 0.0
        %8874 = vmatmul.mubr.f32.gmra.mrb[0].mxu0 %v8320
        %v8875 = vpop.f32.mrb[0].mxu0
        %v8876 = vadd.f32 0.0, %v8875
        %v8877 = vpop.f32.mrb[0].mxu0
        %8878 = vmatprep.mubr.f32.mxu0 0.0
        %8879 = vmatmul.mubr.f32.gmra.mrb[0].mxu0 %v8323
        %v8880 = vpop.f32.mrb[0].mxu0
        %v8881 = vadd.f32 0.0, %v8880
        %v8882 = vpop.f32.mrb[0].mxu0
        %8883 = vmatprep.mubr.f32.mxu0 0.0
        %8884 = vmatmul.mubr.f32.gmra.mrb[0].mxu0 %v8326
        %v8885 = vpop.f32.mrb[0].mxu0
        %v8886 = vadd.f32 0.0, %v8885
        %v8887 = vpop.f32.mrb[0].mxu0
        %8888 = vmatprep.mubr.f32.mxu0 0.0
        %8889 = vmatmul.mubr.f32.gmra.mrb[0].mxu0 %v8329
        %v8890 = vpop.f32.mrb[0].mxu0
        %v8891 = vadd.f32 0.0, %v8890
        %v8892 = vpop.f32.mrb[0].mxu0
        %8893 = vmatprep.mubr.f32.mxu0 0.0
        %8894 = vmatmul.mubr.f32.gmra.mrb[0].mxu0 %v8332
        %v8895 = vpop.f32.mrb[0].mxu0
        %v8896 = vadd.f32 0.0, %v8895
        %v8897 = vpop.f32.mrb[0].mxu0
        %8898 = vmatprep.mubr.f32.mxu0 0.0
        %8899 = vmatmul.mubr.f32.gmra.mrb[0].mxu0 %v8335
        %v8900 = vpop.f32.mrb[0].mxu0
        %v8901 = vadd.f32 0.0, %v8900
        %v8902 = vpop.f32.mrb[0].mxu0
        %8903 = vmatprep.mubr.f32.mxu0 0.0
        %8904 = vmatmul.mubr.f32.gmra.mrb[0].mxu0 %v8338
        %v8905 = vpop.f32.mrb[0].mxu0
        %v8906 = vadd.f32 0.0, %v8905
        %v8907 = vpop.f32.mrb[0].mxu0
        %8908 = vmatprep.mubr.f32.mxu0 0.0
        %8909 = vmatmul.mubr.f32.gmra.mrb[0].mxu0 %v8341
        %v8910 = vpop.f32.mrb[0].mxu0
        %v8911 = vadd.f32 0.0, %v8910
        %v8912 = vpop.f32.mrb[0].mxu0
        %8913 = vmatprep.mubr.f32.mxu0 0.0
        %8914 = vmatmul.mubr.f32.gmra.mrb[0].mxu0 %v8344
        %v8915 = vpop.f32.mrb[0].mxu0
        %v8916 = vadd.f32 0.0, %v8915
        %v8917 = vpop.f32.mrb[0].mxu0
        %8918 = vmatprep.mubr.f32.mxu0 0.0
        %8919 = vmatmul.mubr.f32.gmra.mrb[0].mxu0 %v8347
        %v8920 = vpop.f32.mrb[0].mxu0
        %v8921 = vadd.f32 0.0, %v8920
        %v8922 = vpop.f32.mrb[0].mxu0
        %8923 = vmatprep.mubr.f32.mxu0 0.0
        %8924 = vmatmul.mubr.f32.gmra.mrb[0].mxu0 %v8350
        %v8925 = vpop.f32.mrb[0].mxu0
        %v8926 = vadd.f32 0.0, %v8925
        %v8927 = vpop.f32.mrb[0].mxu0
        %8928 = vmatprep.mubr.f32.mxu0 0.0
        %8929 = vmatmul.mubr.f32.gmra.mrb[0].mxu0 %v8353
        %v8930 = vpop.f32.mrb[0].mxu0
        %v8931 = vadd.f32 0.0, %v8930
        %v8932 = vpop.f32.mrb[0].mxu0
        %8933 = vmatprep.mubr.f32.mxu0 0.0
        %8934 = vmatmul.mubr.f32.gmra.mrb[0].mxu0 %v8356
        %v8935 = vpop.f32.mrb[0].mxu0
        %v8936 = vadd.f32 0.0, %v8935
        %v8937 = vpop.f32.mrb[0].mxu0
        %8938 = vmatprep.mubr.f32.mxu0 0.0
        %8939 = vmatmul.mubr.f32.gmra.mrb[0].mxu0 %v8359
        %v8940 = vpop.f32.mrb[0].mxu0
        %v8941 = vadd.f32 0.0, %v8940
        %v8942 = vpop.f32.mrb[0].mxu0
        %8943 = vmatprep.mubr.f32.mxu0 0.0
        %8944 = vmatmul.mubr.f32.gmra.mrb[0].mxu0 %v8362
        %v8945 = vpop.f32.mrb[0].mxu0
        %v8946 = vadd.f32 0.0, %v8945
        %v8947 = vpop.f32.mrb[0].mxu0
        %8948 = vmatprep.mubr.f32.mxu0 0.0
        %8949 = vmatmul.mubr.f32.gmra.mrb[0].mxu0 %v8365
        %v8950 = vpop.f32.mrb[0].mxu0
        %v8951 = vadd.f32 0.0, %v8950
        %v8952 = vpop.f32.mrb[0].mxu0
        %8953 = vmatprep.mubr.f32.mxu0 0.0
        %8954 = vmatmul.mubr.f32.gmra.mrb[0].mxu0 %v8368
        %v8955 = vpop.f32.mrb[0].mxu0
        %v8956 = vadd.f32 0.0, %v8955
        %v8957 = vpop.f32.mrb[0].mxu0
        %8958 = vmatprep.mubr.f32.mxu0 0.0
        %8959 = vmatmul.mubr.f32.gmra.mrb[0].mxu0 %v8371
        %v8960 = vpop.f32.mrb[0].mxu0
        %v8961 = vadd.f32 0.0, %v8960
        %v8962 = vpop.f32.mrb[0].mxu0
        %8963 = vmatprep.mubr.f32.mxu0 0.0
        %8964 = vmatmul.mubr.f32.gmra.mrb[0].mxu0 %v8374
        %v8965 = vpop.f32.mrb[0].mxu0
        %v8966 = vadd.f32 0.0, %v8965
        %v8967 = vpop.f32.mrb[0].mxu0
        %8968 = vmatprep.mubr.f32.mxu0 0.0
        %8969 = vmatmul.mubr.f32.gmra.mrb[0].mxu0 %v8377
        %v8970 = vpop.f32.mrb[0].mxu0
        %v8971 = vadd.f32 0.0, %v8970
        %v8972 = vpop.f32.mrb[0].mxu0
        %8973 = vmatprep.mubr.f32.mxu0 0.0
        %8974 = vmatmul.mubr.f32.gmra.mrb[0].mxu0 %v8380
        %v8975 = vpop.f32.mrb[0].mxu0
        %v8976 = vadd.f32 0.0, %v8975
        %v8977 = vpop.f32.mrb[0].mxu0
        %8978 = vmatprep.mubr.f32.mxu0 0.0
        %8979 = vmatmul.mubr.f32.gmra.mrb[0].mxu0 %v8383
        %v8980 = vpop.f32.mrb[0].mxu0
        %v8981 = vadd.f32 0.0, %v8980
        %v8982 = vpop.f32.mrb[0].mxu0
        %8983 = vmatprep.mubr.f32.mxu0 0.0
        %8984 = vmatmul.mubr.f32.gmra.mrb[0].mxu0 %v8386
        %v8985 = vpop.f32.mrb[0].mxu0
        %v8986 = vadd.f32 0.0, %v8985
        %v8987 = vpop.f32.mrb[0].mxu0
        %8988 = vmatprep.mubr.f32.mxu0 0.0
        %8989 = vmatmul.mubr.f32.gmra.mrb[0].mxu0 %v8389
        %v8990 = vpop.f32.mrb[0].mxu0
        %v8991 = vadd.f32 0.0, %v8990
        %v8992 = vpop.f32.mrb[0].mxu0
        %8993 = vmatprep.mubr.f32.mxu0 0.0
        %8994 = vmatmul.mubr.f32.gmra.mrb[0].mxu0 %v8392
        %v8995 = vpop.f32.mrb[0].mxu0
        %v8996 = vadd.f32 0.0, %v8995
        %v8997 = vpop.f32.mrb[0].mxu0
        %8998 = vmatprep.mubr.f32.mxu0 0.0
        %8999 = vmatmul.mubr.f32.gmra.mrb[0].mxu0 %v8395
        %v9000 = vpop.f32.mrb[0].mxu0
        %v9001 = vadd.f32 0.0, %v9000
        %v9002 = vpop.f32.mrb[0].mxu0
        %9003 = vmatprep.mubr.f32.mxu0 0.0
        %9004 = vmatmul.mubr.f32.gmra.mrb[0].mxu0 %v8398
        %v9005 = vpop.f32.mrb[0].mxu0
        %v9006 = vadd.f32 0.0, %v9005
        %v9007 = vpop.f32.mrb[0].mxu0
        %9008 = vmatprep.mubr.f32.mxu0 0.0
        %9009 = vmatmul.mubr.f32.gmra.mrb[0].mxu0 %v8401
        %v9010 = vpop.f32.mrb[0].mxu0
        %v9011 = vadd.f32 0.0, %v9010
        %v9012 = vpop.f32.mrb[0].mxu0
        %9013 = vmatprep.mubr.f32.mxu0 0.0
        %9014 = vmatmul.mubr.f32.gmra.mrb[0].mxu0 %v8404
        %v9015 = vpop.f32.mrb[0].mxu0
        %v9016 = vadd.f32 0.0, %v9015
        %v9017 = vpop.f32.mrb[0].mxu0
        %9018 = vmatprep.mubr.f32.mxu0 0.0
        %9019 = vmatmul.mubr.f32.gmra.mrb[0].mxu0 %v8407
        %v9020 = vpop.f32.mrb[0].mxu0
        %v9021 = vadd.f32 0.0, %v9020
        %v9022 = vpop.f32.mrb[0].mxu0
        %9023 = vmatprep.mubr.f32.mxu0 0.0
        %9024 = vmatmul.mubr.f32.gmra.mrb[0].mxu0 %v8410
        %v9025 = vpop.f32.mrb[0].mxu0
        %v9026 = vadd.f32 0.0, %v9025
        %v9027 = vpop.f32.mrb[0].mxu0
        %9028 = vmatprep.mubr.f32.mxu0 0.0
        %9029 = vmatmul.mubr.f32.gmra.mrb[0].mxu0 %v8413
        %v9030 = vpop.f32.mrb[0].mxu0
        %v9031 = vadd.f32 0.0, %v9030
        %v9032 = vpop.f32.mrb[0].mxu0
        %9033 = vmatprep.mubr.f32.mxu0 0.0
        %9034 = vmatmul.mubr.f32.gmra.mrb[0].mxu0 %v8416
        %v9035 = vpop.f32.mrb[0].mxu0
        %v9036 = vadd.f32 0.0, %v9035
        %v9037 = vpop.f32.mrb[0].mxu0
        %9038 = vmatprep.mubr.f32.mxu0 0.0
        %9039 = vmatmul.mubr.f32.gmra.mrb[0].mxu0 %v8419
        %v9040 = vpop.f32.mrb[0].mxu0
        %v9041 = vadd.f32 0.0, %v9040
        %v9042 = vpop.f32.mrb[0].mxu0
        %9043 = vmatprep.mubr.f32.mxu0 0.0
        %9044 = vmatmul.mubr.f32.gmra.mrb[0].mxu0 %v8422
        %v9045 = vpop.f32.mrb[0].mxu0
        %v9046 = vadd.f32 0.0, %v9045
        %v9047 = vpop.f32.mrb[0].mxu0
        %9048 = vmatprep.mubr.f32.mxu0 0.0
        %9049 = vmatmul.mubr.f32.gmra.mrb[0].mxu0 %v8425
        %v9050 = vpop.f32.mrb[0].mxu0
        %v9051 = vadd.f32 0.0, %v9050
        %v9052 = vpop.f32.mrb[0].mxu0
        %9053 = vmatprep.mubr.f32.mxu0 0.0
        %9054 = vmatmul.mubr.f32.gmra.mrb[0].mxu0 %v8428
        %v9055 = vpop.f32.mrb[0].mxu0
        %v9056 = vadd.f32 0.0, %v9055
        %v9057 = vpop.f32.mrb[0].mxu0
        %9058 = vmatprep.mubr.f32.mxu0 0.0
        %9059 = vmatmul.mubr.f32.gmra.mrb[0].mxu0 %v8431
        %v9060 = vpop.f32.mrb[0].mxu0
        %v9061 = vadd.f32 0.0, %v9060
        %v9062 = vpop.f32.mrb[0].mxu0
        %9063 = vmatprep.mubr.f32.mxu0 0.0
        %9064 = vmatmul.mubr.f32.gmra.mrb[0].mxu0 %v8434
        %v9065 = vpop.f32.mrb[0].mxu0
        %v9066 = vadd.f32 0.0, %v9065
        %v9067 = vpop.f32.mrb[0].mxu0
        %9068 = vmatprep.mubr.f32.mxu0 0.0
        %9069 = vmatmul.mubr.f32.gmra.mrb[0].mxu0 %v8437
        %v9070 = vpop.f32.mrb[0].mxu0
        %v9071 = vadd.f32 0.0, %v9070
        %v9072 = vpop.f32.mrb[0].mxu0
        %9073 = vmatprep.mubr.f32.mxu0 0.0
        %9074 = vmatmul.mubr.f32.gmra.mrb[0].mxu0 %v8440
        %v9075 = vpop.f32.mrb[0].mxu0
        %v9076 = vadd.f32 0.0, %v9075
        %v9077 = vpop.f32.mrb[0].mxu0
        %9078 = vmatprep.mubr.f32.mxu0 0.0
        %9079 = vmatmul.mubr.f32.gmra.mrb[0].mxu0 %v8443
        %v9080 = vpop.f32.mrb[0].mxu0
        %v9081 = vadd.f32 0.0, %v9080
        %v9082 = vpop.f32.mrb[0].mxu0
        %9083 = vmatprep.mubr.f32.mxu0 0.0
        %9084 = vmatmul.mubr.f32.gmra.mrb[0].mxu0 %v8446
        %v9085 = vpop.f32.mrb[0].mxu0
        %v9086 = vadd.f32 0.0, %v9085
        %v9087 = vpop.f32.mrb[0].mxu0
        %9088 = vmatprep.mubr.f32.mxu0 0.0
        %9089 = vmatmul.mubr.f32.gmra.mrb[0].mxu0 %v8449
        %v9090 = vpop.f32.mrb[0].mxu0
        %v9091 = vadd.f32 0.0, %v9090
        %v9092 = vpop.f32.mrb[0].mxu0
        %9093 = vmatprep.mubr.f32.mxu0 0.0
        %9094 = vmatmul.mubr.f32.gmra.mrb[0].mxu0 %v8452
        %v9095 = vpop.f32.mrb[0].mxu0
        %v9096 = vadd.f32 0.0, %v9095
        %v9097 = vpop.f32.mrb[0].mxu0
        %9098 = vmatprep.mubr.f32.mxu0 0.0
        %9099 = vmatmul.mubr.f32.gmra.mrb[0].mxu0 %v8455
        %v9100 = vpop.f32.mrb[0].mxu0
        %v9101 = vadd.f32 0.0, %v9100
        %v9102 = vpop.f32.mrb[0].mxu0
        %9103 = vmatprep.mubr.f32.mxu0 0.0
        %9104 = vmatmul.mubr.f32.gmra.mrb[0].mxu0 %v8458
        %v9105 = vpop.f32.mrb[0].mxu0
        %v9106 = vadd.f32 0.0, %v9105
        %v9107 = vpop.f32.mrb[0].mxu0
        %9108 = vmatprep.mubr.f32.mxu0 0.0
        %9109 = vmatmul.mubr.f32.gmra.mrb[0].mxu0 %v8461
        %v9110 = vpop.f32.mrb[0].mxu0
        %v9111 = vadd.f32 0.0, %v9110
        %v9112 = vpop.f32.mrb[0].mxu0
        %9113 = vmatprep.mubr.f32.mxu0 0.0
        %9114 = vmatmul.mubr.f32.gmra.mrb[0].mxu0 %v8464
        %v9115 = vpop.f32.mrb[0].mxu0
        %v9116 = vadd.f32 0.0, %v9115
        %v9117 = vpop.f32.mrb[0].mxu0
        %9118 = vmatprep.mubr.f32.mxu0 0.0
        %9119 = vmatmul.mubr.f32.gmra.mrb[0].mxu0 %v8467
        %v9120 = vpop.f32.mrb[0].mxu0
        %v9121 = vadd.f32 0.0, %v9120
        %v9122 = vpop.f32.mrb[0].mxu0
        %9123 = vmatprep.mubr.f32.mxu0 0.0
        %9124 = vmatmul.mubr.f32.gmra.mrb[0].mxu0 %v8470
        %v9125 = vpop.f32.mrb[0].mxu0
        %v9126 = vadd.f32 0.0, %v9125
        %v9127 = vpop.f32.mrb[0].mxu0
        %9128 = vmatprep.mubr.f32.mxu0 0.0
        %9129 = vmatmul.mubr.f32.gmra.mrb[0].mxu0 %v8473
        %v9130 = vpop.f32.mrb[0].mxu0
        %v9131 = vadd.f32 0.0, %v9130
        %v9132 = vpop.f32.mrb[0].mxu0
        %9133 = vmatprep.mubr.f32.mxu0 0.0
        %9134 = vmatmul.mubr.f32.gmra.mrb[0].mxu0 %v8476
        %v9135 = vpop.f32.mrb[0].mxu0
        %v9136 = vadd.f32 0.0, %v9135
        %v9137 = vpop.f32.mrb[0].mxu0
        %9138 = vmatprep.mubr.f32.mxu0 0.0
        %9139 = vmatmul.mubr.f32.gmra.mrb[0].mxu0 %v8479
        %v9140 = vpop.f32.mrb[0].mxu0
        %v9141 = vadd.f32 0.0, %v9140
        %v9142 = vpop.f32.mrb[0].mxu0
        %9143 = vmatprep.mubr.f32.mxu0 0.0
        %9144 = vmatmul.mubr.f32.gmra.mrb[0].mxu0 %v8482
        %v9145 = vpop.f32.mrb[0].mxu0
        %v9146 = vadd.f32 0.0, %v9145
        %v9147 = vpop.f32.mrb[0].mxu0
        %9148 = vmatprep.mubr.f32.mxu0 0.0
        %9149 = vmatmul.mubr.f32.gmra.mrb[0].mxu0 %v8485
        %v9150 = vpop.f32.mrb[0].mxu0
        %v9151 = vadd.f32 0.0, %v9150
        %v9152 = vpop.f32.mrb[0].mxu0
        %9153 = vmatprep.mubr.f32.mxu0 0.0
        %9154 = vmatmul.mubr.f32.gmra.mrb[0].mxu0 %v8488
        %v9155 = vpop.f32.mrb[0].mxu0
        %v9156 = vadd.f32 0.0, %v9155
        %v9157 = vpop.f32.mrb[0].mxu0
        %9158 = vmatprep.mubr.f32.mxu0 0.0
        %9159 = vmatmul.mubr.f32.gmra.mrb[0].mxu0 %v8491
        %v9160 = vpop.f32.mrb[0].mxu0
        %v9161 = vadd.f32 0.0, %v9160
        %v9162 = vpop.f32.mrb[0].mxu0
        %9163 = vmatprep.mubr.f32.mxu0 0.0
        %9164 = vmatmul.mubr.f32.gmra.mrb[0].mxu0 %v8494
        %v9165 = vpop.f32.mrb[0].mxu0
        %v9166 = vadd.f32 0.0, %v9165
        %v9167 = vpop.f32.mrb[0].mxu0
        %9168 = vmatprep.mubr.f32.mxu0 0.0
        %9169 = vmatmul.mubr.f32.gmra.mrb[0].mxu0 %v8497
        %v9170 = vpop.f32.mrb[0].mxu0
        %v9171 = vadd.f32 0.0, %v9170
        %v9172 = vpop.f32.mrb[0].mxu0
        %9173 = vmatprep.mubr.f32.mxu0 0.0
        %9174 = vmatmul.mubr.f32.gmra.mrb[0].mxu0 %v8500
        %v9175 = vpop.f32.mrb[0].mxu0
        %v9176 = vadd.f32 0.0, %v9175
        %v9177 = vpop.f32.mrb[0].mxu0
        %9178 = vmatprep.mubr.f32.mxu0 0.0
        %9179 = vmatmul.mubr.f32.gmra.mrb[0].mxu0 %v8503
        %v9180 = vpop.f32.mrb[0].mxu0
        %v9181 = vadd.f32 0.0, %v9180
        %v9182 = vpop.f32.mrb[0].mxu0
        %9183 = vmatprep.mubr.f32.mxu0 0.0
        %9184 = vmatmul.mubr.f32.gmra.mrb[0].mxu0 %v8506
        %v9185 = vpop.f32.mrb[0].mxu0
        %v9186 = vadd.f32 0.0, %v9185
        %v9187 = vpop.f32.mrb[0].mxu0
        %9188 = vmatprep.mubr.f32.mxu0 0.0
        %9189 = vmatmul.mubr.f32.gmra.mrb[0].mxu0 %v8509
        %v9190 = vpop.f32.mrb[0].mxu0
        %v9191 = vadd.f32 0.0, %v9190
        %v9192 = vpop.f32.mrb[0].mxu0
        %9193 = vmatprep.mubr.f32.mxu0 0.0
        %9194 = vmatmul.mubr.f32.gmra.mrb[0].mxu0 %v8512
        %v9195 = vpop.f32.mrb[0].mxu0
        %v9196 = vadd.f32 0.0, %v9195
        %v9197 = vpop.f32.mrb[0].mxu0
        %9198 = vmatprep.mubr.f32.mxu0 0.0
        %9199 = vmatmul.mubr.f32.gmra.mrb[0].mxu0 %v8515
        %v9200 = vpop.f32.mrb[0].mxu0
        %v9201 = vadd.f32 0.0, %v9200
        %v9202 = vpop.f32.mrb[0].mxu0
        %9203 = vmatprep.mubr.f32.mxu0 0.0
        %9204 = vmatmul.mubr.f32.gmra.mrb[0].mxu0 %v8518
        %v9205 = vpop.f32.mrb[0].mxu0
        %v9206 = vadd.f32 0.0, %v9205
        %v9207 = vpop.f32.mrb[0].mxu0
        %9208 = vmatprep.mubr.f32.mxu0 0.0
        %9209 = vmatmul.mubr.f32.gmra.mrb[0].mxu0 %v8521
        %v9210 = vpop.f32.mrb[0].mxu0
        %v9211 = vadd.f32 0.0, %v9210
        %v9212 = vpop.f32.mrb[0].mxu0
        %9213 = vmatprep.mubr.f32.mxu0 0.0
        %9214 = vmatmul.mubr.f32.gmra.mrb[0].mxu0 %v8524
        %v9215 = vpop.f32.mrb[0].mxu0
        %v9216 = vadd.f32 0.0, %v9215
        %v9217 = vpop.f32.mrb[0].mxu0
        %9218 = vmatprep.mubr.f32.mxu0 0.0
        %9219 = vmatmul.mubr.f32.gmra.mrb[0].mxu0 %v8527
        %v9220 = vpop.f32.mrb[0].mxu0
        %v9221 = vadd.f32 0.0, %v9220
        %v9222 = vpop.f32.mrb[0].mxu0
        %9223 = vmatprep.mubr.f32.mxu0 0.0
        %9224 = vmatmul.mubr.f32.gmra.mrb[0].mxu0 %v8530
        %v9225 = vpop.f32.mrb[0].mxu0
        %v9226 = vadd.f32 0.0, %v9225
        %v9227 = vpop.f32.mrb[0].mxu0
        %9228 = vmatprep.mubr.f32.mxu0 0.0
        %9229 = vmatmul.mubr.f32.gmra.mrb[0].mxu0 %v8533
        %v9230 = vpop.f32.mrb[0].mxu0
        %v9231 = vadd.f32 0.0, %v9230
        %v9232 = vpop.f32.mrb[0].mxu0
        %9233 = vmatprep.mubr.f32.mxu0 0.0
        %9234 = vmatmul.mubr.f32.gmra.mrb[0].mxu0 %v8536
        %v9235 = vpop.f32.mrb[0].mxu0
        %v9236 = vadd.f32 0.0, %v9235
        %v9237 = vpop.f32.mrb[0].mxu0
        %9238 = vmatprep.mubr.f32.mxu0 0.0
        %9239 = vmatmul.mubr.f32.gmra.mrb[0].mxu0 %v8539
        %v9240 = vpop.f32.mrb[0].mxu0
        %v9241 = vadd.f32 0.0, %v9240
        %v9242 = vpop.f32.mrb[0].mxu0
        %9243 = vmatprep.mubr.f32.mxu0 0.0
        %9244 = vmatmul.mubr.f32.gmra.mrb[0].mxu0 %v8542
        %v9245 = vpop.f32.mrb[0].mxu0
        %v9246 = vadd.f32 0.0, %v9245
        %v9247 = vpop.f32.mrb[0].mxu0
        %9248 = vdwg.mxu0
        %v9249 = vadd.f32 %v7901, %v8611
        %v9250 = vadd.f32 %v7902, %v8616
        %v9251 = vadd.f32 %v7903, %v8621
        %v9252 = vadd.f32 %v7904, %v8626
        %v9253 = vadd.f32 %v7905, %v8631
        %v9254 = vadd.f32 %v7906, %v8636
        %v9255 = vadd.f32 %v7907, %v8641
        %v9256 = vadd.f32 %v7908, %v8646
        %v9257 = vadd.f32 %v7909, %v8651
        %v9258 = vadd.f32 %v7910, %v8656
        %v9259 = vadd.f32 %v7911, %v8661
        %v9260 = vadd.f32 %v7912, %v8666
        %v9261 = vadd.f32 %v7913, %v8671
        %v9262 = vadd.f32 %v7914, %v8676
        %v9263 = vadd.f32 %v7915, %v8681
        %v9264 = vadd.f32 %v7916, %v8686
        %v9265 = vadd.f32 %v7917, %v8691
        %v9266 = vadd.f32 %v7918, %v8696
        %v9267 = vadd.f32 %v7919, %v8701
        %v9268 = vadd.f32 %v7920, %v8706
        %v9269 = vadd.f32 %v7921, %v8711
        %v9270 = vadd.f32 %v7922, %v8716
        %v9271 = vadd.f32 %v7923, %v8721
        %v9272 = vadd.f32 %v7924, %v8726
        %v9273 = vadd.f32 %v7925, %v8731
        %v9274 = vadd.f32 %v7926, %v8736
        %v9275 = vadd.f32 %v7927, %v8741
        %v9276 = vadd.f32 %v7928, %v8746
        %v9277 = vadd.f32 %v7929, %v8751
        %v9278 = vadd.f32 %v7930, %v8756
        %v9279 = vadd.f32 %v7931, %v8761
        %v9280 = vadd.f32 %v7932, %v8766
        %v9281 = vadd.f32 %v7933, %v8771
        %v9282 = vadd.f32 %v7934, %v8776
        %v9283 = vadd.f32 %v7935, %v8781
        %v9284 = vadd.f32 %v7936, %v8786
        %v9285 = vadd.f32 %v7937, %v8791
        %v9286 = vadd.f32 %v7938, %v8796
        %v9287 = vadd.f32 %v7939, %v8801
        %v9288 = vadd.f32 %v7940, %v8806
        %v9289 = vadd.f32 %v7941, %v8811
        %v9290 = vadd.f32 %v7942, %v8816
        %v9291 = vadd.f32 %v7943, %v8821
        %v9292 = vadd.f32 %v7944, %v8826
        %v9293 = vadd.f32 %v7945, %v8831
        %v9294 = vadd.f32 %v7946, %v8836
        %v9295 = vadd.f32 %v7947, %v8841
        %v9296 = vadd.f32 %v7948, %v8846
        %v9297 = vadd.f32 %v7949, %v8851
        %v9298 = vadd.f32 %v7950, %v8856
        %v9299 = vadd.f32 %v7951, %v8861
        %v9300 = vadd.f32 %v7952, %v8866
        %v9301 = vadd.f32 %v7953, %v8871
        %v9302 = vadd.f32 %v7954, %v8876
        %v9303 = vadd.f32 %v7955, %v8881
        %v9304 = vadd.f32 %v7956, %v8886
        %v9305 = vadd.f32 %v7957, %v8891
        %v9306 = vadd.f32 %v7958, %v8896
        %v9307 = vadd.f32 %v7959, %v8901
        %v9308 = vadd.f32 %v7960, %v8906
        %v9309 = vadd.f32 %v7961, %v8911
        %v9310 = vadd.f32 %v7962, %v8916
        %v9311 = vadd.f32 %v7963, %v8921
        %v9312 = vadd.f32 %v7964, %v8926
        %v9313 = vadd.f32 %v7965, %v8931
        %v9314 = vadd.f32 %v7966, %v8936
        %v9315 = vadd.f32 %v7967, %v8941
        %v9316 = vadd.f32 %v7968, %v8946
        %v9317 = vadd.f32 %v7969, %v8951
        %v9318 = vadd.f32 %v7970, %v8956
        %v9319 = vadd.f32 %v7971, %v8961
        %v9320 = vadd.f32 %v7972, %v8966
        %v9321 = vadd.f32 %v7973, %v8971
        %v9322 = vadd.f32 %v7974, %v8976
        %v9323 = vadd.f32 %v7975, %v8981
        %v9324 = vadd.f32 %v7976, %v8986
        %v9325 = vadd.f32 %v7977, %v8991
        %v9326 = vadd.f32 %v7978, %v8996
        %v9327 = vadd.f32 %v7979, %v9001
        %v9328 = vadd.f32 %v7980, %v9006
        %v9329 = vadd.f32 %v7981, %v9011
        %v9330 = vadd.f32 %v7982, %v9016
        %v9331 = vadd.f32 %v7983, %v9021
        %v9332 = vadd.f32 %v7984, %v9026
        %v9333 = vadd.f32 %v7985, %v9031
        %v9334 = vadd.f32 %v7986, %v9036
        %v9335 = vadd.f32 %v7987, %v9041
        %v9336 = vadd.f32 %v7988, %v9046
        %v9337 = vadd.f32 %v7989, %v9051
        %v9338 = vadd.f32 %v7990, %v9056
        %v9339 = vadd.f32 %v7991, %v9061
        %v9340 = vadd.f32 %v7992, %v9066
        %v9341 = vadd.f32 %v7993, %v9071
        %v9342 = vadd.f32 %v7994, %v9076
        %v9343 = vadd.f32 %v7995, %v9081
        %v9344 = vadd.f32 %v7996, %v9086
        %v9345 = vadd.f32 %v7997, %v9091
        %v9346 = vadd.f32 %v7998, %v9096
        %v9347 = vadd.f32 %v7999, %v9101
        %v9348 = vadd.f32 %v8000, %v9106
        %v9349 = vadd.f32 %v8001, %v9111
        %v9350 = vadd.f32 %v8002, %v9116
        %v9351 = vadd.f32 %v8003, %v9121
        %v9352 = vadd.f32 %v8004, %v9126
        %v9353 = vadd.f32 %v8005, %v9131
        %v9354 = vadd.f32 %v8006, %v9136
        %v9355 = vadd.f32 %v8007, %v9141
        %v9356 = vadd.f32 %v8008, %v9146
        %v9357 = vadd.f32 %v8009, %v9151
        %v9358 = vadd.f32 %v8010, %v9156
        %v9359 = vadd.f32 %v8011, %v9161
        %v9360 = vadd.f32 %v8012, %v9166
        %v9361 = vadd.f32 %v8013, %v9171
        %v9362 = vadd.f32 %v8014, %v9176
        %v9363 = vadd.f32 %v8015, %v9181
        %v9364 = vadd.f32 %v8016, %v9186
        %v9365 = vadd.f32 %v8017, %v9191
        %v9366 = vadd.f32 %v8018, %v9196
        %v9367 = vadd.f32 %v8019, %v9201
        %v9368 = vadd.f32 %v8020, %v9206
        %v9369 = vadd.f32 %v8021, %v9211
        %v9370 = vadd.f32 %v8022, %v9216
        %v9371 = vadd.f32 %v8023, %v9221
        %v9372 = vadd.f32 %v8024, %v9226
        %v9373 = vadd.f32 %v8025, %v9231
        %v9374 = vadd.f32 %v8026, %v9236
        %v9375 = vadd.f32 %v8027, %v9241
        %v9376 = vadd.f32 %v8028, %v9246
        %v9377 = vld [vmem:[%s8029 + $0x1] sm:$0xff]
        %v9378 = vld [vmem:[%s8029 + $0x9] sm:$0xff]
        %v9379 = vld [vmem:[%s8029 + $0x19] sm:$0xff]
        %v9380 = vld [vmem:[%s8029 + $0x21] sm:$0xff]
        %v9381 = vld [vmem:[%s8029 + $0x31] sm:$0xff]
        %v9382 = vld [vmem:[%s8029 + $0x39] sm:$0xff]
        %v9383 = vld [vmem:[%s8029 + $0x49] sm:$0xff]
        %v9384 = vld [vmem:[%s8029 + $0x51] sm:$0xff]
        %v9385 = vld [vmem:[%s8029 + $0x61] sm:$0xff]
        %v9386 = vld [vmem:[%s8029 + $0x69] sm:$0xff]
        %v9387 = vld [vmem:[%s8029 + $0x79] sm:$0xff]
        %v9388 = vld [vmem:[%s8029 + $0x81] sm:$0xff]
        %v9389 = vld [vmem:[%s8029 + $0x91] sm:$0xff]
        %v9390 = vld [vmem:[%s8029 + $0x99] sm:$0xff]
        %v9391 = vld [vmem:[%s8029 + $0xa9] sm:$0xff]
        %v9392 = vld [vmem:[%s8029 + $0xb1] sm:$0xff]
        %v9393 = vld [vmem:[%s8029 + $0xc1] sm:$0xff]
        %v9394 = vld [vmem:[%s8029 + $0xc9] sm:$0xff]
        %v9395 = vld [vmem:[%s8029 + $0xd9] sm:$0xff]
        %v9396 = vld [vmem:[%s8029 + $0xe1] sm:$0xff]
        %v9397 = vld [vmem:[%s8029 + $0xf1] sm:$0xff]
        %v9398 = vld [vmem:[%s8029 + $0xf9] sm:$0xff]
        %v9399 = vld [vmem:[%s8029 + $0x109] sm:$0xff]
        %v9400 = vld [vmem:[%s8029 + $0x111] sm:$0xff]
        %v9401 = vld [vmem:[%s8029 + $0x121] sm:$0xff]
        %v9402 = vld [vmem:[%s8029 + $0x129] sm:$0xff]
        %v9403 = vld [vmem:[%s8029 + $0x139] sm:$0xff]
        %v9404 = vld [vmem:[%s8029 + $0x141] sm:$0xff]
        %v9405 = vld [vmem:[%s8029 + $0x151] sm:$0xff]
        %v9406 = vld [vmem:[%s8029 + $0x159] sm:$0xff]
        %v9407 = vld [vmem:[%s8029 + $0x169] sm:$0xff]
        %v9408 = vld [vmem:[%s8029 + $0x171] sm:$0xff]
        %v9409 = vld [vmem:[%s8029 + $0x1b1] sm:$0xff]
        %v9410 = vld [vmem:[%s8029 + $0x1b9] sm:$0xff]
        %v9411 = vld [vmem:[%s8029 + $0x1c9] sm:$0xff]
        %v9412 = vld [vmem:[%s8029 + $0x1d1] sm:$0xff]
        %v9413 = vld [vmem:[%s8029 + $0x1e1] sm:$0xff]
        %v9414 = vld [vmem:[%s8029 + $0x1e9] sm:$0xff]
        %v9415 = vld [vmem:[%s8029 + $0x1f9] sm:$0xff]
        %v9416 = vld [vmem:[%s8029 + $0x201] sm:$0xff]
        %v9417 = vld [vmem:[%s8029 + $0x211] sm:$0xff]
        %v9418 = vld [vmem:[%s8029 + $0x219] sm:$0xff]
        %v9419 = vld [vmem:[%s8029 + $0x229] sm:$0xff]
        %v9420 = vld [vmem:[%s8029 + $0x231] sm:$0xff]
        %v9421 = vld [vmem:[%s8029 + $0x241] sm:$0xff]
        %v9422 = vld [vmem:[%s8029 + $0x249] sm:$0xff]
        %v9423 = vld [vmem:[%s8029 + $0x259] sm:$0xff]
        %v9424 = vld [vmem:[%s8029 + $0x261] sm:$0xff]
        %v9425 = vld [vmem:[%s8029 + $0x271] sm:$0xff]
        %v9426 = vld [vmem:[%s8029 + $0x279] sm:$0xff]
        %v9427 = vld [vmem:[%s8029 + $0x289] sm:$0xff]
        %v9428 = vld [vmem:[%s8029 + $0x291] sm:$0xff]
        %v9429 = vld [vmem:[%s8029 + $0x2a1] sm:$0xff]
        %v9430 = vld [vmem:[%s8029 + $0x2a9] sm:$0xff]
        %v9431 = vld [vmem:[%s8029 + $0x2b9] sm:$0xff]
        %v9432 = vld [vmem:[%s8029 + $0x2c1] sm:$0xff]
        %v9433 = vld [vmem:[%s8029 + $0x2d1] sm:$0xff]
        %v9434 = vld [vmem:[%s8029 + $0x2d9] sm:$0xff]
        %v9435 = vld [vmem:[%s8029 + $0x2e9] sm:$0xff]
        %v9436 = vld [vmem:[%s8029 + $0x2f1] sm:$0xff]
        %v9437 = vld [vmem:[%s8029 + $0x301] sm:$0xff]
        %v9438 = vld [vmem:[%s8029 + $0x309] sm:$0xff]
        %v9439 = vld [vmem:[%s8029 + $0x319] sm:$0xff]
        %v9440 = vld [vmem:[%s8029 + $0x321] sm:$0xff]
        %v9441 = vld [vmem:[%s8029 + $0x361] sm:$0xff]
        %v9442 = vld [vmem:[%s8029 + $0x369] sm:$0xff]
        %v9443 = vld [vmem:[%s8029 + $0x379] sm:$0xff]
        %v9444 = vld [vmem:[%s8029 + $0x381] sm:$0xff]
        %v9445 = vld [vmem:[%s8029 + $0x391] sm:$0xff]
        %v9446 = vld [vmem:[%s8029 + $0x399] sm:$0xff]
        %v9447 = vld [vmem:[%s8029 + $0x3a9] sm:$0xff]
        %v9448 = vld [vmem:[%s8029 + $0x3b1] sm:$0xff]
        %v9449 = vld [vmem:[%s8029 + $0x3c1] sm:$0xff]
        %v9450 = vld [vmem:[%s8029 + $0x3c9] sm:$0xff]
        %v9451 = vld [vmem:[%s8029 + $0x3d9] sm:$0xff]
        %v9452 = vld [vmem:[%s8029 + $0x3e1] sm:$0xff]
        %v9453 = vld [vmem:[%s8029 + $0x3f1] sm:$0xff]
        %v9454 = vld [vmem:[%s8029 + $0x3f9] sm:$0xff]
        %v9455 = vld [vmem:[%s8029 + $0x409] sm:$0xff]
        %v9456 = vld [vmem:[%s8029 + $0x411] sm:$0xff]
        %v9457 = vld [vmem:[%s8029 + $0x421] sm:$0xff]
        %v9458 = vld [vmem:[%s8029 + $0x429] sm:$0xff]
        %v9459 = vld [vmem:[%s8029 + $0x439] sm:$0xff]
        %v9460 = vld [vmem:[%s8029 + $0x441] sm:$0xff]
        %v9461 = vld [vmem:[%s8029 + $0x451] sm:$0xff]
        %v9462 = vld [vmem:[%s8029 + $0x459] sm:$0xff]
        %v9463 = vld [vmem:[%s8029 + $0x469] sm:$0xff]
        %v9464 = vld [vmem:[%s8029 + $0x471] sm:$0xff]
        %v9465 = vld [vmem:[%s8029 + $0x481] sm:$0xff]
        %v9466 = vld [vmem:[%s8029 + $0x489] sm:$0xff]
        %v9467 = vld [vmem:[%s8029 + $0x499] sm:$0xff]
        %v9468 = vld [vmem:[%s8029 + $0x4a1] sm:$0xff]
        %v9469 = vld [vmem:[%s8029 + $0x4b1] sm:$0xff]
        %v9470 = vld [vmem:[%s8029 + $0x4b9] sm:$0xff]
        %v9471 = vld [vmem:[%s8029 + $0x4c9] sm:$0xff]
        %v9472 = vld [vmem:[%s8029 + $0x4d1] sm:$0xff]
        %v9473 = vld [vmem:[%s8029 + $0x511] sm:$0xff]
        %v9474 = vld [vmem:[%s8029 + $0x519] sm:$0xff]
        %v9475 = vld [vmem:[%s8029 + $0x529] sm:$0xff]
        %v9476 = vld [vmem:[%s8029 + $0x531] sm:$0xff]
        %v9477 = vld [vmem:[%s8029 + $0x541] sm:$0xff]
        %v9478 = vld [vmem:[%s8029 + $0x549] sm:$0xff]
        %v9479 = vld [vmem:[%s8029 + $0x559] sm:$0xff]
        %v9480 = vld [vmem:[%s8029 + $0x561] sm:$0xff]
        %v9481 = vld [vmem:[%s8029 + $0x571] sm:$0xff]
        %v9482 = vld [vmem:[%s8029 + $0x579] sm:$0xff]
        %v9483 = vld [vmem:[%s8029 + $0x589] sm:$0xff]
        %v9484 = vld [vmem:[%s8029 + $0x591] sm:$0xff]
        %v9485 = vld [vmem:[%s8029 + $0x5a1] sm:$0xff]
        %v9486 = vld [vmem:[%s8029 + $0x5a9] sm:$0xff]
        %v9487 = vld [vmem:[%s8029 + $0x5b9] sm:$0xff]
        %v9488 = vld [vmem:[%s8029 + $0x5c1] sm:$0xff]
        %v9489 = vld [vmem:[%s8029 + $0x5d1] sm:$0xff]
        %v9490 = vld [vmem:[%s8029 + $0x5d9] sm:$0xff]
        %v9491 = vld [vmem:[%s8029 + $0x5e9] sm:$0xff]
        %v9492 = vld [vmem:[%s8029 + $0x5f1] sm:$0xff]
        %v9493 = vld [vmem:[%s8029 + $0x601] sm:$0xff]
        %v9494 = vld [vmem:[%s8029 + $0x609] sm:$0xff]
        %v9495 = vld [vmem:[%s8029 + $0x619] sm:$0xff]
        %v9496 = vld [vmem:[%s8029 + $0x621] sm:$0xff]
        %v9497 = vld [vmem:[%s8029 + $0x631] sm:$0xff]
        %v9498 = vld [vmem:[%s8029 + $0x639] sm:$0xff]
        %v9499 = vld [vmem:[%s8029 + $0x649] sm:$0xff]
        %v9500 = vld [vmem:[%s8029 + $0x651] sm:$0xff]
        %v9501 = vld [vmem:[%s8029 + $0x661] sm:$0xff]
        %v9502 = vld [vmem:[%s8029 + $0x669] sm:$0xff]
        %v9503 = vld [vmem:[%s8029 + $0x679] sm:$0xff]
        %v9504 = vld [vmem:[%s8029 + $0x681] sm:$0xff]
        %s9505 = scalar_lea.vmem %s1, 56
        %v9506 = vld [vmem:[%s9505] sm:$0xff]
        %v9508 = vsel %vm461, %v9377, 0
        %v9511 = vsel %vm461, %v9378, 0
        %v9514 = vsel %vm461, %v9379, 0
        %v9517 = vsel %vm461, %v9380, 0
        %v9520 = vsel %vm461, %v9381, 0
        %v9523 = vsel %vm461, %v9382, 0
        %v9526 = vsel %vm461, %v9383, 0
        %v9529 = vsel %vm461, %v9384, 0
        %v9532 = vsel %vm461, %v9385, 0
        %v9535 = vsel %vm461, %v9386, 0
        %v9538 = vsel %vm461, %v9387, 0
        %v9541 = vsel %vm461, %v9388, 0
        %v9544 = vsel %vm461, %v9389, 0
        %v9547 = vsel %vm461, %v9390, 0
        %v9550 = vsel %vm461, %v9391, 0
        %v9553 = vsel %vm461, %v9392, 0
        %v9556 = vsel %vm461, %v9393, 0
        %v9559 = vsel %vm461, %v9394, 0
        %v9562 = vsel %vm461, %v9395, 0
        %v9565 = vsel %vm461, %v9396, 0
        %v9568 = vsel %vm461, %v9397, 0
        %v9571 = vsel %vm461, %v9398, 0
        %v9574 = vsel %vm461, %v9399, 0
        %v9577 = vsel %vm461, %v9400, 0
        %v9580 = vsel %vm461, %v9401, 0
        %v9583 = vsel %vm461, %v9402, 0
        %v9586 = vsel %vm461, %v9403, 0
        %v9589 = vsel %vm461, %v9404, 0
        %v9592 = vsel %vm461, %v9405, 0
        %v9595 = vsel %vm461, %v9406, 0
        %v9598 = vsel %vm461, %v9407, 0
        %v9601 = vsel %vm461, %v9408, 0
        %v9604 = vsel %vm461, %v9409, 0
        %v9607 = vsel %vm461, %v9410, 0
        %v9610 = vsel %vm461, %v9411, 0
        %v9613 = vsel %vm461, %v9412, 0
        %v9616 = vsel %vm461, %v9413, 0
        %v9619 = vsel %vm461, %v9414, 0
        %v9622 = vsel %vm461, %v9415, 0
        %v9625 = vsel %vm461, %v9416, 0
        %v9628 = vsel %vm461, %v9417, 0
        %v9631 = vsel %vm461, %v9418, 0
        %v9634 = vsel %vm461, %v9419, 0
        %v9637 = vsel %vm461, %v9420, 0
        %v9640 = vsel %vm461, %v9421, 0
        %v9643 = vsel %vm461, %v9422, 0
        %v9646 = vsel %vm461, %v9423, 0
        %v9649 = vsel %vm461, %v9424, 0
        %v9652 = vsel %vm461, %v9425, 0
        %v9655 = vsel %vm461, %v9426, 0
        %v9658 = vsel %vm461, %v9427, 0
        %v9661 = vsel %vm461, %v9428, 0
        %v9664 = vsel %vm461, %v9429, 0
        %v9667 = vsel %vm461, %v9430, 0
        %v9670 = vsel %vm461, %v9431, 0
        %v9673 = vsel %vm461, %v9432, 0
        %v9676 = vsel %vm461, %v9433, 0
        %v9679 = vsel %vm461, %v9434, 0
        %v9682 = vsel %vm461, %v9435, 0
        %v9685 = vsel %vm461, %v9436, 0
        %v9688 = vsel %vm461, %v9437, 0
        %v9691 = vsel %vm461, %v9438, 0
        %v9694 = vsel %vm461, %v9439, 0
        %v9697 = vsel %vm461, %v9440, 0
        %v9700 = vsel %vm461, %v9441, 0
        %v9703 = vsel %vm461, %v9442, 0
        %v9706 = vsel %vm461, %v9443, 0
        %v9709 = vsel %vm461, %v9444, 0
        %v9712 = vsel %vm461, %v9445, 0
        %v9715 = vsel %vm461, %v9446, 0
        %v9718 = vsel %vm461, %v9447, 0
        %v9721 = vsel %vm461, %v9448, 0
        %v9724 = vsel %vm461, %v9449, 0
        %v9727 = vsel %vm461, %v9450, 0
        %v9730 = vsel %vm461, %v9451, 0
        %v9733 = vsel %vm461, %v9452, 0
        %v9736 = vsel %vm461, %v9453, 0
        %v9739 = vsel %vm461, %v9454, 0
        %v9742 = vsel %vm461, %v9455, 0
        %v9745 = vsel %vm461, %v9456, 0
        %v9748 = vsel %vm461, %v9457, 0
        %v9751 = vsel %vm461, %v9458, 0
        %v9754 = vsel %vm461, %v9459, 0
        %v9757 = vsel %vm461, %v9460, 0
        %v9760 = vsel %vm461, %v9461, 0
        %v9763 = vsel %vm461, %v9462, 0
        %v9766 = vsel %vm461, %v9463, 0
        %v9769 = vsel %vm461, %v9464, 0
        %v9772 = vsel %vm461, %v9465, 0
        %v9775 = vsel %vm461, %v9466, 0
        %v9778 = vsel %vm461, %v9467, 0
        %v9781 = vsel %vm461, %v9468, 0
        %v9784 = vsel %vm461, %v9469, 0
        %v9787 = vsel %vm461, %v9470, 0
        %v9790 = vsel %vm461, %v9471, 0
        %v9793 = vsel %vm461, %v9472, 0
        %v9796 = vsel %vm461, %v9473, 0
        %v9799 = vsel %vm461, %v9474, 0
        %v9802 = vsel %vm461, %v9475, 0
        %v9805 = vsel %vm461, %v9476, 0
        %v9808 = vsel %vm461, %v9477, 0
        %v9811 = vsel %vm461, %v9478, 0
        %v9814 = vsel %vm461, %v9479, 0
        %v9817 = vsel %vm461, %v9480, 0
        %v9820 = vsel %vm461, %v9481, 0
        %v9823 = vsel %vm461, %v9482, 0
        %v9826 = vsel %vm461, %v9483, 0
        %v9829 = vsel %vm461, %v9484, 0
        %v9832 = vsel %vm461, %v9485, 0
        %v9835 = vsel %vm461, %v9486, 0
        %v9838 = vsel %vm461, %v9487, 0
        %v9841 = vsel %vm461, %v9488, 0
        %v9844 = vsel %vm461, %v9489, 0
        %v9847 = vsel %vm461, %v9490, 0
        %v9850 = vsel %vm461, %v9491, 0
        %v9853 = vsel %vm461, %v9492, 0
        %v9856 = vsel %vm461, %v9493, 0
        %v9859 = vsel %vm461, %v9494, 0
        %v9862 = vsel %vm461, %v9495, 0
        %v9865 = vsel %vm461, %v9496, 0
        %v9868 = vsel %vm461, %v9497, 0
        %v9871 = vsel %vm461, %v9498, 0
        %v9874 = vsel %vm461, %v9499, 0
        %v9877 = vsel %vm461, %v9500, 0
        %v9880 = vsel %vm461, %v9501, 0
        %v9883 = vsel %vm461, %v9502, 0
        %v9886 = vsel %vm461, %v9503, 0
        %v9889 = vsel %vm461, %v9504, 0
        %9891 = vmatprep.subr.mxu0 0.0
        %9892 = vmatpush1.msra.mxu0 %v9506
        %9893 = vmatprep.subr.mxu0 0.0
        %9894 = vmatpush1.msra.mxu0 0.0
        %9895 = vmatprep.subr.mxu0 0.0
        %9896 = vmatpush1.msra.mxu0 0.0
        %9897 = vmatprep.subr.mxu0 0.0
        %9898 = vmatpush1.msra.mxu0 0.0
        %9899 = vmatprep.subr.mxu0 0.0
        %9900 = vmatpush1.msra.mxu0 0.0
        %9901 = vmatprep.subr.mxu0 0.0
        %9902 = vmatpush1.msra.mxu0 0.0
        %9903 = vmatprep.subr.mxu0 0.0
        %9904 = vmatpush1.msra.mxu0 0.0
        %9905 = vmatprep.subr.mxu0 0.0
        %9906 = vmatpush1.msra.mxu0 0.0
        %9907 = vmatprep.subr.mxu0 0.0
        %9908 = vmatpush1.msra.mxu0 0.0
        %9909 = vmatprep.subr.mxu0 0.0
        %9910 = vmatpush1.msra.mxu0 0.0
        %9911 = vmatprep.subr.mxu0 0.0
        %9912 = vmatpush1.msra.mxu0 0.0
        %9913 = vmatprep.subr.mxu0 0.0
        %9914 = vmatpush1.msra.mxu0 0.0
        %9915 = vmatprep.subr.mxu0 0.0
        %9916 = vmatpush1.msra.mxu0 0.0
        %9917 = vmatprep.subr.mxu0 0.0
        %9918 = vmatpush1.msra.mxu0 0.0
        %9919 = vmatprep.subr.mxu0 0.0
        %9920 = vmatpush1.msra.mxu0 0.0
        %9921 = vmatprep.subr.mxu0 0.0
        %9922 = vmatpush1.msra.mxu0 0.0
        %9923 = vmatprep.subr.mxu0 0.0
        %9924 = vmatpush1.msra.mxu0 0.0
        %9925 = vmatprep.subr.mxu0 0.0
        %9926 = vmatpush1.msra.mxu0 0.0
        %9927 = vmatprep.subr.mxu0 0.0
        %9928 = vmatpush1.msra.mxu0 0.0
        %9929 = vmatprep.subr.mxu0 0.0
        %9930 = vmatpush1.msra.mxu0 0.0
        %9931 = vmatprep.subr.mxu0 0.0
        %9932 = vmatpush1.msra.mxu0 0.0
        %9933 = vmatprep.subr.mxu0 0.0
        %9934 = vmatpush1.msra.mxu0 0.0
        %9935 = vmatprep.subr.mxu0 0.0
        %9936 = vmatpush1.msra.mxu0 0.0
        %9937 = vmatprep.subr.mxu0 0.0
        %9938 = vmatpush1.msra.mxu0 0.0
        %9939 = vmatprep.subr.mxu0 0.0
        %9940 = vmatpush1.msra.mxu0 0.0
        %9941 = vmatprep.subr.mxu0 0.0
        %9942 = vmatpush1.msra.mxu0 0.0
        %9943 = vmatprep.subr.mxu0 0.0
        %9944 = vmatpush1.msra.mxu0 0.0
        %9945 = vmatprep.subr.mxu0 0.0
        %9946 = vmatpush1.msra.mxu0 0.0
        %9947 = vmatprep.subr.mxu0 0.0
        %9948 = vmatpush1.msra.mxu0 0.0
        %9949 = vmatprep.subr.mxu0 0.0
        %9950 = vmatpush1.msra.mxu0 0.0
        %9951 = vmatprep.subr.mxu0 0.0
        %9952 = vmatpush1.msra.mxu0 0.0
        %9953 = vmatprep.subr.mxu0 0.0
        %9954 = vmatpush1.msra.mxu0 0.0
        %9955 = vmatprep.mubr.f32.mxu0 0.0
        %9956 = vmatmul.mubr.f32.gmra.mrb[0].mxu0 %v9508
        %v9957 = vpop.f32.mrb[0].mxu0
        %v9958 = vadd.f32 0.0, %v9957
        %v9959 = vpop.f32.mrb[0].mxu0
        %9960 = vmatprep.mubr.f32.mxu0 0.0
        %9961 = vmatmul.mubr.f32.gmra.mrb[0].mxu0 %v9511
        %v9962 = vpop.f32.mrb[0].mxu0
        %v9963 = vadd.f32 0.0, %v9962
        %v9964 = vpop.f32.mrb[0].mxu0
        %9965 = vmatprep.mubr.f32.mxu0 0.0
        %9966 = vmatmul.mubr.f32.gmra.mrb[0].mxu0 %v9514
        %v9967 = vpop.f32.mrb[0].mxu0
        %v9968 = vadd.f32 0.0, %v9967
        %v9969 = vpop.f32.mrb[0].mxu0
        %9970 = vmatprep.mubr.f32.mxu0 0.0
        %9971 = vmatmul.mubr.f32.gmra.mrb[0].mxu0 %v9517
        %v9972 = vpop.f32.mrb[0].mxu0
        %v9973 = vadd.f32 0.0, %v9972
        %v9974 = vpop.f32.mrb[0].mxu0
        %9975 = vmatprep.mubr.f32.mxu0 0.0
        %9976 = vmatmul.mubr.f32.gmra.mrb[0].mxu0 %v9520
        %v9977 = vpop.f32.mrb[0].mxu0
        %v9978 = vadd.f32 0.0, %v9977
        %v9979 = vpop.f32.mrb[0].mxu0
        %9980 = vmatprep.mubr.f32.mxu0 0.0
        %9981 = vmatmul.mubr.f32.gmra.mrb[0].mxu0 %v9523
        %v9982 = vpop.f32.mrb[0].mxu0
        %v9983 = vadd.f32 0.0, %v9982
        %v9984 = vpop.f32.mrb[0].mxu0
        %9985 = vmatprep.mubr.f32.mxu0 0.0
        %9986 = vmatmul.mubr.f32.gmra.mrb[0].mxu0 %v9526
        %v9987 = vpop.f32.mrb[0].mxu0
        %v9988 = vadd.f32 0.0, %v9987
        %v9989 = vpop.f32.mrb[0].mxu0
        %9990 = vmatprep.mubr.f32.mxu0 0.0
        %9991 = vmatmul.mubr.f32.gmra.mrb[0].mxu0 %v9529
        %v9992 = vpop.f32.mrb[0].mxu0
        %v9993 = vadd.f32 0.0, %v9992
        %v9994 = vpop.f32.mrb[0].mxu0
        %9995 = vmatprep.mubr.f32.mxu0 0.0
        %9996 = vmatmul.mubr.f32.gmra.mrb[0].mxu0 %v9532
        %v9997 = vpop.f32.mrb[0].mxu0
        %v9998 = vadd.f32 0.0, %v9997
        %v9999 = vpop.f32.mrb[0].mxu0
        %10000 = vmatprep.mubr.f32.mxu0 0.0
        %10001 = vmatmul.mubr.f32.gmra.mrb[0].mxu0 %v9535
        %v10002 = vpop.f32.mrb[0].mxu0
        %v10003 = vadd.f32 0.0, %v10002
        %v10004 = vpop.f32.mrb[0].mxu0
        %10005 = vmatprep.mubr.f32.mxu0 0.0
        %10006 = vmatmul.mubr.f32.gmra.mrb[0].mxu0 %v9538
        %v10007 = vpop.f32.mrb[0].mxu0
        %v10008 = vadd.f32 0.0, %v10007
        %v10009 = vpop.f32.mrb[0].mxu0
        %10010 = vmatprep.mubr.f32.mxu0 0.0
        %10011 = vmatmul.mubr.f32.gmra.mrb[0].mxu0 %v9541
        %v10012 = vpop.f32.mrb[0].mxu0
        %v10013 = vadd.f32 0.0, %v10012
        %v10014 = vpop.f32.mrb[0].mxu0
        %10015 = vmatprep.mubr.f32.mxu0 0.0
        %10016 = vmatmul.mubr.f32.gmra.mrb[0].mxu0 %v9544
        %v10017 = vpop.f32.mrb[0].mxu0
        %v10018 = vadd.f32 0.0, %v10017
        %v10019 = vpop.f32.mrb[0].mxu0
        %10020 = vmatprep.mubr.f32.mxu0 0.0
        %10021 = vmatmul.mubr.f32.gmra.mrb[0].mxu0 %v9547
        %v10022 = vpop.f32.mrb[0].mxu0
        %v10023 = vadd.f32 0.0, %v10022
        %v10024 = vpop.f32.mrb[0].mxu0
        %10025 = vmatprep.mubr.f32.mxu0 0.0
        %10026 = vmatmul.mubr.f32.gmra.mrb[0].mxu0 %v9550
        %v10027 = vpop.f32.mrb[0].mxu0
        %v10028 = vadd.f32 0.0, %v10027
        %v10029 = vpop.f32.mrb[0].mxu0
        %10030 = vmatprep.mubr.f32.mxu0 0.0
        %10031 = vmatmul.mubr.f32.gmra.mrb[0].mxu0 %v9553
        %v10032 = vpop.f32.mrb[0].mxu0
        %v10033 = vadd.f32 0.0, %v10032
        %v10034 = vpop.f32.mrb[0].mxu0
        %10035 = vmatprep.mubr.f32.mxu0 0.0
        %10036 = vmatmul.mubr.f32.gmra.mrb[0].mxu0 %v9556
        %v10037 = vpop.f32.mrb[0].mxu0
        %v10038 = vadd.f32 0.0, %v10037
        %v10039 = vpop.f32.mrb[0].mxu0
        %10040 = vmatprep.mubr.f32.mxu0 0.0
        %10041 = vmatmul.mubr.f32.gmra.mrb[0].mxu0 %v9559
        %v10042 = vpop.f32.mrb[0].mxu0
        %v10043 = vadd.f32 0.0, %v10042
        %v10044 = vpop.f32.mrb[0].mxu0
        %10045 = vmatprep.mubr.f32.mxu0 0.0
        %10046 = vmatmul.mubr.f32.gmra.mrb[0].mxu0 %v9562
        %v10047 = vpop.f32.mrb[0].mxu0
        %v10048 = vadd.f32 0.0, %v10047
        %v10049 = vpop.f32.mrb[0].mxu0
        %10050 = vmatprep.mubr.f32.mxu0 0.0
        %10051 = vmatmul.mubr.f32.gmra.mrb[0].mxu0 %v9565
        %v10052 = vpop.f32.mrb[0].mxu0
        %v10053 = vadd.f32 0.0, %v10052
        %v10054 = vpop.f32.mrb[0].mxu0
        %10055 = vmatprep.mubr.f32.mxu0 0.0
        %10056 = vmatmul.mubr.f32.gmra.mrb[0].mxu0 %v9568
        %v10057 = vpop.f32.mrb[0].mxu0
        %v10058 = vadd.f32 0.0, %v10057
        %v10059 = vpop.f32.mrb[0].mxu0
        %10060 = vmatprep.mubr.f32.mxu0 0.0
        %10061 = vmatmul.mubr.f32.gmra.mrb[0].mxu0 %v9571
        %v10062 = vpop.f32.mrb[0].mxu0
        %v10063 = vadd.f32 0.0, %v10062
        %v10064 = vpop.f32.mrb[0].mxu0
        %10065 = vmatprep.mubr.f32.mxu0 0.0
        %10066 = vmatmul.mubr.f32.gmra.mrb[0].mxu0 %v9574
        %v10067 = vpop.f32.mrb[0].mxu0
        %v10068 = vadd.f32 0.0, %v10067
        %v10069 = vpop.f32.mrb[0].mxu0
        %10070 = vmatprep.mubr.f32.mxu0 0.0
        %10071 = vmatmul.mubr.f32.gmra.mrb[0].mxu0 %v9577
        %v10072 = vpop.f32.mrb[0].mxu0
        %v10073 = vadd.f32 0.0, %v10072
        %v10074 = vpop.f32.mrb[0].mxu0
        %10075 = vmatprep.mubr.f32.mxu0 0.0
        %10076 = vmatmul.mubr.f32.gmra.mrb[0].mxu0 %v9580
        %v10077 = vpop.f32.mrb[0].mxu0
        %v10078 = vadd.f32 0.0, %v10077
        %v10079 = vpop.f32.mrb[0].mxu0
        %10080 = vmatprep.mubr.f32.mxu0 0.0
        %10081 = vmatmul.mubr.f32.gmra.mrb[0].mxu0 %v9583
        %v10082 = vpop.f32.mrb[0].mxu0
        %v10083 = vadd.f32 0.0, %v10082
        %v10084 = vpop.f32.mrb[0].mxu0
        %10085 = vmatprep.mubr.f32.mxu0 0.0
        %10086 = vmatmul.mubr.f32.gmra.mrb[0].mxu0 %v9586
        %v10087 = vpop.f32.mrb[0].mxu0
        %v10088 = vadd.f32 0.0, %v10087
        %v10089 = vpop.f32.mrb[0].mxu0
        %10090 = vmatprep.mubr.f32.mxu0 0.0
        %10091 = vmatmul.mubr.f32.gmra.mrb[0].mxu0 %v9589
        %v10092 = vpop.f32.mrb[0].mxu0
        %v10093 = vadd.f32 0.0, %v10092
        %v10094 = vpop.f32.mrb[0].mxu0
        %10095 = vmatprep.mubr.f32.mxu0 0.0
        %10096 = vmatmul.mubr.f32.gmra.mrb[0].mxu0 %v9592
        %v10097 = vpop.f32.mrb[0].mxu0
        %v10098 = vadd.f32 0.0, %v10097
        %v10099 = vpop.f32.mrb[0].mxu0
        %10100 = vmatprep.mubr.f32.mxu0 0.0
        %10101 = vmatmul.mubr.f32.gmra.mrb[0].mxu0 %v9595
        %v10102 = vpop.f32.mrb[0].mxu0
        %v10103 = vadd.f32 0.0, %v10102
        %v10104 = vpop.f32.mrb[0].mxu0
        %10105 = vmatprep.mubr.f32.mxu0 0.0
        %10106 = vmatmul.mubr.f32.gmra.mrb[0].mxu0 %v9598
        %v10107 = vpop.f32.mrb[0].mxu0
        %v10108 = vadd.f32 0.0, %v10107
        %v10109 = vpop.f32.mrb[0].mxu0
        %10110 = vmatprep.mubr.f32.mxu0 0.0
        %10111 = vmatmul.mubr.f32.gmra.mrb[0].mxu0 %v9601
        %v10112 = vpop.f32.mrb[0].mxu0
        %v10113 = vadd.f32 0.0, %v10112
        %v10114 = vpop.f32.mrb[0].mxu0
        %10115 = vmatprep.mubr.f32.mxu0 0.0
        %10116 = vmatmul.mubr.f32.gmra.mrb[0].mxu0 %v9604
        %v10117 = vpop.f32.mrb[0].mxu0
        %v10118 = vadd.f32 0.0, %v10117
        %v10119 = vpop.f32.mrb[0].mxu0
        %10120 = vmatprep.mubr.f32.mxu0 0.0
        %10121 = vmatmul.mubr.f32.gmra.mrb[0].mxu0 %v9607
        %v10122 = vpop.f32.mrb[0].mxu0
        %v10123 = vadd.f32 0.0, %v10122
        %v10124 = vpop.f32.mrb[0].mxu0
        %10125 = vmatprep.mubr.f32.mxu0 0.0
        %10126 = vmatmul.mubr.f32.gmra.mrb[0].mxu0 %v9610
        %v10127 = vpop.f32.mrb[0].mxu0
        %v10128 = vadd.f32 0.0, %v10127
        %v10129 = vpop.f32.mrb[0].mxu0
        %10130 = vmatprep.mubr.f32.mxu0 0.0
        %10131 = vmatmul.mubr.f32.gmra.mrb[0].mxu0 %v9613
        %v10132 = vpop.f32.mrb[0].mxu0
        %v10133 = vadd.f32 0.0, %v10132
        %v10134 = vpop.f32.mrb[0].mxu0
        %10135 = vmatprep.mubr.f32.mxu0 0.0
        %10136 = vmatmul.mubr.f32.gmra.mrb[0].mxu0 %v9616
        %v10137 = vpop.f32.mrb[0].mxu0
        %v10138 = vadd.f32 0.0, %v10137
        %v10139 = vpop.f32.mrb[0].mxu0
        %10140 = vmatprep.mubr.f32.mxu0 0.0
        %10141 = vmatmul.mubr.f32.gmra.mrb[0].mxu0 %v9619
        %v10142 = vpop.f32.mrb[0].mxu0
        %v10143 = vadd.f32 0.0, %v10142
        %v10144 = vpop.f32.mrb[0].mxu0
        %10145 = vmatprep.mubr.f32.mxu0 0.0
        %10146 = vmatmul.mubr.f32.gmra.mrb[0].mxu0 %v9622
        %v10147 = vpop.f32.mrb[0].mxu0
        %v10148 = vadd.f32 0.0, %v10147
        %v10149 = vpop.f32.mrb[0].mxu0
        %10150 = vmatprep.mubr.f32.mxu0 0.0
        %10151 = vmatmul.mubr.f32.gmra.mrb[0].mxu0 %v9625
        %v10152 = vpop.f32.mrb[0].mxu0
        %v10153 = vadd.f32 0.0, %v10152
        %v10154 = vpop.f32.mrb[0].mxu0
        %10155 = vmatprep.mubr.f32.mxu0 0.0
        %10156 = vmatmul.mubr.f32.gmra.mrb[0].mxu0 %v9628
        %v10157 = vpop.f32.mrb[0].mxu0
        %v10158 = vadd.f32 0.0, %v10157
        %v10159 = vpop.f32.mrb[0].mxu0
        %10160 = vmatprep.mubr.f32.mxu0 0.0
        %10161 = vmatmul.mubr.f32.gmra.mrb[0].mxu0 %v9631
        %v10162 = vpop.f32.mrb[0].mxu0
        %v10163 = vadd.f32 0.0, %v10162
        %v10164 = vpop.f32.mrb[0].mxu0
        %10165 = vmatprep.mubr.f32.mxu0 0.0
        %10166 = vmatmul.mubr.f32.gmra.mrb[0].mxu0 %v9634
        %v10167 = vpop.f32.mrb[0].mxu0
        %v10168 = vadd.f32 0.0, %v10167
        %v10169 = vpop.f32.mrb[0].mxu0
        %10170 = vmatprep.mubr.f32.mxu0 0.0
        %10171 = vmatmul.mubr.f32.gmra.mrb[0].mxu0 %v9637
        %v10172 = vpop.f32.mrb[0].mxu0
        %v10173 = vadd.f32 0.0, %v10172
        %v10174 = vpop.f32.mrb[0].mxu0
        %10175 = vmatprep.mubr.f32.mxu0 0.0
        %10176 = vmatmul.mubr.f32.gmra.mrb[0].mxu0 %v9640
        %v10177 = vpop.f32.mrb[0].mxu0
        %v10178 = vadd.f32 0.0, %v10177
        %v10179 = vpop.f32.mrb[0].mxu0
        %10180 = vmatprep.mubr.f32.mxu0 0.0
        %10181 = vmatmul.mubr.f32.gmra.mrb[0].mxu0 %v9643
        %v10182 = vpop.f32.mrb[0].mxu0
        %v10183 = vadd.f32 0.0, %v10182
        %v10184 = vpop.f32.mrb[0].mxu0
        %10185 = vmatprep.mubr.f32.mxu0 0.0
        %10186 = vmatmul.mubr.f32.gmra.mrb[0].mxu0 %v9646
        %v10187 = vpop.f32.mrb[0].mxu0
        %v10188 = vadd.f32 0.0, %v10187
        %v10189 = vpop.f32.mrb[0].mxu0
        %10190 = vmatprep.mubr.f32.mxu0 0.0
        %10191 = vmatmul.mubr.f32.gmra.mrb[0].mxu0 %v9649
        %v10192 = vpop.f32.mrb[0].mxu0
        %v10193 = vadd.f32 0.0, %v10192
        %v10194 = vpop.f32.mrb[0].mxu0
        %10195 = vmatprep.mubr.f32.mxu0 0.0
        %10196 = vmatmul.mubr.f32.gmra.mrb[0].mxu0 %v9652
        %v10197 = vpop.f32.mrb[0].mxu0
        %v10198 = vadd.f32 0.0, %v10197
        %v10199 = vpop.f32.mrb[0].mxu0
        %10200 = vmatprep.mubr.f32.mxu0 0.0
        %10201 = vmatmul.mubr.f32.gmra.mrb[0].mxu0 %v9655
        %v10202 = vpop.f32.mrb[0].mxu0
        %v10203 = vadd.f32 0.0, %v10202
        %v10204 = vpop.f32.mrb[0].mxu0
        %10205 = vmatprep.mubr.f32.mxu0 0.0
        %10206 = vmatmul.mubr.f32.gmra.mrb[0].mxu0 %v9658
        %v10207 = vpop.f32.mrb[0].mxu0
        %v10208 = vadd.f32 0.0, %v10207
        %v10209 = vpop.f32.mrb[0].mxu0
        %10210 = vmatprep.mubr.f32.mxu0 0.0
        %10211 = vmatmul.mubr.f32.gmra.mrb[0].mxu0 %v9661
        %v10212 = vpop.f32.mrb[0].mxu0
        %v10213 = vadd.f32 0.0, %v10212
        %v10214 = vpop.f32.mrb[0].mxu0
        %10215 = vmatprep.mubr.f32.mxu0 0.0
        %10216 = vmatmul.mubr.f32.gmra.mrb[0].mxu0 %v9664
        %v10217 = vpop.f32.mrb[0].mxu0
        %v10218 = vadd.f32 0.0, %v10217
        %v10219 = vpop.f32.mrb[0].mxu0
        %10220 = vmatprep.mubr.f32.mxu0 0.0
        %10221 = vmatmul.mubr.f32.gmra.mrb[0].mxu0 %v9667
        %v10222 = vpop.f32.mrb[0].mxu0
        %v10223 = vadd.f32 0.0, %v10222
        %v10224 = vpop.f32.mrb[0].mxu0
        %10225 = vmatprep.mubr.f32.mxu0 0.0
        %10226 = vmatmul.mubr.f32.gmra.mrb[0].mxu0 %v9670
        %v10227 = vpop.f32.mrb[0].mxu0
        %v10228 = vadd.f32 0.0, %v10227
        %v10229 = vpop.f32.mrb[0].mxu0
        %10230 = vmatprep.mubr.f32.mxu0 0.0
        %10231 = vmatmul.mubr.f32.gmra.mrb[0].mxu0 %v9673
        %v10232 = vpop.f32.mrb[0].mxu0
        %v10233 = vadd.f32 0.0, %v10232
        %v10234 = vpop.f32.mrb[0].mxu0
        %10235 = vmatprep.mubr.f32.mxu0 0.0
        %10236 = vmatmul.mubr.f32.gmra.mrb[0].mxu0 %v9676
        %v10237 = vpop.f32.mrb[0].mxu0
        %v10238 = vadd.f32 0.0, %v10237
        %v10239 = vpop.f32.mrb[0].mxu0
        %10240 = vmatprep.mubr.f32.mxu0 0.0
        %10241 = vmatmul.mubr.f32.gmra.mrb[0].mxu0 %v9679
        %v10242 = vpop.f32.mrb[0].mxu0
        %v10243 = vadd.f32 0.0, %v10242
        %v10244 = vpop.f32.mrb[0].mxu0
        %10245 = vmatprep.mubr.f32.mxu0 0.0
        %10246 = vmatmul.mubr.f32.gmra.mrb[0].mxu0 %v9682
        %v10247 = vpop.f32.mrb[0].mxu0
        %v10248 = vadd.f32 0.0, %v10247
        %v10249 = vpop.f32.mrb[0].mxu0
        %10250 = vmatprep.mubr.f32.mxu0 0.0
        %10251 = vmatmul.mubr.f32.gmra.mrb[0].mxu0 %v9685
        %v10252 = vpop.f32.mrb[0].mxu0
        %v10253 = vadd.f32 0.0, %v10252
        %v10254 = vpop.f32.mrb[0].mxu0
        %10255 = vmatprep.mubr.f32.mxu0 0.0
        %10256 = vmatmul.mubr.f32.gmra.mrb[0].mxu0 %v9688
        %v10257 = vpop.f32.mrb[0].mxu0
        %v10258 = vadd.f32 0.0, %v10257
        %v10259 = vpop.f32.mrb[0].mxu0
        %10260 = vmatprep.mubr.f32.mxu0 0.0
        %10261 = vmatmul.mubr.f32.gmra.mrb[0].mxu0 %v9691
        %v10262 = vpop.f32.mrb[0].mxu0
        %v10263 = vadd.f32 0.0, %v10262
        %v10264 = vpop.f32.mrb[0].mxu0
        %10265 = vmatprep.mubr.f32.mxu0 0.0
        %10266 = vmatmul.mubr.f32.gmra.mrb[0].mxu0 %v9694
        %v10267 = vpop.f32.mrb[0].mxu0
        %v10268 = vadd.f32 0.0, %v10267
        %v10269 = vpop.f32.mrb[0].mxu0
        %10270 = vmatprep.mubr.f32.mxu0 0.0
        %10271 = vmatmul.mubr.f32.gmra.mrb[0].mxu0 %v9697
        %v10272 = vpop.f32.mrb[0].mxu0
        %v10273 = vadd.f32 0.0, %v10272
        %v10274 = vpop.f32.mrb[0].mxu0
        %10275 = vmatprep.mubr.f32.mxu0 0.0
        %10276 = vmatmul.mubr.f32.gmra.mrb[0].mxu0 %v9700
        %v10277 = vpop.f32.mrb[0].mxu0
        %v10278 = vadd.f32 0.0, %v10277
        %v10279 = vpop.f32.mrb[0].mxu0
        %10280 = vmatprep.mubr.f32.mxu0 0.0
        %10281 = vmatmul.mubr.f32.gmra.mrb[0].mxu0 %v9703
        %v10282 = vpop.f32.mrb[0].mxu0
        %v10283 = vadd.f32 0.0, %v10282
        %v10284 = vpop.f32.mrb[0].mxu0
        %10285 = vmatprep.mubr.f32.mxu0 0.0
        %10286 = vmatmul.mubr.f32.gmra.mrb[0].mxu0 %v9706
        %v10287 = vpop.f32.mrb[0].mxu0
        %v10288 = vadd.f32 0.0, %v10287
        %v10289 = vpop.f32.mrb[0].mxu0
        %10290 = vmatprep.mubr.f32.mxu0 0.0
        %10291 = vmatmul.mubr.f32.gmra.mrb[0].mxu0 %v9709
        %v10292 = vpop.f32.mrb[0].mxu0
        %v10293 = vadd.f32 0.0, %v10292
        %v10294 = vpop.f32.mrb[0].mxu0
        %10295 = vmatprep.mubr.f32.mxu0 0.0
        %10296 = vmatmul.mubr.f32.gmra.mrb[0].mxu0 %v9712
        %v10297 = vpop.f32.mrb[0].mxu0
        %v10298 = vadd.f32 0.0, %v10297
        %v10299 = vpop.f32.mrb[0].mxu0
        %10300 = vmatprep.mubr.f32.mxu0 0.0
        %10301 = vmatmul.mubr.f32.gmra.mrb[0].mxu0 %v9715
        %v10302 = vpop.f32.mrb[0].mxu0
        %v10303 = vadd.f32 0.0, %v10302
        %v10304 = vpop.f32.mrb[0].mxu0
        %10305 = vmatprep.mubr.f32.mxu0 0.0
        %10306 = vmatmul.mubr.f32.gmra.mrb[0].mxu0 %v9718
        %v10307 = vpop.f32.mrb[0].mxu0
        %v10308 = vadd.f32 0.0, %v10307
        %v10309 = vpop.f32.mrb[0].mxu0
        %10310 = vmatprep.mubr.f32.mxu0 0.0
        %10311 = vmatmul.mubr.f32.gmra.mrb[0].mxu0 %v9721
        %v10312 = vpop.f32.mrb[0].mxu0
        %v10313 = vadd.f32 0.0, %v10312
        %v10314 = vpop.f32.mrb[0].mxu0
        %10315 = vmatprep.mubr.f32.mxu0 0.0
        %10316 = vmatmul.mubr.f32.gmra.mrb[0].mxu0 %v9724
        %v10317 = vpop.f32.mrb[0].mxu0
        %v10318 = vadd.f32 0.0, %v10317
        %v10319 = vpop.f32.mrb[0].mxu0
        %10320 = vmatprep.mubr.f32.mxu0 0.0
        %10321 = vmatmul.mubr.f32.gmra.mrb[0].mxu0 %v9727
        %v10322 = vpop.f32.mrb[0].mxu0
        %v10323 = vadd.f32 0.0, %v10322
        %v10324 = vpop.f32.mrb[0].mxu0
        %10325 = vmatprep.mubr.f32.mxu0 0.0
        %10326 = vmatmul.mubr.f32.gmra.mrb[0].mxu0 %v9730
        %v10327 = vpop.f32.mrb[0].mxu0
        %v10328 = vadd.f32 0.0, %v10327
        %v10329 = vpop.f32.mrb[0].mxu0
        %10330 = vmatprep.mubr.f32.mxu0 0.0
        %10331 = vmatmul.mubr.f32.gmra.mrb[0].mxu0 %v9733
        %v10332 = vpop.f32.mrb[0].mxu0
        %v10333 = vadd.f32 0.0, %v10332
        %v10334 = vpop.f32.mrb[0].mxu0
        %10335 = vmatprep.mubr.f32.mxu0 0.0
        %10336 = vmatmul.mubr.f32.gmra.mrb[0].mxu0 %v9736
        %v10337 = vpop.f32.mrb[0].mxu0
        %v10338 = vadd.f32 0.0, %v10337
        %v10339 = vpop.f32.mrb[0].mxu0
        %10340 = vmatprep.mubr.f32.mxu0 0.0
        %10341 = vmatmul.mubr.f32.gmra.mrb[0].mxu0 %v9739
        %v10342 = vpop.f32.mrb[0].mxu0
        %v10343 = vadd.f32 0.0, %v10342
        %v10344 = vpop.f32.mrb[0].mxu0
        %10345 = vmatprep.mubr.f32.mxu0 0.0
        %10346 = vmatmul.mubr.f32.gmra.mrb[0].mxu0 %v9742
        %v10347 = vpop.f32.mrb[0].mxu0
        %v10348 = vadd.f32 0.0, %v10347
        %v10349 = vpop.f32.mrb[0].mxu0
        %10350 = vmatprep.mubr.f32.mxu0 0.0
        %10351 = vmatmul.mubr.f32.gmra.mrb[0].mxu0 %v9745
        %v10352 = vpop.f32.mrb[0].mxu0
        %v10353 = vadd.f32 0.0, %v10352
        %v10354 = vpop.f32.mrb[0].mxu0
        %10355 = vmatprep.mubr.f32.mxu0 0.0
        %10356 = vmatmul.mubr.f32.gmra.mrb[0].mxu0 %v9748
        %v10357 = vpop.f32.mrb[0].mxu0
        %v10358 = vadd.f32 0.0, %v10357
        %v10359 = vpop.f32.mrb[0].mxu0
        %10360 = vmatprep.mubr.f32.mxu0 0.0
        %10361 = vmatmul.mubr.f32.gmra.mrb[0].mxu0 %v9751
        %v10362 = vpop.f32.mrb[0].mxu0
        %v10363 = vadd.f32 0.0, %v10362
        %v10364 = vpop.f32.mrb[0].mxu0
        %10365 = vmatprep.mubr.f32.mxu0 0.0
        %10366 = vmatmul.mubr.f32.gmra.mrb[0].mxu0 %v9754
        %v10367 = vpop.f32.mrb[0].mxu0
        %v10368 = vadd.f32 0.0, %v10367
        %v10369 = vpop.f32.mrb[0].mxu0
        %10370 = vmatprep.mubr.f32.mxu0 0.0
        %10371 = vmatmul.mubr.f32.gmra.mrb[0].mxu0 %v9757
        %v10372 = vpop.f32.mrb[0].mxu0
        %v10373 = vadd.f32 0.0, %v10372
        %v10374 = vpop.f32.mrb[0].mxu0
        %10375 = vmatprep.mubr.f32.mxu0 0.0
        %10376 = vmatmul.mubr.f32.gmra.mrb[0].mxu0 %v9760
        %v10377 = vpop.f32.mrb[0].mxu0
        %v10378 = vadd.f32 0.0, %v10377
        %v10379 = vpop.f32.mrb[0].mxu0
        %10380 = vmatprep.mubr.f32.mxu0 0.0
        %10381 = vmatmul.mubr.f32.gmra.mrb[0].mxu0 %v9763
        %v10382 = vpop.f32.mrb[0].mxu0
        %v10383 = vadd.f32 0.0, %v10382
        %v10384 = vpop.f32.mrb[0].mxu0
        %10385 = vmatprep.mubr.f32.mxu0 0.0
        %10386 = vmatmul.mubr.f32.gmra.mrb[0].mxu0 %v9766
        %v10387 = vpop.f32.mrb[0].mxu0
        %v10388 = vadd.f32 0.0, %v10387
        %v10389 = vpop.f32.mrb[0].mxu0
        %10390 = vmatprep.mubr.f32.mxu0 0.0
        %10391 = vmatmul.mubr.f32.gmra.mrb[0].mxu0 %v9769
        %v10392 = vpop.f32.mrb[0].mxu0
        %v10393 = vadd.f32 0.0, %v10392
        %v10394 = vpop.f32.mrb[0].mxu0
        %10395 = vmatprep.mubr.f32.mxu0 0.0
        %10396 = vmatmul.mubr.f32.gmra.mrb[0].mxu0 %v9772
        %v10397 = vpop.f32.mrb[0].mxu0
        %v10398 = vadd.f32 0.0, %v10397
        %v10399 = vpop.f32.mrb[0].mxu0
        %10400 = vmatprep.mubr.f32.mxu0 0.0
        %10401 = vmatmul.mubr.f32.gmra.mrb[0].mxu0 %v9775
        %v10402 = vpop.f32.mrb[0].mxu0
        %v10403 = vadd.f32 0.0, %v10402
        %v10404 = vpop.f32.mrb[0].mxu0
        %10405 = vmatprep.mubr.f32.mxu0 0.0
        %10406 = vmatmul.mubr.f32.gmra.mrb[0].mxu0 %v9778
        %v10407 = vpop.f32.mrb[0].mxu0
        %v10408 = vadd.f32 0.0, %v10407
        %v10409 = vpop.f32.mrb[0].mxu0
        %10410 = vmatprep.mubr.f32.mxu0 0.0
        %10411 = vmatmul.mubr.f32.gmra.mrb[0].mxu0 %v9781
        %v10412 = vpop.f32.mrb[0].mxu0
        %v10413 = vadd.f32 0.0, %v10412
        %v10414 = vpop.f32.mrb[0].mxu0
        %10415 = vmatprep.mubr.f32.mxu0 0.0
        %10416 = vmatmul.mubr.f32.gmra.mrb[0].mxu0 %v9784
        %v10417 = vpop.f32.mrb[0].mxu0
        %v10418 = vadd.f32 0.0, %v10417
        %v10419 = vpop.f32.mrb[0].mxu0
        %10420 = vmatprep.mubr.f32.mxu0 0.0
        %10421 = vmatmul.mubr.f32.gmra.mrb[0].mxu0 %v9787
        %v10422 = vpop.f32.mrb[0].mxu0
        %v10423 = vadd.f32 0.0, %v10422
        %v10424 = vpop.f32.mrb[0].mxu0
        %10425 = vmatprep.mubr.f32.mxu0 0.0
        %10426 = vmatmul.mubr.f32.gmra.mrb[0].mxu0 %v9790
        %v10427 = vpop.f32.mrb[0].mxu0
        %v10428 = vadd.f32 0.0, %v10427
        %v10429 = vpop.f32.mrb[0].mxu0
        %10430 = vmatprep.mubr.f32.mxu0 0.0
        %10431 = vmatmul.mubr.f32.gmra.mrb[0].mxu0 %v9793
        %v10432 = vpop.f32.mrb[0].mxu0
        %v10433 = vadd.f32 0.0, %v10432
        %v10434 = vpop.f32.mrb[0].mxu0
        %10435 = vmatprep.mubr.f32.mxu0 0.0
        %10436 = vmatmul.mubr.f32.gmra.mrb[0].mxu0 %v9796
        %v10437 = vpop.f32.mrb[0].mxu0
        %v10438 = vadd.f32 0.0, %v10437
        %v10439 = vpop.f32.mrb[0].mxu0
        %10440 = vmatprep.mubr.f32.mxu0 0.0
        %10441 = vmatmul.mubr.f32.gmra.mrb[0].mxu0 %v9799
        %v10442 = vpop.f32.mrb[0].mxu0
        %v10443 = vadd.f32 0.0, %v10442
        %v10444 = vpop.f32.mrb[0].mxu0
        %10445 = vmatprep.mubr.f32.mxu0 0.0
        %10446 = vmatmul.mubr.f32.gmra.mrb[0].mxu0 %v9802
        %v10447 = vpop.f32.mrb[0].mxu0
        %v10448 = vadd.f32 0.0, %v10447
        %v10449 = vpop.f32.mrb[0].mxu0
        %10450 = vmatprep.mubr.f32.mxu0 0.0
        %10451 = vmatmul.mubr.f32.gmra.mrb[0].mxu0 %v9805
        %v10452 = vpop.f32.mrb[0].mxu0
        %v10453 = vadd.f32 0.0, %v10452
        %v10454 = vpop.f32.mrb[0].mxu0
        %10455 = vmatprep.mubr.f32.mxu0 0.0
        %10456 = vmatmul.mubr.f32.gmra.mrb[0].mxu0 %v9808
        %v10457 = vpop.f32.mrb[0].mxu0
        %v10458 = vadd.f32 0.0, %v10457
        %v10459 = vpop.f32.mrb[0].mxu0
        %10460 = vmatprep.mubr.f32.mxu0 0.0
        %10461 = vmatmul.mubr.f32.gmra.mrb[0].mxu0 %v9811
        %v10462 = vpop.f32.mrb[0].mxu0
        %v10463 = vadd.f32 0.0, %v10462
        %v10464 = vpop.f32.mrb[0].mxu0
        %10465 = vmatprep.mubr.f32.mxu0 0.0
        %10466 = vmatmul.mubr.f32.gmra.mrb[0].mxu0 %v9814
        %v10467 = vpop.f32.mrb[0].mxu0
        %v10468 = vadd.f32 0.0, %v10467
        %v10469 = vpop.f32.mrb[0].mxu0
        %10470 = vmatprep.mubr.f32.mxu0 0.0
        %10471 = vmatmul.mubr.f32.gmra.mrb[0].mxu0 %v9817
        %v10472 = vpop.f32.mrb[0].mxu0
        %v10473 = vadd.f32 0.0, %v10472
        %v10474 = vpop.f32.mrb[0].mxu0
        %10475 = vmatprep.mubr.f32.mxu0 0.0
        %10476 = vmatmul.mubr.f32.gmra.mrb[0].mxu0 %v9820
        %v10477 = vpop.f32.mrb[0].mxu0
        %v10478 = vadd.f32 0.0, %v10477
        %v10479 = vpop.f32.mrb[0].mxu0
        %10480 = vmatprep.mubr.f32.mxu0 0.0
        %10481 = vmatmul.mubr.f32.gmra.mrb[0].mxu0 %v9823
        %v10482 = vpop.f32.mrb[0].mxu0
        %v10483 = vadd.f32 0.0, %v10482
        %v10484 = vpop.f32.mrb[0].mxu0
        %10485 = vmatprep.mubr.f32.mxu0 0.0
        %10486 = vmatmul.mubr.f32.gmra.mrb[0].mxu0 %v9826
        %v10487 = vpop.f32.mrb[0].mxu0
        %v10488 = vadd.f32 0.0, %v10487
        %v10489 = vpop.f32.mrb[0].mxu0
        %10490 = vmatprep.mubr.f32.mxu0 0.0
        %10491 = vmatmul.mubr.f32.gmra.mrb[0].mxu0 %v9829
        %v10492 = vpop.f32.mrb[0].mxu0
        %v10493 = vadd.f32 0.0, %v10492
        %v10494 = vpop.f32.mrb[0].mxu0
        %10495 = vmatprep.mubr.f32.mxu0 0.0
        %10496 = vmatmul.mubr.f32.gmra.mrb[0].mxu0 %v9832
        %v10497 = vpop.f32.mrb[0].mxu0
        %v10498 = vadd.f32 0.0, %v10497
        %v10499 = vpop.f32.mrb[0].mxu0
        %10500 = vmatprep.mubr.f32.mxu0 0.0
        %10501 = vmatmul.mubr.f32.gmra.mrb[0].mxu0 %v9835
        %v10502 = vpop.f32.mrb[0].mxu0
        %v10503 = vadd.f32 0.0, %v10502
        %v10504 = vpop.f32.mrb[0].mxu0
        %10505 = vmatprep.mubr.f32.mxu0 0.0
        %10506 = vmatmul.mubr.f32.gmra.mrb[0].mxu0 %v9838
        %v10507 = vpop.f32.mrb[0].mxu0
        %v10508 = vadd.f32 0.0, %v10507
        %v10509 = vpop.f32.mrb[0].mxu0
        %10510 = vmatprep.mubr.f32.mxu0 0.0
        %10511 = vmatmul.mubr.f32.gmra.mrb[0].mxu0 %v9841
        %v10512 = vpop.f32.mrb[0].mxu0
        %v10513 = vadd.f32 0.0, %v10512
        %v10514 = vpop.f32.mrb[0].mxu0
        %10515 = vmatprep.mubr.f32.mxu0 0.0
        %10516 = vmatmul.mubr.f32.gmra.mrb[0].mxu0 %v9844
        %v10517 = vpop.f32.mrb[0].mxu0
        %v10518 = vadd.f32 0.0, %v10517
        %v10519 = vpop.f32.mrb[0].mxu0
        %10520 = vmatprep.mubr.f32.mxu0 0.0
        %10521 = vmatmul.mubr.f32.gmra.mrb[0].mxu0 %v9847
        %v10522 = vpop.f32.mrb[0].mxu0
        %v10523 = vadd.f32 0.0, %v10522
        %v10524 = vpop.f32.mrb[0].mxu0
        %10525 = vmatprep.mubr.f32.mxu0 0.0
        %10526 = vmatmul.mubr.f32.gmra.mrb[0].mxu0 %v9850
        %v10527 = vpop.f32.mrb[0].mxu0
        %v10528 = vadd.f32 0.0, %v10527
        %v10529 = vpop.f32.mrb[0].mxu0
        %10530 = vmatprep.mubr.f32.mxu0 0.0
        %10531 = vmatmul.mubr.f32.gmra.mrb[0].mxu0 %v9853
        %v10532 = vpop.f32.mrb[0].mxu0
        %v10533 = vadd.f32 0.0, %v10532
        %v10534 = vpop.f32.mrb[0].mxu0
        %10535 = vmatprep.mubr.f32.mxu0 0.0
        %10536 = vmatmul.mubr.f32.gmra.mrb[0].mxu0 %v9856
        %v10537 = vpop.f32.mrb[0].mxu0
        %v10538 = vadd.f32 0.0, %v10537
        %v10539 = vpop.f32.mrb[0].mxu0
        %10540 = vmatprep.mubr.f32.mxu0 0.0
        %10541 = vmatmul.mubr.f32.gmra.mrb[0].mxu0 %v9859
        %v10542 = vpop.f32.mrb[0].mxu0
        %v10543 = vadd.f32 0.0, %v10542
        %v10544 = vpop.f32.mrb[0].mxu0
        %10545 = vmatprep.mubr.f32.mxu0 0.0
        %10546 = vmatmul.mubr.f32.gmra.mrb[0].mxu0 %v9862
        %v10547 = vpop.f32.mrb[0].mxu0
        %v10548 = vadd.f32 0.0, %v10547
        %v10549 = vpop.f32.mrb[0].mxu0
        %10550 = vmatprep.mubr.f32.mxu0 0.0
        %10551 = vmatmul.mubr.f32.gmra.mrb[0].mxu0 %v9865
        %v10552 = vpop.f32.mrb[0].mxu0
        %v10553 = vadd.f32 0.0, %v10552
        %v10554 = vpop.f32.mrb[0].mxu0
        %10555 = vmatprep.mubr.f32.mxu0 0.0
        %10556 = vmatmul.mubr.f32.gmra.mrb[0].mxu0 %v9868
        %v10557 = vpop.f32.mrb[0].mxu0
        %v10558 = vadd.f32 0.0, %v10557
        %v10559 = vpop.f32.mrb[0].mxu0
        %10560 = vmatprep.mubr.f32.mxu0 0.0
        %10561 = vmatmul.mubr.f32.gmra.mrb[0].mxu0 %v9871
        %v10562 = vpop.f32.mrb[0].mxu0
        %v10563 = vadd.f32 0.0, %v10562
        %v10564 = vpop.f32.mrb[0].mxu0
        %10565 = vmatprep.mubr.f32.mxu0 0.0
        %10566 = vmatmul.mubr.f32.gmra.mrb[0].mxu0 %v9874
        %v10567 = vpop.f32.mrb[0].mxu0
        %v10568 = vadd.f32 0.0, %v10567
        %v10569 = vpop.f32.mrb[0].mxu0
        %10570 = vmatprep.mubr.f32.mxu0 0.0
        %10571 = vmatmul.mubr.f32.gmra.mrb[0].mxu0 %v9877
        %v10572 = vpop.f32.mrb[0].mxu0
        %v10573 = vadd.f32 0.0, %v10572
        %v10574 = vpop.f32.mrb[0].mxu0
        %10575 = vmatprep.mubr.f32.mxu0 0.0
        %10576 = vmatmul.mubr.f32.gmra.mrb[0].mxu0 %v9880
        %v10577 = vpop.f32.mrb[0].mxu0
        %v10578 = vadd.f32 0.0, %v10577
        %v10579 = vpop.f32.mrb[0].mxu0
        %10580 = vmatprep.mubr.f32.mxu0 0.0
        %10581 = vmatmul.mubr.f32.gmra.mrb[0].mxu0 %v9883
        %v10582 = vpop.f32.mrb[0].mxu0
        %v10583 = vadd.f32 0.0, %v10582
        %v10584 = vpop.f32.mrb[0].mxu0
        %10585 = vmatprep.mubr.f32.mxu0 0.0
        %10586 = vmatmul.mubr.f32.gmra.mrb[0].mxu0 %v9886
        %v10587 = vpop.f32.mrb[0].mxu0
        %v10588 = vadd.f32 0.0, %v10587
        %v10589 = vpop.f32.mrb[0].mxu0
        %10590 = vmatprep.mubr.f32.mxu0 0.0
        %10591 = vmatmul.mubr.f32.gmra.mrb[0].mxu0 %v9889
        %v10592 = vpop.f32.mrb[0].mxu0
        %v10593 = vadd.f32 0.0, %v10592
        %v10594 = vpop.f32.mrb[0].mxu0
        %10595 = vdwg.mxu0
        %v10596 = vadd.f32 %v9249, %v9958
        %v10597 = vadd.f32 %v9250, %v9963
        %v10598 = vadd.f32 %v9251, %v9968
        %v10599 = vadd.f32 %v9252, %v9973
        %v10600 = vadd.f32 %v9253, %v9978
        %v10601 = vadd.f32 %v9254, %v9983
        %v10602 = vadd.f32 %v9255, %v9988
        %v10603 = vadd.f32 %v9256, %v9993
        %v10604 = vadd.f32 %v9257, %v9998
        %v10605 = vadd.f32 %v9258, %v10003
        %v10606 = vadd.f32 %v9259, %v10008
        %v10607 = vadd.f32 %v9260, %v10013
        %v10608 = vadd.f32 %v9261, %v10018
        %v10609 = vadd.f32 %v9262, %v10023
        %v10610 = vadd.f32 %v9263, %v10028
        %v10611 = vadd.f32 %v9264, %v10033
        %v10612 = vadd.f32 %v9265, %v10038
        %v10613 = vadd.f32 %v9266, %v10043
        %v10614 = vadd.f32 %v9267, %v10048
        %v10615 = vadd.f32 %v9268, %v10053
        %v10616 = vadd.f32 %v9269, %v10058
        %v10617 = vadd.f32 %v9270, %v10063
        %v10618 = vadd.f32 %v9271, %v10068
        %v10619 = vadd.f32 %v9272, %v10073
        %v10620 = vadd.f32 %v9273, %v10078
        %v10621 = vadd.f32 %v9274, %v10083
        %v10622 = vadd.f32 %v9275, %v10088
        %v10623 = vadd.f32 %v9276, %v10093
        %v10624 = vadd.f32 %v9277, %v10098
        %v10625 = vadd.f32 %v9278, %v10103
        %v10626 = vadd.f32 %v9279, %v10108
        %v10627 = vadd.f32 %v9280, %v10113
        %v10628 = vadd.f32 %v9281, %v10118
        %v10629 = vadd.f32 %v9282, %v10123
        %v10630 = vadd.f32 %v9283, %v10128
        %v10631 = vadd.f32 %v9284, %v10133
        %v10632 = vadd.f32 %v9285, %v10138
        %v10633 = vadd.f32 %v9286, %v10143
        %v10634 = vadd.f32 %v9287, %v10148
        %v10635 = vadd.f32 %v9288, %v10153
        %v10636 = vadd.f32 %v9289, %v10158
        %v10637 = vadd.f32 %v9290, %v10163
        %v10638 = vadd.f32 %v9291, %v10168
        %v10639 = vadd.f32 %v9292, %v10173
        %v10640 = vadd.f32 %v9293, %v10178
        %v10641 = vadd.f32 %v9294, %v10183
        %v10642 = vadd.f32 %v9295, %v10188
        %v10643 = vadd.f32 %v9296, %v10193
        %v10644 = vadd.f32 %v9297, %v10198
        %v10645 = vadd.f32 %v9298, %v10203
        %v10646 = vadd.f32 %v9299, %v10208
        %v10647 = vadd.f32 %v9300, %v10213
        %v10648 = vadd.f32 %v9301, %v10218
        %v10649 = vadd.f32 %v9302, %v10223
        %v10650 = vadd.f32 %v9303, %v10228
        %v10651 = vadd.f32 %v9304, %v10233
        %v10652 = vadd.f32 %v9305, %v10238
        %v10653 = vadd.f32 %v9306, %v10243
        %v10654 = vadd.f32 %v9307, %v10248
        %v10655 = vadd.f32 %v9308, %v10253
        %v10656 = vadd.f32 %v9309, %v10258
        %v10657 = vadd.f32 %v9310, %v10263
        %v10658 = vadd.f32 %v9311, %v10268
        %v10659 = vadd.f32 %v9312, %v10273
        %v10660 = vadd.f32 %v9313, %v10278
        %v10661 = vadd.f32 %v9314, %v10283
        %v10662 = vadd.f32 %v9315, %v10288
        %v10663 = vadd.f32 %v9316, %v10293
        %v10664 = vadd.f32 %v9317, %v10298
        %v10665 = vadd.f32 %v9318, %v10303
        %v10666 = vadd.f32 %v9319, %v10308
        %v10667 = vadd.f32 %v9320, %v10313
        %v10668 = vadd.f32 %v9321, %v10318
        %v10669 = vadd.f32 %v9322, %v10323
        %v10670 = vadd.f32 %v9323, %v10328
        %v10671 = vadd.f32 %v9324, %v10333
        %v10672 = vadd.f32 %v9325, %v10338
        %v10673 = vadd.f32 %v9326, %v10343
        %v10674 = vadd.f32 %v9327, %v10348
        %v10675 = vadd.f32 %v9328, %v10353
        %v10676 = vadd.f32 %v9329, %v10358
        %v10677 = vadd.f32 %v9330, %v10363
        %v10678 = vadd.f32 %v9331, %v10368
        %v10679 = vadd.f32 %v9332, %v10373
        %v10680 = vadd.f32 %v9333, %v10378
        %v10681 = vadd.f32 %v9334, %v10383
        %v10682 = vadd.f32 %v9335, %v10388
        %v10683 = vadd.f32 %v9336, %v10393
        %v10684 = vadd.f32 %v9337, %v10398
        %v10685 = vadd.f32 %v9338, %v10403
        %v10686 = vadd.f32 %v9339, %v10408
        %v10687 = vadd.f32 %v9340, %v10413
        %v10688 = vadd.f32 %v9341, %v10418
        %v10689 = vadd.f32 %v9342, %v10423
        %v10690 = vadd.f32 %v9343, %v10428
        %v10691 = vadd.f32 %v9344, %v10433
        %v10692 = vadd.f32 %v9345, %v10438
        %v10693 = vadd.f32 %v9346, %v10443
        %v10694 = vadd.f32 %v9347, %v10448
        %v10695 = vadd.f32 %v9348, %v10453
        %v10696 = vadd.f32 %v9349, %v10458
        %v10697 = vadd.f32 %v9350, %v10463
        %v10698 = vadd.f32 %v9351, %v10468
        %v10699 = vadd.f32 %v9352, %v10473
        %v10700 = vadd.f32 %v9353, %v10478
        %v10701 = vadd.f32 %v9354, %v10483
        %v10702 = vadd.f32 %v9355, %v10488
        %v10703 = vadd.f32 %v9356, %v10493
        %v10704 = vadd.f32 %v9357, %v10498
        %v10705 = vadd.f32 %v9358, %v10503
        %v10706 = vadd.f32 %v9359, %v10508
        %v10707 = vadd.f32 %v9360, %v10513
        %v10708 = vadd.f32 %v9361, %v10518
        %v10709 = vadd.f32 %v9362, %v10523
        %v10710 = vadd.f32 %v9363, %v10528
        %v10711 = vadd.f32 %v9364, %v10533
        %v10712 = vadd.f32 %v9365, %v10538
        %v10713 = vadd.f32 %v9366, %v10543
        %v10714 = vadd.f32 %v9367, %v10548
        %v10715 = vadd.f32 %v9368, %v10553
        %v10716 = vadd.f32 %v9369, %v10558
        %v10717 = vadd.f32 %v9370, %v10563
        %v10718 = vadd.f32 %v9371, %v10568
        %v10719 = vadd.f32 %v9372, %v10573
        %v10720 = vadd.f32 %v9373, %v10578
        %v10721 = vadd.f32 %v9374, %v10583
        %v10722 = vadd.f32 %v9375, %v10588
        %v10723 = vadd.f32 %v9376, %v10593
        %v10724 = vld [vmem:[%s8029 + $0x2] sm:$0xff]
        %v10725 = vld [vmem:[%s8029 + $0xa] sm:$0xff]
        %v10726 = vld [vmem:[%s8029 + $0x1a] sm:$0xff]
        %v10727 = vld [vmem:[%s8029 + $0x22] sm:$0xff]
        %v10728 = vld [vmem:[%s8029 + $0x32] sm:$0xff]
        %v10729 = vld [vmem:[%s8029 + $0x3a] sm:$0xff]
        %v10730 = vld [vmem:[%s8029 + $0x4a] sm:$0xff]
        %v10731 = vld [vmem:[%s8029 + $0x52] sm:$0xff]
        %v10732 = vld [vmem:[%s8029 + $0x62] sm:$0xff]
        %v10733 = vld [vmem:[%s8029 + $0x6a] sm:$0xff]
        %v10734 = vld [vmem:[%s8029 + $0x7a] sm:$0xff]
        %v10735 = vld [vmem:[%s8029 + $0x82] sm:$0xff]
        %v10736 = vld [vmem:[%s8029 + $0x92] sm:$0xff]
        %v10737 = vld [vmem:[%s8029 + $0x9a] sm:$0xff]
        %v10738 = vld [vmem:[%s8029 + $0xaa] sm:$0xff]
        %v10739 = vld [vmem:[%s8029 + $0xb2] sm:$0xff]
        %v10740 = vld [vmem:[%s8029 + $0xc2] sm:$0xff]
        %v10741 = vld [vmem:[%s8029 + $0xca] sm:$0xff]
        %v10742 = vld [vmem:[%s8029 + $0xda] sm:$0xff]
        %v10743 = vld [vmem:[%s8029 + $0xe2] sm:$0xff]
        %v10744 = vld [vmem:[%s8029 + $0xf2] sm:$0xff]
        %v10745 = vld [vmem:[%s8029 + $0xfa] sm:$0xff]
        %v10746 = vld [vmem:[%s8029 + $0x10a] sm:$0xff]
        %v10747 = vld [vmem:[%s8029 + $0x112] sm:$0xff]
        %v10748 = vld [vmem:[%s8029 + $0x122] sm:$0xff]
        %v10749 = vld [vmem:[%s8029 + $0x12a] sm:$0xff]
        %v10750 = vld [vmem:[%s8029 + $0x13a] sm:$0xff]
        %v10751 = vld [vmem:[%s8029 + $0x142] sm:$0xff]
        %v10752 = vld [vmem:[%s8029 + $0x152] sm:$0xff]
        %v10753 = vld [vmem:[%s8029 + $0x15a] sm:$0xff]
        %v10754 = vld [vmem:[%s8029 + $0x16a] sm:$0xff]
        %v10755 = vld [vmem:[%s8029 + $0x172] sm:$0xff]
        %v10756 = vld [vmem:[%s8029 + $0x1b2] sm:$0xff]
        %v10757 = vld [vmem:[%s8029 + $0x1ba] sm:$0xff]
        %v10758 = vld [vmem:[%s8029 + $0x1ca] sm:$0xff]
        %v10759 = vld [vmem:[%s8029 + $0x1d2] sm:$0xff]
        %v10760 = vld [vmem:[%s8029 + $0x1e2] sm:$0xff]
        %v10761 = vld [vmem:[%s8029 + $0x1ea] sm:$0xff]
        %v10762 = vld [vmem:[%s8029 + $0x1fa] sm:$0xff]
        %v10763 = vld [vmem:[%s8029 + $0x202] sm:$0xff]
        %v10764 = vld [vmem:[%s8029 + $0x212] sm:$0xff]
        %v10765 = vld [vmem:[%s8029 + $0x21a] sm:$0xff]
        %v10766 = vld [vmem:[%s8029 + $0x22a] sm:$0xff]
        %v10767 = vld [vmem:[%s8029 + $0x232] sm:$0xff]
        %v10768 = vld [vmem:[%s8029 + $0x242] sm:$0xff]
        %v10769 = vld [vmem:[%s8029 + $0x24a] sm:$0xff]
        %v10770 = vld [vmem:[%s8029 + $0x25a] sm:$0xff]
        %v10771 = vld [vmem:[%s8029 + $0x262] sm:$0xff]
        %v10772 = vld [vmem:[%s8029 + $0x272] sm:$0xff]
        %v10773 = vld [vmem:[%s8029 + $0x27a] sm:$0xff]
        %v10774 = vld [vmem:[%s8029 + $0x28a] sm:$0xff]
        %v10775 = vld [vmem:[%s8029 + $0x292] sm:$0xff]
        %v10776 = vld [vmem:[%s8029 + $0x2a2] sm:$0xff]
        %v10777 = vld [vmem:[%s8029 + $0x2aa] sm:$0xff]
        %v10778 = vld [vmem:[%s8029 + $0x2ba] sm:$0xff]
        %v10779 = vld [vmem:[%s8029 + $0x2c2] sm:$0xff]
        %v10780 = vld [vmem:[%s8029 + $0x2d2] sm:$0xff]
        %v10781 = vld [vmem:[%s8029 + $0x2da] sm:$0xff]
        %v10782 = vld [vmem:[%s8029 + $0x2ea] sm:$0xff]
        %v10783 = vld [vmem:[%s8029 + $0x2f2] sm:$0xff]
        %v10784 = vld [vmem:[%s8029 + $0x302] sm:$0xff]
        %v10785 = vld [vmem:[%s8029 + $0x30a] sm:$0xff]
        %v10786 = vld [vmem:[%s8029 + $0x31a] sm:$0xff]
        %v10787 = vld [vmem:[%s8029 + $0x322] sm:$0xff]
        %v10788 = vld [vmem:[%s8029 + $0x362] sm:$0xff]
        %v10789 = vld [vmem:[%s8029 + $0x36a] sm:$0xff]
        %v10790 = vld [vmem:[%s8029 + $0x37a] sm:$0xff]
        %v10791 = vld [vmem:[%s8029 + $0x382] sm:$0xff]
        %v10792 = vld [vmem:[%s8029 + $0x392] sm:$0xff]
        %v10793 = vld [vmem:[%s8029 + $0x39a] sm:$0xff]
        %v10794 = vld [vmem:[%s8029 + $0x3aa] sm:$0xff]
        %v10795 = vld [vmem:[%s8029 + $0x3b2] sm:$0xff]
        %v10796 = vld [vmem:[%s8029 + $0x3c2] sm:$0xff]
        %v10797 = vld [vmem:[%s8029 + $0x3ca] sm:$0xff]
        %v10798 = vld [vmem:[%s8029 + $0x3da] sm:$0xff]
        %v10799 = vld [vmem:[%s8029 + $0x3e2] sm:$0xff]
        %v10800 = vld [vmem:[%s8029 + $0x3f2] sm:$0xff]
        %v10801 = vld [vmem:[%s8029 + $0x3fa] sm:$0xff]
        %v10802 = vld [vmem:[%s8029 + $0x40a] sm:$0xff]
        %v10803 = vld [vmem:[%s8029 + $0x412] sm:$0xff]
        %v10804 = vld [vmem:[%s8029 + $0x422] sm:$0xff]
        %v10805 = vld [vmem:[%s8029 + $0x42a] sm:$0xff]
        %v10806 = vld [vmem:[%s8029 + $0x43a] sm:$0xff]
        %v10807 = vld [vmem:[%s8029 + $0x442] sm:$0xff]
        %v10808 = vld [vmem:[%s8029 + $0x452] sm:$0xff]
        %v10809 = vld [vmem:[%s8029 + $0x45a] sm:$0xff]
        %v10810 = vld [vmem:[%s8029 + $0x46a] sm:$0xff]
        %v10811 = vld [vmem:[%s8029 + $0x472] sm:$0xff]
        %v10812 = vld [vmem:[%s8029 + $0x482] sm:$0xff]
        %v10813 = vld [vmem:[%s8029 + $0x48a] sm:$0xff]
        %v10814 = vld [vmem:[%s8029 + $0x49a] sm:$0xff]
        %v10815 = vld [vmem:[%s8029 + $0x4a2] sm:$0xff]
        %v10816 = vld [vmem:[%s8029 + $0x4b2] sm:$0xff]
        %v10817 = vld [vmem:[%s8029 + $0x4ba] sm:$0xff]
        %v10818 = vld [vmem:[%s8029 + $0x4ca] sm:$0xff]
        %v10819 = vld [vmem:[%s8029 + $0x4d2] sm:$0xff]
        %v10820 = vld [vmem:[%s8029 + $0x512] sm:$0xff]
        %v10821 = vld [vmem:[%s8029 + $0x51a] sm:$0xff]
        %v10822 = vld [vmem:[%s8029 + $0x52a] sm:$0xff]
        %v10823 = vld [vmem:[%s8029 + $0x532] sm:$0xff]
        %v10824 = vld [vmem:[%s8029 + $0x542] sm:$0xff]
        %v10825 = vld [vmem:[%s8029 + $0x54a] sm:$0xff]
        %v10826 = vld [vmem:[%s8029 + $0x55a] sm:$0xff]
        %v10827 = vld [vmem:[%s8029 + $0x562] sm:$0xff]
        %v10828 = vld [vmem:[%s8029 + $0x572] sm:$0xff]
        %v10829 = vld [vmem:[%s8029 + $0x57a] sm:$0xff]
        %v10830 = vld [vmem:[%s8029 + $0x58a] sm:$0xff]
        %v10831 = vld [vmem:[%s8029 + $0x592] sm:$0xff]
        %v10832 = vld [vmem:[%s8029 + $0x5a2] sm:$0xff]
        %v10833 = vld [vmem:[%s8029 + $0x5aa] sm:$0xff]
        %v10834 = vld [vmem:[%s8029 + $0x5ba] sm:$0xff]
        %v10835 = vld [vmem:[%s8029 + $0x5c2] sm:$0xff]
        %v10836 = vld [vmem:[%s8029 + $0x5d2] sm:$0xff]
        %v10837 = vld [vmem:[%s8029 + $0x5da] sm:$0xff]
        %v10838 = vld [vmem:[%s8029 + $0x5ea] sm:$0xff]
        %v10839 = vld [vmem:[%s8029 + $0x5f2] sm:$0xff]
        %v10840 = vld [vmem:[%s8029 + $0x602] sm:$0xff]
        %v10841 = vld [vmem:[%s8029 + $0x60a] sm:$0xff]
        %v10842 = vld [vmem:[%s8029 + $0x61a] sm:$0xff]
        %v10843 = vld [vmem:[%s8029 + $0x622] sm:$0xff]
        %v10844 = vld [vmem:[%s8029 + $0x632] sm:$0xff]
        %v10845 = vld [vmem:[%s8029 + $0x63a] sm:$0xff]
        %v10846 = vld [vmem:[%s8029 + $0x64a] sm:$0xff]
        %v10847 = vld [vmem:[%s8029 + $0x652] sm:$0xff]
        %v10848 = vld [vmem:[%s8029 + $0x662] sm:$0xff]
        %v10849 = vld [vmem:[%s8029 + $0x66a] sm:$0xff]
        %v10850 = vld [vmem:[%s8029 + $0x67a] sm:$0xff]
        %v10851 = vld [vmem:[%s8029 + $0x682] sm:$0xff]
        %s10852 = scalar_lea.vmem %s1, 64
        %v10853 = vld [vmem:[%s10852] sm:$0xff]
        %v10855 = vsel %vm461, %v10724, 0
        %v10858 = vsel %vm461, %v10725, 0
        %v10861 = vsel %vm461, %v10726, 0
        %v10864 = vsel %vm461, %v10727, 0
        %v10867 = vsel %vm461, %v10728, 0
        %v10870 = vsel %vm461, %v10729, 0
        %v10873 = vsel %vm461, %v10730, 0
        %v10876 = vsel %vm461, %v10731, 0
        %v10879 = vsel %vm461, %v10732, 0
        %v10882 = vsel %vm461, %v10733, 0
        %v10885 = vsel %vm461, %v10734, 0
        %v10888 = vsel %vm461, %v10735, 0
        %v10891 = vsel %vm461, %v10736, 0
        %v10894 = vsel %vm461, %v10737, 0
        %v10897 = vsel %vm461, %v10738, 0
        %v10900 = vsel %vm461, %v10739, 0
        %v10903 = vsel %vm461, %v10740, 0
        %v10906 = vsel %vm461, %v10741, 0
        %v10909 = vsel %vm461, %v10742, 0
        %v10912 = vsel %vm461, %v10743, 0
        %v10915 = vsel %vm461, %v10744, 0
        %v10918 = vsel %vm461, %v10745, 0
        %v10921 = vsel %vm461, %v10746, 0
        %v10924 = vsel %vm461, %v10747, 0
        %v10927 = vsel %vm461, %v10748, 0
        %v10930 = vsel %vm461, %v10749, 0
        %v10933 = vsel %vm461, %v10750, 0
        %v10936 = vsel %vm461, %v10751, 0
        %v10939 = vsel %vm461, %v10752, 0
        %v10942 = vsel %vm461, %v10753, 0
        %v10945 = vsel %vm461, %v10754, 0
        %v10948 = vsel %vm461, %v10755, 0
        %v10951 = vsel %vm461, %v10756, 0
        %v10954 = vsel %vm461, %v10757, 0
        %v10957 = vsel %vm461, %v10758, 0
        %v10960 = vsel %vm461, %v10759, 0
        %v10963 = vsel %vm461, %v10760, 0
        %v10966 = vsel %vm461, %v10761, 0
        %v10969 = vsel %vm461, %v10762, 0
        %v10972 = vsel %vm461, %v10763, 0
        %v10975 = vsel %vm461, %v10764, 0
        %v10978 = vsel %vm461, %v10765, 0
        %v10981 = vsel %vm461, %v10766, 0
        %v10984 = vsel %vm461, %v10767, 0
        %v10987 = vsel %vm461, %v10768, 0
        %v10990 = vsel %vm461, %v10769, 0
        %v10993 = vsel %vm461, %v10770, 0
        %v10996 = vsel %vm461, %v10771, 0
        %v10999 = vsel %vm461, %v10772, 0
        %v11002 = vsel %vm461, %v10773, 0
        %v11005 = vsel %vm461, %v10774, 0
        %v11008 = vsel %vm461, %v10775, 0
        %v11011 = vsel %vm461, %v10776, 0
        %v11014 = vsel %vm461, %v10777, 0
        %v11017 = vsel %vm461, %v10778, 0
        %v11020 = vsel %vm461, %v10779, 0
        %v11023 = vsel %vm461, %v10780, 0
        %v11026 = vsel %vm461, %v10781, 0
        %v11029 = vsel %vm461, %v10782, 0
        %v11032 = vsel %vm461, %v10783, 0
        %v11035 = vsel %vm461, %v10784, 0
        %v11038 = vsel %vm461, %v10785, 0
        %v11041 = vsel %vm461, %v10786, 0
        %v11044 = vsel %vm461, %v10787, 0
        %v11047 = vsel %vm461, %v10788, 0
        %v11050 = vsel %vm461, %v10789, 0
        %v11053 = vsel %vm461, %v10790, 0
        %v11056 = vsel %vm461, %v10791, 0
        %v11059 = vsel %vm461, %v10792, 0
        %v11062 = vsel %vm461, %v10793, 0
        %v11065 = vsel %vm461, %v10794, 0
        %v11068 = vsel %vm461, %v10795, 0
        %v11071 = vsel %vm461, %v10796, 0
        %v11074 = vsel %vm461, %v10797, 0
        %v11077 = vsel %vm461, %v10798, 0
        %v11080 = vsel %vm461, %v10799, 0
        %v11083 = vsel %vm461, %v10800, 0
        %v11086 = vsel %vm461, %v10801, 0
        %v11089 = vsel %vm461, %v10802, 0
        %v11092 = vsel %vm461, %v10803, 0
        %v11095 = vsel %vm461, %v10804, 0
        %v11098 = vsel %vm461, %v10805, 0
        %v11101 = vsel %vm461, %v10806, 0
        %v11104 = vsel %vm461, %v10807, 0
        %v11107 = vsel %vm461, %v10808, 0
        %v11110 = vsel %vm461, %v10809, 0
        %v11113 = vsel %vm461, %v10810, 0
        %v11116 = vsel %vm461, %v10811, 0
        %v11119 = vsel %vm461, %v10812, 0
        %v11122 = vsel %vm461, %v10813, 0
        %v11125 = vsel %vm461, %v10814, 0
        %v11128 = vsel %vm461, %v10815, 0
        %v11131 = vsel %vm461, %v10816, 0
        %v11134 = vsel %vm461, %v10817, 0
        %v11137 = vsel %vm461, %v10818, 0
        %v11140 = vsel %vm461, %v10819, 0
        %v11143 = vsel %vm461, %v10820, 0
        %v11146 = vsel %vm461, %v10821, 0
        %v11149 = vsel %vm461, %v10822, 0
        %v11152 = vsel %vm461, %v10823, 0
        %v11155 = vsel %vm461, %v10824, 0
        %v11158 = vsel %vm461, %v10825, 0
        %v11161 = vsel %vm461, %v10826, 0
        %v11164 = vsel %vm461, %v10827, 0
        %v11167 = vsel %vm461, %v10828, 0
        %v11170 = vsel %vm461, %v10829, 0
        %v11173 = vsel %vm461, %v10830, 0
        %v11176 = vsel %vm461, %v10831, 0
        %v11179 = vsel %vm461, %v10832, 0
        %v11182 = vsel %vm461, %v10833, 0
        %v11185 = vsel %vm461, %v10834, 0
        %v11188 = vsel %vm461, %v10835, 0
        %v11191 = vsel %vm461, %v10836, 0
        %v11194 = vsel %vm461, %v10837, 0
        %v11197 = vsel %vm461, %v10838, 0
        %v11200 = vsel %vm461, %v10839, 0
        %v11203 = vsel %vm461, %v10840, 0
        %v11206 = vsel %vm461, %v10841, 0
        %v11209 = vsel %vm461, %v10842, 0
        %v11212 = vsel %vm461, %v10843, 0
        %v11215 = vsel %vm461, %v10844, 0
        %v11218 = vsel %vm461, %v10845, 0
        %v11221 = vsel %vm461, %v10846, 0
        %v11224 = vsel %vm461, %v10847, 0
        %v11227 = vsel %vm461, %v10848, 0
        %v11230 = vsel %vm461, %v10849, 0
        %v11233 = vsel %vm461, %v10850, 0
        %v11236 = vsel %vm461, %v10851, 0
        %11238 = vmatprep.subr.mxu0 0.0
        %11239 = vmatpush1.msra.mxu0 %v10853
        %11240 = vmatprep.subr.mxu0 0.0
        %11241 = vmatpush1.msra.mxu0 0.0
        %11242 = vmatprep.subr.mxu0 0.0
        %11243 = vmatpush1.msra.mxu0 0.0
        %11244 = vmatprep.subr.mxu0 0.0
        %11245 = vmatpush1.msra.mxu0 0.0
        %11246 = vmatprep.subr.mxu0 0.0
        %11247 = vmatpush1.msra.mxu0 0.0
        %11248 = vmatprep.subr.mxu0 0.0
        %11249 = vmatpush1.msra.mxu0 0.0
        %11250 = vmatprep.subr.mxu0 0.0
        %11251 = vmatpush1.msra.mxu0 0.0
        %11252 = vmatprep.subr.mxu0 0.0
        %11253 = vmatpush1.msra.mxu0 0.0
        %11254 = vmatprep.subr.mxu0 0.0
        %11255 = vmatpush1.msra.mxu0 0.0
        %11256 = vmatprep.subr.mxu0 0.0
        %11257 = vmatpush1.msra.mxu0 0.0
        %11258 = vmatprep.subr.mxu0 0.0
        %11259 = vmatpush1.msra.mxu0 0.0
        %11260 = vmatprep.subr.mxu0 0.0
        %11261 = vmatpush1.msra.mxu0 0.0
        %11262 = vmatprep.subr.mxu0 0.0
        %11263 = vmatpush1.msra.mxu0 0.0
        %11264 = vmatprep.subr.mxu0 0.0
        %11265 = vmatpush1.msra.mxu0 0.0
        %11266 = vmatprep.subr.mxu0 0.0
        %11267 = vmatpush1.msra.mxu0 0.0
        %11268 = vmatprep.subr.mxu0 0.0
        %11269 = vmatpush1.msra.mxu0 0.0
        %11270 = vmatprep.subr.mxu0 0.0
        %11271 = vmatpush1.msra.mxu0 0.0
        %11272 = vmatprep.subr.mxu0 0.0
        %11273 = vmatpush1.msra.mxu0 0.0
        %11274 = vmatprep.subr.mxu0 0.0
        %11275 = vmatpush1.msra.mxu0 0.0
        %11276 = vmatprep.subr.mxu0 0.0
        %11277 = vmatpush1.msra.mxu0 0.0
        %11278 = vmatprep.subr.mxu0 0.0
        %11279 = vmatpush1.msra.mxu0 0.0
        %11280 = vmatprep.subr.mxu0 0.0
        %11281 = vmatpush1.msra.mxu0 0.0
        %11282 = vmatprep.subr.mxu0 0.0
        %11283 = vmatpush1.msra.mxu0 0.0
        %11284 = vmatprep.subr.mxu0 0.0
        %11285 = vmatpush1.msra.mxu0 0.0
        %11286 = vmatprep.subr.mxu0 0.0
        %11287 = vmatpush1.msra.mxu0 0.0
        %11288 = vmatprep.subr.mxu0 0.0
        %11289 = vmatpush1.msra.mxu0 0.0
        %11290 = vmatprep.subr.mxu0 0.0
        %11291 = vmatpush1.msra.mxu0 0.0
        %11292 = vmatprep.subr.mxu0 0.0
        %11293 = vmatpush1.msra.mxu0 0.0
        %11294 = vmatprep.subr.mxu0 0.0
        %11295 = vmatpush1.msra.mxu0 0.0
        %11296 = vmatprep.subr.mxu0 0.0
        %11297 = vmatpush1.msra.mxu0 0.0
        %11298 = vmatprep.subr.mxu0 0.0
        %11299 = vmatpush1.msra.mxu0 0.0
        %11300 = vmatprep.subr.mxu0 0.0
        %11301 = vmatpush1.msra.mxu0 0.0
        %11302 = vmatprep.mubr.f32.mxu0 0.0
        %11303 = vmatmul.mubr.f32.gmra.mrb[0].mxu0 %v10855
        %v11304 = vpop.f32.mrb[0].mxu0
        %v11305 = vadd.f32 0.0, %v11304
        %v11306 = vpop.f32.mrb[0].mxu0
        %11307 = vmatprep.mubr.f32.mxu0 0.0
        %11308 = vmatmul.mubr.f32.gmra.mrb[0].mxu0 %v10858
        %v11309 = vpop.f32.mrb[0].mxu0
        %v11310 = vadd.f32 0.0, %v11309
        %v11311 = vpop.f32.mrb[0].mxu0
        %11312 = vmatprep.mubr.f32.mxu0 0.0
        %11313 = vmatmul.mubr.f32.gmra.mrb[0].mxu0 %v10861
        %v11314 = vpop.f32.mrb[0].mxu0
        %v11315 = vadd.f32 0.0, %v11314
        %v11316 = vpop.f32.mrb[0].mxu0
        %11317 = vmatprep.mubr.f32.mxu0 0.0
        %11318 = vmatmul.mubr.f32.gmra.mrb[0].mxu0 %v10864
        %v11319 = vpop.f32.mrb[0].mxu0
        %v11320 = vadd.f32 0.0, %v11319
        %v11321 = vpop.f32.mrb[0].mxu0
        %11322 = vmatprep.mubr.f32.mxu0 0.0
        %11323 = vmatmul.mubr.f32.gmra.mrb[0].mxu0 %v10867
        %v11324 = vpop.f32.mrb[0].mxu0
        %v11325 = vadd.f32 0.0, %v11324
        %v11326 = vpop.f32.mrb[0].mxu0
        %11327 = vmatprep.mubr.f32.mxu0 0.0
        %11328 = vmatmul.mubr.f32.gmra.mrb[0].mxu0 %v10870
        %v11329 = vpop.f32.mrb[0].mxu0
        %v11330 = vadd.f32 0.0, %v11329
        %v11331 = vpop.f32.mrb[0].mxu0
        %11332 = vmatprep.mubr.f32.mxu0 0.0
        %11333 = vmatmul.mubr.f32.gmra.mrb[0].mxu0 %v10873
        %v11334 = vpop.f32.mrb[0].mxu0
        %v11335 = vadd.f32 0.0, %v11334
        %v11336 = vpop.f32.mrb[0].mxu0
        %11337 = vmatprep.mubr.f32.mxu0 0.0
        %11338 = vmatmul.mubr.f32.gmra.mrb[0].mxu0 %v10876
        %v11339 = vpop.f32.mrb[0].mxu0
        %v11340 = vadd.f32 0.0, %v11339
        %v11341 = vpop.f32.mrb[0].mxu0
        %11342 = vmatprep.mubr.f32.mxu0 0.0
        %11343 = vmatmul.mubr.f32.gmra.mrb[0].mxu0 %v10879
        %v11344 = vpop.f32.mrb[0].mxu0
        %v11345 = vadd.f32 0.0, %v11344
        %v11346 = vpop.f32.mrb[0].mxu0
        %11347 = vmatprep.mubr.f32.mxu0 0.0
        %11348 = vmatmul.mubr.f32.gmra.mrb[0].mxu0 %v10882
        %v11349 = vpop.f32.mrb[0].mxu0
        %v11350 = vadd.f32 0.0, %v11349
        %v11351 = vpop.f32.mrb[0].mxu0
        %11352 = vmatprep.mubr.f32.mxu0 0.0
        %11353 = vmatmul.mubr.f32.gmra.mrb[0].mxu0 %v10885
        %v11354 = vpop.f32.mrb[0].mxu0
        %v11355 = vadd.f32 0.0, %v11354
        %v11356 = vpop.f32.mrb[0].mxu0
        %11357 = vmatprep.mubr.f32.mxu0 0.0
        %11358 = vmatmul.mubr.f32.gmra.mrb[0].mxu0 %v10888
        %v11359 = vpop.f32.mrb[0].mxu0
        %v11360 = vadd.f32 0.0, %v11359
        %v11361 = vpop.f32.mrb[0].mxu0
        %11362 = vmatprep.mubr.f32.mxu0 0.0
        %11363 = vmatmul.mubr.f32.gmra.mrb[0].mxu0 %v10891
        %v11364 = vpop.f32.mrb[0].mxu0
        %v11365 = vadd.f32 0.0, %v11364
        %v11366 = vpop.f32.mrb[0].mxu0
        %11367 = vmatprep.mubr.f32.mxu0 0.0
        %11368 = vmatmul.mubr.f32.gmra.mrb[0].mxu0 %v10894
        %v11369 = vpop.f32.mrb[0].mxu0
        %v11370 = vadd.f32 0.0, %v11369
        %v11371 = vpop.f32.mrb[0].mxu0
        %11372 = vmatprep.mubr.f32.mxu0 0.0
        %11373 = vmatmul.mubr.f32.gmra.mrb[0].mxu0 %v10897
        %v11374 = vpop.f32.mrb[0].mxu0
        %v11375 = vadd.f32 0.0, %v11374
        %v11376 = vpop.f32.mrb[0].mxu0
        %11377 = vmatprep.mubr.f32.mxu0 0.0
        %11378 = vmatmul.mubr.f32.gmra.mrb[0].mxu0 %v10900
        %v11379 = vpop.f32.mrb[0].mxu0
        %v11380 = vadd.f32 0.0, %v11379
        %v11381 = vpop.f32.mrb[0].mxu0
        %11382 = vmatprep.mubr.f32.mxu0 0.0
        %11383 = vmatmul.mubr.f32.gmra.mrb[0].mxu0 %v10903
        %v11384 = vpop.f32.mrb[0].mxu0
        %v11385 = vadd.f32 0.0, %v11384
        %v11386 = vpop.f32.mrb[0].mxu0
        %11387 = vmatprep.mubr.f32.mxu0 0.0
        %11388 = vmatmul.mubr.f32.gmra.mrb[0].mxu0 %v10906
        %v11389 = vpop.f32.mrb[0].mxu0
        %v11390 = vadd.f32 0.0, %v11389
        %v11391 = vpop.f32.mrb[0].mxu0
        %11392 = vmatprep.mubr.f32.mxu0 0.0
        %11393 = vmatmul.mubr.f32.gmra.mrb[0].mxu0 %v10909
        %v11394 = vpop.f32.mrb[0].mxu0
        %v11395 = vadd.f32 0.0, %v11394
        %v11396 = vpop.f32.mrb[0].mxu0
        %11397 = vmatprep.mubr.f32.mxu0 0.0
        %11398 = vmatmul.mubr.f32.gmra.mrb[0].mxu0 %v10912
        %v11399 = vpop.f32.mrb[0].mxu0
        %v11400 = vadd.f32 0.0, %v11399
        %v11401 = vpop.f32.mrb[0].mxu0
        %11402 = vmatprep.mubr.f32.mxu0 0.0
        %11403 = vmatmul.mubr.f32.gmra.mrb[0].mxu0 %v10915
        %v11404 = vpop.f32.mrb[0].mxu0
        %v11405 = vadd.f32 0.0, %v11404
        %v11406 = vpop.f32.mrb[0].mxu0
        %11407 = vmatprep.mubr.f32.mxu0 0.0
        %11408 = vmatmul.mubr.f32.gmra.mrb[0].mxu0 %v10918
        %v11409 = vpop.f32.mrb[0].mxu0
        %v11410 = vadd.f32 0.0, %v11409
        %v11411 = vpop.f32.mrb[0].mxu0
        %11412 = vmatprep.mubr.f32.mxu0 0.0
        %11413 = vmatmul.mubr.f32.gmra.mrb[0].mxu0 %v10921
        %v11414 = vpop.f32.mrb[0].mxu0
        %v11415 = vadd.f32 0.0, %v11414
        %v11416 = vpop.f32.mrb[0].mxu0
        %11417 = vmatprep.mubr.f32.mxu0 0.0
        %11418 = vmatmul.mubr.f32.gmra.mrb[0].mxu0 %v10924
        %v11419 = vpop.f32.mrb[0].mxu0
        %v11420 = vadd.f32 0.0, %v11419
        %v11421 = vpop.f32.mrb[0].mxu0
        %11422 = vmatprep.mubr.f32.mxu0 0.0
        %11423 = vmatmul.mubr.f32.gmra.mrb[0].mxu0 %v10927
        %v11424 = vpop.f32.mrb[0].mxu0
        %v11425 = vadd.f32 0.0, %v11424
        %v11426 = vpop.f32.mrb[0].mxu0
        %11427 = vmatprep.mubr.f32.mxu0 0.0
        %11428 = vmatmul.mubr.f32.gmra.mrb[0].mxu0 %v10930
        %v11429 = vpop.f32.mrb[0].mxu0
        %v11430 = vadd.f32 0.0, %v11429
        %v11431 = vpop.f32.mrb[0].mxu0
        %11432 = vmatprep.mubr.f32.mxu0 0.0
        %11433 = vmatmul.mubr.f32.gmra.mrb[0].mxu0 %v10933
        %v11434 = vpop.f32.mrb[0].mxu0
        %v11435 = vadd.f32 0.0, %v11434
        %v11436 = vpop.f32.mrb[0].mxu0
        %11437 = vmatprep.mubr.f32.mxu0 0.0
        %11438 = vmatmul.mubr.f32.gmra.mrb[0].mxu0 %v10936
        %v11439 = vpop.f32.mrb[0].mxu0
        %v11440 = vadd.f32 0.0, %v11439
        %v11441 = vpop.f32.mrb[0].mxu0
        %11442 = vmatprep.mubr.f32.mxu0 0.0
        %11443 = vmatmul.mubr.f32.gmra.mrb[0].mxu0 %v10939
        %v11444 = vpop.f32.mrb[0].mxu0
        %v11445 = vadd.f32 0.0, %v11444
        %v11446 = vpop.f32.mrb[0].mxu0
        %11447 = vmatprep.mubr.f32.mxu0 0.0
        %11448 = vmatmul.mubr.f32.gmra.mrb[0].mxu0 %v10942
        %v11449 = vpop.f32.mrb[0].mxu0
        %v11450 = vadd.f32 0.0, %v11449
        %v11451 = vpop.f32.mrb[0].mxu0
        %11452 = vmatprep.mubr.f32.mxu0 0.0
        %11453 = vmatmul.mubr.f32.gmra.mrb[0].mxu0 %v10945
        %v11454 = vpop.f32.mrb[0].mxu0
        %v11455 = vadd.f32 0.0, %v11454
        %v11456 = vpop.f32.mrb[0].mxu0
        %11457 = vmatprep.mubr.f32.mxu0 0.0
        %11458 = vmatmul.mubr.f32.gmra.mrb[0].mxu0 %v10948
        %v11459 = vpop.f32.mrb[0].mxu0
        %v11460 = vadd.f32 0.0, %v11459
        %v11461 = vpop.f32.mrb[0].mxu0
        %11462 = vmatprep.mubr.f32.mxu0 0.0
        %11463 = vmatmul.mubr.f32.gmra.mrb[0].mxu0 %v10951
        %v11464 = vpop.f32.mrb[0].mxu0
        %v11465 = vadd.f32 0.0, %v11464
        %v11466 = vpop.f32.mrb[0].mxu0
        %11467 = vmatprep.mubr.f32.mxu0 0.0
        %11468 = vmatmul.mubr.f32.gmra.mrb[0].mxu0 %v10954
        %v11469 = vpop.f32.mrb[0].mxu0
        %v11470 = vadd.f32 0.0, %v11469
        %v11471 = vpop.f32.mrb[0].mxu0
        %11472 = vmatprep.mubr.f32.mxu0 0.0
        %11473 = vmatmul.mubr.f32.gmra.mrb[0].mxu0 %v10957
        %v11474 = vpop.f32.mrb[0].mxu0
        %v11475 = vadd.f32 0.0, %v11474
        %v11476 = vpop.f32.mrb[0].mxu0
        %11477 = vmatprep.mubr.f32.mxu0 0.0
        %11478 = vmatmul.mubr.f32.gmra.mrb[0].mxu0 %v10960
        %v11479 = vpop.f32.mrb[0].mxu0
        %v11480 = vadd.f32 0.0, %v11479
        %v11481 = vpop.f32.mrb[0].mxu0
        %11482 = vmatprep.mubr.f32.mxu0 0.0
        %11483 = vmatmul.mubr.f32.gmra.mrb[0].mxu0 %v10963
        %v11484 = vpop.f32.mrb[0].mxu0
        %v11485 = vadd.f32 0.0, %v11484
        %v11486 = vpop.f32.mrb[0].mxu0
        %11487 = vmatprep.mubr.f32.mxu0 0.0
        %11488 = vmatmul.mubr.f32.gmra.mrb[0].mxu0 %v10966
        %v11489 = vpop.f32.mrb[0].mxu0
        %v11490 = vadd.f32 0.0, %v11489
        %v11491 = vpop.f32.mrb[0].mxu0
        %11492 = vmatprep.mubr.f32.mxu0 0.0
        %11493 = vmatmul.mubr.f32.gmra.mrb[0].mxu0 %v10969
        %v11494 = vpop.f32.mrb[0].mxu0
        %v11495 = vadd.f32 0.0, %v11494
        %v11496 = vpop.f32.mrb[0].mxu0
        %11497 = vmatprep.mubr.f32.mxu0 0.0
        %11498 = vmatmul.mubr.f32.gmra.mrb[0].mxu0 %v10972
        %v11499 = vpop.f32.mrb[0].mxu0
        %v11500 = vadd.f32 0.0, %v11499
        %v11501 = vpop.f32.mrb[0].mxu0
        %11502 = vmatprep.mubr.f32.mxu0 0.0
        %11503 = vmatmul.mubr.f32.gmra.mrb[0].mxu0 %v10975
        %v11504 = vpop.f32.mrb[0].mxu0
        %v11505 = vadd.f32 0.0, %v11504
        %v11506 = vpop.f32.mrb[0].mxu0
        %11507 = vmatprep.mubr.f32.mxu0 0.0
        %11508 = vmatmul.mubr.f32.gmra.mrb[0].mxu0 %v10978
        %v11509 = vpop.f32.mrb[0].mxu0
        %v11510 = vadd.f32 0.0, %v11509
        %v11511 = vpop.f32.mrb[0].mxu0
        %11512 = vmatprep.mubr.f32.mxu0 0.0
        %11513 = vmatmul.mubr.f32.gmra.mrb[0].mxu0 %v10981
        %v11514 = vpop.f32.mrb[0].mxu0
        %v11515 = vadd.f32 0.0, %v11514
        %v11516 = vpop.f32.mrb[0].mxu0
        %11517 = vmatprep.mubr.f32.mxu0 0.0
        %11518 = vmatmul.mubr.f32.gmra.mrb[0].mxu0 %v10984
        %v11519 = vpop.f32.mrb[0].mxu0
        %v11520 = vadd.f32 0.0, %v11519
        %v11521 = vpop.f32.mrb[0].mxu0
        %11522 = vmatprep.mubr.f32.mxu0 0.0
        %11523 = vmatmul.mubr.f32.gmra.mrb[0].mxu0 %v10987
        %v11524 = vpop.f32.mrb[0].mxu0
        %v11525 = vadd.f32 0.0, %v11524
        %v11526 = vpop.f32.mrb[0].mxu0
        %11527 = vmatprep.mubr.f32.mxu0 0.0
        %11528 = vmatmul.mubr.f32.gmra.mrb[0].mxu0 %v10990
        %v11529 = vpop.f32.mrb[0].mxu0
        %v11530 = vadd.f32 0.0, %v11529
        %v11531 = vpop.f32.mrb[0].mxu0
        %11532 = vmatprep.mubr.f32.mxu0 0.0
        %11533 = vmatmul.mubr.f32.gmra.mrb[0].mxu0 %v10993
        %v11534 = vpop.f32.mrb[0].mxu0
        %v11535 = vadd.f32 0.0, %v11534
        %v11536 = vpop.f32.mrb[0].mxu0
        %11537 = vmatprep.mubr.f32.mxu0 0.0
        %11538 = vmatmul.mubr.f32.gmra.mrb[0].mxu0 %v10996
        %v11539 = vpop.f32.mrb[0].mxu0
        %v11540 = vadd.f32 0.0, %v11539
        %v11541 = vpop.f32.mrb[0].mxu0
        %11542 = vmatprep.mubr.f32.mxu0 0.0
        %11543 = vmatmul.mubr.f32.gmra.mrb[0].mxu0 %v10999
        %v11544 = vpop.f32.mrb[0].mxu0
        %v11545 = vadd.f32 0.0, %v11544
        %v11546 = vpop.f32.mrb[0].mxu0
        %11547 = vmatprep.mubr.f32.mxu0 0.0
        %11548 = vmatmul.mubr.f32.gmra.mrb[0].mxu0 %v11002
        %v11549 = vpop.f32.mrb[0].mxu0
        %v11550 = vadd.f32 0.0, %v11549
        %v11551 = vpop.f32.mrb[0].mxu0
        %11552 = vmatprep.mubr.f32.mxu0 0.0
        %11553 = vmatmul.mubr.f32.gmra.mrb[0].mxu0 %v11005
        %v11554 = vpop.f32.mrb[0].mxu0
        %v11555 = vadd.f32 0.0, %v11554
        %v11556 = vpop.f32.mrb[0].mxu0
        %11557 = vmatprep.mubr.f32.mxu0 0.0
        %11558 = vmatmul.mubr.f32.gmra.mrb[0].mxu0 %v11008
        %v11559 = vpop.f32.mrb[0].mxu0
        %v11560 = vadd.f32 0.0, %v11559
        %v11561 = vpop.f32.mrb[0].mxu0
        %11562 = vmatprep.mubr.f32.mxu0 0.0
        %11563 = vmatmul.mubr.f32.gmra.mrb[0].mxu0 %v11011
        %v11564 = vpop.f32.mrb[0].mxu0
        %v11565 = vadd.f32 0.0, %v11564
        %v11566 = vpop.f32.mrb[0].mxu0
        %11567 = vmatprep.mubr.f32.mxu0 0.0
        %11568 = vmatmul.mubr.f32.gmra.mrb[0].mxu0 %v11014
        %v11569 = vpop.f32.mrb[0].mxu0
        %v11570 = vadd.f32 0.0, %v11569
        %v11571 = vpop.f32.mrb[0].mxu0
        %11572 = vmatprep.mubr.f32.mxu0 0.0
        %11573 = vmatmul.mubr.f32.gmra.mrb[0].mxu0 %v11017
        %v11574 = vpop.f32.mrb[0].mxu0
        %v11575 = vadd.f32 0.0, %v11574
        %v11576 = vpop.f32.mrb[0].mxu0
        %11577 = vmatprep.mubr.f32.mxu0 0.0
        %11578 = vmatmul.mubr.f32.gmra.mrb[0].mxu0 %v11020
        %v11579 = vpop.f32.mrb[0].mxu0
        %v11580 = vadd.f32 0.0, %v11579
        %v11581 = vpop.f32.mrb[0].mxu0
        %11582 = vmatprep.mubr.f32.mxu0 0.0
        %11583 = vmatmul.mubr.f32.gmra.mrb[0].mxu0 %v11023
        %v11584 = vpop.f32.mrb[0].mxu0
        %v11585 = vadd.f32 0.0, %v11584
        %v11586 = vpop.f32.mrb[0].mxu0
        %11587 = vmatprep.mubr.f32.mxu0 0.0
        %11588 = vmatmul.mubr.f32.gmra.mrb[0].mxu0 %v11026
        %v11589 = vpop.f32.mrb[0].mxu0
        %v11590 = vadd.f32 0.0, %v11589
        %v11591 = vpop.f32.mrb[0].mxu0
        %11592 = vmatprep.mubr.f32.mxu0 0.0
        %11593 = vmatmul.mubr.f32.gmra.mrb[0].mxu0 %v11029
        %v11594 = vpop.f32.mrb[0].mxu0
        %v11595 = vadd.f32 0.0, %v11594
        %v11596 = vpop.f32.mrb[0].mxu0
        %11597 = vmatprep.mubr.f32.mxu0 0.0
        %11598 = vmatmul.mubr.f32.gmra.mrb[0].mxu0 %v11032
        %v11599 = vpop.f32.mrb[0].mxu0
        %v11600 = vadd.f32 0.0, %v11599
        %v11601 = vpop.f32.mrb[0].mxu0
        %11602 = vmatprep.mubr.f32.mxu0 0.0
        %11603 = vmatmul.mubr.f32.gmra.mrb[0].mxu0 %v11035
        %v11604 = vpop.f32.mrb[0].mxu0
        %v11605 = vadd.f32 0.0, %v11604
        %v11606 = vpop.f32.mrb[0].mxu0
        %11607 = vmatprep.mubr.f32.mxu0 0.0
        %11608 = vmatmul.mubr.f32.gmra.mrb[0].mxu0 %v11038
        %v11609 = vpop.f32.mrb[0].mxu0
        %v11610 = vadd.f32 0.0, %v11609
        %v11611 = vpop.f32.mrb[0].mxu0
        %11612 = vmatprep.mubr.f32.mxu0 0.0
        %11613 = vmatmul.mubr.f32.gmra.mrb[0].mxu0 %v11041
        %v11614 = vpop.f32.mrb[0].mxu0
        %v11615 = vadd.f32 0.0, %v11614
        %v11616 = vpop.f32.mrb[0].mxu0
        %11617 = vmatprep.mubr.f32.mxu0 0.0
        %11618 = vmatmul.mubr.f32.gmra.mrb[0].mxu0 %v11044
        %v11619 = vpop.f32.mrb[0].mxu0
        %v11620 = vadd.f32 0.0, %v11619
        %v11621 = vpop.f32.mrb[0].mxu0
        %11622 = vmatprep.mubr.f32.mxu0 0.0
        %11623 = vmatmul.mubr.f32.gmra.mrb[0].mxu0 %v11047
        %v11624 = vpop.f32.mrb[0].mxu0
        %v11625 = vadd.f32 0.0, %v11624
        %v11626 = vpop.f32.mrb[0].mxu0
        %11627 = vmatprep.mubr.f32.mxu0 0.0
        %11628 = vmatmul.mubr.f32.gmra.mrb[0].mxu0 %v11050
        %v11629 = vpop.f32.mrb[0].mxu0
        %v11630 = vadd.f32 0.0, %v11629
        %v11631 = vpop.f32.mrb[0].mxu0
        %11632 = vmatprep.mubr.f32.mxu0 0.0
        %11633 = vmatmul.mubr.f32.gmra.mrb[0].mxu0 %v11053
        %v11634 = vpop.f32.mrb[0].mxu0
        %v11635 = vadd.f32 0.0, %v11634
        %v11636 = vpop.f32.mrb[0].mxu0
        %11637 = vmatprep.mubr.f32.mxu0 0.0
        %11638 = vmatmul.mubr.f32.gmra.mrb[0].mxu0 %v11056
        %v11639 = vpop.f32.mrb[0].mxu0
        %v11640 = vadd.f32 0.0, %v11639
        %v11641 = vpop.f32.mrb[0].mxu0
        %11642 = vmatprep.mubr.f32.mxu0 0.0
        %11643 = vmatmul.mubr.f32.gmra.mrb[0].mxu0 %v11059
        %v11644 = vpop.f32.mrb[0].mxu0
        %v11645 = vadd.f32 0.0, %v11644
        %v11646 = vpop.f32.mrb[0].mxu0
        %11647 = vmatprep.mubr.f32.mxu0 0.0
        %11648 = vmatmul.mubr.f32.gmra.mrb[0].mxu0 %v11062
        %v11649 = vpop.f32.mrb[0].mxu0
        %v11650 = vadd.f32 0.0, %v11649
        %v11651 = vpop.f32.mrb[0].mxu0
        %11652 = vmatprep.mubr.f32.mxu0 0.0
        %11653 = vmatmul.mubr.f32.gmra.mrb[0].mxu0 %v11065
        %v11654 = vpop.f32.mrb[0].mxu0
        %v11655 = vadd.f32 0.0, %v11654
        %v11656 = vpop.f32.mrb[0].mxu0
        %11657 = vmatprep.mubr.f32.mxu0 0.0
        %11658 = vmatmul.mubr.f32.gmra.mrb[0].mxu0 %v11068
        %v11659 = vpop.f32.mrb[0].mxu0
        %v11660 = vadd.f32 0.0, %v11659
        %v11661 = vpop.f32.mrb[0].mxu0
        %11662 = vmatprep.mubr.f32.mxu0 0.0
        %11663 = vmatmul.mubr.f32.gmra.mrb[0].mxu0 %v11071
        %v11664 = vpop.f32.mrb[0].mxu0
        %v11665 = vadd.f32 0.0, %v11664
        %v11666 = vpop.f32.mrb[0].mxu0
        %11667 = vmatprep.mubr.f32.mxu0 0.0
        %11668 = vmatmul.mubr.f32.gmra.mrb[0].mxu0 %v11074
        %v11669 = vpop.f32.mrb[0].mxu0
        %v11670 = vadd.f32 0.0, %v11669
        %v11671 = vpop.f32.mrb[0].mxu0
        %11672 = vmatprep.mubr.f32.mxu0 0.0
        %11673 = vmatmul.mubr.f32.gmra.mrb[0].mxu0 %v11077
        %v11674 = vpop.f32.mrb[0].mxu0
        %v11675 = vadd.f32 0.0, %v11674
        %v11676 = vpop.f32.mrb[0].mxu0
        %11677 = vmatprep.mubr.f32.mxu0 0.0
        %11678 = vmatmul.mubr.f32.gmra.mrb[0].mxu0 %v11080
        %v11679 = vpop.f32.mrb[0].mxu0
        %v11680 = vadd.f32 0.0, %v11679
        %v11681 = vpop.f32.mrb[0].mxu0
        %11682 = vmatprep.mubr.f32.mxu0 0.0
        %11683 = vmatmul.mubr.f32.gmra.mrb[0].mxu0 %v11083
        %v11684 = vpop.f32.mrb[0].mxu0
        %v11685 = vadd.f32 0.0, %v11684
        %v11686 = vpop.f32.mrb[0].mxu0
        %11687 = vmatprep.mubr.f32.mxu0 0.0
        %11688 = vmatmul.mubr.f32.gmra.mrb[0].mxu0 %v11086
        %v11689 = vpop.f32.mrb[0].mxu0
        %v11690 = vadd.f32 0.0, %v11689
        %v11691 = vpop.f32.mrb[0].mxu0
        %11692 = vmatprep.mubr.f32.mxu0 0.0
        %11693 = vmatmul.mubr.f32.gmra.mrb[0].mxu0 %v11089
        %v11694 = vpop.f32.mrb[0].mxu0
        %v11695 = vadd.f32 0.0, %v11694
        %v11696 = vpop.f32.mrb[0].mxu0
        %11697 = vmatprep.mubr.f32.mxu0 0.0
        %11698 = vmatmul.mubr.f32.gmra.mrb[0].mxu0 %v11092
        %v11699 = vpop.f32.mrb[0].mxu0
        %v11700 = vadd.f32 0.0, %v11699
        %v11701 = vpop.f32.mrb[0].mxu0
        %11702 = vmatprep.mubr.f32.mxu0 0.0
        %11703 = vmatmul.mubr.f32.gmra.mrb[0].mxu0 %v11095
        %v11704 = vpop.f32.mrb[0].mxu0
        %v11705 = vadd.f32 0.0, %v11704
        %v11706 = vpop.f32.mrb[0].mxu0
        %11707 = vmatprep.mubr.f32.mxu0 0.0
        %11708 = vmatmul.mubr.f32.gmra.mrb[0].mxu0 %v11098
        %v11709 = vpop.f32.mrb[0].mxu0
        %v11710 = vadd.f32 0.0, %v11709
        %v11711 = vpop.f32.mrb[0].mxu0
        %11712 = vmatprep.mubr.f32.mxu0 0.0
        %11713 = vmatmul.mubr.f32.gmra.mrb[0].mxu0 %v11101
        %v11714 = vpop.f32.mrb[0].mxu0
        %v11715 = vadd.f32 0.0, %v11714
        %v11716 = vpop.f32.mrb[0].mxu0
        %11717 = vmatprep.mubr.f32.mxu0 0.0
        %11718 = vmatmul.mubr.f32.gmra.mrb[0].mxu0 %v11104
        %v11719 = vpop.f32.mrb[0].mxu0
        %v11720 = vadd.f32 0.0, %v11719
        %v11721 = vpop.f32.mrb[0].mxu0
        %11722 = vmatprep.mubr.f32.mxu0 0.0
        %11723 = vmatmul.mubr.f32.gmra.mrb[0].mxu0 %v11107
        %v11724 = vpop.f32.mrb[0].mxu0
        %v11725 = vadd.f32 0.0, %v11724
        %v11726 = vpop.f32.mrb[0].mxu0
        %11727 = vmatprep.mubr.f32.mxu0 0.0
        %11728 = vmatmul.mubr.f32.gmra.mrb[0].mxu0 %v11110
        %v11729 = vpop.f32.mrb[0].mxu0
        %v11730 = vadd.f32 0.0, %v11729
        %v11731 = vpop.f32.mrb[0].mxu0
        %11732 = vmatprep.mubr.f32.mxu0 0.0
        %11733 = vmatmul.mubr.f32.gmra.mrb[0].mxu0 %v11113
        %v11734 = vpop.f32.mrb[0].mxu0
        %v11735 = vadd.f32 0.0, %v11734
        %v11736 = vpop.f32.mrb[0].mxu0
        %11737 = vmatprep.mubr.f32.mxu0 0.0
        %11738 = vmatmul.mubr.f32.gmra.mrb[0].mxu0 %v11116
        %v11739 = vpop.f32.mrb[0].mxu0
        %v11740 = vadd.f32 0.0, %v11739
        %v11741 = vpop.f32.mrb[0].mxu0
        %11742 = vmatprep.mubr.f32.mxu0 0.0
        %11743 = vmatmul.mubr.f32.gmra.mrb[0].mxu0 %v11119
        %v11744 = vpop.f32.mrb[0].mxu0
        %v11745 = vadd.f32 0.0, %v11744
        %v11746 = vpop.f32.mrb[0].mxu0
        %11747 = vmatprep.mubr.f32.mxu0 0.0
        %11748 = vmatmul.mubr.f32.gmra.mrb[0].mxu0 %v11122
        %v11749 = vpop.f32.mrb[0].mxu0
        %v11750 = vadd.f32 0.0, %v11749
        %v11751 = vpop.f32.mrb[0].mxu0
        %11752 = vmatprep.mubr.f32.mxu0 0.0
        %11753 = vmatmul.mubr.f32.gmra.mrb[0].mxu0 %v11125
        %v11754 = vpop.f32.mrb[0].mxu0
        %v11755 = vadd.f32 0.0, %v11754
        %v11756 = vpop.f32.mrb[0].mxu0
        %11757 = vmatprep.mubr.f32.mxu0 0.0
        %11758 = vmatmul.mubr.f32.gmra.mrb[0].mxu0 %v11128
        %v11759 = vpop.f32.mrb[0].mxu0
        %v11760 = vadd.f32 0.0, %v11759
        %v11761 = vpop.f32.mrb[0].mxu0
        %11762 = vmatprep.mubr.f32.mxu0 0.0
        %11763 = vmatmul.mubr.f32.gmra.mrb[0].mxu0 %v11131
        %v11764 = vpop.f32.mrb[0].mxu0
        %v11765 = vadd.f32 0.0, %v11764
        %v11766 = vpop.f32.mrb[0].mxu0
        %11767 = vmatprep.mubr.f32.mxu0 0.0
        %11768 = vmatmul.mubr.f32.gmra.mrb[0].mxu0 %v11134
        %v11769 = vpop.f32.mrb[0].mxu0
        %v11770 = vadd.f32 0.0, %v11769
        %v11771 = vpop.f32.mrb[0].mxu0
        %11772 = vmatprep.mubr.f32.mxu0 0.0
        %11773 = vmatmul.mubr.f32.gmra.mrb[0].mxu0 %v11137
        %v11774 = vpop.f32.mrb[0].mxu0
        %v11775 = vadd.f32 0.0, %v11774
        %v11776 = vpop.f32.mrb[0].mxu0
        %11777 = vmatprep.mubr.f32.mxu0 0.0
        %11778 = vmatmul.mubr.f32.gmra.mrb[0].mxu0 %v11140
        %v11779 = vpop.f32.mrb[0].mxu0
        %v11780 = vadd.f32 0.0, %v11779
        %v11781 = vpop.f32.mrb[0].mxu0
        %11782 = vmatprep.mubr.f32.mxu0 0.0
        %11783 = vmatmul.mubr.f32.gmra.mrb[0].mxu0 %v11143
        %v11784 = vpop.f32.mrb[0].mxu0
        %v11785 = vadd.f32 0.0, %v11784
        %v11786 = vpop.f32.mrb[0].mxu0
        %11787 = vmatprep.mubr.f32.mxu0 0.0
        %11788 = vmatmul.mubr.f32.gmra.mrb[0].mxu0 %v11146
        %v11789 = vpop.f32.mrb[0].mxu0
        %v11790 = vadd.f32 0.0, %v11789
        %v11791 = vpop.f32.mrb[0].mxu0
        %11792 = vmatprep.mubr.f32.mxu0 0.0
        %11793 = vmatmul.mubr.f32.gmra.mrb[0].mxu0 %v11149
        %v11794 = vpop.f32.mrb[0].mxu0
        %v11795 = vadd.f32 0.0, %v11794
        %v11796 = vpop.f32.mrb[0].mxu0
        %11797 = vmatprep.mubr.f32.mxu0 0.0
        %11798 = vmatmul.mubr.f32.gmra.mrb[0].mxu0 %v11152
        %v11799 = vpop.f32.mrb[0].mxu0
        %v11800 = vadd.f32 0.0, %v11799
        %v11801 = vpop.f32.mrb[0].mxu0
        %11802 = vmatprep.mubr.f32.mxu0 0.0
        %11803 = vmatmul.mubr.f32.gmra.mrb[0].mxu0 %v11155
        %v11804 = vpop.f32.mrb[0].mxu0
        %v11805 = vadd.f32 0.0, %v11804
        %v11806 = vpop.f32.mrb[0].mxu0
        %11807 = vmatprep.mubr.f32.mxu0 0.0
        %11808 = vmatmul.mubr.f32.gmra.mrb[0].mxu0 %v11158
        %v11809 = vpop.f32.mrb[0].mxu0
        %v11810 = vadd.f32 0.0, %v11809
        %v11811 = vpop.f32.mrb[0].mxu0
        %11812 = vmatprep.mubr.f32.mxu0 0.0
        %11813 = vmatmul.mubr.f32.gmra.mrb[0].mxu0 %v11161
        %v11814 = vpop.f32.mrb[0].mxu0
        %v11815 = vadd.f32 0.0, %v11814
        %v11816 = vpop.f32.mrb[0].mxu0
        %11817 = vmatprep.mubr.f32.mxu0 0.0
        %11818 = vmatmul.mubr.f32.gmra.mrb[0].mxu0 %v11164
        %v11819 = vpop.f32.mrb[0].mxu0
        %v11820 = vadd.f32 0.0, %v11819
        %v11821 = vpop.f32.mrb[0].mxu0
        %11822 = vmatprep.mubr.f32.mxu0 0.0
        %11823 = vmatmul.mubr.f32.gmra.mrb[0].mxu0 %v11167
        %v11824 = vpop.f32.mrb[0].mxu0
        %v11825 = vadd.f32 0.0, %v11824
        %v11826 = vpop.f32.mrb[0].mxu0
        %11827 = vmatprep.mubr.f32.mxu0 0.0
        %11828 = vmatmul.mubr.f32.gmra.mrb[0].mxu0 %v11170
        %v11829 = vpop.f32.mrb[0].mxu0
        %v11830 = vadd.f32 0.0, %v11829
        %v11831 = vpop.f32.mrb[0].mxu0
        %11832 = vmatprep.mubr.f32.mxu0 0.0
        %11833 = vmatmul.mubr.f32.gmra.mrb[0].mxu0 %v11173
        %v11834 = vpop.f32.mrb[0].mxu0
        %v11835 = vadd.f32 0.0, %v11834
        %v11836 = vpop.f32.mrb[0].mxu0
        %11837 = vmatprep.mubr.f32.mxu0 0.0
        %11838 = vmatmul.mubr.f32.gmra.mrb[0].mxu0 %v11176
        %v11839 = vpop.f32.mrb[0].mxu0
        %v11840 = vadd.f32 0.0, %v11839
        %v11841 = vpop.f32.mrb[0].mxu0
        %11842 = vmatprep.mubr.f32.mxu0 0.0
        %11843 = vmatmul.mubr.f32.gmra.mrb[0].mxu0 %v11179
        %v11844 = vpop.f32.mrb[0].mxu0
        %v11845 = vadd.f32 0.0, %v11844
        %v11846 = vpop.f32.mrb[0].mxu0
        %11847 = vmatprep.mubr.f32.mxu0 0.0
        %11848 = vmatmul.mubr.f32.gmra.mrb[0].mxu0 %v11182
        %v11849 = vpop.f32.mrb[0].mxu0
        %v11850 = vadd.f32 0.0, %v11849
        %v11851 = vpop.f32.mrb[0].mxu0
        %11852 = vmatprep.mubr.f32.mxu0 0.0
        %11853 = vmatmul.mubr.f32.gmra.mrb[0].mxu0 %v11185
        %v11854 = vpop.f32.mrb[0].mxu0
        %v11855 = vadd.f32 0.0, %v11854
        %v11856 = vpop.f32.mrb[0].mxu0
        %11857 = vmatprep.mubr.f32.mxu0 0.0
        %11858 = vmatmul.mubr.f32.gmra.mrb[0].mxu0 %v11188
        %v11859 = vpop.f32.mrb[0].mxu0
        %v11860 = vadd.f32 0.0, %v11859
        %v11861 = vpop.f32.mrb[0].mxu0
        %11862 = vmatprep.mubr.f32.mxu0 0.0
        %11863 = vmatmul.mubr.f32.gmra.mrb[0].mxu0 %v11191
        %v11864 = vpop.f32.mrb[0].mxu0
        %v11865 = vadd.f32 0.0, %v11864
        %v11866 = vpop.f32.mrb[0].mxu0
        %11867 = vmatprep.mubr.f32.mxu0 0.0
        %11868 = vmatmul.mubr.f32.gmra.mrb[0].mxu0 %v11194
        %v11869 = vpop.f32.mrb[0].mxu0
        %v11870 = vadd.f32 0.0, %v11869
        %v11871 = vpop.f32.mrb[0].mxu0
        %11872 = vmatprep.mubr.f32.mxu0 0.0
        %11873 = vmatmul.mubr.f32.gmra.mrb[0].mxu0 %v11197
        %v11874 = vpop.f32.mrb[0].mxu0
        %v11875 = vadd.f32 0.0, %v11874
        %v11876 = vpop.f32.mrb[0].mxu0
        %11877 = vmatprep.mubr.f32.mxu0 0.0
        %11878 = vmatmul.mubr.f32.gmra.mrb[0].mxu0 %v11200
        %v11879 = vpop.f32.mrb[0].mxu0
        %v11880 = vadd.f32 0.0, %v11879
        %v11881 = vpop.f32.mrb[0].mxu0
        %11882 = vmatprep.mubr.f32.mxu0 0.0
        %11883 = vmatmul.mubr.f32.gmra.mrb[0].mxu0 %v11203
        %v11884 = vpop.f32.mrb[0].mxu0
        %v11885 = vadd.f32 0.0, %v11884
        %v11886 = vpop.f32.mrb[0].mxu0
        %11887 = vmatprep.mubr.f32.mxu0 0.0
        %11888 = vmatmul.mubr.f32.gmra.mrb[0].mxu0 %v11206
        %v11889 = vpop.f32.mrb[0].mxu0
        %v11890 = vadd.f32 0.0, %v11889
        %v11891 = vpop.f32.mrb[0].mxu0
        %11892 = vmatprep.mubr.f32.mxu0 0.0
        %11893 = vmatmul.mubr.f32.gmra.mrb[0].mxu0 %v11209
        %v11894 = vpop.f32.mrb[0].mxu0
        %v11895 = vadd.f32 0.0, %v11894
        %v11896 = vpop.f32.mrb[0].mxu0
        %11897 = vmatprep.mubr.f32.mxu0 0.0
        %11898 = vmatmul.mubr.f32.gmra.mrb[0].mxu0 %v11212
        %v11899 = vpop.f32.mrb[0].mxu0
        %v11900 = vadd.f32 0.0, %v11899
        %v11901 = vpop.f32.mrb[0].mxu0
        %11902 = vmatprep.mubr.f32.mxu0 0.0
        %11903 = vmatmul.mubr.f32.gmra.mrb[0].mxu0 %v11215
        %v11904 = vpop.f32.mrb[0].mxu0
        %v11905 = vadd.f32 0.0, %v11904
        %v11906 = vpop.f32.mrb[0].mxu0
        %11907 = vmatprep.mubr.f32.mxu0 0.0
        %11908 = vmatmul.mubr.f32.gmra.mrb[0].mxu0 %v11218
        %v11909 = vpop.f32.mrb[0].mxu0
        %v11910 = vadd.f32 0.0, %v11909
        %v11911 = vpop.f32.mrb[0].mxu0
        %11912 = vmatprep.mubr.f32.mxu0 0.0
        %11913 = vmatmul.mubr.f32.gmra.mrb[0].mxu0 %v11221
        %v11914 = vpop.f32.mrb[0].mxu0
        %v11915 = vadd.f32 0.0, %v11914
        %v11916 = vpop.f32.mrb[0].mxu0
        %11917 = vmatprep.mubr.f32.mxu0 0.0
        %11918 = vmatmul.mubr.f32.gmra.mrb[0].mxu0 %v11224
        %v11919 = vpop.f32.mrb[0].mxu0
        %v11920 = vadd.f32 0.0, %v11919
        %v11921 = vpop.f32.mrb[0].mxu0
        %11922 = vmatprep.mubr.f32.mxu0 0.0
        %11923 = vmatmul.mubr.f32.gmra.mrb[0].mxu0 %v11227
        %v11924 = vpop.f32.mrb[0].mxu0
        %v11925 = vadd.f32 0.0, %v11924
        %v11926 = vpop.f32.mrb[0].mxu0
        %11927 = vmatprep.mubr.f32.mxu0 0.0
        %11928 = vmatmul.mubr.f32.gmra.mrb[0].mxu0 %v11230
        %v11929 = vpop.f32.mrb[0].mxu0
        %v11930 = vadd.f32 0.0, %v11929
        %v11931 = vpop.f32.mrb[0].mxu0
        %11932 = vmatprep.mubr.f32.mxu0 0.0
        %11933 = vmatmul.mubr.f32.gmra.mrb[0].mxu0 %v11233
        %v11934 = vpop.f32.mrb[0].mxu0
        %v11935 = vadd.f32 0.0, %v11934
        %v11936 = vpop.f32.mrb[0].mxu0
        %11937 = vmatprep.mubr.f32.mxu0 0.0
        %11938 = vmatmul.mubr.f32.gmra.mrb[0].mxu0 %v11236
        %v11939 = vpop.f32.mrb[0].mxu0
        %v11940 = vadd.f32 0.0, %v11939
        %v11941 = vpop.f32.mrb[0].mxu0
        %11942 = vdwg.mxu0
        %v11943 = vadd.f32 %v10596, %v11305
        %v11944 = vadd.f32 %v10597, %v11310
        %v11945 = vadd.f32 %v10598, %v11315
        %v11946 = vadd.f32 %v10599, %v11320
        %v11947 = vadd.f32 %v10600, %v11325
        %v11948 = vadd.f32 %v10601, %v11330
        %v11949 = vadd.f32 %v10602, %v11335
        %v11950 = vadd.f32 %v10603, %v11340
        %v11951 = vadd.f32 %v10604, %v11345
        %v11952 = vadd.f32 %v10605, %v11350
        %v11953 = vadd.f32 %v10606, %v11355
        %v11954 = vadd.f32 %v10607, %v11360
        %v11955 = vadd.f32 %v10608, %v11365
        %v11956 = vadd.f32 %v10609, %v11370
        %v11957 = vadd.f32 %v10610, %v11375
        %v11958 = vadd.f32 %v10611, %v11380
        %v11959 = vadd.f32 %v10612, %v11385
        %v11960 = vadd.f32 %v10613, %v11390
        %v11961 = vadd.f32 %v10614, %v11395
        %v11962 = vadd.f32 %v10615, %v11400
        %v11963 = vadd.f32 %v10616, %v11405
        %v11964 = vadd.f32 %v10617, %v11410
        %v11965 = vadd.f32 %v10618, %v11415
        %v11966 = vadd.f32 %v10619, %v11420
        %v11967 = vadd.f32 %v10620, %v11425
        %v11968 = vadd.f32 %v10621, %v11430
        %v11969 = vadd.f32 %v10622, %v11435
        %v11970 = vadd.f32 %v10623, %v11440
        %v11971 = vadd.f32 %v10624, %v11445
        %v11972 = vadd.f32 %v10625, %v11450
        %v11973 = vadd.f32 %v10626, %v11455
        %v11974 = vadd.f32 %v10627, %v11460
        %v11975 = vadd.f32 %v10628, %v11465
        %v11976 = vadd.f32 %v10629, %v11470
        %v11977 = vadd.f32 %v10630, %v11475
        %v11978 = vadd.f32 %v10631, %v11480
        %v11979 = vadd.f32 %v10632, %v11485
        %v11980 = vadd.f32 %v10633, %v11490
        %v11981 = vadd.f32 %v10634, %v11495
        %v11982 = vadd.f32 %v10635, %v11500
        %v11983 = vadd.f32 %v10636, %v11505
        %v11984 = vadd.f32 %v10637, %v11510
        %v11985 = vadd.f32 %v10638, %v11515
        %v11986 = vadd.f32 %v10639, %v11520
        %v11987 = vadd.f32 %v10640, %v11525
        %v11988 = vadd.f32 %v10641, %v11530
        %v11989 = vadd.f32 %v10642, %v11535
        %v11990 = vadd.f32 %v10643, %v11540
        %v11991 = vadd.f32 %v10644, %v11545
        %v11992 = vadd.f32 %v10645, %v11550
        %v11993 = vadd.f32 %v10646, %v11555
        %v11994 = vadd.f32 %v10647, %v11560
        %v11995 = vadd.f32 %v10648, %v11565
        %v11996 = vadd.f32 %v10649, %v11570
        %v11997 = vadd.f32 %v10650, %v11575
        %v11998 = vadd.f32 %v10651, %v11580
        %v11999 = vadd.f32 %v10652, %v11585
        %v12000 = vadd.f32 %v10653, %v11590
        %v12001 = vadd.f32 %v10654, %v11595
        %v12002 = vadd.f32 %v10655, %v11600
        %v12003 = vadd.f32 %v10656, %v11605
        %v12004 = vadd.f32 %v10657, %v11610
        %v12005 = vadd.f32 %v10658, %v11615
        %v12006 = vadd.f32 %v10659, %v11620
        %v12007 = vadd.f32 %v10660, %v11625
        %v12008 = vadd.f32 %v10661, %v11630
        %v12009 = vadd.f32 %v10662, %v11635
        %v12010 = vadd.f32 %v10663, %v11640
        %v12011 = vadd.f32 %v10664, %v11645
        %v12012 = vadd.f32 %v10665, %v11650
        %v12013 = vadd.f32 %v10666, %v11655
        %v12014 = vadd.f32 %v10667, %v11660
        %v12015 = vadd.f32 %v10668, %v11665
        %v12016 = vadd.f32 %v10669, %v11670
        %v12017 = vadd.f32 %v10670, %v11675
        %v12018 = vadd.f32 %v10671, %v11680
        %v12019 = vadd.f32 %v10672, %v11685
        %v12020 = vadd.f32 %v10673, %v11690
        %v12021 = vadd.f32 %v10674, %v11695
        %v12022 = vadd.f32 %v10675, %v11700
        %v12023 = vadd.f32 %v10676, %v11705
        %v12024 = vadd.f32 %v10677, %v11710
        %v12025 = vadd.f32 %v10678, %v11715
        %v12026 = vadd.f32 %v10679, %v11720
        %v12027 = vadd.f32 %v10680, %v11725
        %v12028 = vadd.f32 %v10681, %v11730
        %v12029 = vadd.f32 %v10682, %v11735
        %v12030 = vadd.f32 %v10683, %v11740
        %v12031 = vadd.f32 %v10684, %v11745
        %v12032 = vadd.f32 %v10685, %v11750
        %v12033 = vadd.f32 %v10686, %v11755
        %v12034 = vadd.f32 %v10687, %v11760
        %v12035 = vadd.f32 %v10688, %v11765
        %v12036 = vadd.f32 %v10689, %v11770
        %v12037 = vadd.f32 %v10690, %v11775
        %v12038 = vadd.f32 %v10691, %v11780
        %v12039 = vadd.f32 %v10692, %v11785
        %v12040 = vadd.f32 %v10693, %v11790
        %v12041 = vadd.f32 %v10694, %v11795
        %v12042 = vadd.f32 %v10695, %v11800
        %v12043 = vadd.f32 %v10696, %v11805
        %v12044 = vadd.f32 %v10697, %v11810
        %v12045 = vadd.f32 %v10698, %v11815
        %v12046 = vadd.f32 %v10699, %v11820
        %v12047 = vadd.f32 %v10700, %v11825
        %v12048 = vadd.f32 %v10701, %v11830
        %v12049 = vadd.f32 %v10702, %v11835
        %v12050 = vadd.f32 %v10703, %v11840
        %v12051 = vadd.f32 %v10704, %v11845
        %v12052 = vadd.f32 %v10705, %v11850
        %v12053 = vadd.f32 %v10706, %v11855
        %v12054 = vadd.f32 %v10707, %v11860
        %v12055 = vadd.f32 %v10708, %v11865
        %v12056 = vadd.f32 %v10709, %v11870
        %v12057 = vadd.f32 %v10710, %v11875
        %v12058 = vadd.f32 %v10711, %v11880
        %v12059 = vadd.f32 %v10712, %v11885
        %v12060 = vadd.f32 %v10713, %v11890
        %v12061 = vadd.f32 %v10714, %v11895
        %v12062 = vadd.f32 %v10715, %v11900
        %v12063 = vadd.f32 %v10716, %v11905
        %v12064 = vadd.f32 %v10717, %v11910
        %v12065 = vadd.f32 %v10718, %v11915
        %v12066 = vadd.f32 %v10719, %v11920
        %v12067 = vadd.f32 %v10720, %v11925
        %v12068 = vadd.f32 %v10721, %v11930
        %v12069 = vadd.f32 %v10722, %v11935
        %v12070 = vadd.f32 %v10723, %v11940
        %v12071 = vld [vmem:[%s2] sm:$0x1]
        %v12073 = vlaneseq
        %v12074 = vshrl.u32 %v12073, 7
        %v12075 = vsub.s32 0, %v12074
        %v12076 = vrot.slane %v12071, %v12075
        %v12078 = vmul.f32 %v11943, %v12076
        %v12079 = vmul.f32 %v11944, %v12076
        %v12080 = vmul.f32 %v11945, %v12076
        %v12081 = vmul.f32 %v11946, %v12076
        %v12082 = vmul.f32 %v11947, %v12076
        %v12083 = vmul.f32 %v11948, %v12076
        %v12084 = vmul.f32 %v11949, %v12076
        %v12085 = vmul.f32 %v11950, %v12076
        %v12086 = vmul.f32 %v11951, %v12076
        %v12087 = vmul.f32 %v11952, %v12076
        %v12088 = vmul.f32 %v11953, %v12076
        %v12089 = vmul.f32 %v11954, %v12076
        %v12090 = vmul.f32 %v11955, %v12076
        %v12091 = vmul.f32 %v11956, %v12076
        %v12092 = vmul.f32 %v11957, %v12076
        %v12093 = vmul.f32 %v11958, %v12076
        %v12094 = vmul.f32 %v11959, %v12076
        %v12095 = vmul.f32 %v11960, %v12076
        %v12096 = vmul.f32 %v11961, %v12076
        %v12097 = vmul.f32 %v11962, %v12076
        %v12098 = vmul.f32 %v11963, %v12076
        %v12099 = vmul.f32 %v11964, %v12076
        %v12100 = vmul.f32 %v11965, %v12076
        %v12101 = vmul.f32 %v11966, %v12076
        %v12102 = vmul.f32 %v11967, %v12076
        %v12103 = vmul.f32 %v11968, %v12076
        %v12104 = vmul.f32 %v11969, %v12076
        %v12105 = vmul.f32 %v11970, %v12076
        %v12106 = vmul.f32 %v11971, %v12076
        %v12107 = vmul.f32 %v11972, %v12076
        %v12108 = vmul.f32 %v11973, %v12076
        %v12109 = vmul.f32 %v11974, %v12076
        %v12110 = vmul.f32 %v11975, %v12076
        %v12111 = vmul.f32 %v11976, %v12076
        %v12112 = vmul.f32 %v11977, %v12076
        %v12113 = vmul.f32 %v11978, %v12076
        %v12114 = vmul.f32 %v11979, %v12076
        %v12115 = vmul.f32 %v11980, %v12076
        %v12116 = vmul.f32 %v11981, %v12076
        %v12117 = vmul.f32 %v11982, %v12076
        %v12118 = vmul.f32 %v11983, %v12076
        %v12119 = vmul.f32 %v11984, %v12076
        %v12120 = vmul.f32 %v11985, %v12076
        %v12121 = vmul.f32 %v11986, %v12076
        %v12122 = vmul.f32 %v11987, %v12076
        %v12123 = vmul.f32 %v11988, %v12076
        %v12124 = vmul.f32 %v11989, %v12076
        %v12125 = vmul.f32 %v11990, %v12076
        %v12126 = vmul.f32 %v11991, %v12076
        %v12127 = vmul.f32 %v11992, %v12076
        %v12128 = vmul.f32 %v11993, %v12076
        %v12129 = vmul.f32 %v11994, %v12076
        %v12130 = vmul.f32 %v11995, %v12076
        %v12131 = vmul.f32 %v11996, %v12076
        %v12132 = vmul.f32 %v11997, %v12076
        %v12133 = vmul.f32 %v11998, %v12076
        %v12134 = vmul.f32 %v11999, %v12076
        %v12135 = vmul.f32 %v12000, %v12076
        %v12136 = vmul.f32 %v12001, %v12076
        %v12137 = vmul.f32 %v12002, %v12076
        %v12138 = vmul.f32 %v12003, %v12076
        %v12139 = vmul.f32 %v12004, %v12076
        %v12140 = vmul.f32 %v12005, %v12076
        %v12141 = vmul.f32 %v12006, %v12076
        %v12142 = vmul.f32 %v12007, %v12076
        %v12143 = vmul.f32 %v12008, %v12076
        %v12144 = vmul.f32 %v12009, %v12076
        %v12145 = vmul.f32 %v12010, %v12076
        %v12146 = vmul.f32 %v12011, %v12076
        %v12147 = vmul.f32 %v12012, %v12076
        %v12148 = vmul.f32 %v12013, %v12076
        %v12149 = vmul.f32 %v12014, %v12076
        %v12150 = vmul.f32 %v12015, %v12076
        %v12151 = vmul.f32 %v12016, %v12076
        %v12152 = vmul.f32 %v12017, %v12076
        %v12153 = vmul.f32 %v12018, %v12076
        %v12154 = vmul.f32 %v12019, %v12076
        %v12155 = vmul.f32 %v12020, %v12076
        %v12156 = vmul.f32 %v12021, %v12076
        %v12157 = vmul.f32 %v12022, %v12076
        %v12158 = vmul.f32 %v12023, %v12076
        %v12159 = vmul.f32 %v12024, %v12076
        %v12160 = vmul.f32 %v12025, %v12076
        %v12161 = vmul.f32 %v12026, %v12076
        %v12162 = vmul.f32 %v12027, %v12076
        %v12163 = vmul.f32 %v12028, %v12076
        %v12164 = vmul.f32 %v12029, %v12076
        %v12165 = vmul.f32 %v12030, %v12076
        %v12166 = vmul.f32 %v12031, %v12076
        %v12167 = vmul.f32 %v12032, %v12076
        %v12168 = vmul.f32 %v12033, %v12076
        %v12169 = vmul.f32 %v12034, %v12076
        %v12170 = vmul.f32 %v12035, %v12076
        %v12171 = vmul.f32 %v12036, %v12076
        %v12172 = vmul.f32 %v12037, %v12076
        %v12173 = vmul.f32 %v12038, %v12076
        %v12174 = vmul.f32 %v12039, %v12076
        %v12175 = vmul.f32 %v12040, %v12076
        %v12176 = vmul.f32 %v12041, %v12076
        %v12177 = vmul.f32 %v12042, %v12076
        %v12178 = vmul.f32 %v12043, %v12076
        %v12179 = vmul.f32 %v12044, %v12076
        %v12180 = vmul.f32 %v12045, %v12076
        %v12181 = vmul.f32 %v12046, %v12076
        %v12182 = vmul.f32 %v12047, %v12076
        %v12183 = vmul.f32 %v12048, %v12076
        %v12184 = vmul.f32 %v12049, %v12076
        %v12185 = vmul.f32 %v12050, %v12076
        %v12186 = vmul.f32 %v12051, %v12076
        %v12187 = vmul.f32 %v12052, %v12076
        %v12188 = vmul.f32 %v12053, %v12076
        %v12189 = vmul.f32 %v12054, %v12076
        %v12190 = vmul.f32 %v12055, %v12076
        %v12191 = vmul.f32 %v12056, %v12076
        %v12192 = vmul.f32 %v12057, %v12076
        %v12193 = vmul.f32 %v12058, %v12076
        %v12194 = vmul.f32 %v12059, %v12076
        %v12195 = vmul.f32 %v12060, %v12076
        %v12196 = vmul.f32 %v12061, %v12076
        %v12197 = vmul.f32 %v12062, %v12076
        %v12198 = vmul.f32 %v12063, %v12076
        %v12199 = vmul.f32 %v12064, %v12076
        %v12200 = vmul.f32 %v12065, %v12076
        %v12201 = vmul.f32 %v12066, %v12076
        %v12202 = vmul.f32 %v12067, %v12076
        %v12203 = vmul.f32 %v12068, %v12076
        %v12204 = vmul.f32 %v12069, %v12076
        %v12205 = vmul.f32 %v12070, %v12076
        %v12206 = vld [vmem:[%s3] sm:$0x1]
        %v12208 = vlaneseq
        %v12209 = vshrl.u32 %v12208, 7
        %v12210 = vsub.s32 0, %v12209
        %v12211 = vrot.slane %v12206, %v12210
        %v12213 = vadd.f32 %v12078, %v12211
        %v12214 = vadd.f32 %v12079, %v12211
        %v12215 = vadd.f32 %v12080, %v12211
        %v12216 = vadd.f32 %v12081, %v12211
        %v12217 = vadd.f32 %v12082, %v12211
        %v12218 = vadd.f32 %v12083, %v12211
        %v12219 = vadd.f32 %v12084, %v12211
        %v12220 = vadd.f32 %v12085, %v12211
        %v12221 = vadd.f32 %v12086, %v12211
        %v12222 = vadd.f32 %v12087, %v12211
        %v12223 = vadd.f32 %v12088, %v12211
        %v12224 = vadd.f32 %v12089, %v12211
        %v12225 = vadd.f32 %v12090, %v12211
        %v12226 = vadd.f32 %v12091, %v12211
        %v12227 = vadd.f32 %v12092, %v12211
        %v12228 = vadd.f32 %v12093, %v12211
        %v12229 = vadd.f32 %v12094, %v12211
        %v12230 = vadd.f32 %v12095, %v12211
        %v12231 = vadd.f32 %v12096, %v12211
        %v12232 = vadd.f32 %v12097, %v12211
        %v12233 = vadd.f32 %v12098, %v12211
        %v12234 = vadd.f32 %v12099, %v12211
        %v12235 = vadd.f32 %v12100, %v12211
        %v12236 = vadd.f32 %v12101, %v12211
        %v12237 = vadd.f32 %v12102, %v12211
        %v12238 = vadd.f32 %v12103, %v12211
        %v12239 = vadd.f32 %v12104, %v12211
        %v12240 = vadd.f32 %v12105, %v12211
        %v12241 = vadd.f32 %v12106, %v12211
        %v12242 = vadd.f32 %v12107, %v12211
        %v12243 = vadd.f32 %v12108, %v12211
        %v12244 = vadd.f32 %v12109, %v12211
        %v12245 = vadd.f32 %v12110, %v12211
        %v12246 = vadd.f32 %v12111, %v12211
        %v12247 = vadd.f32 %v12112, %v12211
        %v12248 = vadd.f32 %v12113, %v12211
        %v12249 = vadd.f32 %v12114, %v12211
        %v12250 = vadd.f32 %v12115, %v12211
        %v12251 = vadd.f32 %v12116, %v12211
        %v12252 = vadd.f32 %v12117, %v12211
        %v12253 = vadd.f32 %v12118, %v12211
        %v12254 = vadd.f32 %v12119, %v12211
        %v12255 = vadd.f32 %v12120, %v12211
        %v12256 = vadd.f32 %v12121, %v12211
        %v12257 = vadd.f32 %v12122, %v12211
        %v12258 = vadd.f32 %v12123, %v12211
        %v12259 = vadd.f32 %v12124, %v12211
        %v12260 = vadd.f32 %v12125, %v12211
        %v12261 = vadd.f32 %v12126, %v12211
        %v12262 = vadd.f32 %v12127, %v12211
        %v12263 = vadd.f32 %v12128, %v12211
        %v12264 = vadd.f32 %v12129, %v12211
        %v12265 = vadd.f32 %v12130, %v12211
        %v12266 = vadd.f32 %v12131, %v12211
        %v12267 = vadd.f32 %v12132, %v12211
        %v12268 = vadd.f32 %v12133, %v12211
        %v12269 = vadd.f32 %v12134, %v12211
        %v12270 = vadd.f32 %v12135, %v12211
        %v12271 = vadd.f32 %v12136, %v12211
        %v12272 = vadd.f32 %v12137, %v12211
        %v12273 = vadd.f32 %v12138, %v12211
        %v12274 = vadd.f32 %v12139, %v12211
        %v12275 = vadd.f32 %v12140, %v12211
        %v12276 = vadd.f32 %v12141, %v12211
        %v12277 = vadd.f32 %v12142, %v12211
        %v12278 = vadd.f32 %v12143, %v12211
        %v12279 = vadd.f32 %v12144, %v12211
        %v12280 = vadd.f32 %v12145, %v12211
        %v12281 = vadd.f32 %v12146, %v12211
        %v12282 = vadd.f32 %v12147, %v12211
        %v12283 = vadd.f32 %v12148, %v12211
        %v12284 = vadd.f32 %v12149, %v12211
        %v12285 = vadd.f32 %v12150, %v12211
        %v12286 = vadd.f32 %v12151, %v12211
        %v12287 = vadd.f32 %v12152, %v12211
        %v12288 = vadd.f32 %v12153, %v12211
        %v12289 = vadd.f32 %v12154, %v12211
        %v12290 = vadd.f32 %v12155, %v12211
        %v12291 = vadd.f32 %v12156, %v12211
        %v12292 = vadd.f32 %v12157, %v12211
        %v12293 = vadd.f32 %v12158, %v12211
        %v12294 = vadd.f32 %v12159, %v12211
        %v12295 = vadd.f32 %v12160, %v12211
        %v12296 = vadd.f32 %v12161, %v12211
        %v12297 = vadd.f32 %v12162, %v12211
        %v12298 = vadd.f32 %v12163, %v12211
        %v12299 = vadd.f32 %v12164, %v12211
        %v12300 = vadd.f32 %v12165, %v12211
        %v12301 = vadd.f32 %v12166, %v12211
        %v12302 = vadd.f32 %v12167, %v12211
        %v12303 = vadd.f32 %v12168, %v12211
        %v12304 = vadd.f32 %v12169, %v12211
        %v12305 = vadd.f32 %v12170, %v12211
        %v12306 = vadd.f32 %v12171, %v12211
        %v12307 = vadd.f32 %v12172, %v12211
        %v12308 = vadd.f32 %v12173, %v12211
        %v12309 = vadd.f32 %v12174, %v12211
        %v12310 = vadd.f32 %v12175, %v12211
        %v12311 = vadd.f32 %v12176, %v12211
        %v12312 = vadd.f32 %v12177, %v12211
        %v12313 = vadd.f32 %v12178, %v12211
        %v12314 = vadd.f32 %v12179, %v12211
        %v12315 = vadd.f32 %v12180, %v12211
        %v12316 = vadd.f32 %v12181, %v12211
        %v12317 = vadd.f32 %v12182, %v12211
        %v12318 = vadd.f32 %v12183, %v12211
        %v12319 = vadd.f32 %v12184, %v12211
        %v12320 = vadd.f32 %v12185, %v12211
        %v12321 = vadd.f32 %v12186, %v12211
        %v12322 = vadd.f32 %v12187, %v12211
        %v12323 = vadd.f32 %v12188, %v12211
        %v12324 = vadd.f32 %v12189, %v12211
        %v12325 = vadd.f32 %v12190, %v12211
        %v12326 = vadd.f32 %v12191, %v12211
        %v12327 = vadd.f32 %v12192, %v12211
        %v12328 = vadd.f32 %v12193, %v12211
        %v12329 = vadd.f32 %v12194, %v12211
        %v12330 = vadd.f32 %v12195, %v12211
        %v12331 = vadd.f32 %v12196, %v12211
        %v12332 = vadd.f32 %v12197, %v12211
        %v12333 = vadd.f32 %v12198, %v12211
        %v12334 = vadd.f32 %v12199, %v12211
        %v12335 = vadd.f32 %v12200, %v12211
        %v12336 = vadd.f32 %v12201, %v12211
        %v12337 = vadd.f32 %v12202, %v12211
        %v12338 = vadd.f32 %v12203, %v12211
        %v12339 = vadd.f32 %v12204, %v12211
        %v12340 = vadd.f32 %v12205, %v12211
        %v12341 = vmax.f32 %v12213, 0.0
        %v12342 = vmax.f32 %v12214, 0.0
        %v12343 = vmax.f32 %v12215, 0.0
        %v12344 = vmax.f32 %v12216, 0.0
        %v12345 = vmax.f32 %v12217, 0.0
        %v12346 = vmax.f32 %v12218, 0.0
        %v12347 = vmax.f32 %v12219, 0.0
        %v12348 = vmax.f32 %v12220, 0.0
        %v12349 = vmax.f32 %v12221, 0.0
        %v12350 = vmax.f32 %v12222, 0.0
        %v12351 = vmax.f32 %v12223, 0.0
        %v12352 = vmax.f32 %v12224, 0.0
        %v12353 = vmax.f32 %v12225, 0.0
        %v12354 = vmax.f32 %v12226, 0.0
        %v12355 = vmax.f32 %v12227, 0.0
        %v12356 = vmax.f32 %v12228, 0.0
        %v12357 = vmax.f32 %v12229, 0.0
        %v12358 = vmax.f32 %v12230, 0.0
        %v12359 = vmax.f32 %v12231, 0.0
        %v12360 = vmax.f32 %v12232, 0.0
        %v12361 = vmax.f32 %v12233, 0.0
        %v12362 = vmax.f32 %v12234, 0.0
        %v12363 = vmax.f32 %v12235, 0.0
        %v12364 = vmax.f32 %v12236, 0.0
        %v12365 = vmax.f32 %v12237, 0.0
        %v12366 = vmax.f32 %v12238, 0.0
        %v12367 = vmax.f32 %v12239, 0.0
        %v12368 = vmax.f32 %v12240, 0.0
        %v12369 = vmax.f32 %v12241, 0.0
        %v12370 = vmax.f32 %v12242, 0.0
        %v12371 = vmax.f32 %v12243, 0.0
        %v12372 = vmax.f32 %v12244, 0.0
        %v12373 = vmax.f32 %v12245, 0.0
        %v12374 = vmax.f32 %v12246, 0.0
        %v12375 = vmax.f32 %v12247, 0.0
        %v12376 = vmax.f32 %v12248, 0.0
        %v12377 = vmax.f32 %v12249, 0.0
        %v12378 = vmax.f32 %v12250, 0.0
        %v12379 = vmax.f32 %v12251, 0.0
        %v12380 = vmax.f32 %v12252, 0.0
        %v12381 = vmax.f32 %v12253, 0.0
        %v12382 = vmax.f32 %v12254, 0.0
        %v12383 = vmax.f32 %v12255, 0.0
        %v12384 = vmax.f32 %v12256, 0.0
        %v12385 = vmax.f32 %v12257, 0.0
        %v12386 = vmax.f32 %v12258, 0.0
        %v12387 = vmax.f32 %v12259, 0.0
        %v12388 = vmax.f32 %v12260, 0.0
        %v12389 = vmax.f32 %v12261, 0.0
        %v12390 = vmax.f32 %v12262, 0.0
        %v12391 = vmax.f32 %v12263, 0.0
        %v12392 = vmax.f32 %v12264, 0.0
        %v12393 = vmax.f32 %v12265, 0.0
        %v12394 = vmax.f32 %v12266, 0.0
        %v12395 = vmax.f32 %v12267, 0.0
        %v12396 = vmax.f32 %v12268, 0.0
        %v12397 = vmax.f32 %v12269, 0.0
        %v12398 = vmax.f32 %v12270, 0.0
        %v12399 = vmax.f32 %v12271, 0.0
        %v12400 = vmax.f32 %v12272, 0.0
        %v12401 = vmax.f32 %v12273, 0.0
        %v12402 = vmax.f32 %v12274, 0.0
        %v12403 = vmax.f32 %v12275, 0.0
        %v12404 = vmax.f32 %v12276, 0.0
        %v12405 = vmax.f32 %v12277, 0.0
        %v12406 = vmax.f32 %v12278, 0.0
        %v12407 = vmax.f32 %v12279, 0.0
        %v12408 = vmax.f32 %v12280, 0.0
        %v12409 = vmax.f32 %v12281, 0.0
        %v12410 = vmax.f32 %v12282, 0.0
        %v12411 = vmax.f32 %v12283, 0.0
        %v12412 = vmax.f32 %v12284, 0.0
        %v12413 = vmax.f32 %v12285, 0.0
        %v12414 = vmax.f32 %v12286, 0.0
        %v12415 = vmax.f32 %v12287, 0.0
        %v12416 = vmax.f32 %v12288, 0.0
        %v12417 = vmax.f32 %v12289, 0.0
        %v12418 = vmax.f32 %v12290, 0.0
        %v12419 = vmax.f32 %v12291, 0.0
        %v12420 = vmax.f32 %v12292, 0.0
        %v12421 = vmax.f32 %v12293, 0.0
        %v12422 = vmax.f32 %v12294, 0.0
        %v12423 = vmax.f32 %v12295, 0.0
        %v12424 = vmax.f32 %v12296, 0.0
        %v12425 = vmax.f32 %v12297, 0.0
        %v12426 = vmax.f32 %v12298, 0.0
        %v12427 = vmax.f32 %v12299, 0.0
        %v12428 = vmax.f32 %v12300, 0.0
        %v12429 = vmax.f32 %v12301, 0.0
        %v12430 = vmax.f32 %v12302, 0.0
        %v12431 = vmax.f32 %v12303, 0.0
        %v12432 = vmax.f32 %v12304, 0.0
        %v12433 = vmax.f32 %v12305, 0.0
        %v12434 = vmax.f32 %v12306, 0.0
        %v12435 = vmax.f32 %v12307, 0.0
        %v12436 = vmax.f32 %v12308, 0.0
        %v12437 = vmax.f32 %v12309, 0.0
        %v12438 = vmax.f32 %v12310, 0.0
        %v12439 = vmax.f32 %v12311, 0.0
        %v12440 = vmax.f32 %v12312, 0.0
        %v12441 = vmax.f32 %v12313, 0.0
        %v12442 = vmax.f32 %v12314, 0.0
        %v12443 = vmax.f32 %v12315, 0.0
        %v12444 = vmax.f32 %v12316, 0.0
        %v12445 = vmax.f32 %v12317, 0.0
        %v12446 = vmax.f32 %v12318, 0.0
        %v12447 = vmax.f32 %v12319, 0.0
        %v12448 = vmax.f32 %v12320, 0.0
        %v12449 = vmax.f32 %v12321, 0.0
        %v12450 = vmax.f32 %v12322, 0.0
        %v12451 = vmax.f32 %v12323, 0.0
        %v12452 = vmax.f32 %v12324, 0.0
        %v12453 = vmax.f32 %v12325, 0.0
        %v12454 = vmax.f32 %v12326, 0.0
        %v12455 = vmax.f32 %v12327, 0.0
        %v12456 = vmax.f32 %v12328, 0.0
        %v12457 = vmax.f32 %v12329, 0.0
        %v12458 = vmax.f32 %v12330, 0.0
        %v12459 = vmax.f32 %v12331, 0.0
        %v12460 = vmax.f32 %v12332, 0.0
        %v12461 = vmax.f32 %v12333, 0.0
        %v12462 = vmax.f32 %v12334, 0.0
        %v12463 = vmax.f32 %v12335, 0.0
        %v12464 = vmax.f32 %v12336, 0.0
        %v12465 = vmax.f32 %v12337, 0.0
        %v12466 = vmax.f32 %v12338, 0.0
        %v12467 = vmax.f32 %v12339, 0.0
        %v12468 = vmax.f32 %v12340, 0.0
        %vm12469 = vcmask 261120
        %12470 = vst.msk [vmem:[%s193] sm:$0xff] %vm12469, %v12341
        %12471 = vst.msk [vmem:[%s193 + $0x8] sm:$0xff] %vm12469, %v12342
        %12472 = vst.msk [vmem:[%s193 + $0x10] sm:$0xff] %vm12469, %v12343
        %12473 = vst.msk [vmem:[%s193 + $0x18] sm:$0xff] %vm12469, %v12344
        %12474 = vst.msk [vmem:[%s193 + $0x20] sm:$0xff] %vm12469, %v12345
        %12475 = vst.msk [vmem:[%s193 + $0x28] sm:$0xff] %vm12469, %v12346
        %12476 = vst.msk [vmem:[%s193 + $0x30] sm:$0xff] %vm12469, %v12347
        %12477 = vst.msk [vmem:[%s193 + $0x38] sm:$0xff] %vm12469, %v12348
        %12478 = vst.msk [vmem:[%s193 + $0x40] sm:$0xff] %vm12469, %v12349
        %12479 = vst.msk [vmem:[%s193 + $0x48] sm:$0xff] %vm12469, %v12350
        %12480 = vst.msk [vmem:[%s193 + $0x50] sm:$0xff] %vm12469, %v12351
        %12481 = vst.msk [vmem:[%s193 + $0x58] sm:$0xff] %vm12469, %v12352
        %12482 = vst.msk [vmem:[%s193 + $0x60] sm:$0xff] %vm12469, %v12353
        %12483 = vst.msk [vmem:[%s193 + $0x68] sm:$0xff] %vm12469, %v12354
        %12484 = vst.msk [vmem:[%s193 + $0x70] sm:$0xff] %vm12469, %v12355
        %12485 = vst.msk [vmem:[%s193 + $0x78] sm:$0xff] %vm12469, %v12356
        %12486 = vst.msk [vmem:[%s193 + $0x80] sm:$0xff] %vm12469, %v12357
        %12487 = vst.msk [vmem:[%s193 + $0x88] sm:$0xff] %vm12469, %v12358
        %12488 = vst.msk [vmem:[%s193 + $0x90] sm:$0xff] %vm12469, %v12359
        %12489 = vst.msk [vmem:[%s193 + $0x98] sm:$0xff] %vm12469, %v12360
        %12490 = vst.msk [vmem:[%s193 + $0xa0] sm:$0xff] %vm12469, %v12361
        %12491 = vst.msk [vmem:[%s193 + $0xa8] sm:$0xff] %vm12469, %v12362
        %12492 = vst.msk [vmem:[%s193 + $0xb0] sm:$0xff] %vm12469, %v12363
        %12493 = vst.msk [vmem:[%s193 + $0xb8] sm:$0xff] %vm12469, %v12364
        %12494 = vst.msk [vmem:[%s193 + $0xc0] sm:$0xff] %vm12469, %v12365
        %12495 = vst.msk [vmem:[%s193 + $0xc8] sm:$0xff] %vm12469, %v12366
        %12496 = vst.msk [vmem:[%s193 + $0xd0] sm:$0xff] %vm12469, %v12367
        %12497 = vst.msk [vmem:[%s193 + $0xd8] sm:$0xff] %vm12469, %v12368
        %12498 = vst.msk [vmem:[%s193 + $0xe0] sm:$0xff] %vm12469, %v12369
        %12499 = vst.msk [vmem:[%s193 + $0xe8] sm:$0xff] %vm12469, %v12370
        %12500 = vst.msk [vmem:[%s193 + $0xf0] sm:$0xff] %vm12469, %v12371
        %12501 = vst.msk [vmem:[%s193 + $0xf8] sm:$0xff] %vm12469, %v12372
        %12502 = vst.msk [vmem:[%s193 + $0x100] sm:$0xff] %vm12469, %v12373
        %12503 = vst.msk [vmem:[%s193 + $0x108] sm:$0xff] %vm12469, %v12374
        %12504 = vst.msk [vmem:[%s193 + $0x110] sm:$0xff] %vm12469, %v12375
        %12505 = vst.msk [vmem:[%s193 + $0x118] sm:$0xff] %vm12469, %v12376
        %12506 = vst.msk [vmem:[%s193 + $0x120] sm:$0xff] %vm12469, %v12377
        %12507 = vst.msk [vmem:[%s193 + $0x128] sm:$0xff] %vm12469, %v12378
        %12508 = vst.msk [vmem:[%s193 + $0x130] sm:$0xff] %vm12469, %v12379
        %12509 = vst.msk [vmem:[%s193 + $0x138] sm:$0xff] %vm12469, %v12380
        %12510 = vst.msk [vmem:[%s193 + $0x140] sm:$0xff] %vm12469, %v12381
        %12511 = vst.msk [vmem:[%s193 + $0x148] sm:$0xff] %vm12469, %v12382
        %12512 = vst.msk [vmem:[%s193 + $0x150] sm:$0xff] %vm12469, %v12383
        %12513 = vst.msk [vmem:[%s193 + $0x158] sm:$0xff] %vm12469, %v12384
        %12514 = vst.msk [vmem:[%s193 + $0x160] sm:$0xff] %vm12469, %v12385
        %12515 = vst.msk [vmem:[%s193 + $0x168] sm:$0xff] %vm12469, %v12386
        %12516 = vst.msk [vmem:[%s193 + $0x170] sm:$0xff] %vm12469, %v12387
        %12517 = vst.msk [vmem:[%s193 + $0x178] sm:$0xff] %vm12469, %v12388
        %12518 = vst.msk [vmem:[%s193 + $0x180] sm:$0xff] %vm12469, %v12389
        %12519 = vst.msk [vmem:[%s193 + $0x188] sm:$0xff] %vm12469, %v12390
        %12520 = vst.msk [vmem:[%s193 + $0x190] sm:$0xff] %vm12469, %v12391
        %12521 = vst.msk [vmem:[%s193 + $0x198] sm:$0xff] %vm12469, %v12392
        %12522 = vst.msk [vmem:[%s193 + $0x1a0] sm:$0xff] %vm12469, %v12393
        %12523 = vst.msk [vmem:[%s193 + $0x1a8] sm:$0xff] %vm12469, %v12394
        %12524 = vst.msk [vmem:[%s193 + $0x1b0] sm:$0xff] %vm12469, %v12395
        %12525 = vst.msk [vmem:[%s193 + $0x1b8] sm:$0xff] %vm12469, %v12396
        %12526 = vst.msk [vmem:[%s193 + $0x1c0] sm:$0xff] %vm12469, %v12397
        %12527 = vst.msk [vmem:[%s193 + $0x1c8] sm:$0xff] %vm12469, %v12398
        %12528 = vst.msk [vmem:[%s193 + $0x1d0] sm:$0xff] %vm12469, %v12399
        %12529 = vst.msk [vmem:[%s193 + $0x1d8] sm:$0xff] %vm12469, %v12400
        %12530 = vst.msk [vmem:[%s193 + $0x1e0] sm:$0xff] %vm12469, %v12401
        %12531 = vst.msk [vmem:[%s193 + $0x1e8] sm:$0xff] %vm12469, %v12402
        %12532 = vst.msk [vmem:[%s193 + $0x1f0] sm:$0xff] %vm12469, %v12403
        %12533 = vst.msk [vmem:[%s193 + $0x1f8] sm:$0xff] %vm12469, %v12404
        %12534 = vst.msk [vmem:[%s193 + $0x200] sm:$0xff] %vm12469, %v12405
        %12535 = vst.msk [vmem:[%s193 + $0x208] sm:$0xff] %vm12469, %v12406
        %12536 = vst.msk [vmem:[%s193 + $0x210] sm:$0xff] %vm12469, %v12407
        %12537 = vst.msk [vmem:[%s193 + $0x218] sm:$0xff] %vm12469, %v12408
        %12538 = vst.msk [vmem:[%s193 + $0x220] sm:$0xff] %vm12469, %v12409
        %12539 = vst.msk [vmem:[%s193 + $0x228] sm:$0xff] %vm12469, %v12410
        %12540 = vst.msk [vmem:[%s193 + $0x230] sm:$0xff] %vm12469, %v12411
        %12541 = vst.msk [vmem:[%s193 + $0x238] sm:$0xff] %vm12469, %v12412
        %12542 = vst.msk [vmem:[%s193 + $0x240] sm:$0xff] %vm12469, %v12413
        %12543 = vst.msk [vmem:[%s193 + $0x248] sm:$0xff] %vm12469, %v12414
        %12544 = vst.msk [vmem:[%s193 + $0x250] sm:$0xff] %vm12469, %v12415
        %12545 = vst.msk [vmem:[%s193 + $0x258] sm:$0xff] %vm12469, %v12416
        %12546 = vst.msk [vmem:[%s193 + $0x260] sm:$0xff] %vm12469, %v12417
        %12547 = vst.msk [vmem:[%s193 + $0x268] sm:$0xff] %vm12469, %v12418
        %12548 = vst.msk [vmem:[%s193 + $0x270] sm:$0xff] %vm12469, %v12419
        %12549 = vst.msk [vmem:[%s193 + $0x278] sm:$0xff] %vm12469, %v12420
        %12550 = vst.msk [vmem:[%s193 + $0x280] sm:$0xff] %vm12469, %v12421
        %12551 = vst.msk [vmem:[%s193 + $0x288] sm:$0xff] %vm12469, %v12422
        %12552 = vst.msk [vmem:[%s193 + $0x290] sm:$0xff] %vm12469, %v12423
        %12553 = vst.msk [vmem:[%s193 + $0x298] sm:$0xff] %vm12469, %v12424
        %12554 = vst.msk [vmem:[%s193 + $0x2a0] sm:$0xff] %vm12469, %v12425
        %12555 = vst.msk [vmem:[%s193 + $0x2a8] sm:$0xff] %vm12469, %v12426
        %12556 = vst.msk [vmem:[%s193 + $0x2b0] sm:$0xff] %vm12469, %v12427
        %12557 = vst.msk [vmem:[%s193 + $0x2b8] sm:$0xff] %vm12469, %v12428
        %12558 = vst.msk [vmem:[%s193 + $0x2c0] sm:$0xff] %vm12469, %v12429
        %12559 = vst.msk [vmem:[%s193 + $0x2c8] sm:$0xff] %vm12469, %v12430
        %12560 = vst.msk [vmem:[%s193 + $0x2d0] sm:$0xff] %vm12469, %v12431
        %12561 = vst.msk [vmem:[%s193 + $0x2d8] sm:$0xff] %vm12469, %v12432
        %12562 = vst.msk [vmem:[%s193 + $0x2e0] sm:$0xff] %vm12469, %v12433
        %12563 = vst.msk [vmem:[%s193 + $0x2e8] sm:$0xff] %vm12469, %v12434
        %12564 = vst.msk [vmem:[%s193 + $0x2f0] sm:$0xff] %vm12469, %v12435
        %12565 = vst.msk [vmem:[%s193 + $0x2f8] sm:$0xff] %vm12469, %v12436
        %12566 = vst.msk [vmem:[%s193 + $0x300] sm:$0xff] %vm12469, %v12437
        %12567 = vst.msk [vmem:[%s193 + $0x308] sm:$0xff] %vm12469, %v12438
        %12568 = vst.msk [vmem:[%s193 + $0x310] sm:$0xff] %vm12469, %v12439
        %12569 = vst.msk [vmem:[%s193 + $0x318] sm:$0xff] %vm12469, %v12440
        %12570 = vst.msk [vmem:[%s193 + $0x320] sm:$0xff] %vm12469, %v12441
        %12571 = vst.msk [vmem:[%s193 + $0x328] sm:$0xff] %vm12469, %v12442
        %12572 = vst.msk [vmem:[%s193 + $0x330] sm:$0xff] %vm12469, %v12443
        %12573 = vst.msk [vmem:[%s193 + $0x338] sm:$0xff] %vm12469, %v12444
        %12574 = vst.msk [vmem:[%s193 + $0x340] sm:$0xff] %vm12469, %v12445
        %12575 = vst.msk [vmem:[%s193 + $0x348] sm:$0xff] %vm12469, %v12446
        %12576 = vst.msk [vmem:[%s193 + $0x350] sm:$0xff] %vm12469, %v12447
        %12577 = vst.msk [vmem:[%s193 + $0x358] sm:$0xff] %vm12469, %v12448
        %12578 = vst.msk [vmem:[%s193 + $0x360] sm:$0xff] %vm12469, %v12449
        %12579 = vst.msk [vmem:[%s193 + $0x368] sm:$0xff] %vm12469, %v12450
        %12580 = vst.msk [vmem:[%s193 + $0x370] sm:$0xff] %vm12469, %v12451
        %12581 = vst.msk [vmem:[%s193 + $0x378] sm:$0xff] %vm12469, %v12452
        %12582 = vst.msk [vmem:[%s193 + $0x380] sm:$0xff] %vm12469, %v12453
        %12583 = vst.msk [vmem:[%s193 + $0x388] sm:$0xff] %vm12469, %v12454
        %12584 = vst.msk [vmem:[%s193 + $0x390] sm:$0xff] %vm12469, %v12455
        %12585 = vst.msk [vmem:[%s193 + $0x398] sm:$0xff] %vm12469, %v12456
        %12586 = vst.msk [vmem:[%s193 + $0x3a0] sm:$0xff] %vm12469, %v12457
        %12587 = vst.msk [vmem:[%s193 + $0x3a8] sm:$0xff] %vm12469, %v12458
        %12588 = vst.msk [vmem:[%s193 + $0x3b0] sm:$0xff] %vm12469, %v12459
        %12589 = vst.msk [vmem:[%s193 + $0x3b8] sm:$0xff] %vm12469, %v12460
        %12590 = vst.msk [vmem:[%s193 + $0x3c0] sm:$0xff] %vm12469, %v12461
        %12591 = vst.msk [vmem:[%s193 + $0x3c8] sm:$0xff] %vm12469, %v12462
        %12592 = vst.msk [vmem:[%s193 + $0x3d0] sm:$0xff] %vm12469, %v12463
        %12593 = vst.msk [vmem:[%s193 + $0x3d8] sm:$0xff] %vm12469, %v12464
        %12594 = vst.msk [vmem:[%s193 + $0x3e0] sm:$0xff] %vm12469, %v12465
        %12595 = vst.msk [vmem:[%s193 + $0x3e8] sm:$0xff] %vm12469, %v12466
        %12596 = vst.msk [vmem:[%s193 + $0x3f0] sm:$0xff] %vm12469, %v12467
        %12597 = vst.msk [vmem:[%s193 + $0x3f8] sm:$0xff] %vm12469, %v12468
        %s12598 = sand.u32 %s115, 1
        %s12599 = scalar_lea.sflag [#allocation3], %s12598
        %s12600 = sand.u32 %s115, 1
        %s12601 = smul.addr %s12600, 1024
        %s12602 = scalar_lea.vmem [#allocation2], %s12601
        // Predicated region
        $region37: #{tpu_custom_call.1} parent=35 // pred_check
          %p12603 = pneg %p125
        $region38: #{tpu_custom_call.1} parent=35 // pred_check_branch
          %12605 = sbr.rel (%p12603) target = $region40
        $region39: #{tpu_custom_call.1} parent=35 // pred_region
          %s12606 = smul.u32 4, %s18
          %s12608 = ssub.s32 16384, 16384
          %12609 = vsyncadd %s12599, %s12608
          %s12610 = smul.addr %s12606, 32
          %s12611 = smul.addr %s12610, 128
          %s12612 = scalar_lea.hbm %s4, %s12611
          %s12613 = sshll.u32 %s12602, 4
          %s12614 = int_to_ptr.vmem [resolvable:$true] %s12613
          %12619 = dma.vmem_to_hbm [thread:$0]  %s12614, 16384, %s12612, %s12599, 128, 128, 8
        $region40: #{tpu_custom_call.1} parent=35 // pred_fallthru
          _
      $region36: #{tpu_custom_call.1} parent=5 // pred_fallthru
        _
      %p12620 = scmp.le.s32.totalorder 2, %s13
      // Predicated region
      $region41: #{tpu_custom_call.1} parent=5 // pred_check
        %p12621 = pneg %p12620
      $region42: #{tpu_custom_call.1} parent=5 // pred_check_branch
        %12623 = sbr.rel (%p12621) target = $region44
      $region43: #{tpu_custom_call.1} parent=5 // pred_region
        %s12624 = ssub.s32 %s13, 2
        // Predicated region
        $region45: #{tpu_custom_call.1} parent=43 // pred_check
          %p12625 = pneg %p131
        $region46: #{tpu_custom_call.1} parent=43 // pred_check_branch
          %12627 = sbr.rel (%p12625) target = $region48
        $region47: #{tpu_custom_call.1} parent=43 // pred_region
          %s12628 = sand.u32 %s116, 1
          %s12629 = scalar_lea.sflag [#allocation3], %s12628
          %s12630 = sand.u32 %s116, 1
          %s12631 = smul.addr %s12630, 1024
          %s12632 = scalar_lea.vmem [#allocation2], %s12631
          %12633 = dma.done %s12629, 16384
        $region48: #{tpu_custom_call.1} parent=43 // pred_fallthru
          _
      $region44: #{tpu_custom_call.1} parent=5 // pred_fallthru
        _
    $region6: #{tpu_custom_call.1} parent=1 // loop_footer
      %s17 = sadd.s32 1, %s13
    $region7: #{tpu_custom_call.1} parent=1 // loop_footer_branch
      %12 = sbr.rel target = $region3
    $region8: #{tpu_custom_call.1} parent=1 // loop_exit
      _
    %12634 = vsyncpa [#allocation3], 1
    %s12635 = scalar_lea.sflag [#allocation3], 1
    %12636 = vsyncpa %s12635, 1

</llo_original>
